<compile_context>
chip_gen: v6e
topology: v6e:2x2x1
jax: 0.10.0
libtpu: 0.0.40
codegen_flags: <defaults>
</compile_context>

<pallas_src>
import jax
import jax.numpy as jnp
from jax import lax
from jax.experimental import pallas as pl
from jax.experimental.pallas import tpu as pltpu

K_CONV = 100            # conv kernel size
C_OUT = 5               # conv out channels
POOL = 50               # avg-pool window / stride
N_POOL = 38             # pooled length expected by the Linear layer (5*38 features)
FC_OUT = 4              # classifier outputs
T_USE = N_POOL * POOL   # 1900 conv outputs actually consumed (AvgPool1d floor drops the rest)
LANE = 128
N_MBLK = 15             # ceil(T_USE / 128): 15 lane-blocks of conv output positions
X_PAD_LEN = (N_MBLK + 1) * LANE   # 2048: window m reads x[128m : 128m + 256]


def fused_classifier_kernel(x_ref, wtoe_ref, brow_ref, wfc_ref, bf_ref, out_ref):
    # x_ref:    (Bblk, 2048)        zero-padded raw input rows for this batch block
    # wtoe_ref: (256, 640)          Toeplitz conv weight: Wtoe[j, c*128+l] = wc[c, j-l]
    # brow_ref: (1, 640)            conv bias broadcast per lane-block: brow[c*128+l] = bc[c]
    # wfc_ref:  (15, 4, 640)        pool-folded FC weight in (m, o, c*128+l) layout
    # bf_ref:   (1, 4)              fc bias
    # out_ref:  (Bblk, 4)
    wtoe = wtoe_ref[...]
    brow = brow_ref[...]
    bblk = x_ref.shape[0]
    acc = jnp.zeros((bblk, FC_OUT), jnp.float32)

    # 15 lane-aligned windows cover conv output positions t = 128*m + l, l in [0,128).
    for m in range(N_MBLK):
        # Lane-aligned static slice (offset multiple of 128) -> cheap aligned vector loads.
        xs = x_ref[:, LANE * m: LANE * m + 2 * LANE]                   # (Bblk, 256)
        # Conv1d(1, 5, 100) for 128 positions x 5 channels in ONE MXU matmul.
        z = jnp.dot(xs, wtoe, preferred_element_type=jnp.float32)      # (Bblk, 640)
        h = jnp.tanh(z + brow)                                         # bias + tanh (VPU/EUP)
        # AvgPool(50) + Linear(190,4), folded into wfc: one contraction over the 640 lanes.
        acc = acc + lax.dot_general(
            h, wfc_ref[m],                                             # (Bblk,640).(4,640)^T
            dimension_numbers=(((1,), (1,)), ((), ())),
            preferred_element_type=jnp.float32)                        # -> (Bblk, 4)

    out_ref[...] = acc + bf_ref[...]


@jax.jit
def classifier_forward(x, wc, bc, wf, bf):
    """x: (B, 1, L) float32; wc: (5,1,100); bc: (5,); wf: (4,190); bf: (4,)."""
    B, _, L = x.shape
    L_out = L - K_CONV + 1
    assert L_out >= T_USE and L_out // POOL == N_POOL, \
        "input length inconsistent with Linear(5*38, 4)"

    x2 = x.reshape(B, L).astype(jnp.float32)
    wc2 = wc.reshape(C_OUT, K_CONV).astype(jnp.float32)
    bc2 = bc.reshape(C_OUT).astype(jnp.float32)
    wf2 = wf.reshape(FC_OUT, C_OUT * N_POOL).astype(jnp.float32)
    bf2 = bf.reshape(1, FC_OUT).astype(jnp.float32)

    # --- Host/XLA-side weight preprocessing (done once per call, weights only) ----------
    # Banded/Toeplitz conv weight: Wtoe[j, c*128 + l] = wc[c, j - l] if 0 <= j-l < 100.
    jj = jnp.arange(2 * LANE)[:, None]                  # (256, 1)
    ll = jnp.arange(LANE)[None, :]                      # (1, 128)
    diff = jj - ll                                      # (256, 128)
    valid_k = (diff >= 0) & (diff < K_CONV)
    wtoe_c = jnp.where(valid_k[None], wc2[:, jnp.clip(diff, 0, K_CONV - 1)], 0.0)  # (5,256,128)
    wtoe = wtoe_c.transpose(1, 0, 2).reshape(2 * LANE, C_OUT * LANE)               # (256, 640)

    # Conv bias per (c*128 + l) lane: brow[c*128+l] = bc[c].
    brow = jnp.repeat(bc2, LANE).reshape(1, C_OUT * LANE)                           # (1, 640)

    # Pool-folded FC weight in Toeplitz layout:
    #   wfc[m, o, c*128+l] = wf[o, 38*c + (128m+l)//50] / 50   if 128m+l < 1900 else 0
    t = (LANE * jnp.arange(N_MBLK))[:, None] + jnp.arange(LANE)[None, :]            # (15, 128)
    p = t // POOL                                                                    # (15, 128)
    valid_t = (t < T_USE).astype(jnp.float32)                                        # (15, 128)
    feat = N_POOL * jnp.arange(C_OUT)[None, :, None] + p[:, None, :]                 # (15, 5, 128)
    feat = jnp.clip(feat, 0, C_OUT * N_POOL - 1)
    wfc = wf2[:, feat] * valid_t[None, :, None, :] / float(POOL)                     # (4,15,5,128)
    wfc = wfc.transpose(1, 0, 2, 3).reshape(N_MBLK, FC_OUT, C_OUT * LANE)            # (15,4,640)

    # --- Batch blocking / padding --------------------------------------------------------
    bblk = 32 if B >= 64 else 8
    grid_n = pl.cdiv(B, bblk)
    b_pad = grid_n * bblk
    x_pad = jnp.zeros((b_pad, X_PAD_LEN), jnp.float32)
    x_pad = x_pad.at[:B, :min(L, X_PAD_LEN)].set(x2[:, :X_PAD_LEN])

    out = pl.pallas_call(
        fused_classifier_kernel,
        out_shape=jax.ShapeDtypeStruct((b_pad, FC_OUT), jnp.float32),
        grid=(grid_n,),
        in_specs=[
            pl.BlockSpec((bblk, X_PAD_LEN), lambda i: (i, 0)),            # x (8 KB/elem stream)
            pl.BlockSpec((2 * LANE, C_OUT * LANE), lambda i: (0, 0)),     # Wtoe   (resident)
            pl.BlockSpec((1, C_OUT * LANE), lambda i: (0, 0)),            # conv bias (resident)
            pl.BlockSpec((N_MBLK, FC_OUT, C_OUT * LANE), lambda i: (0, 0, 0)),  # fc W (resident)
            pl.BlockSpec((1, FC_OUT), lambda i: (0, 0)),                  # fc bias (resident)
        ],
        out_specs=pl.BlockSpec((bblk, FC_OUT), lambda i: (i, 0)),
        compiler_params=pltpu.CompilerParams(dimension_semantics=("parallel",)),
    )(x_pad, wtoe, brow, wfc, bf2)
    return out[:B]


def reference_forward(x, wc, bc, wf, bf):
    """Pure-JAX reference mirroring the PyTorch forward pass exactly."""
    z = lax.conv_general_dilated(
        x, wc, window_strides=(1,), padding="VALID",
        dimension_numbers=("NCH", "OIH", "NCH"))
    z = z + bc[None, :, None]
    z = jnp.tanh(z)
    B = x.shape[0]
    z = z[:, :, : N_POOL * POOL].reshape(B, C_OUT, N_POOL, POOL).mean(-1)
    flat = z.reshape(B, C_OUT * N_POOL)
    return flat @ wf.T + bf


if __name__ == "__main__":
    key = jax.random.PRNGKey(0)
    kx, kwc, kbc, kwf, kbf = jax.random.split(key, 5)

    B, L = 2, 2000   # (L - 99) // 50 == 38, matching the module's Linear(5*38, 4)
    x = jax.random.normal(kx, (B, 1, L), dtype=jnp.float32)

    # deterministic synthetic parameters (same shapes as the PyTorch module)
    wc = jax.random.normal(kwc, (C_OUT, 1, K_CONV), dtype=jnp.float32) * 0.1        # Conv1d.weight
    bc = jax.random.normal(kbc, (C_OUT,), dtype=jnp.float32) * 0.1                  # Conv1d.bias
    wf = jax.random.normal(kwf, (FC_OUT, C_OUT * N_POOL), dtype=jnp.float32) * 0.1  # Linear.weight
    bf = jax.random.normal(kbf, (FC_OUT,), dtype=jnp.float32) * 0.1                 # Linear.bias

    out = jax.block_until_ready(classifier_forward(x, wc, bc, wf, bf))
    ref = jax.block_until_ready(reference_forward(x, wc, bc, wf, bf))

    assert out.shape == (B, FC_OUT), out.shape
    assert jnp.allclose(out, ref, rtol=2e-3, atol=2e-3), (out, ref)
    print("KERNEL_OK")
</pallas_src>

<mosaic_0001>
module attributes {stable_mosaic.version = 11 : i64} {
  func.func @fused_classifier_kernel(%arg0: i32, %arg1: memref<8x2048xf32, #tpu.memory_space<vmem>>, %arg2: memref<256x640xf32, #tpu.memory_space<vmem>>, %arg3: memref<1x640xf32, #tpu.memory_space<vmem>>, %arg4: memref<15x4x640xf32, #tpu.memory_space<vmem>>, %arg5: memref<1x4xf32, #tpu.memory_space<vmem>>, %arg6: memref<8x4xf32, #tpu.memory_space<vmem>>) attributes {dimension_semantics = [#tpu.dimension_semantics<parallel>], iteration_bounds = array<i64: 1>, scalar_prefetch = 0 : i64, scratch_operands = 0 : i64, tpu.core_type = #tpu.core_type<tc>, window_params = [{transform_indices = @transform_0, window_bounds = array<i64: 8, 2048>}, {pipeline_mode = #tpu.pipeline_mode<synchronous>, transform_indices = @transform_1, window_bounds = array<i64: 256, 640>}, {pipeline_mode = #tpu.pipeline_mode<synchronous>, transform_indices = @transform_2, window_bounds = array<i64: 1, 640>}, {pipeline_mode = #tpu.pipeline_mode<synchronous>, transform_indices = @transform_3, window_bounds = array<i64: 15, 4, 640>}, {pipeline_mode = #tpu.pipeline_mode<synchronous>, transform_indices = @transform_4, window_bounds = array<i64: 1, 4>}, {transform_indices = @transform_5, window_bounds = array<i64: 8, 4>}]} {
    %c0 = arith.constant 0 : index
    %c0_0 = arith.constant 0 : index
    %0 = vector.load %arg2[%c0, %c0_0] : memref<256x640xf32, #tpu.memory_space<vmem>>, vector<256x640xf32>
    %c0_1 = arith.constant 0 : index
    %c0_2 = arith.constant 0 : index
    %1 = vector.load %arg3[%c0_1, %c0_2] : memref<1x640xf32, #tpu.memory_space<vmem>>, vector<1x640xf32>
    %cst = arith.constant 0.000000e+00 : f32
    %2 = vector.broadcast %cst : f32 to vector<8x4xf32>
    %c0_3 = arith.constant 0 : index
    %c0_4 = arith.constant 0 : index
    %3 = vector.load %arg1[%c0_3, %c0_4] : memref<8x2048xf32, #tpu.memory_space<vmem>>, vector<8x256xf32>
    %cst_5 = arith.constant dense<0.000000e+00> : vector<8x640xf32>
    %4 = tpu.matmul %3, %0, %cst_5 {dimension_numbers = #tpu.dot_dimension_numbers<[1], [0], [0], [1], [0, 0, 1, 1], [], []>} : vector<8x256xf32>, vector<256x640xf32>, vector<8x640xf32> -> vector<8x640xf32>
    %5 = vector.broadcast %1 : vector<1x640xf32> to vector<8x640xf32>
    %6 = arith.addf %4, %5 : vector<8x640xf32>
    %7 = math.tanh %6 : vector<8x640xf32>
    %c0_6 = arith.constant 0 : index
    %c0_7 = arith.constant 0 : index
    %c0_8 = arith.constant 0 : index
    %8 = vector.load %arg4[%c0_6, %c0_7, %c0_8] : memref<15x4x640xf32, #tpu.memory_space<vmem>>, vector<1x4x640xf32>
    %9 = vector.shape_cast %8 : vector<1x4x640xf32> to vector<4x640xf32>
    %cst_9 = arith.constant dense<0.000000e+00> : vector<8x4xf32>
    %10 = tpu.matmul %7, %9, %cst_9 {dimension_numbers = #tpu.dot_dimension_numbers<[1], [1], [0], [0], [0, 0, 1, 0], [], []>} : vector<8x640xf32>, vector<4x640xf32>, vector<8x4xf32> -> vector<8x4xf32>
    %11 = arith.addf %2, %10 : vector<8x4xf32>
    %c0_10 = arith.constant 0 : index
    %c128 = arith.constant 128 : index
    %12 = vector.load %arg1[%c0_10, %c128] : memref<8x2048xf32, #tpu.memory_space<vmem>>, vector<8x256xf32>
    %cst_11 = arith.constant dense<0.000000e+00> : vector<8x640xf32>
    %13 = tpu.matmul %12, %0, %cst_11 {dimension_numbers = #tpu.dot_dimension_numbers<[1], [0], [0], [1], [0, 0, 1, 1], [], []>} : vector<8x256xf32>, vector<256x640xf32>, vector<8x640xf32> -> vector<8x640xf32>
    %14 = vector.broadcast %1 : vector<1x640xf32> to vector<8x640xf32>
    %15 = arith.addf %13, %14 : vector<8x640xf32>
    %16 = math.tanh %15 : vector<8x640xf32>
    %c1 = arith.constant 1 : index
    %c0_12 = arith.constant 0 : index
    %c0_13 = arith.constant 0 : index
    %17 = vector.load %arg4[%c1, %c0_12, %c0_13] : memref<15x4x640xf32, #tpu.memory_space<vmem>>, vector<1x4x640xf32>
    %18 = vector.shape_cast %17 : vector<1x4x640xf32> to vector<4x640xf32>
    %cst_14 = arith.constant dense<0.000000e+00> : vector<8x4xf32>
    %19 = tpu.matmul %16, %18, %cst_14 {dimension_numbers = #tpu.dot_dimension_numbers<[1], [1], [0], [0], [0, 0, 1, 0], [], []>} : vector<8x640xf32>, vector<4x640xf32>, vector<8x4xf32> -> vector<8x4xf32>
    %20 = arith.addf %11, %19 : vector<8x4xf32>
    %c0_15 = arith.constant 0 : index
    %c256 = arith.constant 256 : index
    %21 = vector.load %arg1[%c0_15, %c256] : memref<8x2048xf32, #tpu.memory_space<vmem>>, vector<8x256xf32>
    %cst_16 = arith.constant dense<0.000000e+00> : vector<8x640xf32>
    %22 = tpu.matmul %21, %0, %cst_16 {dimension_numbers = #tpu.dot_dimension_numbers<[1], [0], [0], [1], [0, 0, 1, 1], [], []>} : vector<8x256xf32>, vector<256x640xf32>, vector<8x640xf32> -> vector<8x640xf32>
    %23 = vector.broadcast %1 : vector<1x640xf32> to vector<8x640xf32>
    %24 = arith.addf %22, %23 : vector<8x640xf32>
    %25 = math.tanh %24 : vector<8x640xf32>
    %c2 = arith.constant 2 : index
    %c0_17 = arith.constant 0 : index
    %c0_18 = arith.constant 0 : index
    %26 = vector.load %arg4[%c2, %c0_17, %c0_18] : memref<15x4x640xf32, #tpu.memory_space<vmem>>, vector<1x4x640xf32>
    %27 = vector.shape_cast %26 : vector<1x4x640xf32> to vector<4x640xf32>
    %cst_19 = arith.constant dense<0.000000e+00> : vector<8x4xf32>
    %28 = tpu.matmul %25, %27, %cst_19 {dimension_numbers = #tpu.dot_dimension_numbers<[1], [1], [0], [0], [0, 0, 1, 0], [], []>} : vector<8x640xf32>, vector<4x640xf32>, vector<8x4xf32> -> vector<8x4xf32>
    %29 = arith.addf %20, %28 : vector<8x4xf32>
    %c0_20 = arith.constant 0 : index
    %c384 = arith.constant 384 : index
    %30 = vector.load %arg1[%c0_20, %c384] : memref<8x2048xf32, #tpu.memory_space<vmem>>, vector<8x256xf32>
    %cst_21 = arith.constant dense<0.000000e+00> : vector<8x640xf32>
    %31 = tpu.matmul %30, %0, %cst_21 {dimension_numbers = #tpu.dot_dimension_numbers<[1], [0], [0], [1], [0, 0, 1, 1], [], []>} : vector<8x256xf32>, vector<256x640xf32>, vector<8x640xf32> -> vector<8x640xf32>
    %32 = vector.broadcast %1 : vector<1x640xf32> to vector<8x640xf32>
    %33 = arith.addf %31, %32 : vector<8x640xf32>
    %34 = math.tanh %33 : vector<8x640xf32>
    %c3 = arith.constant 3 : index
    %c0_22 = arith.constant 0 : index
    %c0_23 = arith.constant 0 : index
    %35 = vector.load %arg4[%c3, %c0_22, %c0_23] : memref<15x4x640xf32, #tpu.memory_space<vmem>>, vector<1x4x640xf32>
    %36 = vector.shape_cast %35 : vector<1x4x640xf32> to vector<4x640xf32>
    %cst_24 = arith.constant dense<0.000000e+00> : vector<8x4xf32>
    %37 = tpu.matmul %34, %36, %cst_24 {dimension_numbers = #tpu.dot_dimension_numbers<[1], [1], [0], [0], [0, 0, 1, 0], [], []>} : vector<8x640xf32>, vector<4x640xf32>, vector<8x4xf32> -> vector<8x4xf32>
    %38 = arith.addf %29, %37 : vector<8x4xf32>
    %c0_25 = arith.constant 0 : index
    %c512 = arith.constant 512 : index
    %39 = vector.load %arg1[%c0_25, %c512] : memref<8x2048xf32, #tpu.memory_space<vmem>>, vector<8x256xf32>
    %cst_26 = arith.constant dense<0.000000e+00> : vector<8x640xf32>
    %40 = tpu.matmul %39, %0, %cst_26 {dimension_numbers = #tpu.dot_dimension_numbers<[1], [0], [0], [1], [0, 0, 1, 1], [], []>} : vector<8x256xf32>, vector<256x640xf32>, vector<8x640xf32> -> vector<8x640xf32>
    %41 = vector.broadcast %1 : vector<1x640xf32> to vector<8x640xf32>
    %42 = arith.addf %40, %41 : vector<8x640xf32>
    %43 = math.tanh %42 : vector<8x640xf32>
    %c4 = arith.constant 4 : index
    %c0_27 = arith.constant 0 : index
    %c0_28 = arith.constant 0 : index
    %44 = vector.load %arg4[%c4, %c0_27, %c0_28] : memref<15x4x640xf32, #tpu.memory_space<vmem>>, vector<1x4x640xf32>
    %45 = vector.shape_cast %44 : vector<1x4x640xf32> to vector<4x640xf32>
    %cst_29 = arith.constant dense<0.000000e+00> : vector<8x4xf32>
    %46 = tpu.matmul %43, %45, %cst_29 {dimension_numbers = #tpu.dot_dimension_numbers<[1], [1], [0], [0], [0, 0, 1, 0], [], []>} : vector<8x640xf32>, vector<4x640xf32>, vector<8x4xf32> -> vector<8x4xf32>
    %47 = arith.addf %38, %46 : vector<8x4xf32>
    %c0_30 = arith.constant 0 : index
    %c640 = arith.constant 640 : index
    %48 = vector.load %arg1[%c0_30, %c640] : memref<8x2048xf32, #tpu.memory_space<vmem>>, vector<8x256xf32>
    %cst_31 = arith.constant dense<0.000000e+00> : vector<8x640xf32>
    %49 = tpu.matmul %48, %0, %cst_31 {dimension_numbers = #tpu.dot_dimension_numbers<[1], [0], [0], [1], [0, 0, 1, 1], [], []>} : vector<8x256xf32>, vector<256x640xf32>, vector<8x640xf32> -> vector<8x640xf32>
    %50 = vector.broadcast %1 : vector<1x640xf32> to vector<8x640xf32>
    %51 = arith.addf %49, %50 : vector<8x640xf32>
    %52 = math.tanh %51 : vector<8x640xf32>
    %c5 = arith.constant 5 : index
    %c0_32 = arith.constant 0 : index
    %c0_33 = arith.constant 0 : index
    %53 = vector.load %arg4[%c5, %c0_32, %c0_33] : memref<15x4x640xf32, #tpu.memory_space<vmem>>, vector<1x4x640xf32>
    %54 = vector.shape_cast %53 : vector<1x4x640xf32> to vector<4x640xf32>
    %cst_34 = arith.constant dense<0.000000e+00> : vector<8x4xf32>
    %55 = tpu.matmul %52, %54, %cst_34 {dimension_numbers = #tpu.dot_dimension_numbers<[1], [1], [0], [0], [0, 0, 1, 0], [], []>} : vector<8x640xf32>, vector<4x640xf32>, vector<8x4xf32> -> vector<8x4xf32>
    %56 = arith.addf %47, %55 : vector<8x4xf32>
    %c0_35 = arith.constant 0 : index
    %c768 = arith.constant 768 : index
    %57 = vector.load %arg1[%c0_35, %c768] : memref<8x2048xf32, #tpu.memory_space<vmem>>, vector<8x256xf32>
    %cst_36 = arith.constant dense<0.000000e+00> : vector<8x640xf32>
    %58 = tpu.matmul %57, %0, %cst_36 {dimension_numbers = #tpu.dot_dimension_numbers<[1], [0], [0], [1], [0, 0, 1, 1], [], []>} : vector<8x256xf32>, vector<256x640xf32>, vector<8x640xf32> -> vector<8x640xf32>
    %59 = vector.broadcast %1 : vector<1x640xf32> to vector<8x640xf32>
    %60 = arith.addf %58, %59 : vector<8x640xf32>
    %61 = math.tanh %60 : vector<8x640xf32>
    %c6 = arith.constant 6 : index
    %c0_37 = arith.constant 0 : index
    %c0_38 = arith.constant 0 : index
    %62 = vector.load %arg4[%c6, %c0_37, %c0_38] : memref<15x4x640xf32, #tpu.memory_space<vmem>>, vector<1x4x640xf32>
    %63 = vector.shape_cast %62 : vector<1x4x640xf32> to vector<4x640xf32>
    %cst_39 = arith.constant dense<0.000000e+00> : vector<8x4xf32>
    %64 = tpu.matmul %61, %63, %cst_39 {dimension_numbers = #tpu.dot_dimension_numbers<[1], [1], [0], [0], [0, 0, 1, 0], [], []>} : vector<8x640xf32>, vector<4x640xf32>, vector<8x4xf32> -> vector<8x4xf32>
    %65 = arith.addf %56, %64 : vector<8x4xf32>
    %c0_40 = arith.constant 0 : index
    %c896 = arith.constant 896 : index
    %66 = vector.load %arg1[%c0_40, %c896] : memref<8x2048xf32, #tpu.memory_space<vmem>>, vector<8x256xf32>
    %cst_41 = arith.constant dense<0.000000e+00> : vector<8x640xf32>
    %67 = tpu.matmul %66, %0, %cst_41 {dimension_numbers = #tpu.dot_dimension_numbers<[1], [0], [0], [1], [0, 0, 1, 1], [], []>} : vector<8x256xf32>, vector<256x640xf32>, vector<8x640xf32> -> vector<8x640xf32>
    %68 = vector.broadcast %1 : vector<1x640xf32> to vector<8x640xf32>
    %69 = arith.addf %67, %68 : vector<8x640xf32>
    %70 = math.tanh %69 : vector<8x640xf32>
    %c7 = arith.constant 7 : index
    %c0_42 = arith.constant 0 : index
    %c0_43 = arith.constant 0 : index
    %71 = vector.load %arg4[%c7, %c0_42, %c0_43] : memref<15x4x640xf32, #tpu.memory_space<vmem>>, vector<1x4x640xf32>
    %72 = vector.shape_cast %71 : vector<1x4x640xf32> to vector<4x640xf32>
    %cst_44 = arith.constant dense<0.000000e+00> : vector<8x4xf32>
    %73 = tpu.matmul %70, %72, %cst_44 {dimension_numbers = #tpu.dot_dimension_numbers<[1], [1], [0], [0], [0, 0, 1, 0], [], []>} : vector<8x640xf32>, vector<4x640xf32>, vector<8x4xf32> -> vector<8x4xf32>
    %74 = arith.addf %65, %73 : vector<8x4xf32>
    %c0_45 = arith.constant 0 : index
    %c1024 = arith.constant 1024 : index
    %75 = vector.load %arg1[%c0_45, %c1024] : memref<8x2048xf32, #tpu.memory_space<vmem>>, vector<8x256xf32>
    %cst_46 = arith.constant dense<0.000000e+00> : vector<8x640xf32>
    %76 = tpu.matmul %75, %0, %cst_46 {dimension_numbers = #tpu.dot_dimension_numbers<[1], [0], [0], [1], [0, 0, 1, 1], [], []>} : vector<8x256xf32>, vector<256x640xf32>, vector<8x640xf32> -> vector<8x640xf32>
    %77 = vector.broadcast %1 : vector<1x640xf32> to vector<8x640xf32>
    %78 = arith.addf %76, %77 : vector<8x640xf32>
    %79 = math.tanh %78 : vector<8x640xf32>
    %c8 = arith.constant 8 : index
    %c0_47 = arith.constant 0 : index
    %c0_48 = arith.constant 0 : index
    %80 = vector.load %arg4[%c8, %c0_47, %c0_48] : memref<15x4x640xf32, #tpu.memory_space<vmem>>, vector<1x4x640xf32>
    %81 = vector.shape_cast %80 : vector<1x4x640xf32> to vector<4x640xf32>
    %cst_49 = arith.constant dense<0.000000e+00> : vector<8x4xf32>
    %82 = tpu.matmul %79, %81, %cst_49 {dimension_numbers = #tpu.dot_dimension_numbers<[1], [1], [0], [0], [0, 0, 1, 0], [], []>} : vector<8x640xf32>, vector<4x640xf32>, vector<8x4xf32> -> vector<8x4xf32>
    %83 = arith.addf %74, %82 : vector<8x4xf32>
    %c0_50 = arith.constant 0 : index
    %c1152 = arith.constant 1152 : index
    %84 = vector.load %arg1[%c0_50, %c1152] : memref<8x2048xf32, #tpu.memory_space<vmem>>, vector<8x256xf32>
    %cst_51 = arith.constant dense<0.000000e+00> : vector<8x640xf32>
    %85 = tpu.matmul %84, %0, %cst_51 {dimension_numbers = #tpu.dot_dimension_numbers<[1], [0], [0], [1], [0, 0, 1, 1], [], []>} : vector<8x256xf32>, vector<256x640xf32>, vector<8x640xf32> -> vector<8x640xf32>
    %86 = vector.broadcast %1 : vector<1x640xf32> to vector<8x640xf32>
    %87 = arith.addf %85, %86 : vector<8x640xf32>
    %88 = math.tanh %87 : vector<8x640xf32>
    %c9 = arith.constant 9 : index
    %c0_52 = arith.constant 0 : index
    %c0_53 = arith.constant 0 : index
    %89 = vector.load %arg4[%c9, %c0_52, %c0_53] : memref<15x4x640xf32, #tpu.memory_space<vmem>>, vector<1x4x640xf32>
    %90 = vector.shape_cast %89 : vector<1x4x640xf32> to vector<4x640xf32>
    %cst_54 = arith.constant dense<0.000000e+00> : vector<8x4xf32>
    %91 = tpu.matmul %88, %90, %cst_54 {dimension_numbers = #tpu.dot_dimension_numbers<[1], [1], [0], [0], [0, 0, 1, 0], [], []>} : vector<8x640xf32>, vector<4x640xf32>, vector<8x4xf32> -> vector<8x4xf32>
    %92 = arith.addf %83, %91 : vector<8x4xf32>
    %c0_55 = arith.constant 0 : index
    %c1280 = arith.constant 1280 : index
    %93 = vector.load %arg1[%c0_55, %c1280] : memref<8x2048xf32, #tpu.memory_space<vmem>>, vector<8x256xf32>
    %cst_56 = arith.constant dense<0.000000e+00> : vector<8x640xf32>
    %94 = tpu.matmul %93, %0, %cst_56 {dimension_numbers = #tpu.dot_dimension_numbers<[1], [0], [0], [1], [0, 0, 1, 1], [], []>} : vector<8x256xf32>, vector<256x640xf32>, vector<8x640xf32> -> vector<8x640xf32>
    %95 = vector.broadcast %1 : vector<1x640xf32> to vector<8x640xf32>
    %96 = arith.addf %94, %95 : vector<8x640xf32>
    %97 = math.tanh %96 : vector<8x640xf32>
    %c10 = arith.constant 10 : index
    %c0_57 = arith.constant 0 : index
    %c0_58 = arith.constant 0 : index
    %98 = vector.load %arg4[%c10, %c0_57, %c0_58] : memref<15x4x640xf32, #tpu.memory_space<vmem>>, vector<1x4x640xf32>
    %99 = vector.shape_cast %98 : vector<1x4x640xf32> to vector<4x640xf32>
    %cst_59 = arith.constant dense<0.000000e+00> : vector<8x4xf32>
    %100 = tpu.matmul %97, %99, %cst_59 {dimension_numbers = #tpu.dot_dimension_numbers<[1], [1], [0], [0], [0, 0, 1, 0], [], []>} : vector<8x640xf32>, vector<4x640xf32>, vector<8x4xf32> -> vector<8x4xf32>
    %101 = arith.addf %92, %100 : vector<8x4xf32>
    %c0_60 = arith.constant 0 : index
    %c1408 = arith.constant 1408 : index
    %102 = vector.load %arg1[%c0_60, %c1408] : memref<8x2048xf32, #tpu.memory_space<vmem>>, vector<8x256xf32>
    %cst_61 = arith.constant dense<0.000000e+00> : vector<8x640xf32>
    %103 = tpu.matmul %102, %0, %cst_61 {dimension_numbers = #tpu.dot_dimension_numbers<[1], [0], [0], [1], [0, 0, 1, 1], [], []>} : vector<8x256xf32>, vector<256x640xf32>, vector<8x640xf32> -> vector<8x640xf32>
    %104 = vector.broadcast %1 : vector<1x640xf32> to vector<8x640xf32>
    %105 = arith.addf %103, %104 : vector<8x640xf32>
    %106 = math.tanh %105 : vector<8x640xf32>
    %c11 = arith.constant 11 : index
    %c0_62 = arith.constant 0 : index
    %c0_63 = arith.constant 0 : index
    %107 = vector.load %arg4[%c11, %c0_62, %c0_63] : memref<15x4x640xf32, #tpu.memory_space<vmem>>, vector<1x4x640xf32>
    %108 = vector.shape_cast %107 : vector<1x4x640xf32> to vector<4x640xf32>
    %cst_64 = arith.constant dense<0.000000e+00> : vector<8x4xf32>
    %109 = tpu.matmul %106, %108, %cst_64 {dimension_numbers = #tpu.dot_dimension_numbers<[1], [1], [0], [0], [0, 0, 1, 0], [], []>} : vector<8x640xf32>, vector<4x640xf32>, vector<8x4xf32> -> vector<8x4xf32>
    %110 = arith.addf %101, %109 : vector<8x4xf32>
    %c0_65 = arith.constant 0 : index
    %c1536 = arith.constant 1536 : index
    %111 = vector.load %arg1[%c0_65, %c1536] : memref<8x2048xf32, #tpu.memory_space<vmem>>, vector<8x256xf32>
    %cst_66 = arith.constant dense<0.000000e+00> : vector<8x640xf32>
    %112 = tpu.matmul %111, %0, %cst_66 {dimension_numbers = #tpu.dot_dimension_numbers<[1], [0], [0], [1], [0, 0, 1, 1], [], []>} : vector<8x256xf32>, vector<256x640xf32>, vector<8x640xf32> -> vector<8x640xf32>
    %113 = vector.broadcast %1 : vector<1x640xf32> to vector<8x640xf32>
    %114 = arith.addf %112, %113 : vector<8x640xf32>
    %115 = math.tanh %114 : vector<8x640xf32>
    %c12 = arith.constant 12 : index
    %c0_67 = arith.constant 0 : index
    %c0_68 = arith.constant 0 : index
    %116 = vector.load %arg4[%c12, %c0_67, %c0_68] : memref<15x4x640xf32, #tpu.memory_space<vmem>>, vector<1x4x640xf32>
    %117 = vector.shape_cast %116 : vector<1x4x640xf32> to vector<4x640xf32>
    %cst_69 = arith.constant dense<0.000000e+00> : vector<8x4xf32>
    %118 = tpu.matmul %115, %117, %cst_69 {dimension_numbers = #tpu.dot_dimension_numbers<[1], [1], [0], [0], [0, 0, 1, 0], [], []>} : vector<8x640xf32>, vector<4x640xf32>, vector<8x4xf32> -> vector<8x4xf32>
    %119 = arith.addf %110, %118 : vector<8x4xf32>
    %c0_70 = arith.constant 0 : index
    %c1664 = arith.constant 1664 : index
    %120 = vector.load %arg1[%c0_70, %c1664] : memref<8x2048xf32, #tpu.memory_space<vmem>>, vector<8x256xf32>
    %cst_71 = arith.constant dense<0.000000e+00> : vector<8x640xf32>
    %121 = tpu.matmul %120, %0, %cst_71 {dimension_numbers = #tpu.dot_dimension_numbers<[1], [0], [0], [1], [0, 0, 1, 1], [], []>} : vector<8x256xf32>, vector<256x640xf32>, vector<8x640xf32> -> vector<8x640xf32>
    %122 = vector.broadcast %1 : vector<1x640xf32> to vector<8x640xf32>
    %123 = arith.addf %121, %122 : vector<8x640xf32>
    %124 = math.tanh %123 : vector<8x640xf32>
    %c13 = arith.constant 13 : index
    %c0_72 = arith.constant 0 : index
    %c0_73 = arith.constant 0 : index
    %125 = vector.load %arg4[%c13, %c0_72, %c0_73] : memref<15x4x640xf32, #tpu.memory_space<vmem>>, vector<1x4x640xf32>
    %126 = vector.shape_cast %125 : vector<1x4x640xf32> to vector<4x640xf32>
    %cst_74 = arith.constant dense<0.000000e+00> : vector<8x4xf32>
    %127 = tpu.matmul %124, %126, %cst_74 {dimension_numbers = #tpu.dot_dimension_numbers<[1], [1], [0], [0], [0, 0, 1, 0], [], []>} : vector<8x640xf32>, vector<4x640xf32>, vector<8x4xf32> -> vector<8x4xf32>
    %128 = arith.addf %119, %127 : vector<8x4xf32>
    %c0_75 = arith.constant 0 : index
    %c1792 = arith.constant 1792 : index
    %129 = vector.load %arg1[%c0_75, %c1792] : memref<8x2048xf32, #tpu.memory_space<vmem>>, vector<8x256xf32>
    %cst_76 = arith.constant dense<0.000000e+00> : vector<8x640xf32>
    %130 = tpu.matmul %129, %0, %cst_76 {dimension_numbers = #tpu.dot_dimension_numbers<[1], [0], [0], [1], [0, 0, 1, 1], [], []>} : vector<8x256xf32>, vector<256x640xf32>, vector<8x640xf32> -> vector<8x640xf32>
    %131 = vector.broadcast %1 : vector<1x640xf32> to vector<8x640xf32>
    %132 = arith.addf %130, %131 : vector<8x640xf32>
    %133 = math.tanh %132 : vector<8x640xf32>
    %c14 = arith.constant 14 : index
    %c0_77 = arith.constant 0 : index
    %c0_78 = arith.constant 0 : index
    %134 = vector.load %arg4[%c14, %c0_77, %c0_78] : memref<15x4x640xf32, #tpu.memory_space<vmem>>, vector<1x4x640xf32>
    %135 = vector.shape_cast %134 : vector<1x4x640xf32> to vector<4x640xf32>
    %cst_79 = arith.constant dense<0.000000e+00> : vector<8x4xf32>
    %136 = tpu.matmul %133, %135, %cst_79 {dimension_numbers = #tpu.dot_dimension_numbers<[1], [1], [0], [0], [0, 0, 1, 0], [], []>} : vector<8x640xf32>, vector<4x640xf32>, vector<8x4xf32> -> vector<8x4xf32>
    %137 = arith.addf %128, %136 : vector<8x4xf32>
    %c0_80 = arith.constant 0 : index
    %c0_81 = arith.constant 0 : index
    %138 = vector.load %arg5[%c0_80, %c0_81] : memref<1x4xf32, #tpu.memory_space<vmem>>, vector<1x4xf32>
    %139 = vector.broadcast %138 : vector<1x4xf32> to vector<8x4xf32>
    %140 = arith.addf %137, %139 : vector<8x4xf32>
    %c0_82 = arith.constant 0 : index
    %c0_83 = arith.constant 0 : index
    %141 = vector.load %arg6[%c0_82, %c0_83] : memref<8x4xf32, #tpu.memory_space<vmem>>, vector<8x4xf32>
    tpu.vector_store %arg6[%c0_82, %c0_83], %140 {strides = array<i32>} : memref<8x4xf32, #tpu.memory_space<vmem>>, vector<8x4xf32>,
    return
  }
  func.func @transform_0(%arg0: i32) -> (i32, i32) {
    %c0_i32 = arith.constant 0 : i32
    %c0_i32_0 = arith.constant 0 : i32
    return %arg0, %c0_i32 : i32, i32
  }
  func.func @transform_1(%arg0: i32) -> (i32, i32) {
    %c0_i32 = arith.constant 0 : i32
    %c0_i32_0 = arith.constant 0 : i32
    %c0_i32_1 = arith.constant 0 : i32
    return %c0_i32, %c0_i32_0 : i32, i32
  }
  func.func @transform_2(%arg0: i32) -> (i32, i32) {
    %c0_i32 = arith.constant 0 : i32
    %c0_i32_0 = arith.constant 0 : i32
    %c0_i32_1 = arith.constant 0 : i32
    return %c0_i32, %c0_i32_0 : i32, i32
  }
  func.func @transform_3(%arg0: i32) -> (i32, i32, i32) {
    %c0_i32 = arith.constant 0 : i32
    %c0_i32_0 = arith.constant 0 : i32
    %c0_i32_1 = arith.constant 0 : i32
    %c0_i32_2 = arith.constant 0 : i32
    return %c0_i32, %c0_i32_0, %c0_i32_1 : i32, i32, i32
  }
  func.func @transform_4(%arg0: i32) -> (i32, i32) {
    %c0_i32 = arith.constant 0 : i32
    %c0_i32_0 = arith.constant 0 : i32
    %c0_i32_1 = arith.constant 0 : i32
    return %c0_i32, %c0_i32_0 : i32, i32
  }
  func.func @transform_5(%arg0: i32) -> (i32, i32) {
    %c0_i32 = arith.constant 0 : i32
    %c0_i32_0 = arith.constant 0 : i32
    return %arg0, %c0_i32 : i32, i32
  }
}

</mosaic_0001>

<llo_original>
// kernel: classifier_forward.1
$region0: #{classifier_forward.1}
  #allocation0 [shape = 'u32[]', space=smem, size = 0x4, offset = 0x4, fixed_abs, tag = 'smem constant byte address 0x4 - core index']
  #allocation1 [shape = 'u32[144,128]{1,0:T(1,128)}', space=vmem, size = 0x12000, scoped, tag = 'internal scratch']
  %s0 = inlined_call_operand.vmem [shape: f32[8,2048], index: 0, kind: input, shape index: {}]
  %s1 = inlined_call_operand.vmem [shape: f32[256,640], index: 1, kind: input, shape index: {}]
  %s2 = inlined_call_operand.vmem [shape: f32[1,640], index: 2, kind: input, shape index: {}]
  %s3 = inlined_call_operand.vmem [shape: f32[15,4,640], index: 3, kind: input, shape index: {}]
  %s4 = inlined_call_operand.vmem [shape: f32[1,4], index: 4, kind: input, shape index: {}]
  %s5 = inlined_call_operand.vmem [shape: f32[8,4], index: 5, kind: output, shape index: {}]
  %s6 = sld [smem:[#allocation0]]
  $region30: #{classifier_forward.1} parent=0
    _
  %s8 = ssub.s32 1, %s6
  %s9 = scalar_select 0, %s8, %s6
  // Predicated region
  $region2: #{classifier_forward.1} parent=0 // pred_check
    _
  $region3: #{classifier_forward.1} parent=0 // pred_check_branch
    %11 = sbr.rel (0) target = $region5
  $region4: #{classifier_forward.1} parent=0 // pred_region
    _
  $region5: #{classifier_forward.1} parent=0 // pred_fallthru
    _
  // Predicated region
  $region6: #{classifier_forward.1} parent=0 // pred_check
    _
  $region7: #{classifier_forward.1} parent=0 // pred_check_branch
    %13 = sbr.rel (0) target = $region9
  $region8: #{classifier_forward.1} parent=0 // pred_region
    _
  $region9: #{classifier_forward.1} parent=0 // pred_fallthru
    _
  // Predicated region
  $region10: #{classifier_forward.1} parent=0 // pred_check
    _
  $region11: #{classifier_forward.1} parent=0 // pred_check_branch
    %15 = sbr.rel (0) target = $region13
  $region12: #{classifier_forward.1} parent=0 // pred_region
    _
  $region13: #{classifier_forward.1} parent=0 // pred_fallthru
    _
  // Predicated region
  $region14: #{classifier_forward.1} parent=0 // pred_check
    _
  $region15: #{classifier_forward.1} parent=0 // pred_check_branch
    %17 = sbr.rel (0) target = $region17
  $region16: #{classifier_forward.1} parent=0 // pred_region
    _
  $region17: #{classifier_forward.1} parent=0 // pred_fallthru
    _
  // Predicated region
  $region18: #{classifier_forward.1} parent=0 // pred_check
    _
  $region19: #{classifier_forward.1} parent=0 // pred_check_branch
    %19 = sbr.rel (0) target = $region21
  $region20: #{classifier_forward.1} parent=0 // pred_region
    _
  $region21: #{classifier_forward.1} parent=0 // pred_fallthru
    _
  %v20 = vld [vmem:[%s1] sm:$0xff]
  %v21 = vld [vmem:[%s1 + $0x8] sm:$0xff]
  %v22 = vld [vmem:[%s1 + $0x10] sm:$0xff]
  %v23 = vld [vmem:[%s1 + $0x18] sm:$0xff]
  %v24 = vld [vmem:[%s1 + $0x20] sm:$0xff]
  %v25 = vld [vmem:[%s1 + $0x28] sm:$0xff]
  %v26 = vld [vmem:[%s1 + $0x30] sm:$0xff]
  %v27 = vld [vmem:[%s1 + $0x38] sm:$0xff]
  %v28 = vld [vmem:[%s1 + $0x40] sm:$0xff]
  %v29 = vld [vmem:[%s1 + $0x48] sm:$0xff]
  %v30 = vld [vmem:[%s1 + $0x50] sm:$0xff]
  %v31 = vld [vmem:[%s1 + $0x58] sm:$0xff]
  %v32 = vld [vmem:[%s1 + $0x60] sm:$0xff]
  %v33 = vld [vmem:[%s1 + $0x68] sm:$0xff]
  %v34 = vld [vmem:[%s1 + $0x70] sm:$0xff]
  %v35 = vld [vmem:[%s1 + $0x78] sm:$0xff]
  %v36 = vld [vmem:[%s1 + $0x80] sm:$0xff]
  %v37 = vld [vmem:[%s1 + $0x88] sm:$0xff]
  %v38 = vld [vmem:[%s1 + $0x90] sm:$0xff]
  %v39 = vld [vmem:[%s1 + $0x98] sm:$0xff]
  %v40 = vld [vmem:[%s1 + $0xa0] sm:$0xff]
  %v41 = vld [vmem:[%s1 + $0xa8] sm:$0xff]
  %v42 = vld [vmem:[%s1 + $0xb0] sm:$0xff]
  %v43 = vld [vmem:[%s1 + $0xb8] sm:$0xff]
  %v44 = vld [vmem:[%s1 + $0xc0] sm:$0xff]
  %v45 = vld [vmem:[%s1 + $0xc8] sm:$0xff]
  %v46 = vld [vmem:[%s1 + $0xd0] sm:$0xff]
  %v47 = vld [vmem:[%s1 + $0xd8] sm:$0xff]
  %v48 = vld [vmem:[%s1 + $0xe0] sm:$0xff]
  %v49 = vld [vmem:[%s1 + $0xe8] sm:$0xff]
  %v50 = vld [vmem:[%s1 + $0xf0] sm:$0xff]
  %v51 = vld [vmem:[%s1 + $0xf8] sm:$0xff]
  %v52 = vld [vmem:[%s1 + $0x100] sm:$0xff]
  %v53 = vld [vmem:[%s1 + $0x108] sm:$0xff]
  %v54 = vld [vmem:[%s1 + $0x110] sm:$0xff]
  %v55 = vld [vmem:[%s1 + $0x118] sm:$0xff]
  %v56 = vld [vmem:[%s1 + $0x120] sm:$0xff]
  %v57 = vld [vmem:[%s1 + $0x128] sm:$0xff]
  %v58 = vld [vmem:[%s1 + $0x130] sm:$0xff]
  %v59 = vld [vmem:[%s1 + $0x138] sm:$0xff]
  %v60 = vld [vmem:[%s1 + $0x140] sm:$0xff]
  %v61 = vld [vmem:[%s1 + $0x148] sm:$0xff]
  %v62 = vld [vmem:[%s1 + $0x150] sm:$0xff]
  %v63 = vld [vmem:[%s1 + $0x158] sm:$0xff]
  %v64 = vld [vmem:[%s1 + $0x160] sm:$0xff]
  %v65 = vld [vmem:[%s1 + $0x168] sm:$0xff]
  %v66 = vld [vmem:[%s1 + $0x170] sm:$0xff]
  %v67 = vld [vmem:[%s1 + $0x178] sm:$0xff]
  %v68 = vld [vmem:[%s1 + $0x180] sm:$0xff]
  %v69 = vld [vmem:[%s1 + $0x188] sm:$0xff]
  %v70 = vld [vmem:[%s1 + $0x190] sm:$0xff]
  %v71 = vld [vmem:[%s1 + $0x198] sm:$0xff]
  %v72 = vld [vmem:[%s1 + $0x1a0] sm:$0xff]
  %v73 = vld [vmem:[%s1 + $0x1a8] sm:$0xff]
  %v74 = vld [vmem:[%s1 + $0x1b0] sm:$0xff]
  %v75 = vld [vmem:[%s1 + $0x1b8] sm:$0xff]
  %v76 = vld [vmem:[%s1 + $0x1c0] sm:$0xff]
  %v77 = vld [vmem:[%s1 + $0x1c8] sm:$0xff]
  %v78 = vld [vmem:[%s1 + $0x1d0] sm:$0xff]
  %v79 = vld [vmem:[%s1 + $0x1d8] sm:$0xff]
  %v80 = vld [vmem:[%s1 + $0x1e0] sm:$0xff]
  %v81 = vld [vmem:[%s1 + $0x1e8] sm:$0xff]
  %v82 = vld [vmem:[%s1 + $0x1f0] sm:$0xff]
  %v83 = vld [vmem:[%s1 + $0x1f8] sm:$0xff]
  %v84 = vld [vmem:[%s1 + $0x200] sm:$0xff]
  %v85 = vld [vmem:[%s1 + $0x208] sm:$0xff]
  %v86 = vld [vmem:[%s1 + $0x210] sm:$0xff]
  %v87 = vld [vmem:[%s1 + $0x218] sm:$0xff]
  %v88 = vld [vmem:[%s1 + $0x220] sm:$0xff]
  %v89 = vld [vmem:[%s1 + $0x228] sm:$0xff]
  %v90 = vld [vmem:[%s1 + $0x230] sm:$0xff]
  %v91 = vld [vmem:[%s1 + $0x238] sm:$0xff]
  %v92 = vld [vmem:[%s1 + $0x240] sm:$0xff]
  %v93 = vld [vmem:[%s1 + $0x248] sm:$0xff]
  %v94 = vld [vmem:[%s1 + $0x250] sm:$0xff]
  %v95 = vld [vmem:[%s1 + $0x258] sm:$0xff]
  %v96 = vld [vmem:[%s1 + $0x260] sm:$0xff]
  %v97 = vld [vmem:[%s1 + $0x268] sm:$0xff]
  %v98 = vld [vmem:[%s1 + $0x270] sm:$0xff]
  %v99 = vld [vmem:[%s1 + $0x278] sm:$0xff]
  %v100 = vld [vmem:[%s1 + $0x280] sm:$0xff]
  %v101 = vld [vmem:[%s1 + $0x288] sm:$0xff]
  %v102 = vld [vmem:[%s1 + $0x290] sm:$0xff]
  %v103 = vld [vmem:[%s1 + $0x298] sm:$0xff]
  %v104 = vld [vmem:[%s1 + $0x2a0] sm:$0xff]
  %v105 = vld [vmem:[%s1 + $0x2a8] sm:$0xff]
  %v106 = vld [vmem:[%s1 + $0x2b0] sm:$0xff]
  %v107 = vld [vmem:[%s1 + $0x2b8] sm:$0xff]
  %v108 = vld [vmem:[%s1 + $0x2c0] sm:$0xff]
  %v109 = vld [vmem:[%s1 + $0x2c8] sm:$0xff]
  %v110 = vld [vmem:[%s1 + $0x2d0] sm:$0xff]
  %v111 = vld [vmem:[%s1 + $0x2d8] sm:$0xff]
  %v112 = vld [vmem:[%s1 + $0x2e0] sm:$0xff]
  %v113 = vld [vmem:[%s1 + $0x2e8] sm:$0xff]
  %v114 = vld [vmem:[%s1 + $0x2f0] sm:$0xff]
  %v115 = vld [vmem:[%s1 + $0x2f8] sm:$0xff]
  %v116 = vld [vmem:[%s1 + $0x300] sm:$0xff]
  %v117 = vld [vmem:[%s1 + $0x308] sm:$0xff]
  %v118 = vld [vmem:[%s1 + $0x310] sm:$0xff]
  %v119 = vld [vmem:[%s1 + $0x318] sm:$0xff]
  %v120 = vld [vmem:[%s1 + $0x320] sm:$0xff]
  %v121 = vld [vmem:[%s1 + $0x328] sm:$0xff]
  %v122 = vld [vmem:[%s1 + $0x330] sm:$0xff]
  %v123 = vld [vmem:[%s1 + $0x338] sm:$0xff]
  %v124 = vld [vmem:[%s1 + $0x340] sm:$0xff]
  %v125 = vld [vmem:[%s1 + $0x348] sm:$0xff]
  %v126 = vld [vmem:[%s1 + $0x350] sm:$0xff]
  %v127 = vld [vmem:[%s1 + $0x358] sm:$0xff]
  %v128 = vld [vmem:[%s1 + $0x360] sm:$0xff]
  %v129 = vld [vmem:[%s1 + $0x368] sm:$0xff]
  %v130 = vld [vmem:[%s1 + $0x370] sm:$0xff]
  %v131 = vld [vmem:[%s1 + $0x378] sm:$0xff]
  %v132 = vld [vmem:[%s1 + $0x380] sm:$0xff]
  %v133 = vld [vmem:[%s1 + $0x388] sm:$0xff]
  %v134 = vld [vmem:[%s1 + $0x390] sm:$0xff]
  %v135 = vld [vmem:[%s1 + $0x398] sm:$0xff]
  %v136 = vld [vmem:[%s1 + $0x3a0] sm:$0xff]
  %v137 = vld [vmem:[%s1 + $0x3a8] sm:$0xff]
  %v138 = vld [vmem:[%s1 + $0x3b0] sm:$0xff]
  %v139 = vld [vmem:[%s1 + $0x3b8] sm:$0xff]
  %v140 = vld [vmem:[%s1 + $0x3c0] sm:$0xff]
  %v141 = vld [vmem:[%s1 + $0x3c8] sm:$0xff]
  %v142 = vld [vmem:[%s1 + $0x3d0] sm:$0xff]
  %v143 = vld [vmem:[%s1 + $0x3d8] sm:$0xff]
  %v144 = vld [vmem:[%s1 + $0x3e0] sm:$0xff]
  %v145 = vld [vmem:[%s1 + $0x3e8] sm:$0xff]
  %v146 = vld [vmem:[%s1 + $0x3f0] sm:$0xff]
  %v147 = vld [vmem:[%s1 + $0x3f8] sm:$0xff]
  %v148 = vld [vmem:[%s1 + $0x400] sm:$0xff]
  %v149 = vld [vmem:[%s1 + $0x408] sm:$0xff]
  %v150 = vld [vmem:[%s1 + $0x410] sm:$0xff]
  %v151 = vld [vmem:[%s1 + $0x418] sm:$0xff]
  %v152 = vld [vmem:[%s1 + $0x420] sm:$0xff]
  %v153 = vld [vmem:[%s1 + $0x428] sm:$0xff]
  %v154 = vld [vmem:[%s1 + $0x430] sm:$0xff]
  %v155 = vld [vmem:[%s1 + $0x438] sm:$0xff]
  %v156 = vld [vmem:[%s1 + $0x440] sm:$0xff]
  %v157 = vld [vmem:[%s1 + $0x448] sm:$0xff]
  %v158 = vld [vmem:[%s1 + $0x450] sm:$0xff]
  %v159 = vld [vmem:[%s1 + $0x458] sm:$0xff]
  %v160 = vld [vmem:[%s1 + $0x460] sm:$0xff]
  %v161 = vld [vmem:[%s1 + $0x468] sm:$0xff]
  %v162 = vld [vmem:[%s1 + $0x470] sm:$0xff]
  %v163 = vld [vmem:[%s1 + $0x478] sm:$0xff]
  %v164 = vld [vmem:[%s1 + $0x480] sm:$0xff]
  %v165 = vld [vmem:[%s1 + $0x488] sm:$0xff]
  %v166 = vld [vmem:[%s1 + $0x490] sm:$0xff]
  %v167 = vld [vmem:[%s1 + $0x498] sm:$0xff]
  %v168 = vld [vmem:[%s1 + $0x4a0] sm:$0xff]
  %v169 = vld [vmem:[%s1 + $0x4a8] sm:$0xff]
  %v170 = vld [vmem:[%s1 + $0x4b0] sm:$0xff]
  %v171 = vld [vmem:[%s1 + $0x4b8] sm:$0xff]
  %v172 = vld [vmem:[%s1 + $0x4c0] sm:$0xff]
  %v173 = vld [vmem:[%s1 + $0x4c8] sm:$0xff]
  %v174 = vld [vmem:[%s1 + $0x4d0] sm:$0xff]
  %v175 = vld [vmem:[%s1 + $0x4d8] sm:$0xff]
  %v176 = vld [vmem:[%s1 + $0x4e0] sm:$0xff]
  %v177 = vld [vmem:[%s1 + $0x4e8] sm:$0xff]
  %v178 = vld [vmem:[%s1 + $0x4f0] sm:$0xff]
  %v179 = vld [vmem:[%s1 + $0x4f8] sm:$0xff]
  %v180 = vld [vmem:[%s2] sm:$0x1f]
  %v181 = vld [vmem:[%s0] sm:$0xff]
  %v182 = vld [vmem:[%s0 + $0x8] sm:$0xff]
  %v184 = vlaneseq
  %v185 = vshrl.u32 %v184, 7
  %v186 = vsub.s32 0, %v185
  %v187 = vrot.slane %v180, %v186
  %v188 = vlaneseq
  %v189 = vshrl.u32 %v188, 7
  %v190 = vsub.s32 1, %v189
  %v191 = vrot.slane %v180, %v190
  %v192 = vlaneseq
  %v193 = vshrl.u32 %v192, 7
  %v194 = vsub.s32 2, %v193
  %v195 = vrot.slane %v180, %v194
  %v196 = vlaneseq
  %v197 = vshrl.u32 %v196, 7
  %v198 = vsub.s32 3, %v197
  %v199 = vrot.slane %v180, %v198
  %v200 = vlaneseq
  %v201 = vshrl.u32 %v200, 7
  %v202 = vsub.s32 4, %v201
  %v203 = vrot.slane %v180, %v202
  %209 = vmatprep.subr.mxu0 %v96
  %210 = vmatpush1.msra.mxu0 %v95
  %211 = vmatprep.subr.mxu0 %v91
  %212 = vmatpush1.msra.mxu0 %v90
  %213 = vmatprep.subr.mxu0 %v86
  %214 = vmatpush1.msra.mxu0 %v85
  %215 = vmatprep.subr.mxu0 %v81
  %216 = vmatpush1.msra.mxu0 %v80
  %217 = vmatprep.subr.mxu0 %v76
  %218 = vmatpush1.msra.mxu0 %v75
  %219 = vmatprep.subr.mxu0 %v71
  %220 = vmatpush1.msra.mxu0 %v70
  %221 = vmatprep.subr.mxu0 %v66
  %222 = vmatpush1.msra.mxu0 %v65
  %223 = vmatprep.subr.mxu0 %v61
  %224 = vmatpush1.msra.mxu0 %v60
  %225 = vmatprep.subr.mxu0 %v56
  %226 = vmatpush1.msra.mxu0 %v55
  %227 = vmatprep.subr.mxu0 %v51
  %228 = vmatpush1.msra.mxu0 %v50
  %229 = vmatprep.subr.mxu0 %v46
  %230 = vmatpush1.msra.mxu0 %v45
  %231 = vmatprep.subr.mxu0 %v41
  %232 = vmatpush1.msra.mxu0 %v40
  %233 = vmatprep.subr.mxu0 %v36
  %234 = vmatpush1.msra.mxu0 %v35
  %235 = vmatprep.subr.mxu0 %v31
  %236 = vmatpush1.msra.mxu0 %v30
  %237 = vmatprep.subr.mxu0 %v26
  %238 = vmatpush1.msra.mxu0 %v25
  %239 = vmatprep.subr.mxu0 %v21
  %240 = vmatpush1.msra.mxu0 %v20
  %241 = vmatprep.subr.mxu0 %v176
  %242 = vmatpush2.msra.mxu0 %v175
  %243 = vmatprep.subr.mxu0 %v171
  %244 = vmatpush2.msra.mxu0 %v170
  %245 = vmatprep.subr.mxu0 %v166
  %246 = vmatpush2.msra.mxu0 %v165
  %247 = vmatprep.subr.mxu0 %v161
  %248 = vmatpush2.msra.mxu0 %v160
  %249 = vmatprep.subr.mxu0 %v156
  %250 = vmatpush2.msra.mxu0 %v155
  %251 = vmatprep.subr.mxu0 %v151
  %252 = vmatpush2.msra.mxu0 %v150
  %253 = vmatprep.subr.mxu0 %v146
  %254 = vmatpush2.msra.mxu0 %v145
  %255 = vmatprep.subr.mxu0 %v141
  %256 = vmatpush2.msra.mxu0 %v140
  %257 = vmatprep.subr.mxu0 %v136
  %258 = vmatpush2.msra.mxu0 %v135
  %259 = vmatprep.subr.mxu0 %v131
  %260 = vmatpush2.msra.mxu0 %v130
  %261 = vmatprep.subr.mxu0 %v126
  %262 = vmatpush2.msra.mxu0 %v125
  %263 = vmatprep.subr.mxu0 %v121
  %264 = vmatpush2.msra.mxu0 %v120
  %265 = vmatprep.subr.mxu0 %v116
  %266 = vmatpush2.msra.mxu0 %v115
  %267 = vmatprep.subr.mxu0 %v111
  %268 = vmatpush2.msra.mxu0 %v110
  %269 = vmatprep.subr.mxu0 %v106
  %270 = vmatpush2.msra.mxu0 %v105
  %271 = vmatprep.subr.mxu0 %v101
  %272 = vmatpush2.msra.mxu0 %v100
  %273 = vmatprep.mubr.f32.mxu0 %v182
  %274 = vmatmul.mubr.f32.gmra.mxu0 %v181
  %v275 = vpop.f32.mrf.mxu0
  %v276 = vadd.f32 %v187, %v275
  %v277 = vpop.f32.mrf.mxu0
  %v278 = vadd.f32 %v191, %v277
  %279 = vdwg.mxu0
  %280 = vmatprep.subr.mxu0 %v98
  %281 = vmatpush1.msra.mxu0 %v97
  %282 = vmatprep.subr.mxu0 %v93
  %283 = vmatpush1.msra.mxu0 %v92
  %284 = vmatprep.subr.mxu0 %v88
  %285 = vmatpush1.msra.mxu0 %v87
  %286 = vmatprep.subr.mxu0 %v83
  %287 = vmatpush1.msra.mxu0 %v82
  %288 = vmatprep.subr.mxu0 %v78
  %289 = vmatpush1.msra.mxu0 %v77
  %290 = vmatprep.subr.mxu0 %v73
  %291 = vmatpush1.msra.mxu0 %v72
  %292 = vmatprep.subr.mxu0 %v68
  %293 = vmatpush1.msra.mxu0 %v67
  %294 = vmatprep.subr.mxu0 %v63
  %295 = vmatpush1.msra.mxu0 %v62
  %296 = vmatprep.subr.mxu0 %v58
  %297 = vmatpush1.msra.mxu0 %v57
  %298 = vmatprep.subr.mxu0 %v53
  %299 = vmatpush1.msra.mxu0 %v52
  %300 = vmatprep.subr.mxu0 %v48
  %301 = vmatpush1.msra.mxu0 %v47
  %302 = vmatprep.subr.mxu0 %v43
  %303 = vmatpush1.msra.mxu0 %v42
  %304 = vmatprep.subr.mxu0 %v38
  %305 = vmatpush1.msra.mxu0 %v37
  %306 = vmatprep.subr.mxu0 %v33
  %307 = vmatpush1.msra.mxu0 %v32
  %308 = vmatprep.subr.mxu0 %v28
  %309 = vmatpush1.msra.mxu0 %v27
  %310 = vmatprep.subr.mxu0 %v23
  %311 = vmatpush1.msra.mxu0 %v22
  %312 = vmatprep.subr.mxu0 %v178
  %313 = vmatpush2.msra.mxu0 %v177
  %314 = vmatprep.subr.mxu0 %v173
  %315 = vmatpush2.msra.mxu0 %v172
  %316 = vmatprep.subr.mxu0 %v168
  %317 = vmatpush2.msra.mxu0 %v167
  %318 = vmatprep.subr.mxu0 %v163
  %319 = vmatpush2.msra.mxu0 %v162
  %320 = vmatprep.subr.mxu0 %v158
  %321 = vmatpush2.msra.mxu0 %v157
  %322 = vmatprep.subr.mxu0 %v153
  %323 = vmatpush2.msra.mxu0 %v152
  %324 = vmatprep.subr.mxu0 %v148
  %325 = vmatpush2.msra.mxu0 %v147
  %326 = vmatprep.subr.mxu0 %v143
  %327 = vmatpush2.msra.mxu0 %v142
  %328 = vmatprep.subr.mxu0 %v138
  %329 = vmatpush2.msra.mxu0 %v137
  %330 = vmatprep.subr.mxu0 %v133
  %331 = vmatpush2.msra.mxu0 %v132
  %332 = vmatprep.subr.mxu0 %v128
  %333 = vmatpush2.msra.mxu0 %v127
  %334 = vmatprep.subr.mxu0 %v123
  %335 = vmatpush2.msra.mxu0 %v122
  %336 = vmatprep.subr.mxu0 %v118
  %337 = vmatpush2.msra.mxu0 %v117
  %338 = vmatprep.subr.mxu0 %v113
  %339 = vmatpush2.msra.mxu0 %v112
  %340 = vmatprep.subr.mxu0 %v108
  %341 = vmatpush2.msra.mxu0 %v107
  %342 = vmatprep.subr.mxu0 %v103
  %343 = vmatpush2.msra.mxu0 %v102
  %344 = vmatprep.mubr.f32.mxu0 %v182
  %345 = vmatmul.mubr.f32.gmra.mxu0 %v181
  %v346 = vpop.f32.mrf.mxu0
  %v347 = vadd.f32 %v195, %v346
  %v348 = vpop.f32.mrf.mxu0
  %v349 = vadd.f32 %v199, %v348
  %350 = vdwg.mxu0
  %351 = vmatprep.subr.mxu0 0.0
  %352 = vmatpush1.msra.mxu0 %v99
  %353 = vmatprep.subr.mxu0 0.0
  %354 = vmatpush1.msra.mxu0 %v94
  %355 = vmatprep.subr.mxu0 0.0
  %356 = vmatpush1.msra.mxu0 %v89
  %357 = vmatprep.subr.mxu0 0.0
  %358 = vmatpush1.msra.mxu0 %v84
  %359 = vmatprep.subr.mxu0 0.0
  %360 = vmatpush1.msra.mxu0 %v79
  %361 = vmatprep.subr.mxu0 0.0
  %362 = vmatpush1.msra.mxu0 %v74
  %363 = vmatprep.subr.mxu0 0.0
  %364 = vmatpush1.msra.mxu0 %v69
  %365 = vmatprep.subr.mxu0 0.0
  %366 = vmatpush1.msra.mxu0 %v64
  %367 = vmatprep.subr.mxu0 0.0
  %368 = vmatpush1.msra.mxu0 %v59
  %369 = vmatprep.subr.mxu0 0.0
  %370 = vmatpush1.msra.mxu0 %v54
  %371 = vmatprep.subr.mxu0 0.0
  %372 = vmatpush1.msra.mxu0 %v49
  %373 = vmatprep.subr.mxu0 0.0
  %374 = vmatpush1.msra.mxu0 %v44
  %375 = vmatprep.subr.mxu0 0.0
  %376 = vmatpush1.msra.mxu0 %v39
  %377 = vmatprep.subr.mxu0 0.0
  %378 = vmatpush1.msra.mxu0 %v34
  %379 = vmatprep.subr.mxu0 0.0
  %380 = vmatpush1.msra.mxu0 %v29
  %381 = vmatprep.subr.mxu0 0.0
  %382 = vmatpush1.msra.mxu0 %v24
  %383 = vmatprep.subr.mxu0 0.0
  %384 = vmatpush2.msra.mxu0 %v179
  %385 = vmatprep.subr.mxu0 0.0
  %386 = vmatpush2.msra.mxu0 %v174
  %387 = vmatprep.subr.mxu0 0.0
  %388 = vmatpush2.msra.mxu0 %v169
  %389 = vmatprep.subr.mxu0 0.0
  %390 = vmatpush2.msra.mxu0 %v164
  %391 = vmatprep.subr.mxu0 0.0
  %392 = vmatpush2.msra.mxu0 %v159
  %393 = vmatprep.subr.mxu0 0.0
  %394 = vmatpush2.msra.mxu0 %v154
  %395 = vmatprep.subr.mxu0 0.0
  %396 = vmatpush2.msra.mxu0 %v149
  %397 = vmatprep.subr.mxu0 0.0
  %398 = vmatpush2.msra.mxu0 %v144
  %399 = vmatprep.subr.mxu0 0.0
  %400 = vmatpush2.msra.mxu0 %v139
  %401 = vmatprep.subr.mxu0 0.0
  %402 = vmatpush2.msra.mxu0 %v134
  %403 = vmatprep.subr.mxu0 0.0
  %404 = vmatpush2.msra.mxu0 %v129
  %405 = vmatprep.subr.mxu0 0.0
  %406 = vmatpush2.msra.mxu0 %v124
  %407 = vmatprep.subr.mxu0 0.0
  %408 = vmatpush2.msra.mxu0 %v119
  %409 = vmatprep.subr.mxu0 0.0
  %410 = vmatpush2.msra.mxu0 %v114
  %411 = vmatprep.subr.mxu0 0.0
  %412 = vmatpush2.msra.mxu0 %v109
  %413 = vmatprep.subr.mxu0 0.0
  %414 = vmatpush2.msra.mxu0 %v104
  %415 = vmatprep.mubr.f32.mxu0 %v182
  %416 = vmatmul.mubr.f32.gmra.mxu0 %v181
  %v417 = vpop.f32.mrf.mxu0
  %v418 = vadd.f32 %v203, %v417
  %v419 = vpop.f32.mrf.mxu0
  %420 = vdwg.mxu0
  %v421 = vtanh.pop %v276
  %v422 = vtanh.pop %v278
  %v423 = vtanh.pop %v347
  %v424 = vtanh.pop %v349
  %v425 = vtanh.pop %v418
  %v426 = vld [vmem:[%s3] sm:$0xff]
  %v427 = vld [vmem:[%s3 + $0x8] sm:$0xff]
  %v428 = vld [vmem:[%s3 + $0x10] sm:$0xf]
  %v429 = vld [vmem:[%s0 + $0x8] sm:$0xff]
  %v430 = vld [vmem:[%s0 + $0x10] sm:$0xff]
  %431 = vmatprep.subr.mxu0 %v96
  %432 = vmatpush1.msra.mxu0 %v95
  %433 = vmatprep.subr.mxu0 %v91
  %434 = vmatpush1.msra.mxu0 %v90
  %435 = vmatprep.subr.mxu0 %v86
  %436 = vmatpush1.msra.mxu0 %v85
  %437 = vmatprep.subr.mxu0 %v81
  %438 = vmatpush1.msra.mxu0 %v80
  %439 = vmatprep.subr.mxu0 %v76
  %440 = vmatpush1.msra.mxu0 %v75
  %441 = vmatprep.subr.mxu0 %v71
  %442 = vmatpush1.msra.mxu0 %v70
  %443 = vmatprep.subr.mxu0 %v66
  %444 = vmatpush1.msra.mxu0 %v65
  %445 = vmatprep.subr.mxu0 %v61
  %446 = vmatpush1.msra.mxu0 %v60
  %447 = vmatprep.subr.mxu0 %v56
  %448 = vmatpush1.msra.mxu0 %v55
  %449 = vmatprep.subr.mxu0 %v51
  %450 = vmatpush1.msra.mxu0 %v50
  %451 = vmatprep.subr.mxu0 %v46
  %452 = vmatpush1.msra.mxu0 %v45
  %453 = vmatprep.subr.mxu0 %v41
  %454 = vmatpush1.msra.mxu0 %v40
  %455 = vmatprep.subr.mxu0 %v36
  %456 = vmatpush1.msra.mxu0 %v35
  %457 = vmatprep.subr.mxu0 %v31
  %458 = vmatpush1.msra.mxu0 %v30
  %459 = vmatprep.subr.mxu0 %v26
  %460 = vmatpush1.msra.mxu0 %v25
  %461 = vmatprep.subr.mxu0 %v21
  %462 = vmatpush1.msra.mxu0 %v20
  %463 = vmatprep.subr.mxu0 %v176
  %464 = vmatpush2.msra.mxu0 %v175
  %465 = vmatprep.subr.mxu0 %v171
  %466 = vmatpush2.msra.mxu0 %v170
  %467 = vmatprep.subr.mxu0 %v166
  %468 = vmatpush2.msra.mxu0 %v165
  %469 = vmatprep.subr.mxu0 %v161
  %470 = vmatpush2.msra.mxu0 %v160
  %471 = vmatprep.subr.mxu0 %v156
  %472 = vmatpush2.msra.mxu0 %v155
  %473 = vmatprep.subr.mxu0 %v151
  %474 = vmatpush2.msra.mxu0 %v150
  %475 = vmatprep.subr.mxu0 %v146
  %476 = vmatpush2.msra.mxu0 %v145
  %477 = vmatprep.subr.mxu0 %v141
  %478 = vmatpush2.msra.mxu0 %v140
  %479 = vmatprep.subr.mxu0 %v136
  %480 = vmatpush2.msra.mxu0 %v135
  %481 = vmatprep.subr.mxu0 %v131
  %482 = vmatpush2.msra.mxu0 %v130
  %483 = vmatprep.subr.mxu0 %v126
  %484 = vmatpush2.msra.mxu0 %v125
  %485 = vmatprep.subr.mxu0 %v121
  %486 = vmatpush2.msra.mxu0 %v120
  %487 = vmatprep.subr.mxu0 %v116
  %488 = vmatpush2.msra.mxu0 %v115
  %489 = vmatprep.subr.mxu0 %v111
  %490 = vmatpush2.msra.mxu0 %v110
  %491 = vmatprep.subr.mxu0 %v106
  %492 = vmatpush2.msra.mxu0 %v105
  %493 = vmatprep.subr.mxu0 %v101
  %494 = vmatpush2.msra.mxu0 %v100
  %495 = vmatprep.mubr.f32.mxu0 %v430
  %496 = vmatmul.mubr.f32.gmra.mxu0 %v429
  %v497 = vpop.f32.mrf.mxu0
  %v498 = vadd.f32 %v187, %v497
  %v499 = vpop.f32.mrf.mxu0
  %v500 = vadd.f32 %v191, %v499
  %501 = vdwg.mxu0
  %502 = vmatprep.subr.mxu0 %v98
  %503 = vmatpush1.msra.mxu0 %v97
  %504 = vmatprep.subr.mxu0 %v93
  %505 = vmatpush1.msra.mxu0 %v92
  %506 = vmatprep.subr.mxu0 %v88
  %507 = vmatpush1.msra.mxu0 %v87
  %508 = vmatprep.subr.mxu0 %v83
  %509 = vmatpush1.msra.mxu0 %v82
  %510 = vmatprep.subr.mxu0 %v78
  %511 = vmatpush1.msra.mxu0 %v77
  %512 = vmatprep.subr.mxu0 %v73
  %513 = vmatpush1.msra.mxu0 %v72
  %514 = vmatprep.subr.mxu0 %v68
  %515 = vmatpush1.msra.mxu0 %v67
  %516 = vmatprep.subr.mxu0 %v63
  %517 = vmatpush1.msra.mxu0 %v62
  %518 = vmatprep.subr.mxu0 %v58
  %519 = vmatpush1.msra.mxu0 %v57
  %520 = vmatprep.subr.mxu0 %v53
  %521 = vmatpush1.msra.mxu0 %v52
  %522 = vmatprep.subr.mxu0 %v48
  %523 = vmatpush1.msra.mxu0 %v47
  %524 = vmatprep.subr.mxu0 %v43
  %525 = vmatpush1.msra.mxu0 %v42
  %526 = vmatprep.subr.mxu0 %v38
  %527 = vmatpush1.msra.mxu0 %v37
  %528 = vmatprep.subr.mxu0 %v33
  %529 = vmatpush1.msra.mxu0 %v32
  %530 = vmatprep.subr.mxu0 %v28
  %531 = vmatpush1.msra.mxu0 %v27
  %532 = vmatprep.subr.mxu0 %v23
  %533 = vmatpush1.msra.mxu0 %v22
  %534 = vmatprep.subr.mxu0 %v178
  %535 = vmatpush2.msra.mxu0 %v177
  %536 = vmatprep.subr.mxu0 %v173
  %537 = vmatpush2.msra.mxu0 %v172
  %538 = vmatprep.subr.mxu0 %v168
  %539 = vmatpush2.msra.mxu0 %v167
  %540 = vmatprep.subr.mxu0 %v163
  %541 = vmatpush2.msra.mxu0 %v162
  %542 = vmatprep.subr.mxu0 %v158
  %543 = vmatpush2.msra.mxu0 %v157
  %544 = vmatprep.subr.mxu0 %v153
  %545 = vmatpush2.msra.mxu0 %v152
  %546 = vmatprep.subr.mxu0 %v148
  %547 = vmatpush2.msra.mxu0 %v147
  %548 = vmatprep.subr.mxu0 %v143
  %549 = vmatpush2.msra.mxu0 %v142
  %550 = vmatprep.subr.mxu0 %v138
  %551 = vmatpush2.msra.mxu0 %v137
  %552 = vmatprep.subr.mxu0 %v133
  %553 = vmatpush2.msra.mxu0 %v132
  %554 = vmatprep.subr.mxu0 %v128
  %555 = vmatpush2.msra.mxu0 %v127
  %556 = vmatprep.subr.mxu0 %v123
  %557 = vmatpush2.msra.mxu0 %v122
  %558 = vmatprep.subr.mxu0 %v118
  %559 = vmatpush2.msra.mxu0 %v117
  %560 = vmatprep.subr.mxu0 %v113
  %561 = vmatpush2.msra.mxu0 %v112
  %562 = vmatprep.subr.mxu0 %v108
  %563 = vmatpush2.msra.mxu0 %v107
  %564 = vmatprep.subr.mxu0 %v103
  %565 = vmatpush2.msra.mxu0 %v102
  %566 = vmatprep.mubr.f32.mxu0 %v430
  %567 = vmatmul.mubr.f32.gmra.mxu0 %v429
  %v568 = vpop.f32.mrf.mxu0
  %v569 = vadd.f32 %v195, %v568
  %v570 = vpop.f32.mrf.mxu0
  %v571 = vadd.f32 %v199, %v570
  %572 = vdwg.mxu0
  %573 = vmatprep.subr.mxu0 0.0
  %574 = vmatpush1.msra.mxu0 %v99
  %575 = vmatprep.subr.mxu0 0.0
  %576 = vmatpush1.msra.mxu0 %v94
  %577 = vmatprep.subr.mxu0 0.0
  %578 = vmatpush1.msra.mxu0 %v89
  %579 = vmatprep.subr.mxu0 0.0
  %580 = vmatpush1.msra.mxu0 %v84
  %581 = vmatprep.subr.mxu0 0.0
  %582 = vmatpush1.msra.mxu0 %v79
  %583 = vmatprep.subr.mxu0 0.0
  %584 = vmatpush1.msra.mxu0 %v74
  %585 = vmatprep.subr.mxu0 0.0
  %586 = vmatpush1.msra.mxu0 %v69
  %587 = vmatprep.subr.mxu0 0.0
  %588 = vmatpush1.msra.mxu0 %v64
  %589 = vmatprep.subr.mxu0 0.0
  %590 = vmatpush1.msra.mxu0 %v59
  %591 = vmatprep.subr.mxu0 0.0
  %592 = vmatpush1.msra.mxu0 %v54
  %593 = vmatprep.subr.mxu0 0.0
  %594 = vmatpush1.msra.mxu0 %v49
  %595 = vmatprep.subr.mxu0 0.0
  %596 = vmatpush1.msra.mxu0 %v44
  %597 = vmatprep.subr.mxu0 0.0
  %598 = vmatpush1.msra.mxu0 %v39
  %599 = vmatprep.subr.mxu0 0.0
  %600 = vmatpush1.msra.mxu0 %v34
  %601 = vmatprep.subr.mxu0 0.0
  %602 = vmatpush1.msra.mxu0 %v29
  %603 = vmatprep.subr.mxu0 0.0
  %604 = vmatpush1.msra.mxu0 %v24
  %605 = vmatprep.subr.mxu0 0.0
  %606 = vmatpush2.msra.mxu0 %v179
  %607 = vmatprep.subr.mxu0 0.0
  %608 = vmatpush2.msra.mxu0 %v174
  %609 = vmatprep.subr.mxu0 0.0
  %610 = vmatpush2.msra.mxu0 %v169
  %611 = vmatprep.subr.mxu0 0.0
  %612 = vmatpush2.msra.mxu0 %v164
  %613 = vmatprep.subr.mxu0 0.0
  %614 = vmatpush2.msra.mxu0 %v159
  %615 = vmatprep.subr.mxu0 0.0
  %616 = vmatpush2.msra.mxu0 %v154
  %617 = vmatprep.subr.mxu0 0.0
  %618 = vmatpush2.msra.mxu0 %v149
  %619 = vmatprep.subr.mxu0 0.0
  %620 = vmatpush2.msra.mxu0 %v144
  %621 = vmatprep.subr.mxu0 0.0
  %622 = vmatpush2.msra.mxu0 %v139
  %623 = vmatprep.subr.mxu0 0.0
  %624 = vmatpush2.msra.mxu0 %v134
  %625 = vmatprep.subr.mxu0 0.0
  %626 = vmatpush2.msra.mxu0 %v129
  %627 = vmatprep.subr.mxu0 0.0
  %628 = vmatpush2.msra.mxu0 %v124
  %629 = vmatprep.subr.mxu0 0.0
  %630 = vmatpush2.msra.mxu0 %v119
  %631 = vmatprep.subr.mxu0 0.0
  %632 = vmatpush2.msra.mxu0 %v114
  %633 = vmatprep.subr.mxu0 0.0
  %634 = vmatpush2.msra.mxu0 %v109
  %635 = vmatprep.subr.mxu0 0.0
  %636 = vmatpush2.msra.mxu0 %v104
  %637 = vmatprep.mubr.f32.mxu0 %v430
  %638 = vmatmul.mubr.f32.gmra.mxu0 %v429
  %v639 = vpop.f32.mrf.mxu0
  %v640 = vadd.f32 %v203, %v639
  %v641 = vpop.f32.mrf.mxu0
  %642 = vdwg.mxu0
  %v643 = vtanh.pop %v498
  %v644 = vtanh.pop %v500
  %v645 = vtanh.pop %v569
  %v646 = vtanh.pop %v571
  %v647 = vtanh.pop %v640
  %s648 = scalar_lea.vmem %s3, 20
  %v649 = vld [vmem:[%s648] sm:$0xff]
  %v650 = vld [vmem:[%s648 + $0x8] sm:$0xff]
  %v651 = vld [vmem:[%s648 + $0x10] sm:$0xf]
  %v654 = vcombine.high %v649, %v649
  %v655 = vcombine.high %v650, %v650
  %658 = vmatprep.subr.mxu0 0.0
  %659 = vmatpush1.xpose.msra.mxu0 0.0
  %660 = vmatprep.subr.mxu0 0.0
  %661 = vmatpush1.xpose.msra.mxu0 0.0
  %662 = vmatprep.subr.mxu0 0.0
  %663 = vmatpush1.xpose.msra.mxu0 0.0
  %664 = vmatprep.subr.mxu0 0.0
  %665 = vmatpush1.xpose.msra.mxu0 0.0
  %666 = vmatprep.subr.mxu0 0.0
  %667 = vmatpush1.xpose.msra.mxu0 0.0
  %668 = vmatprep.subr.mxu0 0.0
  %669 = vmatpush1.xpose.msra.mxu0 0.0
  %670 = vmatprep.subr.mxu0 0.0
  %671 = vmatpush1.xpose.msra.mxu0 0.0
  %672 = vmatprep.subr.mxu0 0.0
  %673 = vmatpush1.xpose.msra.mxu0 0.0
  %674 = vmatprep.subr.mxu0 0.0
  %675 = vmatpush1.xpose.msra.mxu0 0.0
  %676 = vmatprep.subr.mxu0 0.0
  %677 = vmatpush1.xpose.msra.mxu0 0.0
  %678 = vmatprep.subr.mxu0 0.0
  %679 = vmatpush1.xpose.msra.mxu0 0.0
  %680 = vmatprep.subr.mxu0 0.0
  %681 = vmatpush1.xpose.msra.mxu0 0.0
  %682 = vmatprep.subr.mxu0 0.0
  %683 = vmatpush1.xpose.msra.mxu0 0.0
  %684 = vmatprep.subr.mxu0 0.0
  %685 = vmatpush1.xpose.msra.mxu0 0.0
  %686 = vmatprep.subr.mxu0 0.0
  %687 = vmatpush1.xpose.msra.mxu0 0.0
  %688 = vmatprep.subr.mxu0 %v654
  %689 = vmatpush1.xpose.msra.mxu0 %v649
  %690 = vmatprep.subr.mxu0 0.0
  %691 = vmatpush2.xpose.msra.mxu0 0.0
  %692 = vmatprep.subr.mxu0 0.0
  %693 = vmatpush2.xpose.msra.mxu0 0.0
  %694 = vmatprep.subr.mxu0 0.0
  %695 = vmatpush2.xpose.msra.mxu0 0.0
  %696 = vmatprep.subr.mxu0 0.0
  %697 = vmatpush2.xpose.msra.mxu0 0.0
  %698 = vmatprep.subr.mxu0 0.0
  %699 = vmatpush2.xpose.msra.mxu0 0.0
  %700 = vmatprep.subr.mxu0 0.0
  %701 = vmatpush2.xpose.msra.mxu0 0.0
  %702 = vmatprep.subr.mxu0 0.0
  %703 = vmatpush2.xpose.msra.mxu0 0.0
  %704 = vmatprep.subr.mxu0 0.0
  %705 = vmatpush2.xpose.msra.mxu0 0.0
  %706 = vmatprep.subr.mxu0 0.0
  %707 = vmatpush2.xpose.msra.mxu0 0.0
  %708 = vmatprep.subr.mxu0 0.0
  %709 = vmatpush2.xpose.msra.mxu0 0.0
  %710 = vmatprep.subr.mxu0 0.0
  %711 = vmatpush2.xpose.msra.mxu0 0.0
  %712 = vmatprep.subr.mxu0 0.0
  %713 = vmatpush2.xpose.msra.mxu0 0.0
  %714 = vmatprep.subr.mxu0 0.0
  %715 = vmatpush2.xpose.msra.mxu0 0.0
  %716 = vmatprep.subr.mxu0 0.0
  %717 = vmatpush2.xpose.msra.mxu0 0.0
  %718 = vmatprep.subr.mxu0 0.0
  %719 = vmatpush2.xpose.msra.mxu0 0.0
  %720 = vmatprep.subr.mxu0 0.0
  %721 = vmatpush2.xpose.msra.mxu0 0.0
  %722 = vmatprep.mubr.f32.mxu0 %v644
  %723 = vmatmul.mubr.f32.gmra.mxu0 %v643
  %v724 = vpop.f32.mrf.mxu0
  %v725 = vadd.f32 0.0, %v724
  %v726 = vpop.f32.mrf.mxu0
  %727 = vdwg.mxu0
  %728 = vmatprep.subr.mxu0 0.0
  %729 = vmatpush1.xpose.msra.mxu0 0.0
  %730 = vmatprep.subr.mxu0 0.0
  %731 = vmatpush1.xpose.msra.mxu0 0.0
  %732 = vmatprep.subr.mxu0 0.0
  %733 = vmatpush1.xpose.msra.mxu0 0.0
  %734 = vmatprep.subr.mxu0 0.0
  %735 = vmatpush1.xpose.msra.mxu0 0.0
  %736 = vmatprep.subr.mxu0 0.0
  %737 = vmatpush1.xpose.msra.mxu0 0.0
  %738 = vmatprep.subr.mxu0 0.0
  %739 = vmatpush1.xpose.msra.mxu0 0.0
  %740 = vmatprep.subr.mxu0 0.0
  %741 = vmatpush1.xpose.msra.mxu0 0.0
  %742 = vmatprep.subr.mxu0 0.0
  %743 = vmatpush1.xpose.msra.mxu0 0.0
  %744 = vmatprep.subr.mxu0 0.0
  %745 = vmatpush1.xpose.msra.mxu0 0.0
  %746 = vmatprep.subr.mxu0 0.0
  %747 = vmatpush1.xpose.msra.mxu0 0.0
  %748 = vmatprep.subr.mxu0 0.0
  %749 = vmatpush1.xpose.msra.mxu0 0.0
  %750 = vmatprep.subr.mxu0 0.0
  %751 = vmatpush1.xpose.msra.mxu0 0.0
  %752 = vmatprep.subr.mxu0 0.0
  %753 = vmatpush1.xpose.msra.mxu0 0.0
  %754 = vmatprep.subr.mxu0 0.0
  %755 = vmatpush1.xpose.msra.mxu0 0.0
  %756 = vmatprep.subr.mxu0 0.0
  %757 = vmatpush1.xpose.msra.mxu0 0.0
  %758 = vmatprep.subr.mxu0 %v655
  %759 = vmatpush1.xpose.msra.mxu0 %v650
  %760 = vmatprep.subr.mxu0 0.0
  %761 = vmatpush2.xpose.msra.mxu0 0.0
  %762 = vmatprep.subr.mxu0 0.0
  %763 = vmatpush2.xpose.msra.mxu0 0.0
  %764 = vmatprep.subr.mxu0 0.0
  %765 = vmatpush2.xpose.msra.mxu0 0.0
  %766 = vmatprep.subr.mxu0 0.0
  %767 = vmatpush2.xpose.msra.mxu0 0.0
  %768 = vmatprep.subr.mxu0 0.0
  %769 = vmatpush2.xpose.msra.mxu0 0.0
  %770 = vmatprep.subr.mxu0 0.0
  %771 = vmatpush2.xpose.msra.mxu0 0.0
  %772 = vmatprep.subr.mxu0 0.0
  %773 = vmatpush2.xpose.msra.mxu0 0.0
  %774 = vmatprep.subr.mxu0 0.0
  %775 = vmatpush2.xpose.msra.mxu0 0.0
  %776 = vmatprep.subr.mxu0 0.0
  %777 = vmatpush2.xpose.msra.mxu0 0.0
  %778 = vmatprep.subr.mxu0 0.0
  %779 = vmatpush2.xpose.msra.mxu0 0.0
  %780 = vmatprep.subr.mxu0 0.0
  %781 = vmatpush2.xpose.msra.mxu0 0.0
  %782 = vmatprep.subr.mxu0 0.0
  %783 = vmatpush2.xpose.msra.mxu0 0.0
  %784 = vmatprep.subr.mxu0 0.0
  %785 = vmatpush2.xpose.msra.mxu0 0.0
  %786 = vmatprep.subr.mxu0 0.0
  %787 = vmatpush2.xpose.msra.mxu0 0.0
  %788 = vmatprep.subr.mxu0 0.0
  %789 = vmatpush2.xpose.msra.mxu0 0.0
  %790 = vmatprep.subr.mxu0 0.0
  %791 = vmatpush2.xpose.msra.mxu0 0.0
  %792 = vmatprep.mubr.f32.mxu0 %v646
  %793 = vmatmul.mubr.f32.gmra.mxu0 %v645
  %v794 = vpop.f32.mrf.mxu0
  %v795 = vadd.f32 %v725, %v794
  %v796 = vpop.f32.mrf.mxu0
  %797 = vdwg.mxu0
  %798 = vmatprep.subr.mxu0 0.0
  %799 = vmatpush1.xpose.msra.mxu0 0.0
  %800 = vmatprep.subr.mxu0 0.0
  %801 = vmatpush1.xpose.msra.mxu0 0.0
  %802 = vmatprep.subr.mxu0 0.0
  %803 = vmatpush1.xpose.msra.mxu0 0.0
  %804 = vmatprep.subr.mxu0 0.0
  %805 = vmatpush1.xpose.msra.mxu0 0.0
  %806 = vmatprep.subr.mxu0 0.0
  %807 = vmatpush1.xpose.msra.mxu0 0.0
  %808 = vmatprep.subr.mxu0 0.0
  %809 = vmatpush1.xpose.msra.mxu0 0.0
  %810 = vmatprep.subr.mxu0 0.0
  %811 = vmatpush1.xpose.msra.mxu0 0.0
  %812 = vmatprep.subr.mxu0 0.0
  %813 = vmatpush1.xpose.msra.mxu0 0.0
  %814 = vmatprep.subr.mxu0 0.0
  %815 = vmatpush1.xpose.msra.mxu0 0.0
  %816 = vmatprep.subr.mxu0 0.0
  %817 = vmatpush1.xpose.msra.mxu0 0.0
  %818 = vmatprep.subr.mxu0 0.0
  %819 = vmatpush1.xpose.msra.mxu0 0.0
  %820 = vmatprep.subr.mxu0 0.0
  %821 = vmatpush1.xpose.msra.mxu0 0.0
  %822 = vmatprep.subr.mxu0 0.0
  %823 = vmatpush1.xpose.msra.mxu0 0.0
  %824 = vmatprep.subr.mxu0 0.0
  %825 = vmatpush1.xpose.msra.mxu0 0.0
  %826 = vmatprep.subr.mxu0 0.0
  %827 = vmatpush1.xpose.msra.mxu0 0.0
  %828 = vmatprep.subr.mxu0 0.0
  %829 = vmatpush1.xpose.msra.mxu0 %v651
  %830 = vmatprep.subr.mxu0 0.0
  %831 = vmatpush2.xpose.msra.mxu0 0.0
  %832 = vmatprep.subr.mxu0 0.0
  %833 = vmatpush2.xpose.msra.mxu0 0.0
  %834 = vmatprep.subr.mxu0 0.0
  %835 = vmatpush2.xpose.msra.mxu0 0.0
  %836 = vmatprep.subr.mxu0 0.0
  %837 = vmatpush2.xpose.msra.mxu0 0.0
  %838 = vmatprep.subr.mxu0 0.0
  %839 = vmatpush2.xpose.msra.mxu0 0.0
  %840 = vmatprep.subr.mxu0 0.0
  %841 = vmatpush2.xpose.msra.mxu0 0.0
  %842 = vmatprep.subr.mxu0 0.0
  %843 = vmatpush2.xpose.msra.mxu0 0.0
  %844 = vmatprep.subr.mxu0 0.0
  %845 = vmatpush2.xpose.msra.mxu0 0.0
  %846 = vmatprep.subr.mxu0 0.0
  %847 = vmatpush2.xpose.msra.mxu0 0.0
  %848 = vmatprep.subr.mxu0 0.0
  %849 = vmatpush2.xpose.msra.mxu0 0.0
  %850 = vmatprep.subr.mxu0 0.0
  %851 = vmatpush2.xpose.msra.mxu0 0.0
  %852 = vmatprep.subr.mxu0 0.0
  %853 = vmatpush2.xpose.msra.mxu0 0.0
  %854 = vmatprep.subr.mxu0 0.0
  %855 = vmatpush2.xpose.msra.mxu0 0.0
  %856 = vmatprep.subr.mxu0 0.0
  %857 = vmatpush2.xpose.msra.mxu0 0.0
  %858 = vmatprep.subr.mxu0 0.0
  %859 = vmatpush2.xpose.msra.mxu0 0.0
  %860 = vmatprep.subr.mxu0 0.0
  %861 = vmatpush2.xpose.msra.mxu0 0.0
  %862 = vmatprep.mubr.f32.mxu0 0.0
  %863 = vmatmul.mubr.f32.gmra.mxu0 %v647
  %v864 = vpop.f32.mrf.mxu0
  %v865 = vadd.f32 %v795, %v864
  %v866 = vpop.f32.mrf.mxu0
  %867 = vdwg.mxu0
  %v870 = vcombine.high %v426, %v426
  %v871 = vcombine.high %v427, %v427
  %874 = vmatprep.subr.mxu0 0.0
  %875 = vmatpush1.xpose.msra.mxu0 0.0
  %876 = vmatprep.subr.mxu0 0.0
  %877 = vmatpush1.xpose.msra.mxu0 0.0
  %878 = vmatprep.subr.mxu0 0.0
  %879 = vmatpush1.xpose.msra.mxu0 0.0
  %880 = vmatprep.subr.mxu0 0.0
  %881 = vmatpush1.xpose.msra.mxu0 0.0
  %882 = vmatprep.subr.mxu0 0.0
  %883 = vmatpush1.xpose.msra.mxu0 0.0
  %884 = vmatprep.subr.mxu0 0.0
  %885 = vmatpush1.xpose.msra.mxu0 0.0
  %886 = vmatprep.subr.mxu0 0.0
  %887 = vmatpush1.xpose.msra.mxu0 0.0
  %888 = vmatprep.subr.mxu0 0.0
  %889 = vmatpush1.xpose.msra.mxu0 0.0
  %890 = vmatprep.subr.mxu0 0.0
  %891 = vmatpush1.xpose.msra.mxu0 0.0
  %892 = vmatprep.subr.mxu0 0.0
  %893 = vmatpush1.xpose.msra.mxu0 0.0
  %894 = vmatprep.subr.mxu0 0.0
  %895 = vmatpush1.xpose.msra.mxu0 0.0
  %896 = vmatprep.subr.mxu0 0.0
  %897 = vmatpush1.xpose.msra.mxu0 0.0
  %898 = vmatprep.subr.mxu0 0.0
  %899 = vmatpush1.xpose.msra.mxu0 0.0
  %900 = vmatprep.subr.mxu0 0.0
  %901 = vmatpush1.xpose.msra.mxu0 0.0
  %902 = vmatprep.subr.mxu0 0.0
  %903 = vmatpush1.xpose.msra.mxu0 0.0
  %904 = vmatprep.subr.mxu0 %v870
  %905 = vmatpush1.xpose.msra.mxu0 %v426
  %906 = vmatprep.subr.mxu0 0.0
  %907 = vmatpush2.xpose.msra.mxu0 0.0
  %908 = vmatprep.subr.mxu0 0.0
  %909 = vmatpush2.xpose.msra.mxu0 0.0
  %910 = vmatprep.subr.mxu0 0.0
  %911 = vmatpush2.xpose.msra.mxu0 0.0
  %912 = vmatprep.subr.mxu0 0.0
  %913 = vmatpush2.xpose.msra.mxu0 0.0
  %914 = vmatprep.subr.mxu0 0.0
  %915 = vmatpush2.xpose.msra.mxu0 0.0
  %916 = vmatprep.subr.mxu0 0.0
  %917 = vmatpush2.xpose.msra.mxu0 0.0
  %918 = vmatprep.subr.mxu0 0.0
  %919 = vmatpush2.xpose.msra.mxu0 0.0
  %920 = vmatprep.subr.mxu0 0.0
  %921 = vmatpush2.xpose.msra.mxu0 0.0
  %922 = vmatprep.subr.mxu0 0.0
  %923 = vmatpush2.xpose.msra.mxu0 0.0
  %924 = vmatprep.subr.mxu0 0.0
  %925 = vmatpush2.xpose.msra.mxu0 0.0
  %926 = vmatprep.subr.mxu0 0.0
  %927 = vmatpush2.xpose.msra.mxu0 0.0
  %928 = vmatprep.subr.mxu0 0.0
  %929 = vmatpush2.xpose.msra.mxu0 0.0
  %930 = vmatprep.subr.mxu0 0.0
  %931 = vmatpush2.xpose.msra.mxu0 0.0
  %932 = vmatprep.subr.mxu0 0.0
  %933 = vmatpush2.xpose.msra.mxu0 0.0
  %934 = vmatprep.subr.mxu0 0.0
  %935 = vmatpush2.xpose.msra.mxu0 0.0
  %936 = vmatprep.subr.mxu0 0.0
  %937 = vmatpush2.xpose.msra.mxu0 0.0
  %938 = vmatprep.mubr.f32.mxu0 %v422
  %939 = vmatmul.mubr.f32.gmra.mxu0 %v421
  %v940 = vpop.f32.mrf.mxu0
  %v941 = vadd.f32 %v865, %v940
  %v942 = vpop.f32.mrf.mxu0
  %943 = vdwg.mxu0
  %944 = vmatprep.subr.mxu0 0.0
  %945 = vmatpush1.xpose.msra.mxu0 0.0
  %946 = vmatprep.subr.mxu0 0.0
  %947 = vmatpush1.xpose.msra.mxu0 0.0
  %948 = vmatprep.subr.mxu0 0.0
  %949 = vmatpush1.xpose.msra.mxu0 0.0
  %950 = vmatprep.subr.mxu0 0.0
  %951 = vmatpush1.xpose.msra.mxu0 0.0
  %952 = vmatprep.subr.mxu0 0.0
  %953 = vmatpush1.xpose.msra.mxu0 0.0
  %954 = vmatprep.subr.mxu0 0.0
  %955 = vmatpush1.xpose.msra.mxu0 0.0
  %956 = vmatprep.subr.mxu0 0.0
  %957 = vmatpush1.xpose.msra.mxu0 0.0
  %958 = vmatprep.subr.mxu0 0.0
  %959 = vmatpush1.xpose.msra.mxu0 0.0
  %960 = vmatprep.subr.mxu0 0.0
  %961 = vmatpush1.xpose.msra.mxu0 0.0
  %962 = vmatprep.subr.mxu0 0.0
  %963 = vmatpush1.xpose.msra.mxu0 0.0
  %964 = vmatprep.subr.mxu0 0.0
  %965 = vmatpush1.xpose.msra.mxu0 0.0
  %966 = vmatprep.subr.mxu0 0.0
  %967 = vmatpush1.xpose.msra.mxu0 0.0
  %968 = vmatprep.subr.mxu0 0.0
  %969 = vmatpush1.xpose.msra.mxu0 0.0
  %970 = vmatprep.subr.mxu0 0.0
  %971 = vmatpush1.xpose.msra.mxu0 0.0
  %972 = vmatprep.subr.mxu0 0.0
  %973 = vmatpush1.xpose.msra.mxu0 0.0
  %974 = vmatprep.subr.mxu0 %v871
  %975 = vmatpush1.xpose.msra.mxu0 %v427
  %976 = vmatprep.subr.mxu0 0.0
  %977 = vmatpush2.xpose.msra.mxu0 0.0
  %978 = vmatprep.subr.mxu0 0.0
  %979 = vmatpush2.xpose.msra.mxu0 0.0
  %980 = vmatprep.subr.mxu0 0.0
  %981 = vmatpush2.xpose.msra.mxu0 0.0
  %982 = vmatprep.subr.mxu0 0.0
  %983 = vmatpush2.xpose.msra.mxu0 0.0
  %984 = vmatprep.subr.mxu0 0.0
  %985 = vmatpush2.xpose.msra.mxu0 0.0
  %986 = vmatprep.subr.mxu0 0.0
  %987 = vmatpush2.xpose.msra.mxu0 0.0
  %988 = vmatprep.subr.mxu0 0.0
  %989 = vmatpush2.xpose.msra.mxu0 0.0
  %990 = vmatprep.subr.mxu0 0.0
  %991 = vmatpush2.xpose.msra.mxu0 0.0
  %992 = vmatprep.subr.mxu0 0.0
  %993 = vmatpush2.xpose.msra.mxu0 0.0
  %994 = vmatprep.subr.mxu0 0.0
  %995 = vmatpush2.xpose.msra.mxu0 0.0
  %996 = vmatprep.subr.mxu0 0.0
  %997 = vmatpush2.xpose.msra.mxu0 0.0
  %998 = vmatprep.subr.mxu0 0.0
  %999 = vmatpush2.xpose.msra.mxu0 0.0
  %1000 = vmatprep.subr.mxu0 0.0
  %1001 = vmatpush2.xpose.msra.mxu0 0.0
  %1002 = vmatprep.subr.mxu0 0.0
  %1003 = vmatpush2.xpose.msra.mxu0 0.0
  %1004 = vmatprep.subr.mxu0 0.0
  %1005 = vmatpush2.xpose.msra.mxu0 0.0
  %1006 = vmatprep.subr.mxu0 0.0
  %1007 = vmatpush2.xpose.msra.mxu0 0.0
  %1008 = vmatprep.mubr.f32.mxu0 %v424
  %1009 = vmatmul.mubr.f32.gmra.mxu0 %v423
  %v1010 = vpop.f32.mrf.mxu0
  %v1011 = vadd.f32 %v941, %v1010
  %v1012 = vpop.f32.mrf.mxu0
  %1013 = vdwg.mxu0
  %1014 = vmatprep.subr.mxu0 0.0
  %1015 = vmatpush1.xpose.msra.mxu0 0.0
  %1016 = vmatprep.subr.mxu0 0.0
  %1017 = vmatpush1.xpose.msra.mxu0 0.0
  %1018 = vmatprep.subr.mxu0 0.0
  %1019 = vmatpush1.xpose.msra.mxu0 0.0
  %1020 = vmatprep.subr.mxu0 0.0
  %1021 = vmatpush1.xpose.msra.mxu0 0.0
  %1022 = vmatprep.subr.mxu0 0.0
  %1023 = vmatpush1.xpose.msra.mxu0 0.0
  %1024 = vmatprep.subr.mxu0 0.0
  %1025 = vmatpush1.xpose.msra.mxu0 0.0
  %1026 = vmatprep.subr.mxu0 0.0
  %1027 = vmatpush1.xpose.msra.mxu0 0.0
  %1028 = vmatprep.subr.mxu0 0.0
  %1029 = vmatpush1.xpose.msra.mxu0 0.0
  %1030 = vmatprep.subr.mxu0 0.0
  %1031 = vmatpush1.xpose.msra.mxu0 0.0
  %1032 = vmatprep.subr.mxu0 0.0
  %1033 = vmatpush1.xpose.msra.mxu0 0.0
  %1034 = vmatprep.subr.mxu0 0.0
  %1035 = vmatpush1.xpose.msra.mxu0 0.0
  %1036 = vmatprep.subr.mxu0 0.0
  %1037 = vmatpush1.xpose.msra.mxu0 0.0
  %1038 = vmatprep.subr.mxu0 0.0
  %1039 = vmatpush1.xpose.msra.mxu0 0.0
  %1040 = vmatprep.subr.mxu0 0.0
  %1041 = vmatpush1.xpose.msra.mxu0 0.0
  %1042 = vmatprep.subr.mxu0 0.0
  %1043 = vmatpush1.xpose.msra.mxu0 0.0
  %1044 = vmatprep.subr.mxu0 0.0
  %1045 = vmatpush1.xpose.msra.mxu0 %v428
  %1046 = vmatprep.subr.mxu0 0.0
  %1047 = vmatpush2.xpose.msra.mxu0 0.0
  %1048 = vmatprep.subr.mxu0 0.0
  %1049 = vmatpush2.xpose.msra.mxu0 0.0
  %1050 = vmatprep.subr.mxu0 0.0
  %1051 = vmatpush2.xpose.msra.mxu0 0.0
  %1052 = vmatprep.subr.mxu0 0.0
  %1053 = vmatpush2.xpose.msra.mxu0 0.0
  %1054 = vmatprep.subr.mxu0 0.0
  %1055 = vmatpush2.xpose.msra.mxu0 0.0
  %1056 = vmatprep.subr.mxu0 0.0
  %1057 = vmatpush2.xpose.msra.mxu0 0.0
  %1058 = vmatprep.subr.mxu0 0.0
  %1059 = vmatpush2.xpose.msra.mxu0 0.0
  %1060 = vmatprep.subr.mxu0 0.0
  %1061 = vmatpush2.xpose.msra.mxu0 0.0
  %1062 = vmatprep.subr.mxu0 0.0
  %1063 = vmatpush2.xpose.msra.mxu0 0.0
  %1064 = vmatprep.subr.mxu0 0.0
  %1065 = vmatpush2.xpose.msra.mxu0 0.0
  %1066 = vmatprep.subr.mxu0 0.0
  %1067 = vmatpush2.xpose.msra.mxu0 0.0
  %1068 = vmatprep.subr.mxu0 0.0
  %1069 = vmatpush2.xpose.msra.mxu0 0.0
  %1070 = vmatprep.subr.mxu0 0.0
  %1071 = vmatpush2.xpose.msra.mxu0 0.0
  %1072 = vmatprep.subr.mxu0 0.0
  %1073 = vmatpush2.xpose.msra.mxu0 0.0
  %1074 = vmatprep.subr.mxu0 0.0
  %1075 = vmatpush2.xpose.msra.mxu0 0.0
  %1076 = vmatprep.subr.mxu0 0.0
  %1077 = vmatpush2.xpose.msra.mxu0 0.0
  %1078 = vmatprep.mubr.f32.mxu0 0.0
  %1079 = vmatmul.mubr.f32.gmra.mxu0 %v425
  %v1080 = vpop.f32.mrf.mxu0
  %v1081 = vadd.f32 %v1011, %v1080
  %v1082 = vpop.f32.mrf.mxu0
  %1083 = vdwg.mxu0
  %v1084 = vld [vmem:[%s0 + $0x10] sm:$0xff]
  %v1085 = vld [vmem:[%s0 + $0x18] sm:$0xff]
  %1086 = vmatprep.subr.mxu0 %v96
  %1087 = vmatpush1.msra.mxu0 %v95
  %1088 = vmatprep.subr.mxu0 %v91
  %1089 = vmatpush1.msra.mxu0 %v90
  %1090 = vmatprep.subr.mxu0 %v86
  %1091 = vmatpush1.msra.mxu0 %v85
  %1092 = vmatprep.subr.mxu0 %v81
  %1093 = vmatpush1.msra.mxu0 %v80
  %1094 = vmatprep.subr.mxu0 %v76
  %1095 = vmatpush1.msra.mxu0 %v75
  %1096 = vmatprep.subr.mxu0 %v71
  %1097 = vmatpush1.msra.mxu0 %v70
  %1098 = vmatprep.subr.mxu0 %v66
  %1099 = vmatpush1.msra.mxu0 %v65
  %1100 = vmatprep.subr.mxu0 %v61
  %1101 = vmatpush1.msra.mxu0 %v60
  %1102 = vmatprep.subr.mxu0 %v56
  %1103 = vmatpush1.msra.mxu0 %v55
  %1104 = vmatprep.subr.mxu0 %v51
  %1105 = vmatpush1.msra.mxu0 %v50
  %1106 = vmatprep.subr.mxu0 %v46
  %1107 = vmatpush1.msra.mxu0 %v45
  %1108 = vmatprep.subr.mxu0 %v41
  %1109 = vmatpush1.msra.mxu0 %v40
  %1110 = vmatprep.subr.mxu0 %v36
  %1111 = vmatpush1.msra.mxu0 %v35
  %1112 = vmatprep.subr.mxu0 %v31
  %1113 = vmatpush1.msra.mxu0 %v30
  %1114 = vmatprep.subr.mxu0 %v26
  %1115 = vmatpush1.msra.mxu0 %v25
  %1116 = vmatprep.subr.mxu0 %v21
  %1117 = vmatpush1.msra.mxu0 %v20
  %1118 = vmatprep.subr.mxu0 %v176
  %1119 = vmatpush2.msra.mxu0 %v175
  %1120 = vmatprep.subr.mxu0 %v171
  %1121 = vmatpush2.msra.mxu0 %v170
  %1122 = vmatprep.subr.mxu0 %v166
  %1123 = vmatpush2.msra.mxu0 %v165
  %1124 = vmatprep.subr.mxu0 %v161
  %1125 = vmatpush2.msra.mxu0 %v160
  %1126 = vmatprep.subr.mxu0 %v156
  %1127 = vmatpush2.msra.mxu0 %v155
  %1128 = vmatprep.subr.mxu0 %v151
  %1129 = vmatpush2.msra.mxu0 %v150
  %1130 = vmatprep.subr.mxu0 %v146
  %1131 = vmatpush2.msra.mxu0 %v145
  %1132 = vmatprep.subr.mxu0 %v141
  %1133 = vmatpush2.msra.mxu0 %v140
  %1134 = vmatprep.subr.mxu0 %v136
  %1135 = vmatpush2.msra.mxu0 %v135
  %1136 = vmatprep.subr.mxu0 %v131
  %1137 = vmatpush2.msra.mxu0 %v130
  %1138 = vmatprep.subr.mxu0 %v126
  %1139 = vmatpush2.msra.mxu0 %v125
  %1140 = vmatprep.subr.mxu0 %v121
  %1141 = vmatpush2.msra.mxu0 %v120
  %1142 = vmatprep.subr.mxu0 %v116
  %1143 = vmatpush2.msra.mxu0 %v115
  %1144 = vmatprep.subr.mxu0 %v111
  %1145 = vmatpush2.msra.mxu0 %v110
  %1146 = vmatprep.subr.mxu0 %v106
  %1147 = vmatpush2.msra.mxu0 %v105
  %1148 = vmatprep.subr.mxu0 %v101
  %1149 = vmatpush2.msra.mxu0 %v100
  %1150 = vmatprep.mubr.f32.mxu0 %v1085
  %1151 = vmatmul.mubr.f32.gmra.mxu0 %v1084
  %v1152 = vpop.f32.mrf.mxu0
  %v1153 = vadd.f32 %v187, %v1152
  %v1154 = vpop.f32.mrf.mxu0
  %v1155 = vadd.f32 %v191, %v1154
  %1156 = vdwg.mxu0
  %1157 = vmatprep.subr.mxu0 %v98
  %1158 = vmatpush1.msra.mxu0 %v97
  %1159 = vmatprep.subr.mxu0 %v93
  %1160 = vmatpush1.msra.mxu0 %v92
  %1161 = vmatprep.subr.mxu0 %v88
  %1162 = vmatpush1.msra.mxu0 %v87
  %1163 = vmatprep.subr.mxu0 %v83
  %1164 = vmatpush1.msra.mxu0 %v82
  %1165 = vmatprep.subr.mxu0 %v78
  %1166 = vmatpush1.msra.mxu0 %v77
  %1167 = vmatprep.subr.mxu0 %v73
  %1168 = vmatpush1.msra.mxu0 %v72
  %1169 = vmatprep.subr.mxu0 %v68
  %1170 = vmatpush1.msra.mxu0 %v67
  %1171 = vmatprep.subr.mxu0 %v63
  %1172 = vmatpush1.msra.mxu0 %v62
  %1173 = vmatprep.subr.mxu0 %v58
  %1174 = vmatpush1.msra.mxu0 %v57
  %1175 = vmatprep.subr.mxu0 %v53
  %1176 = vmatpush1.msra.mxu0 %v52
  %1177 = vmatprep.subr.mxu0 %v48
  %1178 = vmatpush1.msra.mxu0 %v47
  %1179 = vmatprep.subr.mxu0 %v43
  %1180 = vmatpush1.msra.mxu0 %v42
  %1181 = vmatprep.subr.mxu0 %v38
  %1182 = vmatpush1.msra.mxu0 %v37
  %1183 = vmatprep.subr.mxu0 %v33
  %1184 = vmatpush1.msra.mxu0 %v32
  %1185 = vmatprep.subr.mxu0 %v28
  %1186 = vmatpush1.msra.mxu0 %v27
  %1187 = vmatprep.subr.mxu0 %v23
  %1188 = vmatpush1.msra.mxu0 %v22
  %1189 = vmatprep.subr.mxu0 %v178
  %1190 = vmatpush2.msra.mxu0 %v177
  %1191 = vmatprep.subr.mxu0 %v173
  %1192 = vmatpush2.msra.mxu0 %v172
  %1193 = vmatprep.subr.mxu0 %v168
  %1194 = vmatpush2.msra.mxu0 %v167
  %1195 = vmatprep.subr.mxu0 %v163
  %1196 = vmatpush2.msra.mxu0 %v162
  %1197 = vmatprep.subr.mxu0 %v158
  %1198 = vmatpush2.msra.mxu0 %v157
  %1199 = vmatprep.subr.mxu0 %v153
  %1200 = vmatpush2.msra.mxu0 %v152
  %1201 = vmatprep.subr.mxu0 %v148
  %1202 = vmatpush2.msra.mxu0 %v147
  %1203 = vmatprep.subr.mxu0 %v143
  %1204 = vmatpush2.msra.mxu0 %v142
  %1205 = vmatprep.subr.mxu0 %v138
  %1206 = vmatpush2.msra.mxu0 %v137
  %1207 = vmatprep.subr.mxu0 %v133
  %1208 = vmatpush2.msra.mxu0 %v132
  %1209 = vmatprep.subr.mxu0 %v128
  %1210 = vmatpush2.msra.mxu0 %v127
  %1211 = vmatprep.subr.mxu0 %v123
  %1212 = vmatpush2.msra.mxu0 %v122
  %1213 = vmatprep.subr.mxu0 %v118
  %1214 = vmatpush2.msra.mxu0 %v117
  %1215 = vmatprep.subr.mxu0 %v113
  %1216 = vmatpush2.msra.mxu0 %v112
  %1217 = vmatprep.subr.mxu0 %v108
  %1218 = vmatpush2.msra.mxu0 %v107
  %1219 = vmatprep.subr.mxu0 %v103
  %1220 = vmatpush2.msra.mxu0 %v102
  %1221 = vmatprep.mubr.f32.mxu0 %v1085
  %1222 = vmatmul.mubr.f32.gmra.mxu0 %v1084
  %v1223 = vpop.f32.mrf.mxu0
  %v1224 = vadd.f32 %v195, %v1223
  %v1225 = vpop.f32.mrf.mxu0
  %v1226 = vadd.f32 %v199, %v1225
  %1227 = vdwg.mxu0
  %1228 = vmatprep.subr.mxu0 0.0
  %1229 = vmatpush1.msra.mxu0 %v99
  %1230 = vmatprep.subr.mxu0 0.0
  %1231 = vmatpush1.msra.mxu0 %v94
  %1232 = vmatprep.subr.mxu0 0.0
  %1233 = vmatpush1.msra.mxu0 %v89
  %1234 = vmatprep.subr.mxu0 0.0
  %1235 = vmatpush1.msra.mxu0 %v84
  %1236 = vmatprep.subr.mxu0 0.0
  %1237 = vmatpush1.msra.mxu0 %v79
  %1238 = vmatprep.subr.mxu0 0.0
  %1239 = vmatpush1.msra.mxu0 %v74
  %1240 = vmatprep.subr.mxu0 0.0
  %1241 = vmatpush1.msra.mxu0 %v69
  %1242 = vmatprep.subr.mxu0 0.0
  %1243 = vmatpush1.msra.mxu0 %v64
  %1244 = vmatprep.subr.mxu0 0.0
  %1245 = vmatpush1.msra.mxu0 %v59
  %1246 = vmatprep.subr.mxu0 0.0
  %1247 = vmatpush1.msra.mxu0 %v54
  %1248 = vmatprep.subr.mxu0 0.0
  %1249 = vmatpush1.msra.mxu0 %v49
  %1250 = vmatprep.subr.mxu0 0.0
  %1251 = vmatpush1.msra.mxu0 %v44
  %1252 = vmatprep.subr.mxu0 0.0
  %1253 = vmatpush1.msra.mxu0 %v39
  %1254 = vmatprep.subr.mxu0 0.0
  %1255 = vmatpush1.msra.mxu0 %v34
  %1256 = vmatprep.subr.mxu0 0.0
  %1257 = vmatpush1.msra.mxu0 %v29
  %1258 = vmatprep.subr.mxu0 0.0
  %1259 = vmatpush1.msra.mxu0 %v24
  %1260 = vmatprep.subr.mxu0 0.0
  %1261 = vmatpush2.msra.mxu0 %v179
  %1262 = vmatprep.subr.mxu0 0.0
  %1263 = vmatpush2.msra.mxu0 %v174
  %1264 = vmatprep.subr.mxu0 0.0
  %1265 = vmatpush2.msra.mxu0 %v169
  %1266 = vmatprep.subr.mxu0 0.0
  %1267 = vmatpush2.msra.mxu0 %v164
  %1268 = vmatprep.subr.mxu0 0.0
  %1269 = vmatpush2.msra.mxu0 %v159
  %1270 = vmatprep.subr.mxu0 0.0
  %1271 = vmatpush2.msra.mxu0 %v154
  %1272 = vmatprep.subr.mxu0 0.0
  %1273 = vmatpush2.msra.mxu0 %v149
  %1274 = vmatprep.subr.mxu0 0.0
  %1275 = vmatpush2.msra.mxu0 %v144
  %1276 = vmatprep.subr.mxu0 0.0
  %1277 = vmatpush2.msra.mxu0 %v139
  %1278 = vmatprep.subr.mxu0 0.0
  %1279 = vmatpush2.msra.mxu0 %v134
  %1280 = vmatprep.subr.mxu0 0.0
  %1281 = vmatpush2.msra.mxu0 %v129
  %1282 = vmatprep.subr.mxu0 0.0
  %1283 = vmatpush2.msra.mxu0 %v124
  %1284 = vmatprep.subr.mxu0 0.0
  %1285 = vmatpush2.msra.mxu0 %v119
  %1286 = vmatprep.subr.mxu0 0.0
  %1287 = vmatpush2.msra.mxu0 %v114
  %1288 = vmatprep.subr.mxu0 0.0
  %1289 = vmatpush2.msra.mxu0 %v109
  %1290 = vmatprep.subr.mxu0 0.0
  %1291 = vmatpush2.msra.mxu0 %v104
  %1292 = vmatprep.mubr.f32.mxu0 %v1085
  %1293 = vmatmul.mubr.f32.gmra.mxu0 %v1084
  %v1294 = vpop.f32.mrf.mxu0
  %v1295 = vadd.f32 %v203, %v1294
  %v1296 = vpop.f32.mrf.mxu0
  %1297 = vdwg.mxu0
  %v1298 = vtanh.pop %v1153
  %v1299 = vtanh.pop %v1155
  %v1300 = vtanh.pop %v1224
  %v1301 = vtanh.pop %v1226
  %v1302 = vtanh.pop %v1295
  %s1303 = scalar_lea.vmem %s3, 40
  %v1304 = vld [vmem:[%s1303] sm:$0xff]
  %v1305 = vld [vmem:[%s1303 + $0x8] sm:$0xff]
  %v1306 = vld [vmem:[%s1303 + $0x10] sm:$0xf]
  %v1309 = vcombine.high %v1304, %v1304
  %v1310 = vcombine.high %v1305, %v1305
  %1313 = vmatprep.subr.mxu0 0.0
  %1314 = vmatpush1.xpose.msra.mxu0 0.0
  %1315 = vmatprep.subr.mxu0 0.0
  %1316 = vmatpush1.xpose.msra.mxu0 0.0
  %1317 = vmatprep.subr.mxu0 0.0
  %1318 = vmatpush1.xpose.msra.mxu0 0.0
  %1319 = vmatprep.subr.mxu0 0.0
  %1320 = vmatpush1.xpose.msra.mxu0 0.0
  %1321 = vmatprep.subr.mxu0 0.0
  %1322 = vmatpush1.xpose.msra.mxu0 0.0
  %1323 = vmatprep.subr.mxu0 0.0
  %1324 = vmatpush1.xpose.msra.mxu0 0.0
  %1325 = vmatprep.subr.mxu0 0.0
  %1326 = vmatpush1.xpose.msra.mxu0 0.0
  %1327 = vmatprep.subr.mxu0 0.0
  %1328 = vmatpush1.xpose.msra.mxu0 0.0
  %1329 = vmatprep.subr.mxu0 0.0
  %1330 = vmatpush1.xpose.msra.mxu0 0.0
  %1331 = vmatprep.subr.mxu0 0.0
  %1332 = vmatpush1.xpose.msra.mxu0 0.0
  %1333 = vmatprep.subr.mxu0 0.0
  %1334 = vmatpush1.xpose.msra.mxu0 0.0
  %1335 = vmatprep.subr.mxu0 0.0
  %1336 = vmatpush1.xpose.msra.mxu0 0.0
  %1337 = vmatprep.subr.mxu0 0.0
  %1338 = vmatpush1.xpose.msra.mxu0 0.0
  %1339 = vmatprep.subr.mxu0 0.0
  %1340 = vmatpush1.xpose.msra.mxu0 0.0
  %1341 = vmatprep.subr.mxu0 0.0
  %1342 = vmatpush1.xpose.msra.mxu0 0.0
  %1343 = vmatprep.subr.mxu0 %v1309
  %1344 = vmatpush1.xpose.msra.mxu0 %v1304
  %1345 = vmatprep.subr.mxu0 0.0
  %1346 = vmatpush2.xpose.msra.mxu0 0.0
  %1347 = vmatprep.subr.mxu0 0.0
  %1348 = vmatpush2.xpose.msra.mxu0 0.0
  %1349 = vmatprep.subr.mxu0 0.0
  %1350 = vmatpush2.xpose.msra.mxu0 0.0
  %1351 = vmatprep.subr.mxu0 0.0
  %1352 = vmatpush2.xpose.msra.mxu0 0.0
  %1353 = vmatprep.subr.mxu0 0.0
  %1354 = vmatpush2.xpose.msra.mxu0 0.0
  %1355 = vmatprep.subr.mxu0 0.0
  %1356 = vmatpush2.xpose.msra.mxu0 0.0
  %1357 = vmatprep.subr.mxu0 0.0
  %1358 = vmatpush2.xpose.msra.mxu0 0.0
  %1359 = vmatprep.subr.mxu0 0.0
  %1360 = vmatpush2.xpose.msra.mxu0 0.0
  %1361 = vmatprep.subr.mxu0 0.0
  %1362 = vmatpush2.xpose.msra.mxu0 0.0
  %1363 = vmatprep.subr.mxu0 0.0
  %1364 = vmatpush2.xpose.msra.mxu0 0.0
  %1365 = vmatprep.subr.mxu0 0.0
  %1366 = vmatpush2.xpose.msra.mxu0 0.0
  %1367 = vmatprep.subr.mxu0 0.0
  %1368 = vmatpush2.xpose.msra.mxu0 0.0
  %1369 = vmatprep.subr.mxu0 0.0
  %1370 = vmatpush2.xpose.msra.mxu0 0.0
  %1371 = vmatprep.subr.mxu0 0.0
  %1372 = vmatpush2.xpose.msra.mxu0 0.0
  %1373 = vmatprep.subr.mxu0 0.0
  %1374 = vmatpush2.xpose.msra.mxu0 0.0
  %1375 = vmatprep.subr.mxu0 0.0
  %1376 = vmatpush2.xpose.msra.mxu0 0.0
  %1377 = vmatprep.mubr.f32.mxu0 %v1299
  %1378 = vmatmul.mubr.f32.gmra.mxu0 %v1298
  %v1379 = vpop.f32.mrf.mxu0
  %v1380 = vadd.f32 0.0, %v1379
  %v1381 = vpop.f32.mrf.mxu0
  %1382 = vdwg.mxu0
  %1383 = vmatprep.subr.mxu0 0.0
  %1384 = vmatpush1.xpose.msra.mxu0 0.0
  %1385 = vmatprep.subr.mxu0 0.0
  %1386 = vmatpush1.xpose.msra.mxu0 0.0
  %1387 = vmatprep.subr.mxu0 0.0
  %1388 = vmatpush1.xpose.msra.mxu0 0.0
  %1389 = vmatprep.subr.mxu0 0.0
  %1390 = vmatpush1.xpose.msra.mxu0 0.0
  %1391 = vmatprep.subr.mxu0 0.0
  %1392 = vmatpush1.xpose.msra.mxu0 0.0
  %1393 = vmatprep.subr.mxu0 0.0
  %1394 = vmatpush1.xpose.msra.mxu0 0.0
  %1395 = vmatprep.subr.mxu0 0.0
  %1396 = vmatpush1.xpose.msra.mxu0 0.0
  %1397 = vmatprep.subr.mxu0 0.0
  %1398 = vmatpush1.xpose.msra.mxu0 0.0
  %1399 = vmatprep.subr.mxu0 0.0
  %1400 = vmatpush1.xpose.msra.mxu0 0.0
  %1401 = vmatprep.subr.mxu0 0.0
  %1402 = vmatpush1.xpose.msra.mxu0 0.0
  %1403 = vmatprep.subr.mxu0 0.0
  %1404 = vmatpush1.xpose.msra.mxu0 0.0
  %1405 = vmatprep.subr.mxu0 0.0
  %1406 = vmatpush1.xpose.msra.mxu0 0.0
  %1407 = vmatprep.subr.mxu0 0.0
  %1408 = vmatpush1.xpose.msra.mxu0 0.0
  %1409 = vmatprep.subr.mxu0 0.0
  %1410 = vmatpush1.xpose.msra.mxu0 0.0
  %1411 = vmatprep.subr.mxu0 0.0
  %1412 = vmatpush1.xpose.msra.mxu0 0.0
  %1413 = vmatprep.subr.mxu0 %v1310
  %1414 = vmatpush1.xpose.msra.mxu0 %v1305
  %1415 = vmatprep.subr.mxu0 0.0
  %1416 = vmatpush2.xpose.msra.mxu0 0.0
  %1417 = vmatprep.subr.mxu0 0.0
  %1418 = vmatpush2.xpose.msra.mxu0 0.0
  %1419 = vmatprep.subr.mxu0 0.0
  %1420 = vmatpush2.xpose.msra.mxu0 0.0
  %1421 = vmatprep.subr.mxu0 0.0
  %1422 = vmatpush2.xpose.msra.mxu0 0.0
  %1423 = vmatprep.subr.mxu0 0.0
  %1424 = vmatpush2.xpose.msra.mxu0 0.0
  %1425 = vmatprep.subr.mxu0 0.0
  %1426 = vmatpush2.xpose.msra.mxu0 0.0
  %1427 = vmatprep.subr.mxu0 0.0
  %1428 = vmatpush2.xpose.msra.mxu0 0.0
  %1429 = vmatprep.subr.mxu0 0.0
  %1430 = vmatpush2.xpose.msra.mxu0 0.0
  %1431 = vmatprep.subr.mxu0 0.0
  %1432 = vmatpush2.xpose.msra.mxu0 0.0
  %1433 = vmatprep.subr.mxu0 0.0
  %1434 = vmatpush2.xpose.msra.mxu0 0.0
  %1435 = vmatprep.subr.mxu0 0.0
  %1436 = vmatpush2.xpose.msra.mxu0 0.0
  %1437 = vmatprep.subr.mxu0 0.0
  %1438 = vmatpush2.xpose.msra.mxu0 0.0
  %1439 = vmatprep.subr.mxu0 0.0
  %1440 = vmatpush2.xpose.msra.mxu0 0.0
  %1441 = vmatprep.subr.mxu0 0.0
  %1442 = vmatpush2.xpose.msra.mxu0 0.0
  %1443 = vmatprep.subr.mxu0 0.0
  %1444 = vmatpush2.xpose.msra.mxu0 0.0
  %1445 = vmatprep.subr.mxu0 0.0
  %1446 = vmatpush2.xpose.msra.mxu0 0.0
  %1447 = vmatprep.mubr.f32.mxu0 %v1301
  %1448 = vmatmul.mubr.f32.gmra.mxu0 %v1300
  %v1449 = vpop.f32.mrf.mxu0
  %v1450 = vadd.f32 %v1380, %v1449
  %v1451 = vpop.f32.mrf.mxu0
  %1452 = vdwg.mxu0
  %1453 = vmatprep.subr.mxu0 0.0
  %1454 = vmatpush1.xpose.msra.mxu0 0.0
  %1455 = vmatprep.subr.mxu0 0.0
  %1456 = vmatpush1.xpose.msra.mxu0 0.0
  %1457 = vmatprep.subr.mxu0 0.0
  %1458 = vmatpush1.xpose.msra.mxu0 0.0
  %1459 = vmatprep.subr.mxu0 0.0
  %1460 = vmatpush1.xpose.msra.mxu0 0.0
  %1461 = vmatprep.subr.mxu0 0.0
  %1462 = vmatpush1.xpose.msra.mxu0 0.0
  %1463 = vmatprep.subr.mxu0 0.0
  %1464 = vmatpush1.xpose.msra.mxu0 0.0
  %1465 = vmatprep.subr.mxu0 0.0
  %1466 = vmatpush1.xpose.msra.mxu0 0.0
  %1467 = vmatprep.subr.mxu0 0.0
  %1468 = vmatpush1.xpose.msra.mxu0 0.0
  %1469 = vmatprep.subr.mxu0 0.0
  %1470 = vmatpush1.xpose.msra.mxu0 0.0
  %1471 = vmatprep.subr.mxu0 0.0
  %1472 = vmatpush1.xpose.msra.mxu0 0.0
  %1473 = vmatprep.subr.mxu0 0.0
  %1474 = vmatpush1.xpose.msra.mxu0 0.0
  %1475 = vmatprep.subr.mxu0 0.0
  %1476 = vmatpush1.xpose.msra.mxu0 0.0
  %1477 = vmatprep.subr.mxu0 0.0
  %1478 = vmatpush1.xpose.msra.mxu0 0.0
  %1479 = vmatprep.subr.mxu0 0.0
  %1480 = vmatpush1.xpose.msra.mxu0 0.0
  %1481 = vmatprep.subr.mxu0 0.0
  %1482 = vmatpush1.xpose.msra.mxu0 0.0
  %1483 = vmatprep.subr.mxu0 0.0
  %1484 = vmatpush1.xpose.msra.mxu0 %v1306
  %1485 = vmatprep.subr.mxu0 0.0
  %1486 = vmatpush2.xpose.msra.mxu0 0.0
  %1487 = vmatprep.subr.mxu0 0.0
  %1488 = vmatpush2.xpose.msra.mxu0 0.0
  %1489 = vmatprep.subr.mxu0 0.0
  %1490 = vmatpush2.xpose.msra.mxu0 0.0
  %1491 = vmatprep.subr.mxu0 0.0
  %1492 = vmatpush2.xpose.msra.mxu0 0.0
  %1493 = vmatprep.subr.mxu0 0.0
  %1494 = vmatpush2.xpose.msra.mxu0 0.0
  %1495 = vmatprep.subr.mxu0 0.0
  %1496 = vmatpush2.xpose.msra.mxu0 0.0
  %1497 = vmatprep.subr.mxu0 0.0
  %1498 = vmatpush2.xpose.msra.mxu0 0.0
  %1499 = vmatprep.subr.mxu0 0.0
  %1500 = vmatpush2.xpose.msra.mxu0 0.0
  %1501 = vmatprep.subr.mxu0 0.0
  %1502 = vmatpush2.xpose.msra.mxu0 0.0
  %1503 = vmatprep.subr.mxu0 0.0
  %1504 = vmatpush2.xpose.msra.mxu0 0.0
  %1505 = vmatprep.subr.mxu0 0.0
  %1506 = vmatpush2.xpose.msra.mxu0 0.0
  %1507 = vmatprep.subr.mxu0 0.0
  %1508 = vmatpush2.xpose.msra.mxu0 0.0
  %1509 = vmatprep.subr.mxu0 0.0
  %1510 = vmatpush2.xpose.msra.mxu0 0.0
  %1511 = vmatprep.subr.mxu0 0.0
  %1512 = vmatpush2.xpose.msra.mxu0 0.0
  %1513 = vmatprep.subr.mxu0 0.0
  %1514 = vmatpush2.xpose.msra.mxu0 0.0
  %1515 = vmatprep.subr.mxu0 0.0
  %1516 = vmatpush2.xpose.msra.mxu0 0.0
  %1517 = vmatprep.mubr.f32.mxu0 0.0
  %1518 = vmatmul.mubr.f32.gmra.mxu0 %v1302
  %v1519 = vpop.f32.mrf.mxu0
  %v1520 = vadd.f32 %v1450, %v1519
  %v1521 = vpop.f32.mrf.mxu0
  %1522 = vdwg.mxu0
  %v1523 = vadd.f32 %v1081, %v1520
  %v1524 = vld [vmem:[%s0 + $0x18] sm:$0xff]
  %v1525 = vld [vmem:[%s0 + $0x20] sm:$0xff]
  %1526 = vmatprep.subr.mxu0 %v96
  %1527 = vmatpush1.msra.mxu0 %v95
  %1528 = vmatprep.subr.mxu0 %v91
  %1529 = vmatpush1.msra.mxu0 %v90
  %1530 = vmatprep.subr.mxu0 %v86
  %1531 = vmatpush1.msra.mxu0 %v85
  %1532 = vmatprep.subr.mxu0 %v81
  %1533 = vmatpush1.msra.mxu0 %v80
  %1534 = vmatprep.subr.mxu0 %v76
  %1535 = vmatpush1.msra.mxu0 %v75
  %1536 = vmatprep.subr.mxu0 %v71
  %1537 = vmatpush1.msra.mxu0 %v70
  %1538 = vmatprep.subr.mxu0 %v66
  %1539 = vmatpush1.msra.mxu0 %v65
  %1540 = vmatprep.subr.mxu0 %v61
  %1541 = vmatpush1.msra.mxu0 %v60
  %1542 = vmatprep.subr.mxu0 %v56
  %1543 = vmatpush1.msra.mxu0 %v55
  %1544 = vmatprep.subr.mxu0 %v51
  %1545 = vmatpush1.msra.mxu0 %v50
  %1546 = vmatprep.subr.mxu0 %v46
  %1547 = vmatpush1.msra.mxu0 %v45
  %1548 = vmatprep.subr.mxu0 %v41
  %1549 = vmatpush1.msra.mxu0 %v40
  %1550 = vmatprep.subr.mxu0 %v36
  %1551 = vmatpush1.msra.mxu0 %v35
  %1552 = vmatprep.subr.mxu0 %v31
  %1553 = vmatpush1.msra.mxu0 %v30
  %1554 = vmatprep.subr.mxu0 %v26
  %1555 = vmatpush1.msra.mxu0 %v25
  %1556 = vmatprep.subr.mxu0 %v21
  %1557 = vmatpush1.msra.mxu0 %v20
  %1558 = vmatprep.subr.mxu0 %v176
  %1559 = vmatpush2.msra.mxu0 %v175
  %1560 = vmatprep.subr.mxu0 %v171
  %1561 = vmatpush2.msra.mxu0 %v170
  %1562 = vmatprep.subr.mxu0 %v166
  %1563 = vmatpush2.msra.mxu0 %v165
  %1564 = vmatprep.subr.mxu0 %v161
  %1565 = vmatpush2.msra.mxu0 %v160
  %1566 = vmatprep.subr.mxu0 %v156
  %1567 = vmatpush2.msra.mxu0 %v155
  %1568 = vmatprep.subr.mxu0 %v151
  %1569 = vmatpush2.msra.mxu0 %v150
  %1570 = vmatprep.subr.mxu0 %v146
  %1571 = vmatpush2.msra.mxu0 %v145
  %1572 = vmatprep.subr.mxu0 %v141
  %1573 = vmatpush2.msra.mxu0 %v140
  %1574 = vmatprep.subr.mxu0 %v136
  %1575 = vmatpush2.msra.mxu0 %v135
  %1576 = vmatprep.subr.mxu0 %v131
  %1577 = vmatpush2.msra.mxu0 %v130
  %1578 = vmatprep.subr.mxu0 %v126
  %1579 = vmatpush2.msra.mxu0 %v125
  %1580 = vmatprep.subr.mxu0 %v121
  %1581 = vmatpush2.msra.mxu0 %v120
  %1582 = vmatprep.subr.mxu0 %v116
  %1583 = vmatpush2.msra.mxu0 %v115
  %1584 = vmatprep.subr.mxu0 %v111
  %1585 = vmatpush2.msra.mxu0 %v110
  %1586 = vmatprep.subr.mxu0 %v106
  %1587 = vmatpush2.msra.mxu0 %v105
  %1588 = vmatprep.subr.mxu0 %v101
  %1589 = vmatpush2.msra.mxu0 %v100
  %1590 = vmatprep.mubr.f32.mxu0 %v1525
  %1591 = vmatmul.mubr.f32.gmra.mxu0 %v1524
  %v1592 = vpop.f32.mrf.mxu0
  %v1593 = vadd.f32 %v187, %v1592
  %v1594 = vpop.f32.mrf.mxu0
  %v1595 = vadd.f32 %v191, %v1594
  %1596 = vdwg.mxu0
  %1597 = vmatprep.subr.mxu0 %v98
  %1598 = vmatpush1.msra.mxu0 %v97
  %1599 = vmatprep.subr.mxu0 %v93
  %1600 = vmatpush1.msra.mxu0 %v92
  %1601 = vmatprep.subr.mxu0 %v88
  %1602 = vmatpush1.msra.mxu0 %v87
  %1603 = vmatprep.subr.mxu0 %v83
  %1604 = vmatpush1.msra.mxu0 %v82
  %1605 = vmatprep.subr.mxu0 %v78
  %1606 = vmatpush1.msra.mxu0 %v77
  %1607 = vmatprep.subr.mxu0 %v73
  %1608 = vmatpush1.msra.mxu0 %v72
  %1609 = vmatprep.subr.mxu0 %v68
  %1610 = vmatpush1.msra.mxu0 %v67
  %1611 = vmatprep.subr.mxu0 %v63
  %1612 = vmatpush1.msra.mxu0 %v62
  %1613 = vmatprep.subr.mxu0 %v58
  %1614 = vmatpush1.msra.mxu0 %v57
  %1615 = vmatprep.subr.mxu0 %v53
  %1616 = vmatpush1.msra.mxu0 %v52
  %1617 = vmatprep.subr.mxu0 %v48
  %1618 = vmatpush1.msra.mxu0 %v47
  %1619 = vmatprep.subr.mxu0 %v43
  %1620 = vmatpush1.msra.mxu0 %v42
  %1621 = vmatprep.subr.mxu0 %v38
  %1622 = vmatpush1.msra.mxu0 %v37
  %1623 = vmatprep.subr.mxu0 %v33
  %1624 = vmatpush1.msra.mxu0 %v32
  %1625 = vmatprep.subr.mxu0 %v28
  %1626 = vmatpush1.msra.mxu0 %v27
  %1627 = vmatprep.subr.mxu0 %v23
  %1628 = vmatpush1.msra.mxu0 %v22
  %1629 = vmatprep.subr.mxu0 %v178
  %1630 = vmatpush2.msra.mxu0 %v177
  %1631 = vmatprep.subr.mxu0 %v173
  %1632 = vmatpush2.msra.mxu0 %v172
  %1633 = vmatprep.subr.mxu0 %v168
  %1634 = vmatpush2.msra.mxu0 %v167
  %1635 = vmatprep.subr.mxu0 %v163
  %1636 = vmatpush2.msra.mxu0 %v162
  %1637 = vmatprep.subr.mxu0 %v158
  %1638 = vmatpush2.msra.mxu0 %v157
  %1639 = vmatprep.subr.mxu0 %v153
  %1640 = vmatpush2.msra.mxu0 %v152
  %1641 = vmatprep.subr.mxu0 %v148
  %1642 = vmatpush2.msra.mxu0 %v147
  %1643 = vmatprep.subr.mxu0 %v143
  %1644 = vmatpush2.msra.mxu0 %v142
  %1645 = vmatprep.subr.mxu0 %v138
  %1646 = vmatpush2.msra.mxu0 %v137
  %1647 = vmatprep.subr.mxu0 %v133
  %1648 = vmatpush2.msra.mxu0 %v132
  %1649 = vmatprep.subr.mxu0 %v128
  %1650 = vmatpush2.msra.mxu0 %v127
  %1651 = vmatprep.subr.mxu0 %v123
  %1652 = vmatpush2.msra.mxu0 %v122
  %1653 = vmatprep.subr.mxu0 %v118
  %1654 = vmatpush2.msra.mxu0 %v117
  %1655 = vmatprep.subr.mxu0 %v113
  %1656 = vmatpush2.msra.mxu0 %v112
  %1657 = vmatprep.subr.mxu0 %v108
  %1658 = vmatpush2.msra.mxu0 %v107
  %1659 = vmatprep.subr.mxu0 %v103
  %1660 = vmatpush2.msra.mxu0 %v102
  %1661 = vmatprep.mubr.f32.mxu0 %v1525
  %1662 = vmatmul.mubr.f32.gmra.mxu0 %v1524
  %v1663 = vpop.f32.mrf.mxu0
  %v1664 = vadd.f32 %v195, %v1663
  %v1665 = vpop.f32.mrf.mxu0
  %v1666 = vadd.f32 %v199, %v1665
  %1667 = vdwg.mxu0
  %1668 = vmatprep.subr.mxu0 0.0
  %1669 = vmatpush1.msra.mxu0 %v99
  %1670 = vmatprep.subr.mxu0 0.0
  %1671 = vmatpush1.msra.mxu0 %v94
  %1672 = vmatprep.subr.mxu0 0.0
  %1673 = vmatpush1.msra.mxu0 %v89
  %1674 = vmatprep.subr.mxu0 0.0
  %1675 = vmatpush1.msra.mxu0 %v84
  %1676 = vmatprep.subr.mxu0 0.0
  %1677 = vmatpush1.msra.mxu0 %v79
  %1678 = vmatprep.subr.mxu0 0.0
  %1679 = vmatpush1.msra.mxu0 %v74
  %1680 = vmatprep.subr.mxu0 0.0
  %1681 = vmatpush1.msra.mxu0 %v69
  %1682 = vmatprep.subr.mxu0 0.0
  %1683 = vmatpush1.msra.mxu0 %v64
  %1684 = vmatprep.subr.mxu0 0.0
  %1685 = vmatpush1.msra.mxu0 %v59
  %1686 = vmatprep.subr.mxu0 0.0
  %1687 = vmatpush1.msra.mxu0 %v54
  %1688 = vmatprep.subr.mxu0 0.0
  %1689 = vmatpush1.msra.mxu0 %v49
  %1690 = vmatprep.subr.mxu0 0.0
  %1691 = vmatpush1.msra.mxu0 %v44
  %1692 = vmatprep.subr.mxu0 0.0
  %1693 = vmatpush1.msra.mxu0 %v39
  %1694 = vmatprep.subr.mxu0 0.0
  %1695 = vmatpush1.msra.mxu0 %v34
  %1696 = vmatprep.subr.mxu0 0.0
  %1697 = vmatpush1.msra.mxu0 %v29
  %1698 = vmatprep.subr.mxu0 0.0
  %1699 = vmatpush1.msra.mxu0 %v24
  %1700 = vmatprep.subr.mxu0 0.0
  %1701 = vmatpush2.msra.mxu0 %v179
  %1702 = vmatprep.subr.mxu0 0.0
  %1703 = vmatpush2.msra.mxu0 %v174
  %1704 = vmatprep.subr.mxu0 0.0
  %1705 = vmatpush2.msra.mxu0 %v169
  %1706 = vmatprep.subr.mxu0 0.0
  %1707 = vmatpush2.msra.mxu0 %v164
  %1708 = vmatprep.subr.mxu0 0.0
  %1709 = vmatpush2.msra.mxu0 %v159
  %1710 = vmatprep.subr.mxu0 0.0
  %1711 = vmatpush2.msra.mxu0 %v154
  %1712 = vmatprep.subr.mxu0 0.0
  %1713 = vmatpush2.msra.mxu0 %v149
  %1714 = vmatprep.subr.mxu0 0.0
  %1715 = vmatpush2.msra.mxu0 %v144
  %1716 = vmatprep.subr.mxu0 0.0
  %1717 = vmatpush2.msra.mxu0 %v139
  %1718 = vmatprep.subr.mxu0 0.0
  %1719 = vmatpush2.msra.mxu0 %v134
  %1720 = vmatprep.subr.mxu0 0.0
  %1721 = vmatpush2.msra.mxu0 %v129
  %1722 = vmatprep.subr.mxu0 0.0
  %1723 = vmatpush2.msra.mxu0 %v124
  %1724 = vmatprep.subr.mxu0 0.0
  %1725 = vmatpush2.msra.mxu0 %v119
  %1726 = vmatprep.subr.mxu0 0.0
  %1727 = vmatpush2.msra.mxu0 %v114
  %1728 = vmatprep.subr.mxu0 0.0
  %1729 = vmatpush2.msra.mxu0 %v109
  %1730 = vmatprep.subr.mxu0 0.0
  %1731 = vmatpush2.msra.mxu0 %v104
  %1732 = vmatprep.mubr.f32.mxu0 %v1525
  %1733 = vmatmul.mubr.f32.gmra.mxu0 %v1524
  %v1734 = vpop.f32.mrf.mxu0
  %v1735 = vadd.f32 %v203, %v1734
  %v1736 = vpop.f32.mrf.mxu0
  %1737 = vdwg.mxu0
  %v1738 = vtanh.pop %v1593
  %v1739 = vtanh.pop %v1595
  %v1740 = vtanh.pop %v1664
  %v1741 = vtanh.pop %v1666
  %v1742 = vtanh.pop %v1735
  %s1743 = scalar_lea.vmem %s3, 60
  %v1744 = vld [vmem:[%s1743] sm:$0xff]
  %v1745 = vld [vmem:[%s1743 + $0x8] sm:$0xff]
  %v1746 = vld [vmem:[%s1743 + $0x10] sm:$0xf]
  %v1749 = vcombine.high %v1744, %v1744
  %v1750 = vcombine.high %v1745, %v1745
  %1753 = vmatprep.subr.mxu0 0.0
  %1754 = vmatpush1.xpose.msra.mxu0 0.0
  %1755 = vmatprep.subr.mxu0 0.0
  %1756 = vmatpush1.xpose.msra.mxu0 0.0
  %1757 = vmatprep.subr.mxu0 0.0
  %1758 = vmatpush1.xpose.msra.mxu0 0.0
  %1759 = vmatprep.subr.mxu0 0.0
  %1760 = vmatpush1.xpose.msra.mxu0 0.0
  %1761 = vmatprep.subr.mxu0 0.0
  %1762 = vmatpush1.xpose.msra.mxu0 0.0
  %1763 = vmatprep.subr.mxu0 0.0
  %1764 = vmatpush1.xpose.msra.mxu0 0.0
  %1765 = vmatprep.subr.mxu0 0.0
  %1766 = vmatpush1.xpose.msra.mxu0 0.0
  %1767 = vmatprep.subr.mxu0 0.0
  %1768 = vmatpush1.xpose.msra.mxu0 0.0
  %1769 = vmatprep.subr.mxu0 0.0
  %1770 = vmatpush1.xpose.msra.mxu0 0.0
  %1771 = vmatprep.subr.mxu0 0.0
  %1772 = vmatpush1.xpose.msra.mxu0 0.0
  %1773 = vmatprep.subr.mxu0 0.0
  %1774 = vmatpush1.xpose.msra.mxu0 0.0
  %1775 = vmatprep.subr.mxu0 0.0
  %1776 = vmatpush1.xpose.msra.mxu0 0.0
  %1777 = vmatprep.subr.mxu0 0.0
  %1778 = vmatpush1.xpose.msra.mxu0 0.0
  %1779 = vmatprep.subr.mxu0 0.0
  %1780 = vmatpush1.xpose.msra.mxu0 0.0
  %1781 = vmatprep.subr.mxu0 0.0
  %1782 = vmatpush1.xpose.msra.mxu0 0.0
  %1783 = vmatprep.subr.mxu0 %v1749
  %1784 = vmatpush1.xpose.msra.mxu0 %v1744
  %1785 = vmatprep.subr.mxu0 0.0
  %1786 = vmatpush2.xpose.msra.mxu0 0.0
  %1787 = vmatprep.subr.mxu0 0.0
  %1788 = vmatpush2.xpose.msra.mxu0 0.0
  %1789 = vmatprep.subr.mxu0 0.0
  %1790 = vmatpush2.xpose.msra.mxu0 0.0
  %1791 = vmatprep.subr.mxu0 0.0
  %1792 = vmatpush2.xpose.msra.mxu0 0.0
  %1793 = vmatprep.subr.mxu0 0.0
  %1794 = vmatpush2.xpose.msra.mxu0 0.0
  %1795 = vmatprep.subr.mxu0 0.0
  %1796 = vmatpush2.xpose.msra.mxu0 0.0
  %1797 = vmatprep.subr.mxu0 0.0
  %1798 = vmatpush2.xpose.msra.mxu0 0.0
  %1799 = vmatprep.subr.mxu0 0.0
  %1800 = vmatpush2.xpose.msra.mxu0 0.0
  %1801 = vmatprep.subr.mxu0 0.0
  %1802 = vmatpush2.xpose.msra.mxu0 0.0
  %1803 = vmatprep.subr.mxu0 0.0
  %1804 = vmatpush2.xpose.msra.mxu0 0.0
  %1805 = vmatprep.subr.mxu0 0.0
  %1806 = vmatpush2.xpose.msra.mxu0 0.0
  %1807 = vmatprep.subr.mxu0 0.0
  %1808 = vmatpush2.xpose.msra.mxu0 0.0
  %1809 = vmatprep.subr.mxu0 0.0
  %1810 = vmatpush2.xpose.msra.mxu0 0.0
  %1811 = vmatprep.subr.mxu0 0.0
  %1812 = vmatpush2.xpose.msra.mxu0 0.0
  %1813 = vmatprep.subr.mxu0 0.0
  %1814 = vmatpush2.xpose.msra.mxu0 0.0
  %1815 = vmatprep.subr.mxu0 0.0
  %1816 = vmatpush2.xpose.msra.mxu0 0.0
  %1817 = vmatprep.mubr.f32.mxu0 %v1739
  %1818 = vmatmul.mubr.f32.gmra.mxu0 %v1738
  %v1819 = vpop.f32.mrf.mxu0
  %v1820 = vadd.f32 0.0, %v1819
  %v1821 = vpop.f32.mrf.mxu0
  %1822 = vdwg.mxu0
  %1823 = vmatprep.subr.mxu0 0.0
  %1824 = vmatpush1.xpose.msra.mxu0 0.0
  %1825 = vmatprep.subr.mxu0 0.0
  %1826 = vmatpush1.xpose.msra.mxu0 0.0
  %1827 = vmatprep.subr.mxu0 0.0
  %1828 = vmatpush1.xpose.msra.mxu0 0.0
  %1829 = vmatprep.subr.mxu0 0.0
  %1830 = vmatpush1.xpose.msra.mxu0 0.0
  %1831 = vmatprep.subr.mxu0 0.0
  %1832 = vmatpush1.xpose.msra.mxu0 0.0
  %1833 = vmatprep.subr.mxu0 0.0
  %1834 = vmatpush1.xpose.msra.mxu0 0.0
  %1835 = vmatprep.subr.mxu0 0.0
  %1836 = vmatpush1.xpose.msra.mxu0 0.0
  %1837 = vmatprep.subr.mxu0 0.0
  %1838 = vmatpush1.xpose.msra.mxu0 0.0
  %1839 = vmatprep.subr.mxu0 0.0
  %1840 = vmatpush1.xpose.msra.mxu0 0.0
  %1841 = vmatprep.subr.mxu0 0.0
  %1842 = vmatpush1.xpose.msra.mxu0 0.0
  %1843 = vmatprep.subr.mxu0 0.0
  %1844 = vmatpush1.xpose.msra.mxu0 0.0
  %1845 = vmatprep.subr.mxu0 0.0
  %1846 = vmatpush1.xpose.msra.mxu0 0.0
  %1847 = vmatprep.subr.mxu0 0.0
  %1848 = vmatpush1.xpose.msra.mxu0 0.0
  %1849 = vmatprep.subr.mxu0 0.0
  %1850 = vmatpush1.xpose.msra.mxu0 0.0
  %1851 = vmatprep.subr.mxu0 0.0
  %1852 = vmatpush1.xpose.msra.mxu0 0.0
  %1853 = vmatprep.subr.mxu0 %v1750
  %1854 = vmatpush1.xpose.msra.mxu0 %v1745
  %1855 = vmatprep.subr.mxu0 0.0
  %1856 = vmatpush2.xpose.msra.mxu0 0.0
  %1857 = vmatprep.subr.mxu0 0.0
  %1858 = vmatpush2.xpose.msra.mxu0 0.0
  %1859 = vmatprep.subr.mxu0 0.0
  %1860 = vmatpush2.xpose.msra.mxu0 0.0
  %1861 = vmatprep.subr.mxu0 0.0
  %1862 = vmatpush2.xpose.msra.mxu0 0.0
  %1863 = vmatprep.subr.mxu0 0.0
  %1864 = vmatpush2.xpose.msra.mxu0 0.0
  %1865 = vmatprep.subr.mxu0 0.0
  %1866 = vmatpush2.xpose.msra.mxu0 0.0
  %1867 = vmatprep.subr.mxu0 0.0
  %1868 = vmatpush2.xpose.msra.mxu0 0.0
  %1869 = vmatprep.subr.mxu0 0.0
  %1870 = vmatpush2.xpose.msra.mxu0 0.0
  %1871 = vmatprep.subr.mxu0 0.0
  %1872 = vmatpush2.xpose.msra.mxu0 0.0
  %1873 = vmatprep.subr.mxu0 0.0
  %1874 = vmatpush2.xpose.msra.mxu0 0.0
  %1875 = vmatprep.subr.mxu0 0.0
  %1876 = vmatpush2.xpose.msra.mxu0 0.0
  %1877 = vmatprep.subr.mxu0 0.0
  %1878 = vmatpush2.xpose.msra.mxu0 0.0
  %1879 = vmatprep.subr.mxu0 0.0
  %1880 = vmatpush2.xpose.msra.mxu0 0.0
  %1881 = vmatprep.subr.mxu0 0.0
  %1882 = vmatpush2.xpose.msra.mxu0 0.0
  %1883 = vmatprep.subr.mxu0 0.0
  %1884 = vmatpush2.xpose.msra.mxu0 0.0
  %1885 = vmatprep.subr.mxu0 0.0
  %1886 = vmatpush2.xpose.msra.mxu0 0.0
  %1887 = vmatprep.mubr.f32.mxu0 %v1741
  %1888 = vmatmul.mubr.f32.gmra.mxu0 %v1740
  %v1889 = vpop.f32.mrf.mxu0
  %v1890 = vadd.f32 %v1820, %v1889
  %v1891 = vpop.f32.mrf.mxu0
  %1892 = vdwg.mxu0
  %1893 = vmatprep.subr.mxu0 0.0
  %1894 = vmatpush1.xpose.msra.mxu0 0.0
  %1895 = vmatprep.subr.mxu0 0.0
  %1896 = vmatpush1.xpose.msra.mxu0 0.0
  %1897 = vmatprep.subr.mxu0 0.0
  %1898 = vmatpush1.xpose.msra.mxu0 0.0
  %1899 = vmatprep.subr.mxu0 0.0
  %1900 = vmatpush1.xpose.msra.mxu0 0.0
  %1901 = vmatprep.subr.mxu0 0.0
  %1902 = vmatpush1.xpose.msra.mxu0 0.0
  %1903 = vmatprep.subr.mxu0 0.0
  %1904 = vmatpush1.xpose.msra.mxu0 0.0
  %1905 = vmatprep.subr.mxu0 0.0
  %1906 = vmatpush1.xpose.msra.mxu0 0.0
  %1907 = vmatprep.subr.mxu0 0.0
  %1908 = vmatpush1.xpose.msra.mxu0 0.0
  %1909 = vmatprep.subr.mxu0 0.0
  %1910 = vmatpush1.xpose.msra.mxu0 0.0
  %1911 = vmatprep.subr.mxu0 0.0
  %1912 = vmatpush1.xpose.msra.mxu0 0.0
  %1913 = vmatprep.subr.mxu0 0.0
  %1914 = vmatpush1.xpose.msra.mxu0 0.0
  %1915 = vmatprep.subr.mxu0 0.0
  %1916 = vmatpush1.xpose.msra.mxu0 0.0
  %1917 = vmatprep.subr.mxu0 0.0
  %1918 = vmatpush1.xpose.msra.mxu0 0.0
  %1919 = vmatprep.subr.mxu0 0.0
  %1920 = vmatpush1.xpose.msra.mxu0 0.0
  %1921 = vmatprep.subr.mxu0 0.0
  %1922 = vmatpush1.xpose.msra.mxu0 0.0
  %1923 = vmatprep.subr.mxu0 0.0
  %1924 = vmatpush1.xpose.msra.mxu0 %v1746
  %1925 = vmatprep.subr.mxu0 0.0
  %1926 = vmatpush2.xpose.msra.mxu0 0.0
  %1927 = vmatprep.subr.mxu0 0.0
  %1928 = vmatpush2.xpose.msra.mxu0 0.0
  %1929 = vmatprep.subr.mxu0 0.0
  %1930 = vmatpush2.xpose.msra.mxu0 0.0
  %1931 = vmatprep.subr.mxu0 0.0
  %1932 = vmatpush2.xpose.msra.mxu0 0.0
  %1933 = vmatprep.subr.mxu0 0.0
  %1934 = vmatpush2.xpose.msra.mxu0 0.0
  %1935 = vmatprep.subr.mxu0 0.0
  %1936 = vmatpush2.xpose.msra.mxu0 0.0
  %1937 = vmatprep.subr.mxu0 0.0
  %1938 = vmatpush2.xpose.msra.mxu0 0.0
  %1939 = vmatprep.subr.mxu0 0.0
  %1940 = vmatpush2.xpose.msra.mxu0 0.0
  %1941 = vmatprep.subr.mxu0 0.0
  %1942 = vmatpush2.xpose.msra.mxu0 0.0
  %1943 = vmatprep.subr.mxu0 0.0
  %1944 = vmatpush2.xpose.msra.mxu0 0.0
  %1945 = vmatprep.subr.mxu0 0.0
  %1946 = vmatpush2.xpose.msra.mxu0 0.0
  %1947 = vmatprep.subr.mxu0 0.0
  %1948 = vmatpush2.xpose.msra.mxu0 0.0
  %1949 = vmatprep.subr.mxu0 0.0
  %1950 = vmatpush2.xpose.msra.mxu0 0.0
  %1951 = vmatprep.subr.mxu0 0.0
  %1952 = vmatpush2.xpose.msra.mxu0 0.0
  %1953 = vmatprep.subr.mxu0 0.0
  %1954 = vmatpush2.xpose.msra.mxu0 0.0
  %1955 = vmatprep.subr.mxu0 0.0
  %1956 = vmatpush2.xpose.msra.mxu0 0.0
  %1957 = vmatprep.mubr.f32.mxu0 0.0
  %1958 = vmatmul.mubr.f32.gmra.mxu0 %v1742
  %v1959 = vpop.f32.mrf.mxu0
  %v1960 = vadd.f32 %v1890, %v1959
  %v1961 = vpop.f32.mrf.mxu0
  %1962 = vdwg.mxu0
  %v1963 = vadd.f32 %v1523, %v1960
  %v1964 = vld [vmem:[%s0 + $0x20] sm:$0xff]
  %v1965 = vld [vmem:[%s0 + $0x28] sm:$0xff]
  %1966 = vmatprep.subr.mxu0 %v96
  %1967 = vmatpush1.msra.mxu0 %v95
  %1968 = vmatprep.subr.mxu0 %v91
  %1969 = vmatpush1.msra.mxu0 %v90
  %1970 = vmatprep.subr.mxu0 %v86
  %1971 = vmatpush1.msra.mxu0 %v85
  %1972 = vmatprep.subr.mxu0 %v81
  %1973 = vmatpush1.msra.mxu0 %v80
  %1974 = vmatprep.subr.mxu0 %v76
  %1975 = vmatpush1.msra.mxu0 %v75
  %1976 = vmatprep.subr.mxu0 %v71
  %1977 = vmatpush1.msra.mxu0 %v70
  %1978 = vmatprep.subr.mxu0 %v66
  %1979 = vmatpush1.msra.mxu0 %v65
  %1980 = vmatprep.subr.mxu0 %v61
  %1981 = vmatpush1.msra.mxu0 %v60
  %1982 = vmatprep.subr.mxu0 %v56
  %1983 = vmatpush1.msra.mxu0 %v55
  %1984 = vmatprep.subr.mxu0 %v51
  %1985 = vmatpush1.msra.mxu0 %v50
  %1986 = vmatprep.subr.mxu0 %v46
  %1987 = vmatpush1.msra.mxu0 %v45
  %1988 = vmatprep.subr.mxu0 %v41
  %1989 = vmatpush1.msra.mxu0 %v40
  %1990 = vmatprep.subr.mxu0 %v36
  %1991 = vmatpush1.msra.mxu0 %v35
  %1992 = vmatprep.subr.mxu0 %v31
  %1993 = vmatpush1.msra.mxu0 %v30
  %1994 = vmatprep.subr.mxu0 %v26
  %1995 = vmatpush1.msra.mxu0 %v25
  %1996 = vmatprep.subr.mxu0 %v21
  %1997 = vmatpush1.msra.mxu0 %v20
  %1998 = vmatprep.subr.mxu0 %v176
  %1999 = vmatpush2.msra.mxu0 %v175
  %2000 = vmatprep.subr.mxu0 %v171
  %2001 = vmatpush2.msra.mxu0 %v170
  %2002 = vmatprep.subr.mxu0 %v166
  %2003 = vmatpush2.msra.mxu0 %v165
  %2004 = vmatprep.subr.mxu0 %v161
  %2005 = vmatpush2.msra.mxu0 %v160
  %2006 = vmatprep.subr.mxu0 %v156
  %2007 = vmatpush2.msra.mxu0 %v155
  %2008 = vmatprep.subr.mxu0 %v151
  %2009 = vmatpush2.msra.mxu0 %v150
  %2010 = vmatprep.subr.mxu0 %v146
  %2011 = vmatpush2.msra.mxu0 %v145
  %2012 = vmatprep.subr.mxu0 %v141
  %2013 = vmatpush2.msra.mxu0 %v140
  %2014 = vmatprep.subr.mxu0 %v136
  %2015 = vmatpush2.msra.mxu0 %v135
  %2016 = vmatprep.subr.mxu0 %v131
  %2017 = vmatpush2.msra.mxu0 %v130
  %2018 = vmatprep.subr.mxu0 %v126
  %2019 = vmatpush2.msra.mxu0 %v125
  %2020 = vmatprep.subr.mxu0 %v121
  %2021 = vmatpush2.msra.mxu0 %v120
  %2022 = vmatprep.subr.mxu0 %v116
  %2023 = vmatpush2.msra.mxu0 %v115
  %2024 = vmatprep.subr.mxu0 %v111
  %2025 = vmatpush2.msra.mxu0 %v110
  %2026 = vmatprep.subr.mxu0 %v106
  %2027 = vmatpush2.msra.mxu0 %v105
  %2028 = vmatprep.subr.mxu0 %v101
  %2029 = vmatpush2.msra.mxu0 %v100
  %2030 = vmatprep.mubr.f32.mxu0 %v1965
  %2031 = vmatmul.mubr.f32.gmra.mxu0 %v1964
  %v2032 = vpop.f32.mrf.mxu0
  %v2033 = vadd.f32 %v187, %v2032
  %v2034 = vpop.f32.mrf.mxu0
  %v2035 = vadd.f32 %v191, %v2034
  %2036 = vdwg.mxu0
  %2037 = vmatprep.subr.mxu0 %v98
  %2038 = vmatpush1.msra.mxu0 %v97
  %2039 = vmatprep.subr.mxu0 %v93
  %2040 = vmatpush1.msra.mxu0 %v92
  %2041 = vmatprep.subr.mxu0 %v88
  %2042 = vmatpush1.msra.mxu0 %v87
  %2043 = vmatprep.subr.mxu0 %v83
  %2044 = vmatpush1.msra.mxu0 %v82
  %2045 = vmatprep.subr.mxu0 %v78
  %2046 = vmatpush1.msra.mxu0 %v77
  %2047 = vmatprep.subr.mxu0 %v73
  %2048 = vmatpush1.msra.mxu0 %v72
  %2049 = vmatprep.subr.mxu0 %v68
  %2050 = vmatpush1.msra.mxu0 %v67
  %2051 = vmatprep.subr.mxu0 %v63
  %2052 = vmatpush1.msra.mxu0 %v62
  %2053 = vmatprep.subr.mxu0 %v58
  %2054 = vmatpush1.msra.mxu0 %v57
  %2055 = vmatprep.subr.mxu0 %v53
  %2056 = vmatpush1.msra.mxu0 %v52
  %2057 = vmatprep.subr.mxu0 %v48
  %2058 = vmatpush1.msra.mxu0 %v47
  %2059 = vmatprep.subr.mxu0 %v43
  %2060 = vmatpush1.msra.mxu0 %v42
  %2061 = vmatprep.subr.mxu0 %v38
  %2062 = vmatpush1.msra.mxu0 %v37
  %2063 = vmatprep.subr.mxu0 %v33
  %2064 = vmatpush1.msra.mxu0 %v32
  %2065 = vmatprep.subr.mxu0 %v28
  %2066 = vmatpush1.msra.mxu0 %v27
  %2067 = vmatprep.subr.mxu0 %v23
  %2068 = vmatpush1.msra.mxu0 %v22
  %2069 = vmatprep.subr.mxu0 %v178
  %2070 = vmatpush2.msra.mxu0 %v177
  %2071 = vmatprep.subr.mxu0 %v173
  %2072 = vmatpush2.msra.mxu0 %v172
  %2073 = vmatprep.subr.mxu0 %v168
  %2074 = vmatpush2.msra.mxu0 %v167
  %2075 = vmatprep.subr.mxu0 %v163
  %2076 = vmatpush2.msra.mxu0 %v162
  %2077 = vmatprep.subr.mxu0 %v158
  %2078 = vmatpush2.msra.mxu0 %v157
  %2079 = vmatprep.subr.mxu0 %v153
  %2080 = vmatpush2.msra.mxu0 %v152
  %2081 = vmatprep.subr.mxu0 %v148
  %2082 = vmatpush2.msra.mxu0 %v147
  %2083 = vmatprep.subr.mxu0 %v143
  %2084 = vmatpush2.msra.mxu0 %v142
  %2085 = vmatprep.subr.mxu0 %v138
  %2086 = vmatpush2.msra.mxu0 %v137
  %2087 = vmatprep.subr.mxu0 %v133
  %2088 = vmatpush2.msra.mxu0 %v132
  %2089 = vmatprep.subr.mxu0 %v128
  %2090 = vmatpush2.msra.mxu0 %v127
  %2091 = vmatprep.subr.mxu0 %v123
  %2092 = vmatpush2.msra.mxu0 %v122
  %2093 = vmatprep.subr.mxu0 %v118
  %2094 = vmatpush2.msra.mxu0 %v117
  %2095 = vmatprep.subr.mxu0 %v113
  %2096 = vmatpush2.msra.mxu0 %v112
  %2097 = vmatprep.subr.mxu0 %v108
  %2098 = vmatpush2.msra.mxu0 %v107
  %2099 = vmatprep.subr.mxu0 %v103
  %2100 = vmatpush2.msra.mxu0 %v102
  %2101 = vmatprep.mubr.f32.mxu0 %v1965
  %2102 = vmatmul.mubr.f32.gmra.mxu0 %v1964
  %v2103 = vpop.f32.mrf.mxu0
  %v2104 = vadd.f32 %v195, %v2103
  %v2105 = vpop.f32.mrf.mxu0
  %v2106 = vadd.f32 %v199, %v2105
  %2107 = vdwg.mxu0
  %2108 = vmatprep.subr.mxu0 0.0
  %2109 = vmatpush1.msra.mxu0 %v99
  %2110 = vmatprep.subr.mxu0 0.0
  %2111 = vmatpush1.msra.mxu0 %v94
  %2112 = vmatprep.subr.mxu0 0.0
  %2113 = vmatpush1.msra.mxu0 %v89
  %2114 = vmatprep.subr.mxu0 0.0
  %2115 = vmatpush1.msra.mxu0 %v84
  %2116 = vmatprep.subr.mxu0 0.0
  %2117 = vmatpush1.msra.mxu0 %v79
  %2118 = vmatprep.subr.mxu0 0.0
  %2119 = vmatpush1.msra.mxu0 %v74
  %2120 = vmatprep.subr.mxu0 0.0
  %2121 = vmatpush1.msra.mxu0 %v69
  %2122 = vmatprep.subr.mxu0 0.0
  %2123 = vmatpush1.msra.mxu0 %v64
  %2124 = vmatprep.subr.mxu0 0.0
  %2125 = vmatpush1.msra.mxu0 %v59
  %2126 = vmatprep.subr.mxu0 0.0
  %2127 = vmatpush1.msra.mxu0 %v54
  %2128 = vmatprep.subr.mxu0 0.0
  %2129 = vmatpush1.msra.mxu0 %v49
  %2130 = vmatprep.subr.mxu0 0.0
  %2131 = vmatpush1.msra.mxu0 %v44
  %2132 = vmatprep.subr.mxu0 0.0
  %2133 = vmatpush1.msra.mxu0 %v39
  %2134 = vmatprep.subr.mxu0 0.0
  %2135 = vmatpush1.msra.mxu0 %v34
  %2136 = vmatprep.subr.mxu0 0.0
  %2137 = vmatpush1.msra.mxu0 %v29
  %2138 = vmatprep.subr.mxu0 0.0
  %2139 = vmatpush1.msra.mxu0 %v24
  %2140 = vmatprep.subr.mxu0 0.0
  %2141 = vmatpush2.msra.mxu0 %v179
  %2142 = vmatprep.subr.mxu0 0.0
  %2143 = vmatpush2.msra.mxu0 %v174
  %2144 = vmatprep.subr.mxu0 0.0
  %2145 = vmatpush2.msra.mxu0 %v169
  %2146 = vmatprep.subr.mxu0 0.0
  %2147 = vmatpush2.msra.mxu0 %v164
  %2148 = vmatprep.subr.mxu0 0.0
  %2149 = vmatpush2.msra.mxu0 %v159
  %2150 = vmatprep.subr.mxu0 0.0
  %2151 = vmatpush2.msra.mxu0 %v154
  %2152 = vmatprep.subr.mxu0 0.0
  %2153 = vmatpush2.msra.mxu0 %v149
  %2154 = vmatprep.subr.mxu0 0.0
  %2155 = vmatpush2.msra.mxu0 %v144
  %2156 = vmatprep.subr.mxu0 0.0
  %2157 = vmatpush2.msra.mxu0 %v139
  %2158 = vmatprep.subr.mxu0 0.0
  %2159 = vmatpush2.msra.mxu0 %v134
  %2160 = vmatprep.subr.mxu0 0.0
  %2161 = vmatpush2.msra.mxu0 %v129
  %2162 = vmatprep.subr.mxu0 0.0
  %2163 = vmatpush2.msra.mxu0 %v124
  %2164 = vmatprep.subr.mxu0 0.0
  %2165 = vmatpush2.msra.mxu0 %v119
  %2166 = vmatprep.subr.mxu0 0.0
  %2167 = vmatpush2.msra.mxu0 %v114
  %2168 = vmatprep.subr.mxu0 0.0
  %2169 = vmatpush2.msra.mxu0 %v109
  %2170 = vmatprep.subr.mxu0 0.0
  %2171 = vmatpush2.msra.mxu0 %v104
  %2172 = vmatprep.mubr.f32.mxu0 %v1965
  %2173 = vmatmul.mubr.f32.gmra.mxu0 %v1964
  %v2174 = vpop.f32.mrf.mxu0
  %v2175 = vadd.f32 %v203, %v2174
  %v2176 = vpop.f32.mrf.mxu0
  %2177 = vdwg.mxu0
  %v2178 = vtanh.pop %v2033
  %v2179 = vtanh.pop %v2035
  %v2180 = vtanh.pop %v2104
  %v2181 = vtanh.pop %v2106
  %v2182 = vtanh.pop %v2175
  %s2183 = scalar_lea.vmem %s3, 80
  %v2184 = vld [vmem:[%s2183] sm:$0xff]
  %v2185 = vld [vmem:[%s2183 + $0x8] sm:$0xff]
  %v2186 = vld [vmem:[%s2183 + $0x10] sm:$0xf]
  %v2189 = vcombine.high %v2184, %v2184
  %v2190 = vcombine.high %v2185, %v2185
  %2193 = vmatprep.subr.mxu0 0.0
  %2194 = vmatpush1.xpose.msra.mxu0 0.0
  %2195 = vmatprep.subr.mxu0 0.0
  %2196 = vmatpush1.xpose.msra.mxu0 0.0
  %2197 = vmatprep.subr.mxu0 0.0
  %2198 = vmatpush1.xpose.msra.mxu0 0.0
  %2199 = vmatprep.subr.mxu0 0.0
  %2200 = vmatpush1.xpose.msra.mxu0 0.0
  %2201 = vmatprep.subr.mxu0 0.0
  %2202 = vmatpush1.xpose.msra.mxu0 0.0
  %2203 = vmatprep.subr.mxu0 0.0
  %2204 = vmatpush1.xpose.msra.mxu0 0.0
  %2205 = vmatprep.subr.mxu0 0.0
  %2206 = vmatpush1.xpose.msra.mxu0 0.0
  %2207 = vmatprep.subr.mxu0 0.0
  %2208 = vmatpush1.xpose.msra.mxu0 0.0
  %2209 = vmatprep.subr.mxu0 0.0
  %2210 = vmatpush1.xpose.msra.mxu0 0.0
  %2211 = vmatprep.subr.mxu0 0.0
  %2212 = vmatpush1.xpose.msra.mxu0 0.0
  %2213 = vmatprep.subr.mxu0 0.0
  %2214 = vmatpush1.xpose.msra.mxu0 0.0
  %2215 = vmatprep.subr.mxu0 0.0
  %2216 = vmatpush1.xpose.msra.mxu0 0.0
  %2217 = vmatprep.subr.mxu0 0.0
  %2218 = vmatpush1.xpose.msra.mxu0 0.0
  %2219 = vmatprep.subr.mxu0 0.0
  %2220 = vmatpush1.xpose.msra.mxu0 0.0
  %2221 = vmatprep.subr.mxu0 0.0
  %2222 = vmatpush1.xpose.msra.mxu0 0.0
  %2223 = vmatprep.subr.mxu0 %v2189
  %2224 = vmatpush1.xpose.msra.mxu0 %v2184
  %2225 = vmatprep.subr.mxu0 0.0
  %2226 = vmatpush2.xpose.msra.mxu0 0.0
  %2227 = vmatprep.subr.mxu0 0.0
  %2228 = vmatpush2.xpose.msra.mxu0 0.0
  %2229 = vmatprep.subr.mxu0 0.0
  %2230 = vmatpush2.xpose.msra.mxu0 0.0
  %2231 = vmatprep.subr.mxu0 0.0
  %2232 = vmatpush2.xpose.msra.mxu0 0.0
  %2233 = vmatprep.subr.mxu0 0.0
  %2234 = vmatpush2.xpose.msra.mxu0 0.0
  %2235 = vmatprep.subr.mxu0 0.0
  %2236 = vmatpush2.xpose.msra.mxu0 0.0
  %2237 = vmatprep.subr.mxu0 0.0
  %2238 = vmatpush2.xpose.msra.mxu0 0.0
  %2239 = vmatprep.subr.mxu0 0.0
  %2240 = vmatpush2.xpose.msra.mxu0 0.0
  %2241 = vmatprep.subr.mxu0 0.0
  %2242 = vmatpush2.xpose.msra.mxu0 0.0
  %2243 = vmatprep.subr.mxu0 0.0
  %2244 = vmatpush2.xpose.msra.mxu0 0.0
  %2245 = vmatprep.subr.mxu0 0.0
  %2246 = vmatpush2.xpose.msra.mxu0 0.0
  %2247 = vmatprep.subr.mxu0 0.0
  %2248 = vmatpush2.xpose.msra.mxu0 0.0
  %2249 = vmatprep.subr.mxu0 0.0
  %2250 = vmatpush2.xpose.msra.mxu0 0.0
  %2251 = vmatprep.subr.mxu0 0.0
  %2252 = vmatpush2.xpose.msra.mxu0 0.0
  %2253 = vmatprep.subr.mxu0 0.0
  %2254 = vmatpush2.xpose.msra.mxu0 0.0
  %2255 = vmatprep.subr.mxu0 0.0
  %2256 = vmatpush2.xpose.msra.mxu0 0.0
  %2257 = vmatprep.mubr.f32.mxu0 %v2179
  %2258 = vmatmul.mubr.f32.gmra.mxu0 %v2178
  %v2259 = vpop.f32.mrf.mxu0
  %v2260 = vadd.f32 0.0, %v2259
  %v2261 = vpop.f32.mrf.mxu0
  %2262 = vdwg.mxu0
  %2263 = vmatprep.subr.mxu0 0.0
  %2264 = vmatpush1.xpose.msra.mxu0 0.0
  %2265 = vmatprep.subr.mxu0 0.0
  %2266 = vmatpush1.xpose.msra.mxu0 0.0
  %2267 = vmatprep.subr.mxu0 0.0
  %2268 = vmatpush1.xpose.msra.mxu0 0.0
  %2269 = vmatprep.subr.mxu0 0.0
  %2270 = vmatpush1.xpose.msra.mxu0 0.0
  %2271 = vmatprep.subr.mxu0 0.0
  %2272 = vmatpush1.xpose.msra.mxu0 0.0
  %2273 = vmatprep.subr.mxu0 0.0
  %2274 = vmatpush1.xpose.msra.mxu0 0.0
  %2275 = vmatprep.subr.mxu0 0.0
  %2276 = vmatpush1.xpose.msra.mxu0 0.0
  %2277 = vmatprep.subr.mxu0 0.0
  %2278 = vmatpush1.xpose.msra.mxu0 0.0
  %2279 = vmatprep.subr.mxu0 0.0
  %2280 = vmatpush1.xpose.msra.mxu0 0.0
  %2281 = vmatprep.subr.mxu0 0.0
  %2282 = vmatpush1.xpose.msra.mxu0 0.0
  %2283 = vmatprep.subr.mxu0 0.0
  %2284 = vmatpush1.xpose.msra.mxu0 0.0
  %2285 = vmatprep.subr.mxu0 0.0
  %2286 = vmatpush1.xpose.msra.mxu0 0.0
  %2287 = vmatprep.subr.mxu0 0.0
  %2288 = vmatpush1.xpose.msra.mxu0 0.0
  %2289 = vmatprep.subr.mxu0 0.0
  %2290 = vmatpush1.xpose.msra.mxu0 0.0
  %2291 = vmatprep.subr.mxu0 0.0
  %2292 = vmatpush1.xpose.msra.mxu0 0.0
  %2293 = vmatprep.subr.mxu0 %v2190
  %2294 = vmatpush1.xpose.msra.mxu0 %v2185
  %2295 = vmatprep.subr.mxu0 0.0
  %2296 = vmatpush2.xpose.msra.mxu0 0.0
  %2297 = vmatprep.subr.mxu0 0.0
  %2298 = vmatpush2.xpose.msra.mxu0 0.0
  %2299 = vmatprep.subr.mxu0 0.0
  %2300 = vmatpush2.xpose.msra.mxu0 0.0
  %2301 = vmatprep.subr.mxu0 0.0
  %2302 = vmatpush2.xpose.msra.mxu0 0.0
  %2303 = vmatprep.subr.mxu0 0.0
  %2304 = vmatpush2.xpose.msra.mxu0 0.0
  %2305 = vmatprep.subr.mxu0 0.0
  %2306 = vmatpush2.xpose.msra.mxu0 0.0
  %2307 = vmatprep.subr.mxu0 0.0
  %2308 = vmatpush2.xpose.msra.mxu0 0.0
  %2309 = vmatprep.subr.mxu0 0.0
  %2310 = vmatpush2.xpose.msra.mxu0 0.0
  %2311 = vmatprep.subr.mxu0 0.0
  %2312 = vmatpush2.xpose.msra.mxu0 0.0
  %2313 = vmatprep.subr.mxu0 0.0
  %2314 = vmatpush2.xpose.msra.mxu0 0.0
  %2315 = vmatprep.subr.mxu0 0.0
  %2316 = vmatpush2.xpose.msra.mxu0 0.0
  %2317 = vmatprep.subr.mxu0 0.0
  %2318 = vmatpush2.xpose.msra.mxu0 0.0
  %2319 = vmatprep.subr.mxu0 0.0
  %2320 = vmatpush2.xpose.msra.mxu0 0.0
  %2321 = vmatprep.subr.mxu0 0.0
  %2322 = vmatpush2.xpose.msra.mxu0 0.0
  %2323 = vmatprep.subr.mxu0 0.0
  %2324 = vmatpush2.xpose.msra.mxu0 0.0
  %2325 = vmatprep.subr.mxu0 0.0
  %2326 = vmatpush2.xpose.msra.mxu0 0.0
  %2327 = vmatprep.mubr.f32.mxu0 %v2181
  %2328 = vmatmul.mubr.f32.gmra.mxu0 %v2180
  %v2329 = vpop.f32.mrf.mxu0
  %v2330 = vadd.f32 %v2260, %v2329
  %v2331 = vpop.f32.mrf.mxu0
  %2332 = vdwg.mxu0
  %2333 = vmatprep.subr.mxu0 0.0
  %2334 = vmatpush1.xpose.msra.mxu0 0.0
  %2335 = vmatprep.subr.mxu0 0.0
  %2336 = vmatpush1.xpose.msra.mxu0 0.0
  %2337 = vmatprep.subr.mxu0 0.0
  %2338 = vmatpush1.xpose.msra.mxu0 0.0
  %2339 = vmatprep.subr.mxu0 0.0
  %2340 = vmatpush1.xpose.msra.mxu0 0.0
  %2341 = vmatprep.subr.mxu0 0.0
  %2342 = vmatpush1.xpose.msra.mxu0 0.0
  %2343 = vmatprep.subr.mxu0 0.0
  %2344 = vmatpush1.xpose.msra.mxu0 0.0
  %2345 = vmatprep.subr.mxu0 0.0
  %2346 = vmatpush1.xpose.msra.mxu0 0.0
  %2347 = vmatprep.subr.mxu0 0.0
  %2348 = vmatpush1.xpose.msra.mxu0 0.0
  %2349 = vmatprep.subr.mxu0 0.0
  %2350 = vmatpush1.xpose.msra.mxu0 0.0
  %2351 = vmatprep.subr.mxu0 0.0
  %2352 = vmatpush1.xpose.msra.mxu0 0.0
  %2353 = vmatprep.subr.mxu0 0.0
  %2354 = vmatpush1.xpose.msra.mxu0 0.0
  %2355 = vmatprep.subr.mxu0 0.0
  %2356 = vmatpush1.xpose.msra.mxu0 0.0
  %2357 = vmatprep.subr.mxu0 0.0
  %2358 = vmatpush1.xpose.msra.mxu0 0.0
  %2359 = vmatprep.subr.mxu0 0.0
  %2360 = vmatpush1.xpose.msra.mxu0 0.0
  %2361 = vmatprep.subr.mxu0 0.0
  %2362 = vmatpush1.xpose.msra.mxu0 0.0
  %2363 = vmatprep.subr.mxu0 0.0
  %2364 = vmatpush1.xpose.msra.mxu0 %v2186
  %2365 = vmatprep.subr.mxu0 0.0
  %2366 = vmatpush2.xpose.msra.mxu0 0.0
  %2367 = vmatprep.subr.mxu0 0.0
  %2368 = vmatpush2.xpose.msra.mxu0 0.0
  %2369 = vmatprep.subr.mxu0 0.0
  %2370 = vmatpush2.xpose.msra.mxu0 0.0
  %2371 = vmatprep.subr.mxu0 0.0
  %2372 = vmatpush2.xpose.msra.mxu0 0.0
  %2373 = vmatprep.subr.mxu0 0.0
  %2374 = vmatpush2.xpose.msra.mxu0 0.0
  %2375 = vmatprep.subr.mxu0 0.0
  %2376 = vmatpush2.xpose.msra.mxu0 0.0
  %2377 = vmatprep.subr.mxu0 0.0
  %2378 = vmatpush2.xpose.msra.mxu0 0.0
  %2379 = vmatprep.subr.mxu0 0.0
  %2380 = vmatpush2.xpose.msra.mxu0 0.0
  %2381 = vmatprep.subr.mxu0 0.0
  %2382 = vmatpush2.xpose.msra.mxu0 0.0
  %2383 = vmatprep.subr.mxu0 0.0
  %2384 = vmatpush2.xpose.msra.mxu0 0.0
  %2385 = vmatprep.subr.mxu0 0.0
  %2386 = vmatpush2.xpose.msra.mxu0 0.0
  %2387 = vmatprep.subr.mxu0 0.0
  %2388 = vmatpush2.xpose.msra.mxu0 0.0
  %2389 = vmatprep.subr.mxu0 0.0
  %2390 = vmatpush2.xpose.msra.mxu0 0.0
  %2391 = vmatprep.subr.mxu0 0.0
  %2392 = vmatpush2.xpose.msra.mxu0 0.0
  %2393 = vmatprep.subr.mxu0 0.0
  %2394 = vmatpush2.xpose.msra.mxu0 0.0
  %2395 = vmatprep.subr.mxu0 0.0
  %2396 = vmatpush2.xpose.msra.mxu0 0.0
  %2397 = vmatprep.mubr.f32.mxu0 0.0
  %2398 = vmatmul.mubr.f32.gmra.mxu0 %v2182
  %v2399 = vpop.f32.mrf.mxu0
  %v2400 = vadd.f32 %v2330, %v2399
  %v2401 = vpop.f32.mrf.mxu0
  %2402 = vdwg.mxu0
  %v2403 = vadd.f32 %v1963, %v2400
  %v2404 = vld [vmem:[%s0 + $0x28] sm:$0xff]
  %v2405 = vld [vmem:[%s0 + $0x30] sm:$0xff]
  %2406 = vmatprep.subr.mxu0 %v96
  %2407 = vmatpush1.msra.mxu0 %v95
  %2408 = vmatprep.subr.mxu0 %v91
  %2409 = vmatpush1.msra.mxu0 %v90
  %2410 = vmatprep.subr.mxu0 %v86
  %2411 = vmatpush1.msra.mxu0 %v85
  %2412 = vmatprep.subr.mxu0 %v81
  %2413 = vmatpush1.msra.mxu0 %v80
  %2414 = vmatprep.subr.mxu0 %v76
  %2415 = vmatpush1.msra.mxu0 %v75
  %2416 = vmatprep.subr.mxu0 %v71
  %2417 = vmatpush1.msra.mxu0 %v70
  %2418 = vmatprep.subr.mxu0 %v66
  %2419 = vmatpush1.msra.mxu0 %v65
  %2420 = vmatprep.subr.mxu0 %v61
  %2421 = vmatpush1.msra.mxu0 %v60
  %2422 = vmatprep.subr.mxu0 %v56
  %2423 = vmatpush1.msra.mxu0 %v55
  %2424 = vmatprep.subr.mxu0 %v51
  %2425 = vmatpush1.msra.mxu0 %v50
  %2426 = vmatprep.subr.mxu0 %v46
  %2427 = vmatpush1.msra.mxu0 %v45
  %2428 = vmatprep.subr.mxu0 %v41
  %2429 = vmatpush1.msra.mxu0 %v40
  %2430 = vmatprep.subr.mxu0 %v36
  %2431 = vmatpush1.msra.mxu0 %v35
  %2432 = vmatprep.subr.mxu0 %v31
  %2433 = vmatpush1.msra.mxu0 %v30
  %2434 = vmatprep.subr.mxu0 %v26
  %2435 = vmatpush1.msra.mxu0 %v25
  %2436 = vmatprep.subr.mxu0 %v21
  %2437 = vmatpush1.msra.mxu0 %v20
  %2438 = vmatprep.subr.mxu0 %v176
  %2439 = vmatpush2.msra.mxu0 %v175
  %2440 = vmatprep.subr.mxu0 %v171
  %2441 = vmatpush2.msra.mxu0 %v170
  %2442 = vmatprep.subr.mxu0 %v166
  %2443 = vmatpush2.msra.mxu0 %v165
  %2444 = vmatprep.subr.mxu0 %v161
  %2445 = vmatpush2.msra.mxu0 %v160
  %2446 = vmatprep.subr.mxu0 %v156
  %2447 = vmatpush2.msra.mxu0 %v155
  %2448 = vmatprep.subr.mxu0 %v151
  %2449 = vmatpush2.msra.mxu0 %v150
  %2450 = vmatprep.subr.mxu0 %v146
  %2451 = vmatpush2.msra.mxu0 %v145
  %2452 = vmatprep.subr.mxu0 %v141
  %2453 = vmatpush2.msra.mxu0 %v140
  %2454 = vmatprep.subr.mxu0 %v136
  %2455 = vmatpush2.msra.mxu0 %v135
  %2456 = vmatprep.subr.mxu0 %v131
  %2457 = vmatpush2.msra.mxu0 %v130
  %2458 = vmatprep.subr.mxu0 %v126
  %2459 = vmatpush2.msra.mxu0 %v125
  %2460 = vmatprep.subr.mxu0 %v121
  %2461 = vmatpush2.msra.mxu0 %v120
  %2462 = vmatprep.subr.mxu0 %v116
  %2463 = vmatpush2.msra.mxu0 %v115
  %2464 = vmatprep.subr.mxu0 %v111
  %2465 = vmatpush2.msra.mxu0 %v110
  %2466 = vmatprep.subr.mxu0 %v106
  %2467 = vmatpush2.msra.mxu0 %v105
  %2468 = vmatprep.subr.mxu0 %v101
  %2469 = vmatpush2.msra.mxu0 %v100
  %2470 = vmatprep.mubr.f32.mxu0 %v2405
  %2471 = vmatmul.mubr.f32.gmra.mxu0 %v2404
  %v2472 = vpop.f32.mrf.mxu0
  %v2473 = vadd.f32 %v187, %v2472
  %v2474 = vpop.f32.mrf.mxu0
  %v2475 = vadd.f32 %v191, %v2474
  %2476 = vdwg.mxu0
  %2477 = vmatprep.subr.mxu0 %v98
  %2478 = vmatpush1.msra.mxu0 %v97
  %2479 = vmatprep.subr.mxu0 %v93
  %2480 = vmatpush1.msra.mxu0 %v92
  %2481 = vmatprep.subr.mxu0 %v88
  %2482 = vmatpush1.msra.mxu0 %v87
  %2483 = vmatprep.subr.mxu0 %v83
  %2484 = vmatpush1.msra.mxu0 %v82
  %2485 = vmatprep.subr.mxu0 %v78
  %2486 = vmatpush1.msra.mxu0 %v77
  %2487 = vmatprep.subr.mxu0 %v73
  %2488 = vmatpush1.msra.mxu0 %v72
  %2489 = vmatprep.subr.mxu0 %v68
  %2490 = vmatpush1.msra.mxu0 %v67
  %2491 = vmatprep.subr.mxu0 %v63
  %2492 = vmatpush1.msra.mxu0 %v62
  %2493 = vmatprep.subr.mxu0 %v58
  %2494 = vmatpush1.msra.mxu0 %v57
  %2495 = vmatprep.subr.mxu0 %v53
  %2496 = vmatpush1.msra.mxu0 %v52
  %2497 = vmatprep.subr.mxu0 %v48
  %2498 = vmatpush1.msra.mxu0 %v47
  %2499 = vmatprep.subr.mxu0 %v43
  %2500 = vmatpush1.msra.mxu0 %v42
  %2501 = vmatprep.subr.mxu0 %v38
  %2502 = vmatpush1.msra.mxu0 %v37
  %2503 = vmatprep.subr.mxu0 %v33
  %2504 = vmatpush1.msra.mxu0 %v32
  %2505 = vmatprep.subr.mxu0 %v28
  %2506 = vmatpush1.msra.mxu0 %v27
  %2507 = vmatprep.subr.mxu0 %v23
  %2508 = vmatpush1.msra.mxu0 %v22
  %2509 = vmatprep.subr.mxu0 %v178
  %2510 = vmatpush2.msra.mxu0 %v177
  %2511 = vmatprep.subr.mxu0 %v173
  %2512 = vmatpush2.msra.mxu0 %v172
  %2513 = vmatprep.subr.mxu0 %v168
  %2514 = vmatpush2.msra.mxu0 %v167
  %2515 = vmatprep.subr.mxu0 %v163
  %2516 = vmatpush2.msra.mxu0 %v162
  %2517 = vmatprep.subr.mxu0 %v158
  %2518 = vmatpush2.msra.mxu0 %v157
  %2519 = vmatprep.subr.mxu0 %v153
  %2520 = vmatpush2.msra.mxu0 %v152
  %2521 = vmatprep.subr.mxu0 %v148
  %2522 = vmatpush2.msra.mxu0 %v147
  %2523 = vmatprep.subr.mxu0 %v143
  %2524 = vmatpush2.msra.mxu0 %v142
  %2525 = vmatprep.subr.mxu0 %v138
  %2526 = vmatpush2.msra.mxu0 %v137
  %2527 = vmatprep.subr.mxu0 %v133
  %2528 = vmatpush2.msra.mxu0 %v132
  %2529 = vmatprep.subr.mxu0 %v128
  %2530 = vmatpush2.msra.mxu0 %v127
  %2531 = vmatprep.subr.mxu0 %v123
  %2532 = vmatpush2.msra.mxu0 %v122
  %2533 = vmatprep.subr.mxu0 %v118
  %2534 = vmatpush2.msra.mxu0 %v117
  %2535 = vmatprep.subr.mxu0 %v113
  %2536 = vmatpush2.msra.mxu0 %v112
  %2537 = vmatprep.subr.mxu0 %v108
  %2538 = vmatpush2.msra.mxu0 %v107
  %2539 = vmatprep.subr.mxu0 %v103
  %2540 = vmatpush2.msra.mxu0 %v102
  %2541 = vmatprep.mubr.f32.mxu0 %v2405
  %2542 = vmatmul.mubr.f32.gmra.mxu0 %v2404
  %v2543 = vpop.f32.mrf.mxu0
  %v2544 = vadd.f32 %v195, %v2543
  %v2545 = vpop.f32.mrf.mxu0
  %v2546 = vadd.f32 %v199, %v2545
  %2547 = vdwg.mxu0
  %2548 = vmatprep.subr.mxu0 0.0
  %2549 = vmatpush1.msra.mxu0 %v99
  %2550 = vmatprep.subr.mxu0 0.0
  %2551 = vmatpush1.msra.mxu0 %v94
  %2552 = vmatprep.subr.mxu0 0.0
  %2553 = vmatpush1.msra.mxu0 %v89
  %2554 = vmatprep.subr.mxu0 0.0
  %2555 = vmatpush1.msra.mxu0 %v84
  %2556 = vmatprep.subr.mxu0 0.0
  %2557 = vmatpush1.msra.mxu0 %v79
  %2558 = vmatprep.subr.mxu0 0.0
  %2559 = vmatpush1.msra.mxu0 %v74
  %2560 = vmatprep.subr.mxu0 0.0
  %2561 = vmatpush1.msra.mxu0 %v69
  %2562 = vmatprep.subr.mxu0 0.0
  %2563 = vmatpush1.msra.mxu0 %v64
  %2564 = vmatprep.subr.mxu0 0.0
  %2565 = vmatpush1.msra.mxu0 %v59
  %2566 = vmatprep.subr.mxu0 0.0
  %2567 = vmatpush1.msra.mxu0 %v54
  %2568 = vmatprep.subr.mxu0 0.0
  %2569 = vmatpush1.msra.mxu0 %v49
  %2570 = vmatprep.subr.mxu0 0.0
  %2571 = vmatpush1.msra.mxu0 %v44
  %2572 = vmatprep.subr.mxu0 0.0
  %2573 = vmatpush1.msra.mxu0 %v39
  %2574 = vmatprep.subr.mxu0 0.0
  %2575 = vmatpush1.msra.mxu0 %v34
  %2576 = vmatprep.subr.mxu0 0.0
  %2577 = vmatpush1.msra.mxu0 %v29
  %2578 = vmatprep.subr.mxu0 0.0
  %2579 = vmatpush1.msra.mxu0 %v24
  %2580 = vmatprep.subr.mxu0 0.0
  %2581 = vmatpush2.msra.mxu0 %v179
  %2582 = vmatprep.subr.mxu0 0.0
  %2583 = vmatpush2.msra.mxu0 %v174
  %2584 = vmatprep.subr.mxu0 0.0
  %2585 = vmatpush2.msra.mxu0 %v169
  %2586 = vmatprep.subr.mxu0 0.0
  %2587 = vmatpush2.msra.mxu0 %v164
  %2588 = vmatprep.subr.mxu0 0.0
  %2589 = vmatpush2.msra.mxu0 %v159
  %2590 = vmatprep.subr.mxu0 0.0
  %2591 = vmatpush2.msra.mxu0 %v154
  %2592 = vmatprep.subr.mxu0 0.0
  %2593 = vmatpush2.msra.mxu0 %v149
  %2594 = vmatprep.subr.mxu0 0.0
  %2595 = vmatpush2.msra.mxu0 %v144
  %2596 = vmatprep.subr.mxu0 0.0
  %2597 = vmatpush2.msra.mxu0 %v139
  %2598 = vmatprep.subr.mxu0 0.0
  %2599 = vmatpush2.msra.mxu0 %v134
  %2600 = vmatprep.subr.mxu0 0.0
  %2601 = vmatpush2.msra.mxu0 %v129
  %2602 = vmatprep.subr.mxu0 0.0
  %2603 = vmatpush2.msra.mxu0 %v124
  %2604 = vmatprep.subr.mxu0 0.0
  %2605 = vmatpush2.msra.mxu0 %v119
  %2606 = vmatprep.subr.mxu0 0.0
  %2607 = vmatpush2.msra.mxu0 %v114
  %2608 = vmatprep.subr.mxu0 0.0
  %2609 = vmatpush2.msra.mxu0 %v109
  %2610 = vmatprep.subr.mxu0 0.0
  %2611 = vmatpush2.msra.mxu0 %v104
  %2612 = vmatprep.mubr.f32.mxu0 %v2405
  %2613 = vmatmul.mubr.f32.gmra.mxu0 %v2404
  %v2614 = vpop.f32.mrf.mxu0
  %v2615 = vadd.f32 %v203, %v2614
  %v2616 = vpop.f32.mrf.mxu0
  %2617 = vdwg.mxu0
  %v2618 = vtanh.pop %v2473
  %v2619 = vtanh.pop %v2475
  %v2620 = vtanh.pop %v2544
  %v2621 = vtanh.pop %v2546
  %v2622 = vtanh.pop %v2615
  %s2623 = scalar_lea.vmem %s3, 100
  %v2624 = vld [vmem:[%s2623] sm:$0xff]
  %v2625 = vld [vmem:[%s2623 + $0x8] sm:$0xff]
  %v2626 = vld [vmem:[%s2623 + $0x10] sm:$0xf]
  %v2629 = vcombine.high %v2624, %v2624
  %v2630 = vcombine.high %v2625, %v2625
  %2633 = vmatprep.subr.mxu0 0.0
  %2634 = vmatpush1.xpose.msra.mxu0 0.0
  %2635 = vmatprep.subr.mxu0 0.0
  %2636 = vmatpush1.xpose.msra.mxu0 0.0
  %2637 = vmatprep.subr.mxu0 0.0
  %2638 = vmatpush1.xpose.msra.mxu0 0.0
  %2639 = vmatprep.subr.mxu0 0.0
  %2640 = vmatpush1.xpose.msra.mxu0 0.0
  %2641 = vmatprep.subr.mxu0 0.0
  %2642 = vmatpush1.xpose.msra.mxu0 0.0
  %2643 = vmatprep.subr.mxu0 0.0
  %2644 = vmatpush1.xpose.msra.mxu0 0.0
  %2645 = vmatprep.subr.mxu0 0.0
  %2646 = vmatpush1.xpose.msra.mxu0 0.0
  %2647 = vmatprep.subr.mxu0 0.0
  %2648 = vmatpush1.xpose.msra.mxu0 0.0
  %2649 = vmatprep.subr.mxu0 0.0
  %2650 = vmatpush1.xpose.msra.mxu0 0.0
  %2651 = vmatprep.subr.mxu0 0.0
  %2652 = vmatpush1.xpose.msra.mxu0 0.0
  %2653 = vmatprep.subr.mxu0 0.0
  %2654 = vmatpush1.xpose.msra.mxu0 0.0
  %2655 = vmatprep.subr.mxu0 0.0
  %2656 = vmatpush1.xpose.msra.mxu0 0.0
  %2657 = vmatprep.subr.mxu0 0.0
  %2658 = vmatpush1.xpose.msra.mxu0 0.0
  %2659 = vmatprep.subr.mxu0 0.0
  %2660 = vmatpush1.xpose.msra.mxu0 0.0
  %2661 = vmatprep.subr.mxu0 0.0
  %2662 = vmatpush1.xpose.msra.mxu0 0.0
  %2663 = vmatprep.subr.mxu0 %v2629
  %2664 = vmatpush1.xpose.msra.mxu0 %v2624
  %2665 = vmatprep.subr.mxu0 0.0
  %2666 = vmatpush2.xpose.msra.mxu0 0.0
  %2667 = vmatprep.subr.mxu0 0.0
  %2668 = vmatpush2.xpose.msra.mxu0 0.0
  %2669 = vmatprep.subr.mxu0 0.0
  %2670 = vmatpush2.xpose.msra.mxu0 0.0
  %2671 = vmatprep.subr.mxu0 0.0
  %2672 = vmatpush2.xpose.msra.mxu0 0.0
  %2673 = vmatprep.subr.mxu0 0.0
  %2674 = vmatpush2.xpose.msra.mxu0 0.0
  %2675 = vmatprep.subr.mxu0 0.0
  %2676 = vmatpush2.xpose.msra.mxu0 0.0
  %2677 = vmatprep.subr.mxu0 0.0
  %2678 = vmatpush2.xpose.msra.mxu0 0.0
  %2679 = vmatprep.subr.mxu0 0.0
  %2680 = vmatpush2.xpose.msra.mxu0 0.0
  %2681 = vmatprep.subr.mxu0 0.0
  %2682 = vmatpush2.xpose.msra.mxu0 0.0
  %2683 = vmatprep.subr.mxu0 0.0
  %2684 = vmatpush2.xpose.msra.mxu0 0.0
  %2685 = vmatprep.subr.mxu0 0.0
  %2686 = vmatpush2.xpose.msra.mxu0 0.0
  %2687 = vmatprep.subr.mxu0 0.0
  %2688 = vmatpush2.xpose.msra.mxu0 0.0
  %2689 = vmatprep.subr.mxu0 0.0
  %2690 = vmatpush2.xpose.msra.mxu0 0.0
  %2691 = vmatprep.subr.mxu0 0.0
  %2692 = vmatpush2.xpose.msra.mxu0 0.0
  %2693 = vmatprep.subr.mxu0 0.0
  %2694 = vmatpush2.xpose.msra.mxu0 0.0
  %2695 = vmatprep.subr.mxu0 0.0
  %2696 = vmatpush2.xpose.msra.mxu0 0.0
  %2697 = vmatprep.mubr.f32.mxu0 %v2619
  %2698 = vmatmul.mubr.f32.gmra.mxu0 %v2618
  %v2699 = vpop.f32.mrf.mxu0
  %v2700 = vadd.f32 0.0, %v2699
  %v2701 = vpop.f32.mrf.mxu0
  %2702 = vdwg.mxu0
  %2703 = vmatprep.subr.mxu0 0.0
  %2704 = vmatpush1.xpose.msra.mxu0 0.0
  %2705 = vmatprep.subr.mxu0 0.0
  %2706 = vmatpush1.xpose.msra.mxu0 0.0
  %2707 = vmatprep.subr.mxu0 0.0
  %2708 = vmatpush1.xpose.msra.mxu0 0.0
  %2709 = vmatprep.subr.mxu0 0.0
  %2710 = vmatpush1.xpose.msra.mxu0 0.0
  %2711 = vmatprep.subr.mxu0 0.0
  %2712 = vmatpush1.xpose.msra.mxu0 0.0
  %2713 = vmatprep.subr.mxu0 0.0
  %2714 = vmatpush1.xpose.msra.mxu0 0.0
  %2715 = vmatprep.subr.mxu0 0.0
  %2716 = vmatpush1.xpose.msra.mxu0 0.0
  %2717 = vmatprep.subr.mxu0 0.0
  %2718 = vmatpush1.xpose.msra.mxu0 0.0
  %2719 = vmatprep.subr.mxu0 0.0
  %2720 = vmatpush1.xpose.msra.mxu0 0.0
  %2721 = vmatprep.subr.mxu0 0.0
  %2722 = vmatpush1.xpose.msra.mxu0 0.0
  %2723 = vmatprep.subr.mxu0 0.0
  %2724 = vmatpush1.xpose.msra.mxu0 0.0
  %2725 = vmatprep.subr.mxu0 0.0
  %2726 = vmatpush1.xpose.msra.mxu0 0.0
  %2727 = vmatprep.subr.mxu0 0.0
  %2728 = vmatpush1.xpose.msra.mxu0 0.0
  %2729 = vmatprep.subr.mxu0 0.0
  %2730 = vmatpush1.xpose.msra.mxu0 0.0
  %2731 = vmatprep.subr.mxu0 0.0
  %2732 = vmatpush1.xpose.msra.mxu0 0.0
  %2733 = vmatprep.subr.mxu0 %v2630
  %2734 = vmatpush1.xpose.msra.mxu0 %v2625
  %2735 = vmatprep.subr.mxu0 0.0
  %2736 = vmatpush2.xpose.msra.mxu0 0.0
  %2737 = vmatprep.subr.mxu0 0.0
  %2738 = vmatpush2.xpose.msra.mxu0 0.0
  %2739 = vmatprep.subr.mxu0 0.0
  %2740 = vmatpush2.xpose.msra.mxu0 0.0
  %2741 = vmatprep.subr.mxu0 0.0
  %2742 = vmatpush2.xpose.msra.mxu0 0.0
  %2743 = vmatprep.subr.mxu0 0.0
  %2744 = vmatpush2.xpose.msra.mxu0 0.0
  %2745 = vmatprep.subr.mxu0 0.0
  %2746 = vmatpush2.xpose.msra.mxu0 0.0
  %2747 = vmatprep.subr.mxu0 0.0
  %2748 = vmatpush2.xpose.msra.mxu0 0.0
  %2749 = vmatprep.subr.mxu0 0.0
  %2750 = vmatpush2.xpose.msra.mxu0 0.0
  %2751 = vmatprep.subr.mxu0 0.0
  %2752 = vmatpush2.xpose.msra.mxu0 0.0
  %2753 = vmatprep.subr.mxu0 0.0
  %2754 = vmatpush2.xpose.msra.mxu0 0.0
  %2755 = vmatprep.subr.mxu0 0.0
  %2756 = vmatpush2.xpose.msra.mxu0 0.0
  %2757 = vmatprep.subr.mxu0 0.0
  %2758 = vmatpush2.xpose.msra.mxu0 0.0
  %2759 = vmatprep.subr.mxu0 0.0
  %2760 = vmatpush2.xpose.msra.mxu0 0.0
  %2761 = vmatprep.subr.mxu0 0.0
  %2762 = vmatpush2.xpose.msra.mxu0 0.0
  %2763 = vmatprep.subr.mxu0 0.0
  %2764 = vmatpush2.xpose.msra.mxu0 0.0
  %2765 = vmatprep.subr.mxu0 0.0
  %2766 = vmatpush2.xpose.msra.mxu0 0.0
  %2767 = vmatprep.mubr.f32.mxu0 %v2621
  %2768 = vmatmul.mubr.f32.gmra.mxu0 %v2620
  %v2769 = vpop.f32.mrf.mxu0
  %v2770 = vadd.f32 %v2700, %v2769
  %v2771 = vpop.f32.mrf.mxu0
  %2772 = vdwg.mxu0
  %2773 = vmatprep.subr.mxu0 0.0
  %2774 = vmatpush1.xpose.msra.mxu0 0.0
  %2775 = vmatprep.subr.mxu0 0.0
  %2776 = vmatpush1.xpose.msra.mxu0 0.0
  %2777 = vmatprep.subr.mxu0 0.0
  %2778 = vmatpush1.xpose.msra.mxu0 0.0
  %2779 = vmatprep.subr.mxu0 0.0
  %2780 = vmatpush1.xpose.msra.mxu0 0.0
  %2781 = vmatprep.subr.mxu0 0.0
  %2782 = vmatpush1.xpose.msra.mxu0 0.0
  %2783 = vmatprep.subr.mxu0 0.0
  %2784 = vmatpush1.xpose.msra.mxu0 0.0
  %2785 = vmatprep.subr.mxu0 0.0
  %2786 = vmatpush1.xpose.msra.mxu0 0.0
  %2787 = vmatprep.subr.mxu0 0.0
  %2788 = vmatpush1.xpose.msra.mxu0 0.0
  %2789 = vmatprep.subr.mxu0 0.0
  %2790 = vmatpush1.xpose.msra.mxu0 0.0
  %2791 = vmatprep.subr.mxu0 0.0
  %2792 = vmatpush1.xpose.msra.mxu0 0.0
  %2793 = vmatprep.subr.mxu0 0.0
  %2794 = vmatpush1.xpose.msra.mxu0 0.0
  %2795 = vmatprep.subr.mxu0 0.0
  %2796 = vmatpush1.xpose.msra.mxu0 0.0
  %2797 = vmatprep.subr.mxu0 0.0
  %2798 = vmatpush1.xpose.msra.mxu0 0.0
  %2799 = vmatprep.subr.mxu0 0.0
  %2800 = vmatpush1.xpose.msra.mxu0 0.0
  %2801 = vmatprep.subr.mxu0 0.0
  %2802 = vmatpush1.xpose.msra.mxu0 0.0
  %2803 = vmatprep.subr.mxu0 0.0
  %2804 = vmatpush1.xpose.msra.mxu0 %v2626
  %2805 = vmatprep.subr.mxu0 0.0
  %2806 = vmatpush2.xpose.msra.mxu0 0.0
  %2807 = vmatprep.subr.mxu0 0.0
  %2808 = vmatpush2.xpose.msra.mxu0 0.0
  %2809 = vmatprep.subr.mxu0 0.0
  %2810 = vmatpush2.xpose.msra.mxu0 0.0
  %2811 = vmatprep.subr.mxu0 0.0
  %2812 = vmatpush2.xpose.msra.mxu0 0.0
  %2813 = vmatprep.subr.mxu0 0.0
  %2814 = vmatpush2.xpose.msra.mxu0 0.0
  %2815 = vmatprep.subr.mxu0 0.0
  %2816 = vmatpush2.xpose.msra.mxu0 0.0
  %2817 = vmatprep.subr.mxu0 0.0
  %2818 = vmatpush2.xpose.msra.mxu0 0.0
  %2819 = vmatprep.subr.mxu0 0.0
  %2820 = vmatpush2.xpose.msra.mxu0 0.0
  %2821 = vmatprep.subr.mxu0 0.0
  %2822 = vmatpush2.xpose.msra.mxu0 0.0
  %2823 = vmatprep.subr.mxu0 0.0
  %2824 = vmatpush2.xpose.msra.mxu0 0.0
  %2825 = vmatprep.subr.mxu0 0.0
  %2826 = vmatpush2.xpose.msra.mxu0 0.0
  %2827 = vmatprep.subr.mxu0 0.0
  %2828 = vmatpush2.xpose.msra.mxu0 0.0
  %2829 = vmatprep.subr.mxu0 0.0
  %2830 = vmatpush2.xpose.msra.mxu0 0.0
  %2831 = vmatprep.subr.mxu0 0.0
  %2832 = vmatpush2.xpose.msra.mxu0 0.0
  %2833 = vmatprep.subr.mxu0 0.0
  %2834 = vmatpush2.xpose.msra.mxu0 0.0
  %2835 = vmatprep.subr.mxu0 0.0
  %2836 = vmatpush2.xpose.msra.mxu0 0.0
  %2837 = vmatprep.mubr.f32.mxu0 0.0
  %2838 = vmatmul.mubr.f32.gmra.mxu0 %v2622
  %v2839 = vpop.f32.mrf.mxu0
  %v2840 = vadd.f32 %v2770, %v2839
  %v2841 = vpop.f32.mrf.mxu0
  %2842 = vdwg.mxu0
  %v2843 = vadd.f32 %v2403, %v2840
  %v2844 = vld [vmem:[%s0 + $0x30] sm:$0xff]
  %v2845 = vld [vmem:[%s0 + $0x38] sm:$0xff]
  %2846 = vmatprep.subr.mxu0 %v96
  %2847 = vmatpush1.msra.mxu0 %v95
  %2848 = vmatprep.subr.mxu0 %v91
  %2849 = vmatpush1.msra.mxu0 %v90
  %2850 = vmatprep.subr.mxu0 %v86
  %2851 = vmatpush1.msra.mxu0 %v85
  %2852 = vmatprep.subr.mxu0 %v81
  %2853 = vmatpush1.msra.mxu0 %v80
  %2854 = vmatprep.subr.mxu0 %v76
  %2855 = vmatpush1.msra.mxu0 %v75
  %2856 = vmatprep.subr.mxu0 %v71
  %2857 = vmatpush1.msra.mxu0 %v70
  %2858 = vmatprep.subr.mxu0 %v66
  %2859 = vmatpush1.msra.mxu0 %v65
  %2860 = vmatprep.subr.mxu0 %v61
  %2861 = vmatpush1.msra.mxu0 %v60
  %2862 = vmatprep.subr.mxu0 %v56
  %2863 = vmatpush1.msra.mxu0 %v55
  %2864 = vmatprep.subr.mxu0 %v51
  %2865 = vmatpush1.msra.mxu0 %v50
  %2866 = vmatprep.subr.mxu0 %v46
  %2867 = vmatpush1.msra.mxu0 %v45
  %2868 = vmatprep.subr.mxu0 %v41
  %2869 = vmatpush1.msra.mxu0 %v40
  %2870 = vmatprep.subr.mxu0 %v36
  %2871 = vmatpush1.msra.mxu0 %v35
  %2872 = vmatprep.subr.mxu0 %v31
  %2873 = vmatpush1.msra.mxu0 %v30
  %2874 = vmatprep.subr.mxu0 %v26
  %2875 = vmatpush1.msra.mxu0 %v25
  %2876 = vmatprep.subr.mxu0 %v21
  %2877 = vmatpush1.msra.mxu0 %v20
  %2878 = vmatprep.subr.mxu0 %v176
  %2879 = vmatpush2.msra.mxu0 %v175
  %2880 = vmatprep.subr.mxu0 %v171
  %2881 = vmatpush2.msra.mxu0 %v170
  %2882 = vmatprep.subr.mxu0 %v166
  %2883 = vmatpush2.msra.mxu0 %v165
  %2884 = vmatprep.subr.mxu0 %v161
  %2885 = vmatpush2.msra.mxu0 %v160
  %2886 = vmatprep.subr.mxu0 %v156
  %2887 = vmatpush2.msra.mxu0 %v155
  %2888 = vmatprep.subr.mxu0 %v151
  %2889 = vmatpush2.msra.mxu0 %v150
  %2890 = vmatprep.subr.mxu0 %v146
  %2891 = vmatpush2.msra.mxu0 %v145
  %2892 = vmatprep.subr.mxu0 %v141
  %2893 = vmatpush2.msra.mxu0 %v140
  %2894 = vmatprep.subr.mxu0 %v136
  %2895 = vmatpush2.msra.mxu0 %v135
  %2896 = vmatprep.subr.mxu0 %v131
  %2897 = vmatpush2.msra.mxu0 %v130
  %2898 = vmatprep.subr.mxu0 %v126
  %2899 = vmatpush2.msra.mxu0 %v125
  %2900 = vmatprep.subr.mxu0 %v121
  %2901 = vmatpush2.msra.mxu0 %v120
  %2902 = vmatprep.subr.mxu0 %v116
  %2903 = vmatpush2.msra.mxu0 %v115
  %2904 = vmatprep.subr.mxu0 %v111
  %2905 = vmatpush2.msra.mxu0 %v110
  %2906 = vmatprep.subr.mxu0 %v106
  %2907 = vmatpush2.msra.mxu0 %v105
  %2908 = vmatprep.subr.mxu0 %v101
  %2909 = vmatpush2.msra.mxu0 %v100
  %2910 = vmatprep.mubr.f32.mxu0 %v2845
  %2911 = vmatmul.mubr.f32.gmra.mxu0 %v2844
  %v2912 = vpop.f32.mrf.mxu0
  %v2913 = vadd.f32 %v187, %v2912
  %v2914 = vpop.f32.mrf.mxu0
  %v2915 = vadd.f32 %v191, %v2914
  %2916 = vdwg.mxu0
  %2917 = vmatprep.subr.mxu0 %v98
  %2918 = vmatpush1.msra.mxu0 %v97
  %2919 = vmatprep.subr.mxu0 %v93
  %2920 = vmatpush1.msra.mxu0 %v92
  %2921 = vmatprep.subr.mxu0 %v88
  %2922 = vmatpush1.msra.mxu0 %v87
  %2923 = vmatprep.subr.mxu0 %v83
  %2924 = vmatpush1.msra.mxu0 %v82
  %2925 = vmatprep.subr.mxu0 %v78
  %2926 = vmatpush1.msra.mxu0 %v77
  %2927 = vmatprep.subr.mxu0 %v73
  %2928 = vmatpush1.msra.mxu0 %v72
  %2929 = vmatprep.subr.mxu0 %v68
  %2930 = vmatpush1.msra.mxu0 %v67
  %2931 = vmatprep.subr.mxu0 %v63
  %2932 = vmatpush1.msra.mxu0 %v62
  %2933 = vmatprep.subr.mxu0 %v58
  %2934 = vmatpush1.msra.mxu0 %v57
  %2935 = vmatprep.subr.mxu0 %v53
  %2936 = vmatpush1.msra.mxu0 %v52
  %2937 = vmatprep.subr.mxu0 %v48
  %2938 = vmatpush1.msra.mxu0 %v47
  %2939 = vmatprep.subr.mxu0 %v43
  %2940 = vmatpush1.msra.mxu0 %v42
  %2941 = vmatprep.subr.mxu0 %v38
  %2942 = vmatpush1.msra.mxu0 %v37
  %2943 = vmatprep.subr.mxu0 %v33
  %2944 = vmatpush1.msra.mxu0 %v32
  %2945 = vmatprep.subr.mxu0 %v28
  %2946 = vmatpush1.msra.mxu0 %v27
  %2947 = vmatprep.subr.mxu0 %v23
  %2948 = vmatpush1.msra.mxu0 %v22
  %2949 = vmatprep.subr.mxu0 %v178
  %2950 = vmatpush2.msra.mxu0 %v177
  %2951 = vmatprep.subr.mxu0 %v173
  %2952 = vmatpush2.msra.mxu0 %v172
  %2953 = vmatprep.subr.mxu0 %v168
  %2954 = vmatpush2.msra.mxu0 %v167
  %2955 = vmatprep.subr.mxu0 %v163
  %2956 = vmatpush2.msra.mxu0 %v162
  %2957 = vmatprep.subr.mxu0 %v158
  %2958 = vmatpush2.msra.mxu0 %v157
  %2959 = vmatprep.subr.mxu0 %v153
  %2960 = vmatpush2.msra.mxu0 %v152
  %2961 = vmatprep.subr.mxu0 %v148
  %2962 = vmatpush2.msra.mxu0 %v147
  %2963 = vmatprep.subr.mxu0 %v143
  %2964 = vmatpush2.msra.mxu0 %v142
  %2965 = vmatprep.subr.mxu0 %v138
  %2966 = vmatpush2.msra.mxu0 %v137
  %2967 = vmatprep.subr.mxu0 %v133
  %2968 = vmatpush2.msra.mxu0 %v132
  %2969 = vmatprep.subr.mxu0 %v128
  %2970 = vmatpush2.msra.mxu0 %v127
  %2971 = vmatprep.subr.mxu0 %v123
  %2972 = vmatpush2.msra.mxu0 %v122
  %2973 = vmatprep.subr.mxu0 %v118
  %2974 = vmatpush2.msra.mxu0 %v117
  %2975 = vmatprep.subr.mxu0 %v113
  %2976 = vmatpush2.msra.mxu0 %v112
  %2977 = vmatprep.subr.mxu0 %v108
  %2978 = vmatpush2.msra.mxu0 %v107
  %2979 = vmatprep.subr.mxu0 %v103
  %2980 = vmatpush2.msra.mxu0 %v102
  %2981 = vmatprep.mubr.f32.mxu0 %v2845
  %2982 = vmatmul.mubr.f32.gmra.mxu0 %v2844
  %v2983 = vpop.f32.mrf.mxu0
  %v2984 = vadd.f32 %v195, %v2983
  %v2985 = vpop.f32.mrf.mxu0
  %v2986 = vadd.f32 %v199, %v2985
  %2987 = vdwg.mxu0
  %2988 = vmatprep.subr.mxu0 0.0
  %2989 = vmatpush1.msra.mxu0 %v99
  %2990 = vmatprep.subr.mxu0 0.0
  %2991 = vmatpush1.msra.mxu0 %v94
  %2992 = vmatprep.subr.mxu0 0.0
  %2993 = vmatpush1.msra.mxu0 %v89
  %2994 = vmatprep.subr.mxu0 0.0
  %2995 = vmatpush1.msra.mxu0 %v84
  %2996 = vmatprep.subr.mxu0 0.0
  %2997 = vmatpush1.msra.mxu0 %v79
  %2998 = vmatprep.subr.mxu0 0.0
  %2999 = vmatpush1.msra.mxu0 %v74
  %3000 = vmatprep.subr.mxu0 0.0
  %3001 = vmatpush1.msra.mxu0 %v69
  %3002 = vmatprep.subr.mxu0 0.0
  %3003 = vmatpush1.msra.mxu0 %v64
  %3004 = vmatprep.subr.mxu0 0.0
  %3005 = vmatpush1.msra.mxu0 %v59
  %3006 = vmatprep.subr.mxu0 0.0
  %3007 = vmatpush1.msra.mxu0 %v54
  %3008 = vmatprep.subr.mxu0 0.0
  %3009 = vmatpush1.msra.mxu0 %v49
  %3010 = vmatprep.subr.mxu0 0.0
  %3011 = vmatpush1.msra.mxu0 %v44
  %3012 = vmatprep.subr.mxu0 0.0
  %3013 = vmatpush1.msra.mxu0 %v39
  %3014 = vmatprep.subr.mxu0 0.0
  %3015 = vmatpush1.msra.mxu0 %v34
  %3016 = vmatprep.subr.mxu0 0.0
  %3017 = vmatpush1.msra.mxu0 %v29
  %3018 = vmatprep.subr.mxu0 0.0
  %3019 = vmatpush1.msra.mxu0 %v24
  %3020 = vmatprep.subr.mxu0 0.0
  %3021 = vmatpush2.msra.mxu0 %v179
  %3022 = vmatprep.subr.mxu0 0.0
  %3023 = vmatpush2.msra.mxu0 %v174
  %3024 = vmatprep.subr.mxu0 0.0
  %3025 = vmatpush2.msra.mxu0 %v169
  %3026 = vmatprep.subr.mxu0 0.0
  %3027 = vmatpush2.msra.mxu0 %v164
  %3028 = vmatprep.subr.mxu0 0.0
  %3029 = vmatpush2.msra.mxu0 %v159
  %3030 = vmatprep.subr.mxu0 0.0
  %3031 = vmatpush2.msra.mxu0 %v154
  %3032 = vmatprep.subr.mxu0 0.0
  %3033 = vmatpush2.msra.mxu0 %v149
  %3034 = vmatprep.subr.mxu0 0.0
  %3035 = vmatpush2.msra.mxu0 %v144
  %3036 = vmatprep.subr.mxu0 0.0
  %3037 = vmatpush2.msra.mxu0 %v139
  %3038 = vmatprep.subr.mxu0 0.0
  %3039 = vmatpush2.msra.mxu0 %v134
  %3040 = vmatprep.subr.mxu0 0.0
  %3041 = vmatpush2.msra.mxu0 %v129
  %3042 = vmatprep.subr.mxu0 0.0
  %3043 = vmatpush2.msra.mxu0 %v124
  %3044 = vmatprep.subr.mxu0 0.0
  %3045 = vmatpush2.msra.mxu0 %v119
  %3046 = vmatprep.subr.mxu0 0.0
  %3047 = vmatpush2.msra.mxu0 %v114
  %3048 = vmatprep.subr.mxu0 0.0
  %3049 = vmatpush2.msra.mxu0 %v109
  %3050 = vmatprep.subr.mxu0 0.0
  %3051 = vmatpush2.msra.mxu0 %v104
  %3052 = vmatprep.mubr.f32.mxu0 %v2845
  %3053 = vmatmul.mubr.f32.gmra.mxu0 %v2844
  %v3054 = vpop.f32.mrf.mxu0
  %v3055 = vadd.f32 %v203, %v3054
  %v3056 = vpop.f32.mrf.mxu0
  %3057 = vdwg.mxu0
  %v3058 = vtanh.pop %v2913
  %v3059 = vtanh.pop %v2915
  %v3060 = vtanh.pop %v2984
  %v3061 = vtanh.pop %v2986
  %v3062 = vtanh.pop %v3055
  %s3063 = scalar_lea.vmem %s3, 120
  %v3064 = vld [vmem:[%s3063] sm:$0xff]
  %v3065 = vld [vmem:[%s3063 + $0x8] sm:$0xff]
  %v3066 = vld [vmem:[%s3063 + $0x10] sm:$0xf]
  %v3069 = vcombine.high %v3064, %v3064
  %v3070 = vcombine.high %v3065, %v3065
  %3073 = vmatprep.subr.mxu0 0.0
  %3074 = vmatpush1.xpose.msra.mxu0 0.0
  %3075 = vmatprep.subr.mxu0 0.0
  %3076 = vmatpush1.xpose.msra.mxu0 0.0
  %3077 = vmatprep.subr.mxu0 0.0
  %3078 = vmatpush1.xpose.msra.mxu0 0.0
  %3079 = vmatprep.subr.mxu0 0.0
  %3080 = vmatpush1.xpose.msra.mxu0 0.0
  %3081 = vmatprep.subr.mxu0 0.0
  %3082 = vmatpush1.xpose.msra.mxu0 0.0
  %3083 = vmatprep.subr.mxu0 0.0
  %3084 = vmatpush1.xpose.msra.mxu0 0.0
  %3085 = vmatprep.subr.mxu0 0.0
  %3086 = vmatpush1.xpose.msra.mxu0 0.0
  %3087 = vmatprep.subr.mxu0 0.0
  %3088 = vmatpush1.xpose.msra.mxu0 0.0
  %3089 = vmatprep.subr.mxu0 0.0
  %3090 = vmatpush1.xpose.msra.mxu0 0.0
  %3091 = vmatprep.subr.mxu0 0.0
  %3092 = vmatpush1.xpose.msra.mxu0 0.0
  %3093 = vmatprep.subr.mxu0 0.0
  %3094 = vmatpush1.xpose.msra.mxu0 0.0
  %3095 = vmatprep.subr.mxu0 0.0
  %3096 = vmatpush1.xpose.msra.mxu0 0.0
  %3097 = vmatprep.subr.mxu0 0.0
  %3098 = vmatpush1.xpose.msra.mxu0 0.0
  %3099 = vmatprep.subr.mxu0 0.0
  %3100 = vmatpush1.xpose.msra.mxu0 0.0
  %3101 = vmatprep.subr.mxu0 0.0
  %3102 = vmatpush1.xpose.msra.mxu0 0.0
  %3103 = vmatprep.subr.mxu0 %v3069
  %3104 = vmatpush1.xpose.msra.mxu0 %v3064
  %3105 = vmatprep.subr.mxu0 0.0
  %3106 = vmatpush2.xpose.msra.mxu0 0.0
  %3107 = vmatprep.subr.mxu0 0.0
  %3108 = vmatpush2.xpose.msra.mxu0 0.0
  %3109 = vmatprep.subr.mxu0 0.0
  %3110 = vmatpush2.xpose.msra.mxu0 0.0
  %3111 = vmatprep.subr.mxu0 0.0
  %3112 = vmatpush2.xpose.msra.mxu0 0.0
  %3113 = vmatprep.subr.mxu0 0.0
  %3114 = vmatpush2.xpose.msra.mxu0 0.0
  %3115 = vmatprep.subr.mxu0 0.0
  %3116 = vmatpush2.xpose.msra.mxu0 0.0
  %3117 = vmatprep.subr.mxu0 0.0
  %3118 = vmatpush2.xpose.msra.mxu0 0.0
  %3119 = vmatprep.subr.mxu0 0.0
  %3120 = vmatpush2.xpose.msra.mxu0 0.0
  %3121 = vmatprep.subr.mxu0 0.0
  %3122 = vmatpush2.xpose.msra.mxu0 0.0
  %3123 = vmatprep.subr.mxu0 0.0
  %3124 = vmatpush2.xpose.msra.mxu0 0.0
  %3125 = vmatprep.subr.mxu0 0.0
  %3126 = vmatpush2.xpose.msra.mxu0 0.0
  %3127 = vmatprep.subr.mxu0 0.0
  %3128 = vmatpush2.xpose.msra.mxu0 0.0
  %3129 = vmatprep.subr.mxu0 0.0
  %3130 = vmatpush2.xpose.msra.mxu0 0.0
  %3131 = vmatprep.subr.mxu0 0.0
  %3132 = vmatpush2.xpose.msra.mxu0 0.0
  %3133 = vmatprep.subr.mxu0 0.0
  %3134 = vmatpush2.xpose.msra.mxu0 0.0
  %3135 = vmatprep.subr.mxu0 0.0
  %3136 = vmatpush2.xpose.msra.mxu0 0.0
  %3137 = vmatprep.mubr.f32.mxu0 %v3059
  %3138 = vmatmul.mubr.f32.gmra.mxu0 %v3058
  %v3139 = vpop.f32.mrf.mxu0
  %v3140 = vadd.f32 0.0, %v3139
  %v3141 = vpop.f32.mrf.mxu0
  %3142 = vdwg.mxu0
  %3143 = vmatprep.subr.mxu0 0.0
  %3144 = vmatpush1.xpose.msra.mxu0 0.0
  %3145 = vmatprep.subr.mxu0 0.0
  %3146 = vmatpush1.xpose.msra.mxu0 0.0
  %3147 = vmatprep.subr.mxu0 0.0
  %3148 = vmatpush1.xpose.msra.mxu0 0.0
  %3149 = vmatprep.subr.mxu0 0.0
  %3150 = vmatpush1.xpose.msra.mxu0 0.0
  %3151 = vmatprep.subr.mxu0 0.0
  %3152 = vmatpush1.xpose.msra.mxu0 0.0
  %3153 = vmatprep.subr.mxu0 0.0
  %3154 = vmatpush1.xpose.msra.mxu0 0.0
  %3155 = vmatprep.subr.mxu0 0.0
  %3156 = vmatpush1.xpose.msra.mxu0 0.0
  %3157 = vmatprep.subr.mxu0 0.0
  %3158 = vmatpush1.xpose.msra.mxu0 0.0
  %3159 = vmatprep.subr.mxu0 0.0
  %3160 = vmatpush1.xpose.msra.mxu0 0.0
  %3161 = vmatprep.subr.mxu0 0.0
  %3162 = vmatpush1.xpose.msra.mxu0 0.0
  %3163 = vmatprep.subr.mxu0 0.0
  %3164 = vmatpush1.xpose.msra.mxu0 0.0
  %3165 = vmatprep.subr.mxu0 0.0
  %3166 = vmatpush1.xpose.msra.mxu0 0.0
  %3167 = vmatprep.subr.mxu0 0.0
  %3168 = vmatpush1.xpose.msra.mxu0 0.0
  %3169 = vmatprep.subr.mxu0 0.0
  %3170 = vmatpush1.xpose.msra.mxu0 0.0
  %3171 = vmatprep.subr.mxu0 0.0
  %3172 = vmatpush1.xpose.msra.mxu0 0.0
  %3173 = vmatprep.subr.mxu0 %v3070
  %3174 = vmatpush1.xpose.msra.mxu0 %v3065
  %3175 = vmatprep.subr.mxu0 0.0
  %3176 = vmatpush2.xpose.msra.mxu0 0.0
  %3177 = vmatprep.subr.mxu0 0.0
  %3178 = vmatpush2.xpose.msra.mxu0 0.0
  %3179 = vmatprep.subr.mxu0 0.0
  %3180 = vmatpush2.xpose.msra.mxu0 0.0
  %3181 = vmatprep.subr.mxu0 0.0
  %3182 = vmatpush2.xpose.msra.mxu0 0.0
  %3183 = vmatprep.subr.mxu0 0.0
  %3184 = vmatpush2.xpose.msra.mxu0 0.0
  %3185 = vmatprep.subr.mxu0 0.0
  %3186 = vmatpush2.xpose.msra.mxu0 0.0
  %3187 = vmatprep.subr.mxu0 0.0
  %3188 = vmatpush2.xpose.msra.mxu0 0.0
  %3189 = vmatprep.subr.mxu0 0.0
  %3190 = vmatpush2.xpose.msra.mxu0 0.0
  %3191 = vmatprep.subr.mxu0 0.0
  %3192 = vmatpush2.xpose.msra.mxu0 0.0
  %3193 = vmatprep.subr.mxu0 0.0
  %3194 = vmatpush2.xpose.msra.mxu0 0.0
  %3195 = vmatprep.subr.mxu0 0.0
  %3196 = vmatpush2.xpose.msra.mxu0 0.0
  %3197 = vmatprep.subr.mxu0 0.0
  %3198 = vmatpush2.xpose.msra.mxu0 0.0
  %3199 = vmatprep.subr.mxu0 0.0
  %3200 = vmatpush2.xpose.msra.mxu0 0.0
  %3201 = vmatprep.subr.mxu0 0.0
  %3202 = vmatpush2.xpose.msra.mxu0 0.0
  %3203 = vmatprep.subr.mxu0 0.0
  %3204 = vmatpush2.xpose.msra.mxu0 0.0
  %3205 = vmatprep.subr.mxu0 0.0
  %3206 = vmatpush2.xpose.msra.mxu0 0.0
  %3207 = vmatprep.mubr.f32.mxu0 %v3061
  %3208 = vmatmul.mubr.f32.gmra.mxu0 %v3060
  %v3209 = vpop.f32.mrf.mxu0
  %v3210 = vadd.f32 %v3140, %v3209
  %v3211 = vpop.f32.mrf.mxu0
  %3212 = vdwg.mxu0
  %3213 = vmatprep.subr.mxu0 0.0
  %3214 = vmatpush1.xpose.msra.mxu0 0.0
  %3215 = vmatprep.subr.mxu0 0.0
  %3216 = vmatpush1.xpose.msra.mxu0 0.0
  %3217 = vmatprep.subr.mxu0 0.0
  %3218 = vmatpush1.xpose.msra.mxu0 0.0
  %3219 = vmatprep.subr.mxu0 0.0
  %3220 = vmatpush1.xpose.msra.mxu0 0.0
  %3221 = vmatprep.subr.mxu0 0.0
  %3222 = vmatpush1.xpose.msra.mxu0 0.0
  %3223 = vmatprep.subr.mxu0 0.0
  %3224 = vmatpush1.xpose.msra.mxu0 0.0
  %3225 = vmatprep.subr.mxu0 0.0
  %3226 = vmatpush1.xpose.msra.mxu0 0.0
  %3227 = vmatprep.subr.mxu0 0.0
  %3228 = vmatpush1.xpose.msra.mxu0 0.0
  %3229 = vmatprep.subr.mxu0 0.0
  %3230 = vmatpush1.xpose.msra.mxu0 0.0
  %3231 = vmatprep.subr.mxu0 0.0
  %3232 = vmatpush1.xpose.msra.mxu0 0.0
  %3233 = vmatprep.subr.mxu0 0.0
  %3234 = vmatpush1.xpose.msra.mxu0 0.0
  %3235 = vmatprep.subr.mxu0 0.0
  %3236 = vmatpush1.xpose.msra.mxu0 0.0
  %3237 = vmatprep.subr.mxu0 0.0
  %3238 = vmatpush1.xpose.msra.mxu0 0.0
  %3239 = vmatprep.subr.mxu0 0.0
  %3240 = vmatpush1.xpose.msra.mxu0 0.0
  %3241 = vmatprep.subr.mxu0 0.0
  %3242 = vmatpush1.xpose.msra.mxu0 0.0
  %3243 = vmatprep.subr.mxu0 0.0
  %3244 = vmatpush1.xpose.msra.mxu0 %v3066
  %3245 = vmatprep.subr.mxu0 0.0
  %3246 = vmatpush2.xpose.msra.mxu0 0.0
  %3247 = vmatprep.subr.mxu0 0.0
  %3248 = vmatpush2.xpose.msra.mxu0 0.0
  %3249 = vmatprep.subr.mxu0 0.0
  %3250 = vmatpush2.xpose.msra.mxu0 0.0
  %3251 = vmatprep.subr.mxu0 0.0
  %3252 = vmatpush2.xpose.msra.mxu0 0.0
  %3253 = vmatprep.subr.mxu0 0.0
  %3254 = vmatpush2.xpose.msra.mxu0 0.0
  %3255 = vmatprep.subr.mxu0 0.0
  %3256 = vmatpush2.xpose.msra.mxu0 0.0
  %3257 = vmatprep.subr.mxu0 0.0
  %3258 = vmatpush2.xpose.msra.mxu0 0.0
  %3259 = vmatprep.subr.mxu0 0.0
  %3260 = vmatpush2.xpose.msra.mxu0 0.0
  %3261 = vmatprep.subr.mxu0 0.0
  %3262 = vmatpush2.xpose.msra.mxu0 0.0
  %3263 = vmatprep.subr.mxu0 0.0
  %3264 = vmatpush2.xpose.msra.mxu0 0.0
  %3265 = vmatprep.subr.mxu0 0.0
  %3266 = vmatpush2.xpose.msra.mxu0 0.0
  %3267 = vmatprep.subr.mxu0 0.0
  %3268 = vmatpush2.xpose.msra.mxu0 0.0
  %3269 = vmatprep.subr.mxu0 0.0
  %3270 = vmatpush2.xpose.msra.mxu0 0.0
  %3271 = vmatprep.subr.mxu0 0.0
  %3272 = vmatpush2.xpose.msra.mxu0 0.0
  %3273 = vmatprep.subr.mxu0 0.0
  %3274 = vmatpush2.xpose.msra.mxu0 0.0
  %3275 = vmatprep.subr.mxu0 0.0
  %3276 = vmatpush2.xpose.msra.mxu0 0.0
  %3277 = vmatprep.mubr.f32.mxu0 0.0
  %3278 = vmatmul.mubr.f32.gmra.mxu0 %v3062
  %v3279 = vpop.f32.mrf.mxu0
  %v3280 = vadd.f32 %v3210, %v3279
  %v3281 = vpop.f32.mrf.mxu0
  %3282 = vdwg.mxu0
  %v3283 = vadd.f32 %v2843, %v3280
  %v3284 = vld [vmem:[%s0 + $0x38] sm:$0xff]
  %v3285 = vld [vmem:[%s0 + $0x40] sm:$0xff]
  %3286 = vmatprep.subr.mxu0 %v96
  %3287 = vmatpush1.msra.mxu0 %v95
  %3288 = vmatprep.subr.mxu0 %v91
  %3289 = vmatpush1.msra.mxu0 %v90
  %3290 = vmatprep.subr.mxu0 %v86
  %3291 = vmatpush1.msra.mxu0 %v85
  %3292 = vmatprep.subr.mxu0 %v81
  %3293 = vmatpush1.msra.mxu0 %v80
  %3294 = vmatprep.subr.mxu0 %v76
  %3295 = vmatpush1.msra.mxu0 %v75
  %3296 = vmatprep.subr.mxu0 %v71
  %3297 = vmatpush1.msra.mxu0 %v70
  %3298 = vmatprep.subr.mxu0 %v66
  %3299 = vmatpush1.msra.mxu0 %v65
  %3300 = vmatprep.subr.mxu0 %v61
  %3301 = vmatpush1.msra.mxu0 %v60
  %3302 = vmatprep.subr.mxu0 %v56
  %3303 = vmatpush1.msra.mxu0 %v55
  %3304 = vmatprep.subr.mxu0 %v51
  %3305 = vmatpush1.msra.mxu0 %v50
  %3306 = vmatprep.subr.mxu0 %v46
  %3307 = vmatpush1.msra.mxu0 %v45
  %3308 = vmatprep.subr.mxu0 %v41
  %3309 = vmatpush1.msra.mxu0 %v40
  %3310 = vmatprep.subr.mxu0 %v36
  %3311 = vmatpush1.msra.mxu0 %v35
  %3312 = vmatprep.subr.mxu0 %v31
  %3313 = vmatpush1.msra.mxu0 %v30
  %3314 = vmatprep.subr.mxu0 %v26
  %3315 = vmatpush1.msra.mxu0 %v25
  %3316 = vmatprep.subr.mxu0 %v21
  %3317 = vmatpush1.msra.mxu0 %v20
  %3318 = vmatprep.subr.mxu0 %v176
  %3319 = vmatpush2.msra.mxu0 %v175
  %3320 = vmatprep.subr.mxu0 %v171
  %3321 = vmatpush2.msra.mxu0 %v170
  %3322 = vmatprep.subr.mxu0 %v166
  %3323 = vmatpush2.msra.mxu0 %v165
  %3324 = vmatprep.subr.mxu0 %v161
  %3325 = vmatpush2.msra.mxu0 %v160
  %3326 = vmatprep.subr.mxu0 %v156
  %3327 = vmatpush2.msra.mxu0 %v155
  %3328 = vmatprep.subr.mxu0 %v151
  %3329 = vmatpush2.msra.mxu0 %v150
  %3330 = vmatprep.subr.mxu0 %v146
  %3331 = vmatpush2.msra.mxu0 %v145
  %3332 = vmatprep.subr.mxu0 %v141
  %3333 = vmatpush2.msra.mxu0 %v140
  %3334 = vmatprep.subr.mxu0 %v136
  %3335 = vmatpush2.msra.mxu0 %v135
  %3336 = vmatprep.subr.mxu0 %v131
  %3337 = vmatpush2.msra.mxu0 %v130
  %3338 = vmatprep.subr.mxu0 %v126
  %3339 = vmatpush2.msra.mxu0 %v125
  %3340 = vmatprep.subr.mxu0 %v121
  %3341 = vmatpush2.msra.mxu0 %v120
  %3342 = vmatprep.subr.mxu0 %v116
  %3343 = vmatpush2.msra.mxu0 %v115
  %3344 = vmatprep.subr.mxu0 %v111
  %3345 = vmatpush2.msra.mxu0 %v110
  %3346 = vmatprep.subr.mxu0 %v106
  %3347 = vmatpush2.msra.mxu0 %v105
  %3348 = vmatprep.subr.mxu0 %v101
  %3349 = vmatpush2.msra.mxu0 %v100
  %3350 = vmatprep.mubr.f32.mxu0 %v3285
  %3351 = vmatmul.mubr.f32.gmra.mxu0 %v3284
  %v3352 = vpop.f32.mrf.mxu0
  %v3353 = vadd.f32 %v187, %v3352
  %v3354 = vpop.f32.mrf.mxu0
  %v3355 = vadd.f32 %v191, %v3354
  %3356 = vdwg.mxu0
  %3357 = vmatprep.subr.mxu0 %v98
  %3358 = vmatpush1.msra.mxu0 %v97
  %3359 = vmatprep.subr.mxu0 %v93
  %3360 = vmatpush1.msra.mxu0 %v92
  %3361 = vmatprep.subr.mxu0 %v88
  %3362 = vmatpush1.msra.mxu0 %v87
  %3363 = vmatprep.subr.mxu0 %v83
  %3364 = vmatpush1.msra.mxu0 %v82
  %3365 = vmatprep.subr.mxu0 %v78
  %3366 = vmatpush1.msra.mxu0 %v77
  %3367 = vmatprep.subr.mxu0 %v73
  %3368 = vmatpush1.msra.mxu0 %v72
  %3369 = vmatprep.subr.mxu0 %v68
  %3370 = vmatpush1.msra.mxu0 %v67
  %3371 = vmatprep.subr.mxu0 %v63
  %3372 = vmatpush1.msra.mxu0 %v62
  %3373 = vmatprep.subr.mxu0 %v58
  %3374 = vmatpush1.msra.mxu0 %v57
  %3375 = vmatprep.subr.mxu0 %v53
  %3376 = vmatpush1.msra.mxu0 %v52
  %3377 = vmatprep.subr.mxu0 %v48
  %3378 = vmatpush1.msra.mxu0 %v47
  %3379 = vmatprep.subr.mxu0 %v43
  %3380 = vmatpush1.msra.mxu0 %v42
  %3381 = vmatprep.subr.mxu0 %v38
  %3382 = vmatpush1.msra.mxu0 %v37
  %3383 = vmatprep.subr.mxu0 %v33
  %3384 = vmatpush1.msra.mxu0 %v32
  %3385 = vmatprep.subr.mxu0 %v28
  %3386 = vmatpush1.msra.mxu0 %v27
  %3387 = vmatprep.subr.mxu0 %v23
  %3388 = vmatpush1.msra.mxu0 %v22
  %3389 = vmatprep.subr.mxu0 %v178
  %3390 = vmatpush2.msra.mxu0 %v177
  %3391 = vmatprep.subr.mxu0 %v173
  %3392 = vmatpush2.msra.mxu0 %v172
  %3393 = vmatprep.subr.mxu0 %v168
  %3394 = vmatpush2.msra.mxu0 %v167
  %3395 = vmatprep.subr.mxu0 %v163
  %3396 = vmatpush2.msra.mxu0 %v162
  %3397 = vmatprep.subr.mxu0 %v158
  %3398 = vmatpush2.msra.mxu0 %v157
  %3399 = vmatprep.subr.mxu0 %v153
  %3400 = vmatpush2.msra.mxu0 %v152
  %3401 = vmatprep.subr.mxu0 %v148
  %3402 = vmatpush2.msra.mxu0 %v147
  %3403 = vmatprep.subr.mxu0 %v143
  %3404 = vmatpush2.msra.mxu0 %v142
  %3405 = vmatprep.subr.mxu0 %v138
  %3406 = vmatpush2.msra.mxu0 %v137
  %3407 = vmatprep.subr.mxu0 %v133
  %3408 = vmatpush2.msra.mxu0 %v132
  %3409 = vmatprep.subr.mxu0 %v128
  %3410 = vmatpush2.msra.mxu0 %v127
  %3411 = vmatprep.subr.mxu0 %v123
  %3412 = vmatpush2.msra.mxu0 %v122
  %3413 = vmatprep.subr.mxu0 %v118
  %3414 = vmatpush2.msra.mxu0 %v117
  %3415 = vmatprep.subr.mxu0 %v113
  %3416 = vmatpush2.msra.mxu0 %v112
  %3417 = vmatprep.subr.mxu0 %v108
  %3418 = vmatpush2.msra.mxu0 %v107
  %3419 = vmatprep.subr.mxu0 %v103
  %3420 = vmatpush2.msra.mxu0 %v102
  %3421 = vmatprep.mubr.f32.mxu0 %v3285
  %3422 = vmatmul.mubr.f32.gmra.mxu0 %v3284
  %v3423 = vpop.f32.mrf.mxu0
  %v3424 = vadd.f32 %v195, %v3423
  %v3425 = vpop.f32.mrf.mxu0
  %v3426 = vadd.f32 %v199, %v3425
  %3427 = vdwg.mxu0
  %3428 = vmatprep.subr.mxu0 0.0
  %3429 = vmatpush1.msra.mxu0 %v99
  %3430 = vmatprep.subr.mxu0 0.0
  %3431 = vmatpush1.msra.mxu0 %v94
  %3432 = vmatprep.subr.mxu0 0.0
  %3433 = vmatpush1.msra.mxu0 %v89
  %3434 = vmatprep.subr.mxu0 0.0
  %3435 = vmatpush1.msra.mxu0 %v84
  %3436 = vmatprep.subr.mxu0 0.0
  %3437 = vmatpush1.msra.mxu0 %v79
  %3438 = vmatprep.subr.mxu0 0.0
  %3439 = vmatpush1.msra.mxu0 %v74
  %3440 = vmatprep.subr.mxu0 0.0
  %3441 = vmatpush1.msra.mxu0 %v69
  %3442 = vmatprep.subr.mxu0 0.0
  %3443 = vmatpush1.msra.mxu0 %v64
  %3444 = vmatprep.subr.mxu0 0.0
  %3445 = vmatpush1.msra.mxu0 %v59
  %3446 = vmatprep.subr.mxu0 0.0
  %3447 = vmatpush1.msra.mxu0 %v54
  %3448 = vmatprep.subr.mxu0 0.0
  %3449 = vmatpush1.msra.mxu0 %v49
  %3450 = vmatprep.subr.mxu0 0.0
  %3451 = vmatpush1.msra.mxu0 %v44
  %3452 = vmatprep.subr.mxu0 0.0
  %3453 = vmatpush1.msra.mxu0 %v39
  %3454 = vmatprep.subr.mxu0 0.0
  %3455 = vmatpush1.msra.mxu0 %v34
  %3456 = vmatprep.subr.mxu0 0.0
  %3457 = vmatpush1.msra.mxu0 %v29
  %3458 = vmatprep.subr.mxu0 0.0
  %3459 = vmatpush1.msra.mxu0 %v24
  %3460 = vmatprep.subr.mxu0 0.0
  %3461 = vmatpush2.msra.mxu0 %v179
  %3462 = vmatprep.subr.mxu0 0.0
  %3463 = vmatpush2.msra.mxu0 %v174
  %3464 = vmatprep.subr.mxu0 0.0
  %3465 = vmatpush2.msra.mxu0 %v169
  %3466 = vmatprep.subr.mxu0 0.0
  %3467 = vmatpush2.msra.mxu0 %v164
  %3468 = vmatprep.subr.mxu0 0.0
  %3469 = vmatpush2.msra.mxu0 %v159
  %3470 = vmatprep.subr.mxu0 0.0
  %3471 = vmatpush2.msra.mxu0 %v154
  %3472 = vmatprep.subr.mxu0 0.0
  %3473 = vmatpush2.msra.mxu0 %v149
  %3474 = vmatprep.subr.mxu0 0.0
  %3475 = vmatpush2.msra.mxu0 %v144
  %3476 = vmatprep.subr.mxu0 0.0
  %3477 = vmatpush2.msra.mxu0 %v139
  %3478 = vmatprep.subr.mxu0 0.0
  %3479 = vmatpush2.msra.mxu0 %v134
  %3480 = vmatprep.subr.mxu0 0.0
  %3481 = vmatpush2.msra.mxu0 %v129
  %3482 = vmatprep.subr.mxu0 0.0
  %3483 = vmatpush2.msra.mxu0 %v124
  %3484 = vmatprep.subr.mxu0 0.0
  %3485 = vmatpush2.msra.mxu0 %v119
  %3486 = vmatprep.subr.mxu0 0.0
  %3487 = vmatpush2.msra.mxu0 %v114
  %3488 = vmatprep.subr.mxu0 0.0
  %3489 = vmatpush2.msra.mxu0 %v109
  %3490 = vmatprep.subr.mxu0 0.0
  %3491 = vmatpush2.msra.mxu0 %v104
  %3492 = vmatprep.mubr.f32.mxu0 %v3285
  %3493 = vmatmul.mubr.f32.gmra.mxu0 %v3284
  %v3494 = vpop.f32.mrf.mxu0
  %v3495 = vadd.f32 %v203, %v3494
  %v3496 = vpop.f32.mrf.mxu0
  %3497 = vdwg.mxu0
  %v3498 = vtanh.pop %v3353
  %v3499 = vtanh.pop %v3355
  %v3500 = vtanh.pop %v3424
  %v3501 = vtanh.pop %v3426
  %v3502 = vtanh.pop %v3495
  %s3503 = scalar_lea.vmem %s3, 140
  %v3504 = vld [vmem:[%s3503] sm:$0xff]
  %v3505 = vld [vmem:[%s3503 + $0x8] sm:$0xff]
  %v3506 = vld [vmem:[%s3503 + $0x10] sm:$0xf]
  %v3509 = vcombine.high %v3504, %v3504
  %v3510 = vcombine.high %v3505, %v3505
  %3513 = vmatprep.subr.mxu0 0.0
  %3514 = vmatpush1.xpose.msra.mxu0 0.0
  %3515 = vmatprep.subr.mxu0 0.0
  %3516 = vmatpush1.xpose.msra.mxu0 0.0
  %3517 = vmatprep.subr.mxu0 0.0
  %3518 = vmatpush1.xpose.msra.mxu0 0.0
  %3519 = vmatprep.subr.mxu0 0.0
  %3520 = vmatpush1.xpose.msra.mxu0 0.0
  %3521 = vmatprep.subr.mxu0 0.0
  %3522 = vmatpush1.xpose.msra.mxu0 0.0
  %3523 = vmatprep.subr.mxu0 0.0
  %3524 = vmatpush1.xpose.msra.mxu0 0.0
  %3525 = vmatprep.subr.mxu0 0.0
  %3526 = vmatpush1.xpose.msra.mxu0 0.0
  %3527 = vmatprep.subr.mxu0 0.0
  %3528 = vmatpush1.xpose.msra.mxu0 0.0
  %3529 = vmatprep.subr.mxu0 0.0
  %3530 = vmatpush1.xpose.msra.mxu0 0.0
  %3531 = vmatprep.subr.mxu0 0.0
  %3532 = vmatpush1.xpose.msra.mxu0 0.0
  %3533 = vmatprep.subr.mxu0 0.0
  %3534 = vmatpush1.xpose.msra.mxu0 0.0
  %3535 = vmatprep.subr.mxu0 0.0
  %3536 = vmatpush1.xpose.msra.mxu0 0.0
  %3537 = vmatprep.subr.mxu0 0.0
  %3538 = vmatpush1.xpose.msra.mxu0 0.0
  %3539 = vmatprep.subr.mxu0 0.0
  %3540 = vmatpush1.xpose.msra.mxu0 0.0
  %3541 = vmatprep.subr.mxu0 0.0
  %3542 = vmatpush1.xpose.msra.mxu0 0.0
  %3543 = vmatprep.subr.mxu0 %v3509
  %3544 = vmatpush1.xpose.msra.mxu0 %v3504
  %3545 = vmatprep.subr.mxu0 0.0
  %3546 = vmatpush2.xpose.msra.mxu0 0.0
  %3547 = vmatprep.subr.mxu0 0.0
  %3548 = vmatpush2.xpose.msra.mxu0 0.0
  %3549 = vmatprep.subr.mxu0 0.0
  %3550 = vmatpush2.xpose.msra.mxu0 0.0
  %3551 = vmatprep.subr.mxu0 0.0
  %3552 = vmatpush2.xpose.msra.mxu0 0.0
  %3553 = vmatprep.subr.mxu0 0.0
  %3554 = vmatpush2.xpose.msra.mxu0 0.0
  %3555 = vmatprep.subr.mxu0 0.0
  %3556 = vmatpush2.xpose.msra.mxu0 0.0
  %3557 = vmatprep.subr.mxu0 0.0
  %3558 = vmatpush2.xpose.msra.mxu0 0.0
  %3559 = vmatprep.subr.mxu0 0.0
  %3560 = vmatpush2.xpose.msra.mxu0 0.0
  %3561 = vmatprep.subr.mxu0 0.0
  %3562 = vmatpush2.xpose.msra.mxu0 0.0
  %3563 = vmatprep.subr.mxu0 0.0
  %3564 = vmatpush2.xpose.msra.mxu0 0.0
  %3565 = vmatprep.subr.mxu0 0.0
  %3566 = vmatpush2.xpose.msra.mxu0 0.0
  %3567 = vmatprep.subr.mxu0 0.0
  %3568 = vmatpush2.xpose.msra.mxu0 0.0
  %3569 = vmatprep.subr.mxu0 0.0
  %3570 = vmatpush2.xpose.msra.mxu0 0.0
  %3571 = vmatprep.subr.mxu0 0.0
  %3572 = vmatpush2.xpose.msra.mxu0 0.0
  %3573 = vmatprep.subr.mxu0 0.0
  %3574 = vmatpush2.xpose.msra.mxu0 0.0
  %3575 = vmatprep.subr.mxu0 0.0
  %3576 = vmatpush2.xpose.msra.mxu0 0.0
  %3577 = vmatprep.mubr.f32.mxu0 %v3499
  %3578 = vmatmul.mubr.f32.gmra.mxu0 %v3498
  %v3579 = vpop.f32.mrf.mxu0
  %v3580 = vadd.f32 0.0, %v3579
  %v3581 = vpop.f32.mrf.mxu0
  %3582 = vdwg.mxu0
  %3583 = vmatprep.subr.mxu0 0.0
  %3584 = vmatpush1.xpose.msra.mxu0 0.0
  %3585 = vmatprep.subr.mxu0 0.0
  %3586 = vmatpush1.xpose.msra.mxu0 0.0
  %3587 = vmatprep.subr.mxu0 0.0
  %3588 = vmatpush1.xpose.msra.mxu0 0.0
  %3589 = vmatprep.subr.mxu0 0.0
  %3590 = vmatpush1.xpose.msra.mxu0 0.0
  %3591 = vmatprep.subr.mxu0 0.0
  %3592 = vmatpush1.xpose.msra.mxu0 0.0
  %3593 = vmatprep.subr.mxu0 0.0
  %3594 = vmatpush1.xpose.msra.mxu0 0.0
  %3595 = vmatprep.subr.mxu0 0.0
  %3596 = vmatpush1.xpose.msra.mxu0 0.0
  %3597 = vmatprep.subr.mxu0 0.0
  %3598 = vmatpush1.xpose.msra.mxu0 0.0
  %3599 = vmatprep.subr.mxu0 0.0
  %3600 = vmatpush1.xpose.msra.mxu0 0.0
  %3601 = vmatprep.subr.mxu0 0.0
  %3602 = vmatpush1.xpose.msra.mxu0 0.0
  %3603 = vmatprep.subr.mxu0 0.0
  %3604 = vmatpush1.xpose.msra.mxu0 0.0
  %3605 = vmatprep.subr.mxu0 0.0
  %3606 = vmatpush1.xpose.msra.mxu0 0.0
  %3607 = vmatprep.subr.mxu0 0.0
  %3608 = vmatpush1.xpose.msra.mxu0 0.0
  %3609 = vmatprep.subr.mxu0 0.0
  %3610 = vmatpush1.xpose.msra.mxu0 0.0
  %3611 = vmatprep.subr.mxu0 0.0
  %3612 = vmatpush1.xpose.msra.mxu0 0.0
  %3613 = vmatprep.subr.mxu0 %v3510
  %3614 = vmatpush1.xpose.msra.mxu0 %v3505
  %3615 = vmatprep.subr.mxu0 0.0
  %3616 = vmatpush2.xpose.msra.mxu0 0.0
  %3617 = vmatprep.subr.mxu0 0.0
  %3618 = vmatpush2.xpose.msra.mxu0 0.0
  %3619 = vmatprep.subr.mxu0 0.0
  %3620 = vmatpush2.xpose.msra.mxu0 0.0
  %3621 = vmatprep.subr.mxu0 0.0
  %3622 = vmatpush2.xpose.msra.mxu0 0.0
  %3623 = vmatprep.subr.mxu0 0.0
  %3624 = vmatpush2.xpose.msra.mxu0 0.0
  %3625 = vmatprep.subr.mxu0 0.0
  %3626 = vmatpush2.xpose.msra.mxu0 0.0
  %3627 = vmatprep.subr.mxu0 0.0
  %3628 = vmatpush2.xpose.msra.mxu0 0.0
  %3629 = vmatprep.subr.mxu0 0.0
  %3630 = vmatpush2.xpose.msra.mxu0 0.0
  %3631 = vmatprep.subr.mxu0 0.0
  %3632 = vmatpush2.xpose.msra.mxu0 0.0
  %3633 = vmatprep.subr.mxu0 0.0
  %3634 = vmatpush2.xpose.msra.mxu0 0.0
  %3635 = vmatprep.subr.mxu0 0.0
  %3636 = vmatpush2.xpose.msra.mxu0 0.0
  %3637 = vmatprep.subr.mxu0 0.0
  %3638 = vmatpush2.xpose.msra.mxu0 0.0
  %3639 = vmatprep.subr.mxu0 0.0
  %3640 = vmatpush2.xpose.msra.mxu0 0.0
  %3641 = vmatprep.subr.mxu0 0.0
  %3642 = vmatpush2.xpose.msra.mxu0 0.0
  %3643 = vmatprep.subr.mxu0 0.0
  %3644 = vmatpush2.xpose.msra.mxu0 0.0
  %3645 = vmatprep.subr.mxu0 0.0
  %3646 = vmatpush2.xpose.msra.mxu0 0.0
  %3647 = vmatprep.mubr.f32.mxu0 %v3501
  %3648 = vmatmul.mubr.f32.gmra.mxu0 %v3500
  %v3649 = vpop.f32.mrf.mxu0
  %v3650 = vadd.f32 %v3580, %v3649
  %v3651 = vpop.f32.mrf.mxu0
  %3652 = vdwg.mxu0
  %3653 = vmatprep.subr.mxu0 0.0
  %3654 = vmatpush1.xpose.msra.mxu0 0.0
  %3655 = vmatprep.subr.mxu0 0.0
  %3656 = vmatpush1.xpose.msra.mxu0 0.0
  %3657 = vmatprep.subr.mxu0 0.0
  %3658 = vmatpush1.xpose.msra.mxu0 0.0
  %3659 = vmatprep.subr.mxu0 0.0
  %3660 = vmatpush1.xpose.msra.mxu0 0.0
  %3661 = vmatprep.subr.mxu0 0.0
  %3662 = vmatpush1.xpose.msra.mxu0 0.0
  %3663 = vmatprep.subr.mxu0 0.0
  %3664 = vmatpush1.xpose.msra.mxu0 0.0
  %3665 = vmatprep.subr.mxu0 0.0
  %3666 = vmatpush1.xpose.msra.mxu0 0.0
  %3667 = vmatprep.subr.mxu0 0.0
  %3668 = vmatpush1.xpose.msra.mxu0 0.0
  %3669 = vmatprep.subr.mxu0 0.0
  %3670 = vmatpush1.xpose.msra.mxu0 0.0
  %3671 = vmatprep.subr.mxu0 0.0
  %3672 = vmatpush1.xpose.msra.mxu0 0.0
  %3673 = vmatprep.subr.mxu0 0.0
  %3674 = vmatpush1.xpose.msra.mxu0 0.0
  %3675 = vmatprep.subr.mxu0 0.0
  %3676 = vmatpush1.xpose.msra.mxu0 0.0
  %3677 = vmatprep.subr.mxu0 0.0
  %3678 = vmatpush1.xpose.msra.mxu0 0.0
  %3679 = vmatprep.subr.mxu0 0.0
  %3680 = vmatpush1.xpose.msra.mxu0 0.0
  %3681 = vmatprep.subr.mxu0 0.0
  %3682 = vmatpush1.xpose.msra.mxu0 0.0
  %3683 = vmatprep.subr.mxu0 0.0
  %3684 = vmatpush1.xpose.msra.mxu0 %v3506
  %3685 = vmatprep.subr.mxu0 0.0
  %3686 = vmatpush2.xpose.msra.mxu0 0.0
  %3687 = vmatprep.subr.mxu0 0.0
  %3688 = vmatpush2.xpose.msra.mxu0 0.0
  %3689 = vmatprep.subr.mxu0 0.0
  %3690 = vmatpush2.xpose.msra.mxu0 0.0
  %3691 = vmatprep.subr.mxu0 0.0
  %3692 = vmatpush2.xpose.msra.mxu0 0.0
  %3693 = vmatprep.subr.mxu0 0.0
  %3694 = vmatpush2.xpose.msra.mxu0 0.0
  %3695 = vmatprep.subr.mxu0 0.0
  %3696 = vmatpush2.xpose.msra.mxu0 0.0
  %3697 = vmatprep.subr.mxu0 0.0
  %3698 = vmatpush2.xpose.msra.mxu0 0.0
  %3699 = vmatprep.subr.mxu0 0.0
  %3700 = vmatpush2.xpose.msra.mxu0 0.0
  %3701 = vmatprep.subr.mxu0 0.0
  %3702 = vmatpush2.xpose.msra.mxu0 0.0
  %3703 = vmatprep.subr.mxu0 0.0
  %3704 = vmatpush2.xpose.msra.mxu0 0.0
  %3705 = vmatprep.subr.mxu0 0.0
  %3706 = vmatpush2.xpose.msra.mxu0 0.0
  %3707 = vmatprep.subr.mxu0 0.0
  %3708 = vmatpush2.xpose.msra.mxu0 0.0
  %3709 = vmatprep.subr.mxu0 0.0
  %3710 = vmatpush2.xpose.msra.mxu0 0.0
  %3711 = vmatprep.subr.mxu0 0.0
  %3712 = vmatpush2.xpose.msra.mxu0 0.0
  %3713 = vmatprep.subr.mxu0 0.0
  %3714 = vmatpush2.xpose.msra.mxu0 0.0
  %3715 = vmatprep.subr.mxu0 0.0
  %3716 = vmatpush2.xpose.msra.mxu0 0.0
  %3717 = vmatprep.mubr.f32.mxu0 0.0
  %3718 = vmatmul.mubr.f32.gmra.mxu0 %v3502
  %v3719 = vpop.f32.mrf.mxu0
  %v3720 = vadd.f32 %v3650, %v3719
  %v3721 = vpop.f32.mrf.mxu0
  %3722 = vdwg.mxu0
  %v3723 = vadd.f32 %v3283, %v3720
  %v3724 = vld [vmem:[%s0 + $0x40] sm:$0xff]
  %v3725 = vld [vmem:[%s0 + $0x48] sm:$0xff]
  %3726 = vmatprep.subr.mxu0 %v96
  %3727 = vmatpush1.msra.mxu0 %v95
  %3728 = vmatprep.subr.mxu0 %v91
  %3729 = vmatpush1.msra.mxu0 %v90
  %3730 = vmatprep.subr.mxu0 %v86
  %3731 = vmatpush1.msra.mxu0 %v85
  %3732 = vmatprep.subr.mxu0 %v81
  %3733 = vmatpush1.msra.mxu0 %v80
  %3734 = vmatprep.subr.mxu0 %v76
  %3735 = vmatpush1.msra.mxu0 %v75
  %3736 = vmatprep.subr.mxu0 %v71
  %3737 = vmatpush1.msra.mxu0 %v70
  %3738 = vmatprep.subr.mxu0 %v66
  %3739 = vmatpush1.msra.mxu0 %v65
  %3740 = vmatprep.subr.mxu0 %v61
  %3741 = vmatpush1.msra.mxu0 %v60
  %3742 = vmatprep.subr.mxu0 %v56
  %3743 = vmatpush1.msra.mxu0 %v55
  %3744 = vmatprep.subr.mxu0 %v51
  %3745 = vmatpush1.msra.mxu0 %v50
  %3746 = vmatprep.subr.mxu0 %v46
  %3747 = vmatpush1.msra.mxu0 %v45
  %3748 = vmatprep.subr.mxu0 %v41
  %3749 = vmatpush1.msra.mxu0 %v40
  %3750 = vmatprep.subr.mxu0 %v36
  %3751 = vmatpush1.msra.mxu0 %v35
  %3752 = vmatprep.subr.mxu0 %v31
  %3753 = vmatpush1.msra.mxu0 %v30
  %3754 = vmatprep.subr.mxu0 %v26
  %3755 = vmatpush1.msra.mxu0 %v25
  %3756 = vmatprep.subr.mxu0 %v21
  %3757 = vmatpush1.msra.mxu0 %v20
  %3758 = vmatprep.subr.mxu0 %v176
  %3759 = vmatpush2.msra.mxu0 %v175
  %3760 = vmatprep.subr.mxu0 %v171
  %3761 = vmatpush2.msra.mxu0 %v170
  %3762 = vmatprep.subr.mxu0 %v166
  %3763 = vmatpush2.msra.mxu0 %v165
  %3764 = vmatprep.subr.mxu0 %v161
  %3765 = vmatpush2.msra.mxu0 %v160
  %3766 = vmatprep.subr.mxu0 %v156
  %3767 = vmatpush2.msra.mxu0 %v155
  %3768 = vmatprep.subr.mxu0 %v151
  %3769 = vmatpush2.msra.mxu0 %v150
  %3770 = vmatprep.subr.mxu0 %v146
  %3771 = vmatpush2.msra.mxu0 %v145
  %3772 = vmatprep.subr.mxu0 %v141
  %3773 = vmatpush2.msra.mxu0 %v140
  %3774 = vmatprep.subr.mxu0 %v136
  %3775 = vmatpush2.msra.mxu0 %v135
  %3776 = vmatprep.subr.mxu0 %v131
  %3777 = vmatpush2.msra.mxu0 %v130
  %3778 = vmatprep.subr.mxu0 %v126
  %3779 = vmatpush2.msra.mxu0 %v125
  %3780 = vmatprep.subr.mxu0 %v121
  %3781 = vmatpush2.msra.mxu0 %v120
  %3782 = vmatprep.subr.mxu0 %v116
  %3783 = vmatpush2.msra.mxu0 %v115
  %3784 = vmatprep.subr.mxu0 %v111
  %3785 = vmatpush2.msra.mxu0 %v110
  %3786 = vmatprep.subr.mxu0 %v106
  %3787 = vmatpush2.msra.mxu0 %v105
  %3788 = vmatprep.subr.mxu0 %v101
  %3789 = vmatpush2.msra.mxu0 %v100
  %3790 = vmatprep.mubr.f32.mxu0 %v3725
  %3791 = vmatmul.mubr.f32.gmra.mxu0 %v3724
  %v3792 = vpop.f32.mrf.mxu0
  %v3793 = vadd.f32 %v187, %v3792
  %v3794 = vpop.f32.mrf.mxu0
  %v3795 = vadd.f32 %v191, %v3794
  %3796 = vdwg.mxu0
  %3797 = vmatprep.subr.mxu0 %v98
  %3798 = vmatpush1.msra.mxu0 %v97
  %3799 = vmatprep.subr.mxu0 %v93
  %3800 = vmatpush1.msra.mxu0 %v92
  %3801 = vmatprep.subr.mxu0 %v88
  %3802 = vmatpush1.msra.mxu0 %v87
  %3803 = vmatprep.subr.mxu0 %v83
  %3804 = vmatpush1.msra.mxu0 %v82
  %3805 = vmatprep.subr.mxu0 %v78
  %3806 = vmatpush1.msra.mxu0 %v77
  %3807 = vmatprep.subr.mxu0 %v73
  %3808 = vmatpush1.msra.mxu0 %v72
  %3809 = vmatprep.subr.mxu0 %v68
  %3810 = vmatpush1.msra.mxu0 %v67
  %3811 = vmatprep.subr.mxu0 %v63
  %3812 = vmatpush1.msra.mxu0 %v62
  %3813 = vmatprep.subr.mxu0 %v58
  %3814 = vmatpush1.msra.mxu0 %v57
  %3815 = vmatprep.subr.mxu0 %v53
  %3816 = vmatpush1.msra.mxu0 %v52
  %3817 = vmatprep.subr.mxu0 %v48
  %3818 = vmatpush1.msra.mxu0 %v47
  %3819 = vmatprep.subr.mxu0 %v43
  %3820 = vmatpush1.msra.mxu0 %v42
  %3821 = vmatprep.subr.mxu0 %v38
  %3822 = vmatpush1.msra.mxu0 %v37
  %3823 = vmatprep.subr.mxu0 %v33
  %3824 = vmatpush1.msra.mxu0 %v32
  %3825 = vmatprep.subr.mxu0 %v28
  %3826 = vmatpush1.msra.mxu0 %v27
  %3827 = vmatprep.subr.mxu0 %v23
  %3828 = vmatpush1.msra.mxu0 %v22
  %3829 = vmatprep.subr.mxu0 %v178
  %3830 = vmatpush2.msra.mxu0 %v177
  %3831 = vmatprep.subr.mxu0 %v173
  %3832 = vmatpush2.msra.mxu0 %v172
  %3833 = vmatprep.subr.mxu0 %v168
  %3834 = vmatpush2.msra.mxu0 %v167
  %3835 = vmatprep.subr.mxu0 %v163
  %3836 = vmatpush2.msra.mxu0 %v162
  %3837 = vmatprep.subr.mxu0 %v158
  %3838 = vmatpush2.msra.mxu0 %v157
  %3839 = vmatprep.subr.mxu0 %v153
  %3840 = vmatpush2.msra.mxu0 %v152
  %3841 = vmatprep.subr.mxu0 %v148
  %3842 = vmatpush2.msra.mxu0 %v147
  %3843 = vmatprep.subr.mxu0 %v143
  %3844 = vmatpush2.msra.mxu0 %v142
  %3845 = vmatprep.subr.mxu0 %v138
  %3846 = vmatpush2.msra.mxu0 %v137
  %3847 = vmatprep.subr.mxu0 %v133
  %3848 = vmatpush2.msra.mxu0 %v132
  %3849 = vmatprep.subr.mxu0 %v128
  %3850 = vmatpush2.msra.mxu0 %v127
  %3851 = vmatprep.subr.mxu0 %v123
  %3852 = vmatpush2.msra.mxu0 %v122
  %3853 = vmatprep.subr.mxu0 %v118
  %3854 = vmatpush2.msra.mxu0 %v117
  %3855 = vmatprep.subr.mxu0 %v113
  %3856 = vmatpush2.msra.mxu0 %v112
  %3857 = vmatprep.subr.mxu0 %v108
  %3858 = vmatpush2.msra.mxu0 %v107
  %3859 = vmatprep.subr.mxu0 %v103
  %3860 = vmatpush2.msra.mxu0 %v102
  %3861 = vmatprep.mubr.f32.mxu0 %v3725
  %3862 = vmatmul.mubr.f32.gmra.mxu0 %v3724
  %v3863 = vpop.f32.mrf.mxu0
  %v3864 = vadd.f32 %v195, %v3863
  %v3865 = vpop.f32.mrf.mxu0
  %v3866 = vadd.f32 %v199, %v3865
  %3867 = vdwg.mxu0
  %3868 = vmatprep.subr.mxu0 0.0
  %3869 = vmatpush1.msra.mxu0 %v99
  %3870 = vmatprep.subr.mxu0 0.0
  %3871 = vmatpush1.msra.mxu0 %v94
  %3872 = vmatprep.subr.mxu0 0.0
  %3873 = vmatpush1.msra.mxu0 %v89
  %3874 = vmatprep.subr.mxu0 0.0
  %3875 = vmatpush1.msra.mxu0 %v84
  %3876 = vmatprep.subr.mxu0 0.0
  %3877 = vmatpush1.msra.mxu0 %v79
  %3878 = vmatprep.subr.mxu0 0.0
  %3879 = vmatpush1.msra.mxu0 %v74
  %3880 = vmatprep.subr.mxu0 0.0
  %3881 = vmatpush1.msra.mxu0 %v69
  %3882 = vmatprep.subr.mxu0 0.0
  %3883 = vmatpush1.msra.mxu0 %v64
  %3884 = vmatprep.subr.mxu0 0.0
  %3885 = vmatpush1.msra.mxu0 %v59
  %3886 = vmatprep.subr.mxu0 0.0
  %3887 = vmatpush1.msra.mxu0 %v54
  %3888 = vmatprep.subr.mxu0 0.0
  %3889 = vmatpush1.msra.mxu0 %v49
  %3890 = vmatprep.subr.mxu0 0.0
  %3891 = vmatpush1.msra.mxu0 %v44
  %3892 = vmatprep.subr.mxu0 0.0
  %3893 = vmatpush1.msra.mxu0 %v39
  %3894 = vmatprep.subr.mxu0 0.0
  %3895 = vmatpush1.msra.mxu0 %v34
  %3896 = vmatprep.subr.mxu0 0.0
  %3897 = vmatpush1.msra.mxu0 %v29
  %3898 = vmatprep.subr.mxu0 0.0
  %3899 = vmatpush1.msra.mxu0 %v24
  %3900 = vmatprep.subr.mxu0 0.0
  %3901 = vmatpush2.msra.mxu0 %v179
  %3902 = vmatprep.subr.mxu0 0.0
  %3903 = vmatpush2.msra.mxu0 %v174
  %3904 = vmatprep.subr.mxu0 0.0
  %3905 = vmatpush2.msra.mxu0 %v169
  %3906 = vmatprep.subr.mxu0 0.0
  %3907 = vmatpush2.msra.mxu0 %v164
  %3908 = vmatprep.subr.mxu0 0.0
  %3909 = vmatpush2.msra.mxu0 %v159
  %3910 = vmatprep.subr.mxu0 0.0
  %3911 = vmatpush2.msra.mxu0 %v154
  %3912 = vmatprep.subr.mxu0 0.0
  %3913 = vmatpush2.msra.mxu0 %v149
  %3914 = vmatprep.subr.mxu0 0.0
  %3915 = vmatpush2.msra.mxu0 %v144
  %3916 = vmatprep.subr.mxu0 0.0
  %3917 = vmatpush2.msra.mxu0 %v139
  %3918 = vmatprep.subr.mxu0 0.0
  %3919 = vmatpush2.msra.mxu0 %v134
  %3920 = vmatprep.subr.mxu0 0.0
  %3921 = vmatpush2.msra.mxu0 %v129
  %3922 = vmatprep.subr.mxu0 0.0
  %3923 = vmatpush2.msra.mxu0 %v124
  %3924 = vmatprep.subr.mxu0 0.0
  %3925 = vmatpush2.msra.mxu0 %v119
  %3926 = vmatprep.subr.mxu0 0.0
  %3927 = vmatpush2.msra.mxu0 %v114
  %3928 = vmatprep.subr.mxu0 0.0
  %3929 = vmatpush2.msra.mxu0 %v109
  %3930 = vmatprep.subr.mxu0 0.0
  %3931 = vmatpush2.msra.mxu0 %v104
  %3932 = vmatprep.mubr.f32.mxu0 %v3725
  %3933 = vmatmul.mubr.f32.gmra.mxu0 %v3724
  %v3934 = vpop.f32.mrf.mxu0
  %v3935 = vadd.f32 %v203, %v3934
  %v3936 = vpop.f32.mrf.mxu0
  %3937 = vdwg.mxu0
  %v3938 = vtanh.pop %v3793
  %v3939 = vtanh.pop %v3795
  %v3940 = vtanh.pop %v3864
  %v3941 = vtanh.pop %v3866
  %v3942 = vtanh.pop %v3935
  %s3943 = scalar_lea.vmem %s3, 160
  %v3944 = vld [vmem:[%s3943] sm:$0xff]
  %v3945 = vld [vmem:[%s3943 + $0x8] sm:$0xff]
  %v3946 = vld [vmem:[%s3943 + $0x10] sm:$0xf]
  %v3949 = vcombine.high %v3944, %v3944
  %v3950 = vcombine.high %v3945, %v3945
  %3953 = vmatprep.subr.mxu0 0.0
  %3954 = vmatpush1.xpose.msra.mxu0 0.0
  %3955 = vmatprep.subr.mxu0 0.0
  %3956 = vmatpush1.xpose.msra.mxu0 0.0
  %3957 = vmatprep.subr.mxu0 0.0
  %3958 = vmatpush1.xpose.msra.mxu0 0.0
  %3959 = vmatprep.subr.mxu0 0.0
  %3960 = vmatpush1.xpose.msra.mxu0 0.0
  %3961 = vmatprep.subr.mxu0 0.0
  %3962 = vmatpush1.xpose.msra.mxu0 0.0
  %3963 = vmatprep.subr.mxu0 0.0
  %3964 = vmatpush1.xpose.msra.mxu0 0.0
  %3965 = vmatprep.subr.mxu0 0.0
  %3966 = vmatpush1.xpose.msra.mxu0 0.0
  %3967 = vmatprep.subr.mxu0 0.0
  %3968 = vmatpush1.xpose.msra.mxu0 0.0
  %3969 = vmatprep.subr.mxu0 0.0
  %3970 = vmatpush1.xpose.msra.mxu0 0.0
  %3971 = vmatprep.subr.mxu0 0.0
  %3972 = vmatpush1.xpose.msra.mxu0 0.0
  %3973 = vmatprep.subr.mxu0 0.0
  %3974 = vmatpush1.xpose.msra.mxu0 0.0
  %3975 = vmatprep.subr.mxu0 0.0
  %3976 = vmatpush1.xpose.msra.mxu0 0.0
  %3977 = vmatprep.subr.mxu0 0.0
  %3978 = vmatpush1.xpose.msra.mxu0 0.0
  %3979 = vmatprep.subr.mxu0 0.0
  %3980 = vmatpush1.xpose.msra.mxu0 0.0
  %3981 = vmatprep.subr.mxu0 0.0
  %3982 = vmatpush1.xpose.msra.mxu0 0.0
  %3983 = vmatprep.subr.mxu0 %v3949
  %3984 = vmatpush1.xpose.msra.mxu0 %v3944
  %3985 = vmatprep.subr.mxu0 0.0
  %3986 = vmatpush2.xpose.msra.mxu0 0.0
  %3987 = vmatprep.subr.mxu0 0.0
  %3988 = vmatpush2.xpose.msra.mxu0 0.0
  %3989 = vmatprep.subr.mxu0 0.0
  %3990 = vmatpush2.xpose.msra.mxu0 0.0
  %3991 = vmatprep.subr.mxu0 0.0
  %3992 = vmatpush2.xpose.msra.mxu0 0.0
  %3993 = vmatprep.subr.mxu0 0.0
  %3994 = vmatpush2.xpose.msra.mxu0 0.0
  %3995 = vmatprep.subr.mxu0 0.0
  %3996 = vmatpush2.xpose.msra.mxu0 0.0
  %3997 = vmatprep.subr.mxu0 0.0
  %3998 = vmatpush2.xpose.msra.mxu0 0.0
  %3999 = vmatprep.subr.mxu0 0.0
  %4000 = vmatpush2.xpose.msra.mxu0 0.0
  %4001 = vmatprep.subr.mxu0 0.0
  %4002 = vmatpush2.xpose.msra.mxu0 0.0
  %4003 = vmatprep.subr.mxu0 0.0
  %4004 = vmatpush2.xpose.msra.mxu0 0.0
  %4005 = vmatprep.subr.mxu0 0.0
  %4006 = vmatpush2.xpose.msra.mxu0 0.0
  %4007 = vmatprep.subr.mxu0 0.0
  %4008 = vmatpush2.xpose.msra.mxu0 0.0
  %4009 = vmatprep.subr.mxu0 0.0
  %4010 = vmatpush2.xpose.msra.mxu0 0.0
  %4011 = vmatprep.subr.mxu0 0.0
  %4012 = vmatpush2.xpose.msra.mxu0 0.0
  %4013 = vmatprep.subr.mxu0 0.0
  %4014 = vmatpush2.xpose.msra.mxu0 0.0
  %4015 = vmatprep.subr.mxu0 0.0
  %4016 = vmatpush2.xpose.msra.mxu0 0.0
  %4017 = vmatprep.mubr.f32.mxu0 %v3939
  %4018 = vmatmul.mubr.f32.gmra.mxu0 %v3938
  %v4019 = vpop.f32.mrf.mxu0
  %v4020 = vadd.f32 0.0, %v4019
  %v4021 = vpop.f32.mrf.mxu0
  %4022 = vdwg.mxu0
  %4023 = vmatprep.subr.mxu0 0.0
  %4024 = vmatpush1.xpose.msra.mxu0 0.0
  %4025 = vmatprep.subr.mxu0 0.0
  %4026 = vmatpush1.xpose.msra.mxu0 0.0
  %4027 = vmatprep.subr.mxu0 0.0
  %4028 = vmatpush1.xpose.msra.mxu0 0.0
  %4029 = vmatprep.subr.mxu0 0.0
  %4030 = vmatpush1.xpose.msra.mxu0 0.0
  %4031 = vmatprep.subr.mxu0 0.0
  %4032 = vmatpush1.xpose.msra.mxu0 0.0
  %4033 = vmatprep.subr.mxu0 0.0
  %4034 = vmatpush1.xpose.msra.mxu0 0.0
  %4035 = vmatprep.subr.mxu0 0.0
  %4036 = vmatpush1.xpose.msra.mxu0 0.0
  %4037 = vmatprep.subr.mxu0 0.0
  %4038 = vmatpush1.xpose.msra.mxu0 0.0
  %4039 = vmatprep.subr.mxu0 0.0
  %4040 = vmatpush1.xpose.msra.mxu0 0.0
  %4041 = vmatprep.subr.mxu0 0.0
  %4042 = vmatpush1.xpose.msra.mxu0 0.0
  %4043 = vmatprep.subr.mxu0 0.0
  %4044 = vmatpush1.xpose.msra.mxu0 0.0
  %4045 = vmatprep.subr.mxu0 0.0
  %4046 = vmatpush1.xpose.msra.mxu0 0.0
  %4047 = vmatprep.subr.mxu0 0.0
  %4048 = vmatpush1.xpose.msra.mxu0 0.0
  %4049 = vmatprep.subr.mxu0 0.0
  %4050 = vmatpush1.xpose.msra.mxu0 0.0
  %4051 = vmatprep.subr.mxu0 0.0
  %4052 = vmatpush1.xpose.msra.mxu0 0.0
  %4053 = vmatprep.subr.mxu0 %v3950
  %4054 = vmatpush1.xpose.msra.mxu0 %v3945
  %4055 = vmatprep.subr.mxu0 0.0
  %4056 = vmatpush2.xpose.msra.mxu0 0.0
  %4057 = vmatprep.subr.mxu0 0.0
  %4058 = vmatpush2.xpose.msra.mxu0 0.0
  %4059 = vmatprep.subr.mxu0 0.0
  %4060 = vmatpush2.xpose.msra.mxu0 0.0
  %4061 = vmatprep.subr.mxu0 0.0
  %4062 = vmatpush2.xpose.msra.mxu0 0.0
  %4063 = vmatprep.subr.mxu0 0.0
  %4064 = vmatpush2.xpose.msra.mxu0 0.0
  %4065 = vmatprep.subr.mxu0 0.0
  %4066 = vmatpush2.xpose.msra.mxu0 0.0
  %4067 = vmatprep.subr.mxu0 0.0
  %4068 = vmatpush2.xpose.msra.mxu0 0.0
  %4069 = vmatprep.subr.mxu0 0.0
  %4070 = vmatpush2.xpose.msra.mxu0 0.0
  %4071 = vmatprep.subr.mxu0 0.0
  %4072 = vmatpush2.xpose.msra.mxu0 0.0
  %4073 = vmatprep.subr.mxu0 0.0
  %4074 = vmatpush2.xpose.msra.mxu0 0.0
  %4075 = vmatprep.subr.mxu0 0.0
  %4076 = vmatpush2.xpose.msra.mxu0 0.0
  %4077 = vmatprep.subr.mxu0 0.0
  %4078 = vmatpush2.xpose.msra.mxu0 0.0
  %4079 = vmatprep.subr.mxu0 0.0
  %4080 = vmatpush2.xpose.msra.mxu0 0.0
  %4081 = vmatprep.subr.mxu0 0.0
  %4082 = vmatpush2.xpose.msra.mxu0 0.0
  %4083 = vmatprep.subr.mxu0 0.0
  %4084 = vmatpush2.xpose.msra.mxu0 0.0
  %4085 = vmatprep.subr.mxu0 0.0
  %4086 = vmatpush2.xpose.msra.mxu0 0.0
  %4087 = vmatprep.mubr.f32.mxu0 %v3941
  %4088 = vmatmul.mubr.f32.gmra.mxu0 %v3940
  %v4089 = vpop.f32.mrf.mxu0
  %v4090 = vadd.f32 %v4020, %v4089
  %v4091 = vpop.f32.mrf.mxu0
  %4092 = vdwg.mxu0
  %4093 = vmatprep.subr.mxu0 0.0
  %4094 = vmatpush1.xpose.msra.mxu0 0.0
  %4095 = vmatprep.subr.mxu0 0.0
  %4096 = vmatpush1.xpose.msra.mxu0 0.0
  %4097 = vmatprep.subr.mxu0 0.0
  %4098 = vmatpush1.xpose.msra.mxu0 0.0
  %4099 = vmatprep.subr.mxu0 0.0
  %4100 = vmatpush1.xpose.msra.mxu0 0.0
  %4101 = vmatprep.subr.mxu0 0.0
  %4102 = vmatpush1.xpose.msra.mxu0 0.0
  %4103 = vmatprep.subr.mxu0 0.0
  %4104 = vmatpush1.xpose.msra.mxu0 0.0
  %4105 = vmatprep.subr.mxu0 0.0
  %4106 = vmatpush1.xpose.msra.mxu0 0.0
  %4107 = vmatprep.subr.mxu0 0.0
  %4108 = vmatpush1.xpose.msra.mxu0 0.0
  %4109 = vmatprep.subr.mxu0 0.0
  %4110 = vmatpush1.xpose.msra.mxu0 0.0
  %4111 = vmatprep.subr.mxu0 0.0
  %4112 = vmatpush1.xpose.msra.mxu0 0.0
  %4113 = vmatprep.subr.mxu0 0.0
  %4114 = vmatpush1.xpose.msra.mxu0 0.0
  %4115 = vmatprep.subr.mxu0 0.0
  %4116 = vmatpush1.xpose.msra.mxu0 0.0
  %4117 = vmatprep.subr.mxu0 0.0
  %4118 = vmatpush1.xpose.msra.mxu0 0.0
  %4119 = vmatprep.subr.mxu0 0.0
  %4120 = vmatpush1.xpose.msra.mxu0 0.0
  %4121 = vmatprep.subr.mxu0 0.0
  %4122 = vmatpush1.xpose.msra.mxu0 0.0
  %4123 = vmatprep.subr.mxu0 0.0
  %4124 = vmatpush1.xpose.msra.mxu0 %v3946
  %4125 = vmatprep.subr.mxu0 0.0
  %4126 = vmatpush2.xpose.msra.mxu0 0.0
  %4127 = vmatprep.subr.mxu0 0.0
  %4128 = vmatpush2.xpose.msra.mxu0 0.0
  %4129 = vmatprep.subr.mxu0 0.0
  %4130 = vmatpush2.xpose.msra.mxu0 0.0
  %4131 = vmatprep.subr.mxu0 0.0
  %4132 = vmatpush2.xpose.msra.mxu0 0.0
  %4133 = vmatprep.subr.mxu0 0.0
  %4134 = vmatpush2.xpose.msra.mxu0 0.0
  %4135 = vmatprep.subr.mxu0 0.0
  %4136 = vmatpush2.xpose.msra.mxu0 0.0
  %4137 = vmatprep.subr.mxu0 0.0
  %4138 = vmatpush2.xpose.msra.mxu0 0.0
  %4139 = vmatprep.subr.mxu0 0.0
  %4140 = vmatpush2.xpose.msra.mxu0 0.0
  %4141 = vmatprep.subr.mxu0 0.0
  %4142 = vmatpush2.xpose.msra.mxu0 0.0
  %4143 = vmatprep.subr.mxu0 0.0
  %4144 = vmatpush2.xpose.msra.mxu0 0.0
  %4145 = vmatprep.subr.mxu0 0.0
  %4146 = vmatpush2.xpose.msra.mxu0 0.0
  %4147 = vmatprep.subr.mxu0 0.0
  %4148 = vmatpush2.xpose.msra.mxu0 0.0
  %4149 = vmatprep.subr.mxu0 0.0
  %4150 = vmatpush2.xpose.msra.mxu0 0.0
  %4151 = vmatprep.subr.mxu0 0.0
  %4152 = vmatpush2.xpose.msra.mxu0 0.0
  %4153 = vmatprep.subr.mxu0 0.0
  %4154 = vmatpush2.xpose.msra.mxu0 0.0
  %4155 = vmatprep.subr.mxu0 0.0
  %4156 = vmatpush2.xpose.msra.mxu0 0.0
  %4157 = vmatprep.mubr.f32.mxu0 0.0
  %4158 = vmatmul.mubr.f32.gmra.mxu0 %v3942
  %v4159 = vpop.f32.mrf.mxu0
  %v4160 = vadd.f32 %v4090, %v4159
  %v4161 = vpop.f32.mrf.mxu0
  %4162 = vdwg.mxu0
  %v4163 = vadd.f32 %v3723, %v4160
  %v4164 = vld [vmem:[%s0 + $0x48] sm:$0xff]
  %v4165 = vld [vmem:[%s0 + $0x50] sm:$0xff]
  %4166 = vmatprep.subr.mxu0 %v96
  %4167 = vmatpush1.msra.mxu0 %v95
  %4168 = vmatprep.subr.mxu0 %v91
  %4169 = vmatpush1.msra.mxu0 %v90
  %4170 = vmatprep.subr.mxu0 %v86
  %4171 = vmatpush1.msra.mxu0 %v85
  %4172 = vmatprep.subr.mxu0 %v81
  %4173 = vmatpush1.msra.mxu0 %v80
  %4174 = vmatprep.subr.mxu0 %v76
  %4175 = vmatpush1.msra.mxu0 %v75
  %4176 = vmatprep.subr.mxu0 %v71
  %4177 = vmatpush1.msra.mxu0 %v70
  %4178 = vmatprep.subr.mxu0 %v66
  %4179 = vmatpush1.msra.mxu0 %v65
  %4180 = vmatprep.subr.mxu0 %v61
  %4181 = vmatpush1.msra.mxu0 %v60
  %4182 = vmatprep.subr.mxu0 %v56
  %4183 = vmatpush1.msra.mxu0 %v55
  %4184 = vmatprep.subr.mxu0 %v51
  %4185 = vmatpush1.msra.mxu0 %v50
  %4186 = vmatprep.subr.mxu0 %v46
  %4187 = vmatpush1.msra.mxu0 %v45
  %4188 = vmatprep.subr.mxu0 %v41
  %4189 = vmatpush1.msra.mxu0 %v40
  %4190 = vmatprep.subr.mxu0 %v36
  %4191 = vmatpush1.msra.mxu0 %v35
  %4192 = vmatprep.subr.mxu0 %v31
  %4193 = vmatpush1.msra.mxu0 %v30
  %4194 = vmatprep.subr.mxu0 %v26
  %4195 = vmatpush1.msra.mxu0 %v25
  %4196 = vmatprep.subr.mxu0 %v21
  %4197 = vmatpush1.msra.mxu0 %v20
  %4198 = vmatprep.subr.mxu0 %v176
  %4199 = vmatpush2.msra.mxu0 %v175
  %4200 = vmatprep.subr.mxu0 %v171
  %4201 = vmatpush2.msra.mxu0 %v170
  %4202 = vmatprep.subr.mxu0 %v166
  %4203 = vmatpush2.msra.mxu0 %v165
  %4204 = vmatprep.subr.mxu0 %v161
  %4205 = vmatpush2.msra.mxu0 %v160
  %4206 = vmatprep.subr.mxu0 %v156
  %4207 = vmatpush2.msra.mxu0 %v155
  %4208 = vmatprep.subr.mxu0 %v151
  %4209 = vmatpush2.msra.mxu0 %v150
  %4210 = vmatprep.subr.mxu0 %v146
  %4211 = vmatpush2.msra.mxu0 %v145
  %4212 = vmatprep.subr.mxu0 %v141
  %4213 = vmatpush2.msra.mxu0 %v140
  %4214 = vmatprep.subr.mxu0 %v136
  %4215 = vmatpush2.msra.mxu0 %v135
  %4216 = vmatprep.subr.mxu0 %v131
  %4217 = vmatpush2.msra.mxu0 %v130
  %4218 = vmatprep.subr.mxu0 %v126
  %4219 = vmatpush2.msra.mxu0 %v125
  %4220 = vmatprep.subr.mxu0 %v121
  %4221 = vmatpush2.msra.mxu0 %v120
  %4222 = vmatprep.subr.mxu0 %v116
  %4223 = vmatpush2.msra.mxu0 %v115
  %4224 = vmatprep.subr.mxu0 %v111
  %4225 = vmatpush2.msra.mxu0 %v110
  %4226 = vmatprep.subr.mxu0 %v106
  %4227 = vmatpush2.msra.mxu0 %v105
  %4228 = vmatprep.subr.mxu0 %v101
  %4229 = vmatpush2.msra.mxu0 %v100
  %4230 = vmatprep.mubr.f32.mxu0 %v4165
  %4231 = vmatmul.mubr.f32.gmra.mxu0 %v4164
  %v4232 = vpop.f32.mrf.mxu0
  %v4233 = vadd.f32 %v187, %v4232
  %v4234 = vpop.f32.mrf.mxu0
  %v4235 = vadd.f32 %v191, %v4234
  %4236 = vdwg.mxu0
  %4237 = vmatprep.subr.mxu0 %v98
  %4238 = vmatpush1.msra.mxu0 %v97
  %4239 = vmatprep.subr.mxu0 %v93
  %4240 = vmatpush1.msra.mxu0 %v92
  %4241 = vmatprep.subr.mxu0 %v88
  %4242 = vmatpush1.msra.mxu0 %v87
  %4243 = vmatprep.subr.mxu0 %v83
  %4244 = vmatpush1.msra.mxu0 %v82
  %4245 = vmatprep.subr.mxu0 %v78
  %4246 = vmatpush1.msra.mxu0 %v77
  %4247 = vmatprep.subr.mxu0 %v73
  %4248 = vmatpush1.msra.mxu0 %v72
  %4249 = vmatprep.subr.mxu0 %v68
  %4250 = vmatpush1.msra.mxu0 %v67
  %4251 = vmatprep.subr.mxu0 %v63
  %4252 = vmatpush1.msra.mxu0 %v62
  %4253 = vmatprep.subr.mxu0 %v58
  %4254 = vmatpush1.msra.mxu0 %v57
  %4255 = vmatprep.subr.mxu0 %v53
  %4256 = vmatpush1.msra.mxu0 %v52
  %4257 = vmatprep.subr.mxu0 %v48
  %4258 = vmatpush1.msra.mxu0 %v47
  %4259 = vmatprep.subr.mxu0 %v43
  %4260 = vmatpush1.msra.mxu0 %v42
  %4261 = vmatprep.subr.mxu0 %v38
  %4262 = vmatpush1.msra.mxu0 %v37
  %4263 = vmatprep.subr.mxu0 %v33
  %4264 = vmatpush1.msra.mxu0 %v32
  %4265 = vmatprep.subr.mxu0 %v28
  %4266 = vmatpush1.msra.mxu0 %v27
  %4267 = vmatprep.subr.mxu0 %v23
  %4268 = vmatpush1.msra.mxu0 %v22
  %4269 = vmatprep.subr.mxu0 %v178
  %4270 = vmatpush2.msra.mxu0 %v177
  %4271 = vmatprep.subr.mxu0 %v173
  %4272 = vmatpush2.msra.mxu0 %v172
  %4273 = vmatprep.subr.mxu0 %v168
  %4274 = vmatpush2.msra.mxu0 %v167
  %4275 = vmatprep.subr.mxu0 %v163
  %4276 = vmatpush2.msra.mxu0 %v162
  %4277 = vmatprep.subr.mxu0 %v158
  %4278 = vmatpush2.msra.mxu0 %v157
  %4279 = vmatprep.subr.mxu0 %v153
  %4280 = vmatpush2.msra.mxu0 %v152
  %4281 = vmatprep.subr.mxu0 %v148
  %4282 = vmatpush2.msra.mxu0 %v147
  %4283 = vmatprep.subr.mxu0 %v143
  %4284 = vmatpush2.msra.mxu0 %v142
  %4285 = vmatprep.subr.mxu0 %v138
  %4286 = vmatpush2.msra.mxu0 %v137
  %4287 = vmatprep.subr.mxu0 %v133
  %4288 = vmatpush2.msra.mxu0 %v132
  %4289 = vmatprep.subr.mxu0 %v128
  %4290 = vmatpush2.msra.mxu0 %v127
  %4291 = vmatprep.subr.mxu0 %v123
  %4292 = vmatpush2.msra.mxu0 %v122
  %4293 = vmatprep.subr.mxu0 %v118
  %4294 = vmatpush2.msra.mxu0 %v117
  %4295 = vmatprep.subr.mxu0 %v113
  %4296 = vmatpush2.msra.mxu0 %v112
  %4297 = vmatprep.subr.mxu0 %v108
  %4298 = vmatpush2.msra.mxu0 %v107
  %4299 = vmatprep.subr.mxu0 %v103
  %4300 = vmatpush2.msra.mxu0 %v102
  %4301 = vmatprep.mubr.f32.mxu0 %v4165
  %4302 = vmatmul.mubr.f32.gmra.mxu0 %v4164
  %v4303 = vpop.f32.mrf.mxu0
  %v4304 = vadd.f32 %v195, %v4303
  %v4305 = vpop.f32.mrf.mxu0
  %v4306 = vadd.f32 %v199, %v4305
  %4307 = vdwg.mxu0
  %4308 = vmatprep.subr.mxu0 0.0
  %4309 = vmatpush1.msra.mxu0 %v99
  %4310 = vmatprep.subr.mxu0 0.0
  %4311 = vmatpush1.msra.mxu0 %v94
  %4312 = vmatprep.subr.mxu0 0.0
  %4313 = vmatpush1.msra.mxu0 %v89
  %4314 = vmatprep.subr.mxu0 0.0
  %4315 = vmatpush1.msra.mxu0 %v84
  %4316 = vmatprep.subr.mxu0 0.0
  %4317 = vmatpush1.msra.mxu0 %v79
  %4318 = vmatprep.subr.mxu0 0.0
  %4319 = vmatpush1.msra.mxu0 %v74
  %4320 = vmatprep.subr.mxu0 0.0
  %4321 = vmatpush1.msra.mxu0 %v69
  %4322 = vmatprep.subr.mxu0 0.0
  %4323 = vmatpush1.msra.mxu0 %v64
  %4324 = vmatprep.subr.mxu0 0.0
  %4325 = vmatpush1.msra.mxu0 %v59
  %4326 = vmatprep.subr.mxu0 0.0
  %4327 = vmatpush1.msra.mxu0 %v54
  %4328 = vmatprep.subr.mxu0 0.0
  %4329 = vmatpush1.msra.mxu0 %v49
  %4330 = vmatprep.subr.mxu0 0.0
  %4331 = vmatpush1.msra.mxu0 %v44
  %4332 = vmatprep.subr.mxu0 0.0
  %4333 = vmatpush1.msra.mxu0 %v39
  %4334 = vmatprep.subr.mxu0 0.0
  %4335 = vmatpush1.msra.mxu0 %v34
  %4336 = vmatprep.subr.mxu0 0.0
  %4337 = vmatpush1.msra.mxu0 %v29
  %4338 = vmatprep.subr.mxu0 0.0
  %4339 = vmatpush1.msra.mxu0 %v24
  %4340 = vmatprep.subr.mxu0 0.0
  %4341 = vmatpush2.msra.mxu0 %v179
  %4342 = vmatprep.subr.mxu0 0.0
  %4343 = vmatpush2.msra.mxu0 %v174
  %4344 = vmatprep.subr.mxu0 0.0
  %4345 = vmatpush2.msra.mxu0 %v169
  %4346 = vmatprep.subr.mxu0 0.0
  %4347 = vmatpush2.msra.mxu0 %v164
  %4348 = vmatprep.subr.mxu0 0.0
  %4349 = vmatpush2.msra.mxu0 %v159
  %4350 = vmatprep.subr.mxu0 0.0
  %4351 = vmatpush2.msra.mxu0 %v154
  %4352 = vmatprep.subr.mxu0 0.0
  %4353 = vmatpush2.msra.mxu0 %v149
  %4354 = vmatprep.subr.mxu0 0.0
  %4355 = vmatpush2.msra.mxu0 %v144
  %4356 = vmatprep.subr.mxu0 0.0
  %4357 = vmatpush2.msra.mxu0 %v139
  %4358 = vmatprep.subr.mxu0 0.0
  %4359 = vmatpush2.msra.mxu0 %v134
  %4360 = vmatprep.subr.mxu0 0.0
  %4361 = vmatpush2.msra.mxu0 %v129
  %4362 = vmatprep.subr.mxu0 0.0
  %4363 = vmatpush2.msra.mxu0 %v124
  %4364 = vmatprep.subr.mxu0 0.0
  %4365 = vmatpush2.msra.mxu0 %v119
  %4366 = vmatprep.subr.mxu0 0.0
  %4367 = vmatpush2.msra.mxu0 %v114
  %4368 = vmatprep.subr.mxu0 0.0
  %4369 = vmatpush2.msra.mxu0 %v109
  %4370 = vmatprep.subr.mxu0 0.0
  %4371 = vmatpush2.msra.mxu0 %v104
  %4372 = vmatprep.mubr.f32.mxu0 %v4165
  %4373 = vmatmul.mubr.f32.gmra.mxu0 %v4164
  %v4374 = vpop.f32.mrf.mxu0
  %v4375 = vadd.f32 %v203, %v4374
  %v4376 = vpop.f32.mrf.mxu0
  %4377 = vdwg.mxu0
  %v4378 = vtanh.pop %v4233
  %v4379 = vtanh.pop %v4235
  %v4380 = vtanh.pop %v4304
  %v4381 = vtanh.pop %v4306
  %v4382 = vtanh.pop %v4375
  %s4383 = scalar_lea.vmem %s3, 180
  %v4384 = vld [vmem:[%s4383] sm:$0xff]
  %v4385 = vld [vmem:[%s4383 + $0x8] sm:$0xff]
  %v4386 = vld [vmem:[%s4383 + $0x10] sm:$0xf]
  %v4389 = vcombine.high %v4384, %v4384
  %v4390 = vcombine.high %v4385, %v4385
  %4393 = vmatprep.subr.mxu0 0.0
  %4394 = vmatpush1.xpose.msra.mxu0 0.0
  %4395 = vmatprep.subr.mxu0 0.0
  %4396 = vmatpush1.xpose.msra.mxu0 0.0
  %4397 = vmatprep.subr.mxu0 0.0
  %4398 = vmatpush1.xpose.msra.mxu0 0.0
  %4399 = vmatprep.subr.mxu0 0.0
  %4400 = vmatpush1.xpose.msra.mxu0 0.0
  %4401 = vmatprep.subr.mxu0 0.0
  %4402 = vmatpush1.xpose.msra.mxu0 0.0
  %4403 = vmatprep.subr.mxu0 0.0
  %4404 = vmatpush1.xpose.msra.mxu0 0.0
  %4405 = vmatprep.subr.mxu0 0.0
  %4406 = vmatpush1.xpose.msra.mxu0 0.0
  %4407 = vmatprep.subr.mxu0 0.0
  %4408 = vmatpush1.xpose.msra.mxu0 0.0
  %4409 = vmatprep.subr.mxu0 0.0
  %4410 = vmatpush1.xpose.msra.mxu0 0.0
  %4411 = vmatprep.subr.mxu0 0.0
  %4412 = vmatpush1.xpose.msra.mxu0 0.0
  %4413 = vmatprep.subr.mxu0 0.0
  %4414 = vmatpush1.xpose.msra.mxu0 0.0
  %4415 = vmatprep.subr.mxu0 0.0
  %4416 = vmatpush1.xpose.msra.mxu0 0.0
  %4417 = vmatprep.subr.mxu0 0.0
  %4418 = vmatpush1.xpose.msra.mxu0 0.0
  %4419 = vmatprep.subr.mxu0 0.0
  %4420 = vmatpush1.xpose.msra.mxu0 0.0
  %4421 = vmatprep.subr.mxu0 0.0
  %4422 = vmatpush1.xpose.msra.mxu0 0.0
  %4423 = vmatprep.subr.mxu0 %v4389
  %4424 = vmatpush1.xpose.msra.mxu0 %v4384
  %4425 = vmatprep.subr.mxu0 0.0
  %4426 = vmatpush2.xpose.msra.mxu0 0.0
  %4427 = vmatprep.subr.mxu0 0.0
  %4428 = vmatpush2.xpose.msra.mxu0 0.0
  %4429 = vmatprep.subr.mxu0 0.0
  %4430 = vmatpush2.xpose.msra.mxu0 0.0
  %4431 = vmatprep.subr.mxu0 0.0
  %4432 = vmatpush2.xpose.msra.mxu0 0.0
  %4433 = vmatprep.subr.mxu0 0.0
  %4434 = vmatpush2.xpose.msra.mxu0 0.0
  %4435 = vmatprep.subr.mxu0 0.0
  %4436 = vmatpush2.xpose.msra.mxu0 0.0
  %4437 = vmatprep.subr.mxu0 0.0
  %4438 = vmatpush2.xpose.msra.mxu0 0.0
  %4439 = vmatprep.subr.mxu0 0.0
  %4440 = vmatpush2.xpose.msra.mxu0 0.0
  %4441 = vmatprep.subr.mxu0 0.0
  %4442 = vmatpush2.xpose.msra.mxu0 0.0
  %4443 = vmatprep.subr.mxu0 0.0
  %4444 = vmatpush2.xpose.msra.mxu0 0.0
  %4445 = vmatprep.subr.mxu0 0.0
  %4446 = vmatpush2.xpose.msra.mxu0 0.0
  %4447 = vmatprep.subr.mxu0 0.0
  %4448 = vmatpush2.xpose.msra.mxu0 0.0
  %4449 = vmatprep.subr.mxu0 0.0
  %4450 = vmatpush2.xpose.msra.mxu0 0.0
  %4451 = vmatprep.subr.mxu0 0.0
  %4452 = vmatpush2.xpose.msra.mxu0 0.0
  %4453 = vmatprep.subr.mxu0 0.0
  %4454 = vmatpush2.xpose.msra.mxu0 0.0
  %4455 = vmatprep.subr.mxu0 0.0
  %4456 = vmatpush2.xpose.msra.mxu0 0.0
  %4457 = vmatprep.mubr.f32.mxu0 %v4379
  %4458 = vmatmul.mubr.f32.gmra.mxu0 %v4378
  %v4459 = vpop.f32.mrf.mxu0
  %v4460 = vadd.f32 0.0, %v4459
  %v4461 = vpop.f32.mrf.mxu0
  %4462 = vdwg.mxu0
  %4463 = vmatprep.subr.mxu0 0.0
  %4464 = vmatpush1.xpose.msra.mxu0 0.0
  %4465 = vmatprep.subr.mxu0 0.0
  %4466 = vmatpush1.xpose.msra.mxu0 0.0
  %4467 = vmatprep.subr.mxu0 0.0
  %4468 = vmatpush1.xpose.msra.mxu0 0.0
  %4469 = vmatprep.subr.mxu0 0.0
  %4470 = vmatpush1.xpose.msra.mxu0 0.0
  %4471 = vmatprep.subr.mxu0 0.0
  %4472 = vmatpush1.xpose.msra.mxu0 0.0
  %4473 = vmatprep.subr.mxu0 0.0
  %4474 = vmatpush1.xpose.msra.mxu0 0.0
  %4475 = vmatprep.subr.mxu0 0.0
  %4476 = vmatpush1.xpose.msra.mxu0 0.0
  %4477 = vmatprep.subr.mxu0 0.0
  %4478 = vmatpush1.xpose.msra.mxu0 0.0
  %4479 = vmatprep.subr.mxu0 0.0
  %4480 = vmatpush1.xpose.msra.mxu0 0.0
  %4481 = vmatprep.subr.mxu0 0.0
  %4482 = vmatpush1.xpose.msra.mxu0 0.0
  %4483 = vmatprep.subr.mxu0 0.0
  %4484 = vmatpush1.xpose.msra.mxu0 0.0
  %4485 = vmatprep.subr.mxu0 0.0
  %4486 = vmatpush1.xpose.msra.mxu0 0.0
  %4487 = vmatprep.subr.mxu0 0.0
  %4488 = vmatpush1.xpose.msra.mxu0 0.0
  %4489 = vmatprep.subr.mxu0 0.0
  %4490 = vmatpush1.xpose.msra.mxu0 0.0
  %4491 = vmatprep.subr.mxu0 0.0
  %4492 = vmatpush1.xpose.msra.mxu0 0.0
  %4493 = vmatprep.subr.mxu0 %v4390
  %4494 = vmatpush1.xpose.msra.mxu0 %v4385
  %4495 = vmatprep.subr.mxu0 0.0
  %4496 = vmatpush2.xpose.msra.mxu0 0.0
  %4497 = vmatprep.subr.mxu0 0.0
  %4498 = vmatpush2.xpose.msra.mxu0 0.0
  %4499 = vmatprep.subr.mxu0 0.0
  %4500 = vmatpush2.xpose.msra.mxu0 0.0
  %4501 = vmatprep.subr.mxu0 0.0
  %4502 = vmatpush2.xpose.msra.mxu0 0.0
  %4503 = vmatprep.subr.mxu0 0.0
  %4504 = vmatpush2.xpose.msra.mxu0 0.0
  %4505 = vmatprep.subr.mxu0 0.0
  %4506 = vmatpush2.xpose.msra.mxu0 0.0
  %4507 = vmatprep.subr.mxu0 0.0
  %4508 = vmatpush2.xpose.msra.mxu0 0.0
  %4509 = vmatprep.subr.mxu0 0.0
  %4510 = vmatpush2.xpose.msra.mxu0 0.0
  %4511 = vmatprep.subr.mxu0 0.0
  %4512 = vmatpush2.xpose.msra.mxu0 0.0
  %4513 = vmatprep.subr.mxu0 0.0
  %4514 = vmatpush2.xpose.msra.mxu0 0.0
  %4515 = vmatprep.subr.mxu0 0.0
  %4516 = vmatpush2.xpose.msra.mxu0 0.0
  %4517 = vmatprep.subr.mxu0 0.0
  %4518 = vmatpush2.xpose.msra.mxu0 0.0
  %4519 = vmatprep.subr.mxu0 0.0
  %4520 = vmatpush2.xpose.msra.mxu0 0.0
  %4521 = vmatprep.subr.mxu0 0.0
  %4522 = vmatpush2.xpose.msra.mxu0 0.0
  %4523 = vmatprep.subr.mxu0 0.0
  %4524 = vmatpush2.xpose.msra.mxu0 0.0
  %4525 = vmatprep.subr.mxu0 0.0
  %4526 = vmatpush2.xpose.msra.mxu0 0.0
  %4527 = vmatprep.mubr.f32.mxu0 %v4381
  %4528 = vmatmul.mubr.f32.gmra.mxu0 %v4380
  %v4529 = vpop.f32.mrf.mxu0
  %v4530 = vadd.f32 %v4460, %v4529
  %v4531 = vpop.f32.mrf.mxu0
  %4532 = vdwg.mxu0
  %4533 = vmatprep.subr.mxu0 0.0
  %4534 = vmatpush1.xpose.msra.mxu0 0.0
  %4535 = vmatprep.subr.mxu0 0.0
  %4536 = vmatpush1.xpose.msra.mxu0 0.0
  %4537 = vmatprep.subr.mxu0 0.0
  %4538 = vmatpush1.xpose.msra.mxu0 0.0
  %4539 = vmatprep.subr.mxu0 0.0
  %4540 = vmatpush1.xpose.msra.mxu0 0.0
  %4541 = vmatprep.subr.mxu0 0.0
  %4542 = vmatpush1.xpose.msra.mxu0 0.0
  %4543 = vmatprep.subr.mxu0 0.0
  %4544 = vmatpush1.xpose.msra.mxu0 0.0
  %4545 = vmatprep.subr.mxu0 0.0
  %4546 = vmatpush1.xpose.msra.mxu0 0.0
  %4547 = vmatprep.subr.mxu0 0.0
  %4548 = vmatpush1.xpose.msra.mxu0 0.0
  %4549 = vmatprep.subr.mxu0 0.0
  %4550 = vmatpush1.xpose.msra.mxu0 0.0
  %4551 = vmatprep.subr.mxu0 0.0
  %4552 = vmatpush1.xpose.msra.mxu0 0.0
  %4553 = vmatprep.subr.mxu0 0.0
  %4554 = vmatpush1.xpose.msra.mxu0 0.0
  %4555 = vmatprep.subr.mxu0 0.0
  %4556 = vmatpush1.xpose.msra.mxu0 0.0
  %4557 = vmatprep.subr.mxu0 0.0
  %4558 = vmatpush1.xpose.msra.mxu0 0.0
  %4559 = vmatprep.subr.mxu0 0.0
  %4560 = vmatpush1.xpose.msra.mxu0 0.0
  %4561 = vmatprep.subr.mxu0 0.0
  %4562 = vmatpush1.xpose.msra.mxu0 0.0
  %4563 = vmatprep.subr.mxu0 0.0
  %4564 = vmatpush1.xpose.msra.mxu0 %v4386
  %4565 = vmatprep.subr.mxu0 0.0
  %4566 = vmatpush2.xpose.msra.mxu0 0.0
  %4567 = vmatprep.subr.mxu0 0.0
  %4568 = vmatpush2.xpose.msra.mxu0 0.0
  %4569 = vmatprep.subr.mxu0 0.0
  %4570 = vmatpush2.xpose.msra.mxu0 0.0
  %4571 = vmatprep.subr.mxu0 0.0
  %4572 = vmatpush2.xpose.msra.mxu0 0.0
  %4573 = vmatprep.subr.mxu0 0.0
  %4574 = vmatpush2.xpose.msra.mxu0 0.0
  %4575 = vmatprep.subr.mxu0 0.0
  %4576 = vmatpush2.xpose.msra.mxu0 0.0
  %4577 = vmatprep.subr.mxu0 0.0
  %4578 = vmatpush2.xpose.msra.mxu0 0.0
  %4579 = vmatprep.subr.mxu0 0.0
  %4580 = vmatpush2.xpose.msra.mxu0 0.0
  %4581 = vmatprep.subr.mxu0 0.0
  %4582 = vmatpush2.xpose.msra.mxu0 0.0
  %4583 = vmatprep.subr.mxu0 0.0
  %4584 = vmatpush2.xpose.msra.mxu0 0.0
  %4585 = vmatprep.subr.mxu0 0.0
  %4586 = vmatpush2.xpose.msra.mxu0 0.0
  %4587 = vmatprep.subr.mxu0 0.0
  %4588 = vmatpush2.xpose.msra.mxu0 0.0
  %4589 = vmatprep.subr.mxu0 0.0
  %4590 = vmatpush2.xpose.msra.mxu0 0.0
  %4591 = vmatprep.subr.mxu0 0.0
  %4592 = vmatpush2.xpose.msra.mxu0 0.0
  %4593 = vmatprep.subr.mxu0 0.0
  %4594 = vmatpush2.xpose.msra.mxu0 0.0
  %4595 = vmatprep.subr.mxu0 0.0
  %4596 = vmatpush2.xpose.msra.mxu0 0.0
  %4597 = vmatprep.mubr.f32.mxu0 0.0
  %4598 = vmatmul.mubr.f32.gmra.mxu0 %v4382
  %v4599 = vpop.f32.mrf.mxu0
  %v4600 = vadd.f32 %v4530, %v4599
  %v4601 = vpop.f32.mrf.mxu0
  %4602 = vdwg.mxu0
  %v4603 = vadd.f32 %v4163, %v4600
  %v4604 = vld [vmem:[%s0 + $0x50] sm:$0xff]
  %v4605 = vld [vmem:[%s0 + $0x58] sm:$0xff]
  %4606 = vmatprep.subr.mxu0 %v96
  %4607 = vmatpush1.msra.mxu0 %v95
  %4608 = vmatprep.subr.mxu0 %v91
  %4609 = vmatpush1.msra.mxu0 %v90
  %4610 = vmatprep.subr.mxu0 %v86
  %4611 = vmatpush1.msra.mxu0 %v85
  %4612 = vmatprep.subr.mxu0 %v81
  %4613 = vmatpush1.msra.mxu0 %v80
  %4614 = vmatprep.subr.mxu0 %v76
  %4615 = vmatpush1.msra.mxu0 %v75
  %4616 = vmatprep.subr.mxu0 %v71
  %4617 = vmatpush1.msra.mxu0 %v70
  %4618 = vmatprep.subr.mxu0 %v66
  %4619 = vmatpush1.msra.mxu0 %v65
  %4620 = vmatprep.subr.mxu0 %v61
  %4621 = vmatpush1.msra.mxu0 %v60
  %4622 = vmatprep.subr.mxu0 %v56
  %4623 = vmatpush1.msra.mxu0 %v55
  %4624 = vmatprep.subr.mxu0 %v51
  %4625 = vmatpush1.msra.mxu0 %v50
  %4626 = vmatprep.subr.mxu0 %v46
  %4627 = vmatpush1.msra.mxu0 %v45
  %4628 = vmatprep.subr.mxu0 %v41
  %4629 = vmatpush1.msra.mxu0 %v40
  %4630 = vmatprep.subr.mxu0 %v36
  %4631 = vmatpush1.msra.mxu0 %v35
  %4632 = vmatprep.subr.mxu0 %v31
  %4633 = vmatpush1.msra.mxu0 %v30
  %4634 = vmatprep.subr.mxu0 %v26
  %4635 = vmatpush1.msra.mxu0 %v25
  %4636 = vmatprep.subr.mxu0 %v21
  %4637 = vmatpush1.msra.mxu0 %v20
  %4638 = vmatprep.subr.mxu0 %v176
  %4639 = vmatpush2.msra.mxu0 %v175
  %4640 = vmatprep.subr.mxu0 %v171
  %4641 = vmatpush2.msra.mxu0 %v170
  %4642 = vmatprep.subr.mxu0 %v166
  %4643 = vmatpush2.msra.mxu0 %v165
  %4644 = vmatprep.subr.mxu0 %v161
  %4645 = vmatpush2.msra.mxu0 %v160
  %4646 = vmatprep.subr.mxu0 %v156
  %4647 = vmatpush2.msra.mxu0 %v155
  %4648 = vmatprep.subr.mxu0 %v151
  %4649 = vmatpush2.msra.mxu0 %v150
  %4650 = vmatprep.subr.mxu0 %v146
  %4651 = vmatpush2.msra.mxu0 %v145
  %4652 = vmatprep.subr.mxu0 %v141
  %4653 = vmatpush2.msra.mxu0 %v140
  %4654 = vmatprep.subr.mxu0 %v136
  %4655 = vmatpush2.msra.mxu0 %v135
  %4656 = vmatprep.subr.mxu0 %v131
  %4657 = vmatpush2.msra.mxu0 %v130
  %4658 = vmatprep.subr.mxu0 %v126
  %4659 = vmatpush2.msra.mxu0 %v125
  %4660 = vmatprep.subr.mxu0 %v121
  %4661 = vmatpush2.msra.mxu0 %v120
  %4662 = vmatprep.subr.mxu0 %v116
  %4663 = vmatpush2.msra.mxu0 %v115
  %4664 = vmatprep.subr.mxu0 %v111
  %4665 = vmatpush2.msra.mxu0 %v110
  %4666 = vmatprep.subr.mxu0 %v106
  %4667 = vmatpush2.msra.mxu0 %v105
  %4668 = vmatprep.subr.mxu0 %v101
  %4669 = vmatpush2.msra.mxu0 %v100
  %4670 = vmatprep.mubr.f32.mxu0 %v4605
  %4671 = vmatmul.mubr.f32.gmra.mxu0 %v4604
  %v4672 = vpop.f32.mrf.mxu0
  %v4673 = vadd.f32 %v187, %v4672
  %v4674 = vpop.f32.mrf.mxu0
  %v4675 = vadd.f32 %v191, %v4674
  %4676 = vdwg.mxu0
  %4677 = vmatprep.subr.mxu0 %v98
  %4678 = vmatpush1.msra.mxu0 %v97
  %4679 = vmatprep.subr.mxu0 %v93
  %4680 = vmatpush1.msra.mxu0 %v92
  %4681 = vmatprep.subr.mxu0 %v88
  %4682 = vmatpush1.msra.mxu0 %v87
  %4683 = vmatprep.subr.mxu0 %v83
  %4684 = vmatpush1.msra.mxu0 %v82
  %4685 = vmatprep.subr.mxu0 %v78
  %4686 = vmatpush1.msra.mxu0 %v77
  %4687 = vmatprep.subr.mxu0 %v73
  %4688 = vmatpush1.msra.mxu0 %v72
  %4689 = vmatprep.subr.mxu0 %v68
  %4690 = vmatpush1.msra.mxu0 %v67
  %4691 = vmatprep.subr.mxu0 %v63
  %4692 = vmatpush1.msra.mxu0 %v62
  %4693 = vmatprep.subr.mxu0 %v58
  %4694 = vmatpush1.msra.mxu0 %v57
  %4695 = vmatprep.subr.mxu0 %v53
  %4696 = vmatpush1.msra.mxu0 %v52
  %4697 = vmatprep.subr.mxu0 %v48
  %4698 = vmatpush1.msra.mxu0 %v47
  %4699 = vmatprep.subr.mxu0 %v43
  %4700 = vmatpush1.msra.mxu0 %v42
  %4701 = vmatprep.subr.mxu0 %v38
  %4702 = vmatpush1.msra.mxu0 %v37
  %4703 = vmatprep.subr.mxu0 %v33
  %4704 = vmatpush1.msra.mxu0 %v32
  %4705 = vmatprep.subr.mxu0 %v28
  %4706 = vmatpush1.msra.mxu0 %v27
  %4707 = vmatprep.subr.mxu0 %v23
  %4708 = vmatpush1.msra.mxu0 %v22
  %4709 = vmatprep.subr.mxu0 %v178
  %4710 = vmatpush2.msra.mxu0 %v177
  %4711 = vmatprep.subr.mxu0 %v173
  %4712 = vmatpush2.msra.mxu0 %v172
  %4713 = vmatprep.subr.mxu0 %v168
  %4714 = vmatpush2.msra.mxu0 %v167
  %4715 = vmatprep.subr.mxu0 %v163
  %4716 = vmatpush2.msra.mxu0 %v162
  %4717 = vmatprep.subr.mxu0 %v158
  %4718 = vmatpush2.msra.mxu0 %v157
  %4719 = vmatprep.subr.mxu0 %v153
  %4720 = vmatpush2.msra.mxu0 %v152
  %4721 = vmatprep.subr.mxu0 %v148
  %4722 = vmatpush2.msra.mxu0 %v147
  %4723 = vmatprep.subr.mxu0 %v143
  %4724 = vmatpush2.msra.mxu0 %v142
  %4725 = vmatprep.subr.mxu0 %v138
  %4726 = vmatpush2.msra.mxu0 %v137
  %4727 = vmatprep.subr.mxu0 %v133
  %4728 = vmatpush2.msra.mxu0 %v132
  %4729 = vmatprep.subr.mxu0 %v128
  %4730 = vmatpush2.msra.mxu0 %v127
  %4731 = vmatprep.subr.mxu0 %v123
  %4732 = vmatpush2.msra.mxu0 %v122
  %4733 = vmatprep.subr.mxu0 %v118
  %4734 = vmatpush2.msra.mxu0 %v117
  %4735 = vmatprep.subr.mxu0 %v113
  %4736 = vmatpush2.msra.mxu0 %v112
  %4737 = vmatprep.subr.mxu0 %v108
  %4738 = vmatpush2.msra.mxu0 %v107
  %4739 = vmatprep.subr.mxu0 %v103
  %4740 = vmatpush2.msra.mxu0 %v102
  %4741 = vmatprep.mubr.f32.mxu0 %v4605
  %4742 = vmatmul.mubr.f32.gmra.mxu0 %v4604
  %v4743 = vpop.f32.mrf.mxu0
  %v4744 = vadd.f32 %v195, %v4743
  %v4745 = vpop.f32.mrf.mxu0
  %v4746 = vadd.f32 %v199, %v4745
  %4747 = vdwg.mxu0
  %4748 = vmatprep.subr.mxu0 0.0
  %4749 = vmatpush1.msra.mxu0 %v99
  %4750 = vmatprep.subr.mxu0 0.0
  %4751 = vmatpush1.msra.mxu0 %v94
  %4752 = vmatprep.subr.mxu0 0.0
  %4753 = vmatpush1.msra.mxu0 %v89
  %4754 = vmatprep.subr.mxu0 0.0
  %4755 = vmatpush1.msra.mxu0 %v84
  %4756 = vmatprep.subr.mxu0 0.0
  %4757 = vmatpush1.msra.mxu0 %v79
  %4758 = vmatprep.subr.mxu0 0.0
  %4759 = vmatpush1.msra.mxu0 %v74
  %4760 = vmatprep.subr.mxu0 0.0
  %4761 = vmatpush1.msra.mxu0 %v69
  %4762 = vmatprep.subr.mxu0 0.0
  %4763 = vmatpush1.msra.mxu0 %v64
  %4764 = vmatprep.subr.mxu0 0.0
  %4765 = vmatpush1.msra.mxu0 %v59
  %4766 = vmatprep.subr.mxu0 0.0
  %4767 = vmatpush1.msra.mxu0 %v54
  %4768 = vmatprep.subr.mxu0 0.0
  %4769 = vmatpush1.msra.mxu0 %v49
  %4770 = vmatprep.subr.mxu0 0.0
  %4771 = vmatpush1.msra.mxu0 %v44
  %4772 = vmatprep.subr.mxu0 0.0
  %4773 = vmatpush1.msra.mxu0 %v39
  %4774 = vmatprep.subr.mxu0 0.0
  %4775 = vmatpush1.msra.mxu0 %v34
  %4776 = vmatprep.subr.mxu0 0.0
  %4777 = vmatpush1.msra.mxu0 %v29
  %4778 = vmatprep.subr.mxu0 0.0
  %4779 = vmatpush1.msra.mxu0 %v24
  %4780 = vmatprep.subr.mxu0 0.0
  %4781 = vmatpush2.msra.mxu0 %v179
  %4782 = vmatprep.subr.mxu0 0.0
  %4783 = vmatpush2.msra.mxu0 %v174
  %4784 = vmatprep.subr.mxu0 0.0
  %4785 = vmatpush2.msra.mxu0 %v169
  %4786 = vmatprep.subr.mxu0 0.0
  %4787 = vmatpush2.msra.mxu0 %v164
  %4788 = vmatprep.subr.mxu0 0.0
  %4789 = vmatpush2.msra.mxu0 %v159
  %4790 = vmatprep.subr.mxu0 0.0
  %4791 = vmatpush2.msra.mxu0 %v154
  %4792 = vmatprep.subr.mxu0 0.0
  %4793 = vmatpush2.msra.mxu0 %v149
  %4794 = vmatprep.subr.mxu0 0.0
  %4795 = vmatpush2.msra.mxu0 %v144
  %4796 = vmatprep.subr.mxu0 0.0
  %4797 = vmatpush2.msra.mxu0 %v139
  %4798 = vmatprep.subr.mxu0 0.0
  %4799 = vmatpush2.msra.mxu0 %v134
  %4800 = vmatprep.subr.mxu0 0.0
  %4801 = vmatpush2.msra.mxu0 %v129
  %4802 = vmatprep.subr.mxu0 0.0
  %4803 = vmatpush2.msra.mxu0 %v124
  %4804 = vmatprep.subr.mxu0 0.0
  %4805 = vmatpush2.msra.mxu0 %v119
  %4806 = vmatprep.subr.mxu0 0.0
  %4807 = vmatpush2.msra.mxu0 %v114
  %4808 = vmatprep.subr.mxu0 0.0
  %4809 = vmatpush2.msra.mxu0 %v109
  %4810 = vmatprep.subr.mxu0 0.0
  %4811 = vmatpush2.msra.mxu0 %v104
  %4812 = vmatprep.mubr.f32.mxu0 %v4605
  %4813 = vmatmul.mubr.f32.gmra.mxu0 %v4604
  %v4814 = vpop.f32.mrf.mxu0
  %v4815 = vadd.f32 %v203, %v4814
  %v4816 = vpop.f32.mrf.mxu0
  %4817 = vdwg.mxu0
  %v4818 = vtanh.pop %v4673
  %v4819 = vtanh.pop %v4675
  %v4820 = vtanh.pop %v4744
  %v4821 = vtanh.pop %v4746
  %v4822 = vtanh.pop %v4815
  %s4823 = scalar_lea.vmem %s3, 200
  %v4824 = vld [vmem:[%s4823] sm:$0xff]
  %v4825 = vld [vmem:[%s4823 + $0x8] sm:$0xff]
  %v4826 = vld [vmem:[%s4823 + $0x10] sm:$0xf]
  %v4829 = vcombine.high %v4824, %v4824
  %v4830 = vcombine.high %v4825, %v4825
  %4833 = vmatprep.subr.mxu0 0.0
  %4834 = vmatpush1.xpose.msra.mxu0 0.0
  %4835 = vmatprep.subr.mxu0 0.0
  %4836 = vmatpush1.xpose.msra.mxu0 0.0
  %4837 = vmatprep.subr.mxu0 0.0
  %4838 = vmatpush1.xpose.msra.mxu0 0.0
  %4839 = vmatprep.subr.mxu0 0.0
  %4840 = vmatpush1.xpose.msra.mxu0 0.0
  %4841 = vmatprep.subr.mxu0 0.0
  %4842 = vmatpush1.xpose.msra.mxu0 0.0
  %4843 = vmatprep.subr.mxu0 0.0
  %4844 = vmatpush1.xpose.msra.mxu0 0.0
  %4845 = vmatprep.subr.mxu0 0.0
  %4846 = vmatpush1.xpose.msra.mxu0 0.0
  %4847 = vmatprep.subr.mxu0 0.0
  %4848 = vmatpush1.xpose.msra.mxu0 0.0
  %4849 = vmatprep.subr.mxu0 0.0
  %4850 = vmatpush1.xpose.msra.mxu0 0.0
  %4851 = vmatprep.subr.mxu0 0.0
  %4852 = vmatpush1.xpose.msra.mxu0 0.0
  %4853 = vmatprep.subr.mxu0 0.0
  %4854 = vmatpush1.xpose.msra.mxu0 0.0
  %4855 = vmatprep.subr.mxu0 0.0
  %4856 = vmatpush1.xpose.msra.mxu0 0.0
  %4857 = vmatprep.subr.mxu0 0.0
  %4858 = vmatpush1.xpose.msra.mxu0 0.0
  %4859 = vmatprep.subr.mxu0 0.0
  %4860 = vmatpush1.xpose.msra.mxu0 0.0
  %4861 = vmatprep.subr.mxu0 0.0
  %4862 = vmatpush1.xpose.msra.mxu0 0.0
  %4863 = vmatprep.subr.mxu0 %v4829
  %4864 = vmatpush1.xpose.msra.mxu0 %v4824
  %4865 = vmatprep.subr.mxu0 0.0
  %4866 = vmatpush2.xpose.msra.mxu0 0.0
  %4867 = vmatprep.subr.mxu0 0.0
  %4868 = vmatpush2.xpose.msra.mxu0 0.0
  %4869 = vmatprep.subr.mxu0 0.0
  %4870 = vmatpush2.xpose.msra.mxu0 0.0
  %4871 = vmatprep.subr.mxu0 0.0
  %4872 = vmatpush2.xpose.msra.mxu0 0.0
  %4873 = vmatprep.subr.mxu0 0.0
  %4874 = vmatpush2.xpose.msra.mxu0 0.0
  %4875 = vmatprep.subr.mxu0 0.0
  %4876 = vmatpush2.xpose.msra.mxu0 0.0
  %4877 = vmatprep.subr.mxu0 0.0
  %4878 = vmatpush2.xpose.msra.mxu0 0.0
  %4879 = vmatprep.subr.mxu0 0.0
  %4880 = vmatpush2.xpose.msra.mxu0 0.0
  %4881 = vmatprep.subr.mxu0 0.0
  %4882 = vmatpush2.xpose.msra.mxu0 0.0
  %4883 = vmatprep.subr.mxu0 0.0
  %4884 = vmatpush2.xpose.msra.mxu0 0.0
  %4885 = vmatprep.subr.mxu0 0.0
  %4886 = vmatpush2.xpose.msra.mxu0 0.0
  %4887 = vmatprep.subr.mxu0 0.0
  %4888 = vmatpush2.xpose.msra.mxu0 0.0
  %4889 = vmatprep.subr.mxu0 0.0
  %4890 = vmatpush2.xpose.msra.mxu0 0.0
  %4891 = vmatprep.subr.mxu0 0.0
  %4892 = vmatpush2.xpose.msra.mxu0 0.0
  %4893 = vmatprep.subr.mxu0 0.0
  %4894 = vmatpush2.xpose.msra.mxu0 0.0
  %4895 = vmatprep.subr.mxu0 0.0
  %4896 = vmatpush2.xpose.msra.mxu0 0.0
  %4897 = vmatprep.mubr.f32.mxu0 %v4819
  %4898 = vmatmul.mubr.f32.gmra.mxu0 %v4818
  %v4899 = vpop.f32.mrf.mxu0
  %v4900 = vadd.f32 0.0, %v4899
  %v4901 = vpop.f32.mrf.mxu0
  %4902 = vdwg.mxu0
  %4903 = vmatprep.subr.mxu0 0.0
  %4904 = vmatpush1.xpose.msra.mxu0 0.0
  %4905 = vmatprep.subr.mxu0 0.0
  %4906 = vmatpush1.xpose.msra.mxu0 0.0
  %4907 = vmatprep.subr.mxu0 0.0
  %4908 = vmatpush1.xpose.msra.mxu0 0.0
  %4909 = vmatprep.subr.mxu0 0.0
  %4910 = vmatpush1.xpose.msra.mxu0 0.0
  %4911 = vmatprep.subr.mxu0 0.0
  %4912 = vmatpush1.xpose.msra.mxu0 0.0
  %4913 = vmatprep.subr.mxu0 0.0
  %4914 = vmatpush1.xpose.msra.mxu0 0.0
  %4915 = vmatprep.subr.mxu0 0.0
  %4916 = vmatpush1.xpose.msra.mxu0 0.0
  %4917 = vmatprep.subr.mxu0 0.0
  %4918 = vmatpush1.xpose.msra.mxu0 0.0
  %4919 = vmatprep.subr.mxu0 0.0
  %4920 = vmatpush1.xpose.msra.mxu0 0.0
  %4921 = vmatprep.subr.mxu0 0.0
  %4922 = vmatpush1.xpose.msra.mxu0 0.0
  %4923 = vmatprep.subr.mxu0 0.0
  %4924 = vmatpush1.xpose.msra.mxu0 0.0
  %4925 = vmatprep.subr.mxu0 0.0
  %4926 = vmatpush1.xpose.msra.mxu0 0.0
  %4927 = vmatprep.subr.mxu0 0.0
  %4928 = vmatpush1.xpose.msra.mxu0 0.0
  %4929 = vmatprep.subr.mxu0 0.0
  %4930 = vmatpush1.xpose.msra.mxu0 0.0
  %4931 = vmatprep.subr.mxu0 0.0
  %4932 = vmatpush1.xpose.msra.mxu0 0.0
  %4933 = vmatprep.subr.mxu0 %v4830
  %4934 = vmatpush1.xpose.msra.mxu0 %v4825
  %4935 = vmatprep.subr.mxu0 0.0
  %4936 = vmatpush2.xpose.msra.mxu0 0.0
  %4937 = vmatprep.subr.mxu0 0.0
  %4938 = vmatpush2.xpose.msra.mxu0 0.0
  %4939 = vmatprep.subr.mxu0 0.0
  %4940 = vmatpush2.xpose.msra.mxu0 0.0
  %4941 = vmatprep.subr.mxu0 0.0
  %4942 = vmatpush2.xpose.msra.mxu0 0.0
  %4943 = vmatprep.subr.mxu0 0.0
  %4944 = vmatpush2.xpose.msra.mxu0 0.0
  %4945 = vmatprep.subr.mxu0 0.0
  %4946 = vmatpush2.xpose.msra.mxu0 0.0
  %4947 = vmatprep.subr.mxu0 0.0
  %4948 = vmatpush2.xpose.msra.mxu0 0.0
  %4949 = vmatprep.subr.mxu0 0.0
  %4950 = vmatpush2.xpose.msra.mxu0 0.0
  %4951 = vmatprep.subr.mxu0 0.0
  %4952 = vmatpush2.xpose.msra.mxu0 0.0
  %4953 = vmatprep.subr.mxu0 0.0
  %4954 = vmatpush2.xpose.msra.mxu0 0.0
  %4955 = vmatprep.subr.mxu0 0.0
  %4956 = vmatpush2.xpose.msra.mxu0 0.0
  %4957 = vmatprep.subr.mxu0 0.0
  %4958 = vmatpush2.xpose.msra.mxu0 0.0
  %4959 = vmatprep.subr.mxu0 0.0
  %4960 = vmatpush2.xpose.msra.mxu0 0.0
  %4961 = vmatprep.subr.mxu0 0.0
  %4962 = vmatpush2.xpose.msra.mxu0 0.0
  %4963 = vmatprep.subr.mxu0 0.0
  %4964 = vmatpush2.xpose.msra.mxu0 0.0
  %4965 = vmatprep.subr.mxu0 0.0
  %4966 = vmatpush2.xpose.msra.mxu0 0.0
  %4967 = vmatprep.mubr.f32.mxu0 %v4821
  %4968 = vmatmul.mubr.f32.gmra.mxu0 %v4820
  %v4969 = vpop.f32.mrf.mxu0
  %v4970 = vadd.f32 %v4900, %v4969
  %v4971 = vpop.f32.mrf.mxu0
  %4972 = vdwg.mxu0
  %4973 = vmatprep.subr.mxu0 0.0
  %4974 = vmatpush1.xpose.msra.mxu0 0.0
  %4975 = vmatprep.subr.mxu0 0.0
  %4976 = vmatpush1.xpose.msra.mxu0 0.0
  %4977 = vmatprep.subr.mxu0 0.0
  %4978 = vmatpush1.xpose.msra.mxu0 0.0
  %4979 = vmatprep.subr.mxu0 0.0
  %4980 = vmatpush1.xpose.msra.mxu0 0.0
  %4981 = vmatprep.subr.mxu0 0.0
  %4982 = vmatpush1.xpose.msra.mxu0 0.0
  %4983 = vmatprep.subr.mxu0 0.0
  %4984 = vmatpush1.xpose.msra.mxu0 0.0
  %4985 = vmatprep.subr.mxu0 0.0
  %4986 = vmatpush1.xpose.msra.mxu0 0.0
  %4987 = vmatprep.subr.mxu0 0.0
  %4988 = vmatpush1.xpose.msra.mxu0 0.0
  %4989 = vmatprep.subr.mxu0 0.0
  %4990 = vmatpush1.xpose.msra.mxu0 0.0
  %4991 = vmatprep.subr.mxu0 0.0
  %4992 = vmatpush1.xpose.msra.mxu0 0.0
  %4993 = vmatprep.subr.mxu0 0.0
  %4994 = vmatpush1.xpose.msra.mxu0 0.0
  %4995 = vmatprep.subr.mxu0 0.0
  %4996 = vmatpush1.xpose.msra.mxu0 0.0
  %4997 = vmatprep.subr.mxu0 0.0
  %4998 = vmatpush1.xpose.msra.mxu0 0.0
  %4999 = vmatprep.subr.mxu0 0.0
  %5000 = vmatpush1.xpose.msra.mxu0 0.0
  %5001 = vmatprep.subr.mxu0 0.0
  %5002 = vmatpush1.xpose.msra.mxu0 0.0
  %5003 = vmatprep.subr.mxu0 0.0
  %5004 = vmatpush1.xpose.msra.mxu0 %v4826
  %5005 = vmatprep.subr.mxu0 0.0
  %5006 = vmatpush2.xpose.msra.mxu0 0.0
  %5007 = vmatprep.subr.mxu0 0.0
  %5008 = vmatpush2.xpose.msra.mxu0 0.0
  %5009 = vmatprep.subr.mxu0 0.0
  %5010 = vmatpush2.xpose.msra.mxu0 0.0
  %5011 = vmatprep.subr.mxu0 0.0
  %5012 = vmatpush2.xpose.msra.mxu0 0.0
  %5013 = vmatprep.subr.mxu0 0.0
  %5014 = vmatpush2.xpose.msra.mxu0 0.0
  %5015 = vmatprep.subr.mxu0 0.0
  %5016 = vmatpush2.xpose.msra.mxu0 0.0
  %5017 = vmatprep.subr.mxu0 0.0
  %5018 = vmatpush2.xpose.msra.mxu0 0.0
  %5019 = vmatprep.subr.mxu0 0.0
  %5020 = vmatpush2.xpose.msra.mxu0 0.0
  %5021 = vmatprep.subr.mxu0 0.0
  %5022 = vmatpush2.xpose.msra.mxu0 0.0
  %5023 = vmatprep.subr.mxu0 0.0
  %5024 = vmatpush2.xpose.msra.mxu0 0.0
  %5025 = vmatprep.subr.mxu0 0.0
  %5026 = vmatpush2.xpose.msra.mxu0 0.0
  %5027 = vmatprep.subr.mxu0 0.0
  %5028 = vmatpush2.xpose.msra.mxu0 0.0
  %5029 = vmatprep.subr.mxu0 0.0
  %5030 = vmatpush2.xpose.msra.mxu0 0.0
  %5031 = vmatprep.subr.mxu0 0.0
  %5032 = vmatpush2.xpose.msra.mxu0 0.0
  %5033 = vmatprep.subr.mxu0 0.0
  %5034 = vmatpush2.xpose.msra.mxu0 0.0
  %5035 = vmatprep.subr.mxu0 0.0
  %5036 = vmatpush2.xpose.msra.mxu0 0.0
  %5037 = vmatprep.mubr.f32.mxu0 0.0
  %5038 = vmatmul.mubr.f32.gmra.mxu0 %v4822
  %v5039 = vpop.f32.mrf.mxu0
  %v5040 = vadd.f32 %v4970, %v5039
  %v5041 = vpop.f32.mrf.mxu0
  %5042 = vdwg.mxu0
  %v5043 = vadd.f32 %v4603, %v5040
  %v5044 = vld [vmem:[%s0 + $0x58] sm:$0xff]
  %v5045 = vld [vmem:[%s0 + $0x60] sm:$0xff]
  %5046 = vmatprep.subr.mxu0 %v96
  %5047 = vmatpush1.msra.mxu0 %v95
  %5048 = vmatprep.subr.mxu0 %v91
  %5049 = vmatpush1.msra.mxu0 %v90
  %5050 = vmatprep.subr.mxu0 %v86
  %5051 = vmatpush1.msra.mxu0 %v85
  %5052 = vmatprep.subr.mxu0 %v81
  %5053 = vmatpush1.msra.mxu0 %v80
  %5054 = vmatprep.subr.mxu0 %v76
  %5055 = vmatpush1.msra.mxu0 %v75
  %5056 = vmatprep.subr.mxu0 %v71
  %5057 = vmatpush1.msra.mxu0 %v70
  %5058 = vmatprep.subr.mxu0 %v66
  %5059 = vmatpush1.msra.mxu0 %v65
  %5060 = vmatprep.subr.mxu0 %v61
  %5061 = vmatpush1.msra.mxu0 %v60
  %5062 = vmatprep.subr.mxu0 %v56
  %5063 = vmatpush1.msra.mxu0 %v55
  %5064 = vmatprep.subr.mxu0 %v51
  %5065 = vmatpush1.msra.mxu0 %v50
  %5066 = vmatprep.subr.mxu0 %v46
  %5067 = vmatpush1.msra.mxu0 %v45
  %5068 = vmatprep.subr.mxu0 %v41
  %5069 = vmatpush1.msra.mxu0 %v40
  %5070 = vmatprep.subr.mxu0 %v36
  %5071 = vmatpush1.msra.mxu0 %v35
  %5072 = vmatprep.subr.mxu0 %v31
  %5073 = vmatpush1.msra.mxu0 %v30
  %5074 = vmatprep.subr.mxu0 %v26
  %5075 = vmatpush1.msra.mxu0 %v25
  %5076 = vmatprep.subr.mxu0 %v21
  %5077 = vmatpush1.msra.mxu0 %v20
  %5078 = vmatprep.subr.mxu0 %v176
  %5079 = vmatpush2.msra.mxu0 %v175
  %5080 = vmatprep.subr.mxu0 %v171
  %5081 = vmatpush2.msra.mxu0 %v170
  %5082 = vmatprep.subr.mxu0 %v166
  %5083 = vmatpush2.msra.mxu0 %v165
  %5084 = vmatprep.subr.mxu0 %v161
  %5085 = vmatpush2.msra.mxu0 %v160
  %5086 = vmatprep.subr.mxu0 %v156
  %5087 = vmatpush2.msra.mxu0 %v155
  %5088 = vmatprep.subr.mxu0 %v151
  %5089 = vmatpush2.msra.mxu0 %v150
  %5090 = vmatprep.subr.mxu0 %v146
  %5091 = vmatpush2.msra.mxu0 %v145
  %5092 = vmatprep.subr.mxu0 %v141
  %5093 = vmatpush2.msra.mxu0 %v140
  %5094 = vmatprep.subr.mxu0 %v136
  %5095 = vmatpush2.msra.mxu0 %v135
  %5096 = vmatprep.subr.mxu0 %v131
  %5097 = vmatpush2.msra.mxu0 %v130
  %5098 = vmatprep.subr.mxu0 %v126
  %5099 = vmatpush2.msra.mxu0 %v125
  %5100 = vmatprep.subr.mxu0 %v121
  %5101 = vmatpush2.msra.mxu0 %v120
  %5102 = vmatprep.subr.mxu0 %v116
  %5103 = vmatpush2.msra.mxu0 %v115
  %5104 = vmatprep.subr.mxu0 %v111
  %5105 = vmatpush2.msra.mxu0 %v110
  %5106 = vmatprep.subr.mxu0 %v106
  %5107 = vmatpush2.msra.mxu0 %v105
  %5108 = vmatprep.subr.mxu0 %v101
  %5109 = vmatpush2.msra.mxu0 %v100
  %5110 = vmatprep.mubr.f32.mxu0 %v5045
  %5111 = vmatmul.mubr.f32.gmra.mxu0 %v5044
  %v5112 = vpop.f32.mrf.mxu0
  %v5113 = vadd.f32 %v187, %v5112
  %v5114 = vpop.f32.mrf.mxu0
  %v5115 = vadd.f32 %v191, %v5114
  %5116 = vdwg.mxu0
  %5117 = vmatprep.subr.mxu0 %v98
  %5118 = vmatpush1.msra.mxu0 %v97
  %5119 = vmatprep.subr.mxu0 %v93
  %5120 = vmatpush1.msra.mxu0 %v92
  %5121 = vmatprep.subr.mxu0 %v88
  %5122 = vmatpush1.msra.mxu0 %v87
  %5123 = vmatprep.subr.mxu0 %v83
  %5124 = vmatpush1.msra.mxu0 %v82
  %5125 = vmatprep.subr.mxu0 %v78
  %5126 = vmatpush1.msra.mxu0 %v77
  %5127 = vmatprep.subr.mxu0 %v73
  %5128 = vmatpush1.msra.mxu0 %v72
  %5129 = vmatprep.subr.mxu0 %v68
  %5130 = vmatpush1.msra.mxu0 %v67
  %5131 = vmatprep.subr.mxu0 %v63
  %5132 = vmatpush1.msra.mxu0 %v62
  %5133 = vmatprep.subr.mxu0 %v58
  %5134 = vmatpush1.msra.mxu0 %v57
  %5135 = vmatprep.subr.mxu0 %v53
  %5136 = vmatpush1.msra.mxu0 %v52
  %5137 = vmatprep.subr.mxu0 %v48
  %5138 = vmatpush1.msra.mxu0 %v47
  %5139 = vmatprep.subr.mxu0 %v43
  %5140 = vmatpush1.msra.mxu0 %v42
  %5141 = vmatprep.subr.mxu0 %v38
  %5142 = vmatpush1.msra.mxu0 %v37
  %5143 = vmatprep.subr.mxu0 %v33
  %5144 = vmatpush1.msra.mxu0 %v32
  %5145 = vmatprep.subr.mxu0 %v28
  %5146 = vmatpush1.msra.mxu0 %v27
  %5147 = vmatprep.subr.mxu0 %v23
  %5148 = vmatpush1.msra.mxu0 %v22
  %5149 = vmatprep.subr.mxu0 %v178
  %5150 = vmatpush2.msra.mxu0 %v177
  %5151 = vmatprep.subr.mxu0 %v173
  %5152 = vmatpush2.msra.mxu0 %v172
  %5153 = vmatprep.subr.mxu0 %v168
  %5154 = vmatpush2.msra.mxu0 %v167
  %5155 = vmatprep.subr.mxu0 %v163
  %5156 = vmatpush2.msra.mxu0 %v162
  %5157 = vmatprep.subr.mxu0 %v158
  %5158 = vmatpush2.msra.mxu0 %v157
  %5159 = vmatprep.subr.mxu0 %v153
  %5160 = vmatpush2.msra.mxu0 %v152
  %5161 = vmatprep.subr.mxu0 %v148
  %5162 = vmatpush2.msra.mxu0 %v147
  %5163 = vmatprep.subr.mxu0 %v143
  %5164 = vmatpush2.msra.mxu0 %v142
  %5165 = vmatprep.subr.mxu0 %v138
  %5166 = vmatpush2.msra.mxu0 %v137
  %5167 = vmatprep.subr.mxu0 %v133
  %5168 = vmatpush2.msra.mxu0 %v132
  %5169 = vmatprep.subr.mxu0 %v128
  %5170 = vmatpush2.msra.mxu0 %v127
  %5171 = vmatprep.subr.mxu0 %v123
  %5172 = vmatpush2.msra.mxu0 %v122
  %5173 = vmatprep.subr.mxu0 %v118
  %5174 = vmatpush2.msra.mxu0 %v117
  %5175 = vmatprep.subr.mxu0 %v113
  %5176 = vmatpush2.msra.mxu0 %v112
  %5177 = vmatprep.subr.mxu0 %v108
  %5178 = vmatpush2.msra.mxu0 %v107
  %5179 = vmatprep.subr.mxu0 %v103
  %5180 = vmatpush2.msra.mxu0 %v102
  %5181 = vmatprep.mubr.f32.mxu0 %v5045
  %5182 = vmatmul.mubr.f32.gmra.mxu0 %v5044
  %v5183 = vpop.f32.mrf.mxu0
  %v5184 = vadd.f32 %v195, %v5183
  %v5185 = vpop.f32.mrf.mxu0
  %v5186 = vadd.f32 %v199, %v5185
  %5187 = vdwg.mxu0
  %5188 = vmatprep.subr.mxu0 0.0
  %5189 = vmatpush1.msra.mxu0 %v99
  %5190 = vmatprep.subr.mxu0 0.0
  %5191 = vmatpush1.msra.mxu0 %v94
  %5192 = vmatprep.subr.mxu0 0.0
  %5193 = vmatpush1.msra.mxu0 %v89
  %5194 = vmatprep.subr.mxu0 0.0
  %5195 = vmatpush1.msra.mxu0 %v84
  %5196 = vmatprep.subr.mxu0 0.0
  %5197 = vmatpush1.msra.mxu0 %v79
  %5198 = vmatprep.subr.mxu0 0.0
  %5199 = vmatpush1.msra.mxu0 %v74
  %5200 = vmatprep.subr.mxu0 0.0
  %5201 = vmatpush1.msra.mxu0 %v69
  %5202 = vmatprep.subr.mxu0 0.0
  %5203 = vmatpush1.msra.mxu0 %v64
  %5204 = vmatprep.subr.mxu0 0.0
  %5205 = vmatpush1.msra.mxu0 %v59
  %5206 = vmatprep.subr.mxu0 0.0
  %5207 = vmatpush1.msra.mxu0 %v54
  %5208 = vmatprep.subr.mxu0 0.0
  %5209 = vmatpush1.msra.mxu0 %v49
  %5210 = vmatprep.subr.mxu0 0.0
  %5211 = vmatpush1.msra.mxu0 %v44
  %5212 = vmatprep.subr.mxu0 0.0
  %5213 = vmatpush1.msra.mxu0 %v39
  %5214 = vmatprep.subr.mxu0 0.0
  %5215 = vmatpush1.msra.mxu0 %v34
  %5216 = vmatprep.subr.mxu0 0.0
  %5217 = vmatpush1.msra.mxu0 %v29
  %5218 = vmatprep.subr.mxu0 0.0
  %5219 = vmatpush1.msra.mxu0 %v24
  %5220 = vmatprep.subr.mxu0 0.0
  %5221 = vmatpush2.msra.mxu0 %v179
  %5222 = vmatprep.subr.mxu0 0.0
  %5223 = vmatpush2.msra.mxu0 %v174
  %5224 = vmatprep.subr.mxu0 0.0
  %5225 = vmatpush2.msra.mxu0 %v169
  %5226 = vmatprep.subr.mxu0 0.0
  %5227 = vmatpush2.msra.mxu0 %v164
  %5228 = vmatprep.subr.mxu0 0.0
  %5229 = vmatpush2.msra.mxu0 %v159
  %5230 = vmatprep.subr.mxu0 0.0
  %5231 = vmatpush2.msra.mxu0 %v154
  %5232 = vmatprep.subr.mxu0 0.0
  %5233 = vmatpush2.msra.mxu0 %v149
  %5234 = vmatprep.subr.mxu0 0.0
  %5235 = vmatpush2.msra.mxu0 %v144
  %5236 = vmatprep.subr.mxu0 0.0
  %5237 = vmatpush2.msra.mxu0 %v139
  %5238 = vmatprep.subr.mxu0 0.0
  %5239 = vmatpush2.msra.mxu0 %v134
  %5240 = vmatprep.subr.mxu0 0.0
  %5241 = vmatpush2.msra.mxu0 %v129
  %5242 = vmatprep.subr.mxu0 0.0
  %5243 = vmatpush2.msra.mxu0 %v124
  %5244 = vmatprep.subr.mxu0 0.0
  %5245 = vmatpush2.msra.mxu0 %v119
  %5246 = vmatprep.subr.mxu0 0.0
  %5247 = vmatpush2.msra.mxu0 %v114
  %5248 = vmatprep.subr.mxu0 0.0
  %5249 = vmatpush2.msra.mxu0 %v109
  %5250 = vmatprep.subr.mxu0 0.0
  %5251 = vmatpush2.msra.mxu0 %v104
  %5252 = vmatprep.mubr.f32.mxu0 %v5045
  %5253 = vmatmul.mubr.f32.gmra.mxu0 %v5044
  %v5254 = vpop.f32.mrf.mxu0
  %v5255 = vadd.f32 %v203, %v5254
  %v5256 = vpop.f32.mrf.mxu0
  %5257 = vdwg.mxu0
  %v5258 = vtanh.pop %v5113
  %v5259 = vtanh.pop %v5115
  %v5260 = vtanh.pop %v5184
  %v5261 = vtanh.pop %v5186
  %v5262 = vtanh.pop %v5255
  %s5263 = scalar_lea.vmem %s3, 220
  %v5264 = vld [vmem:[%s5263] sm:$0xff]
  %v5265 = vld [vmem:[%s5263 + $0x8] sm:$0xff]
  %v5266 = vld [vmem:[%s5263 + $0x10] sm:$0xf]
  %v5269 = vcombine.high %v5264, %v5264
  %v5270 = vcombine.high %v5265, %v5265
  %5273 = vmatprep.subr.mxu0 0.0
  %5274 = vmatpush1.xpose.msra.mxu0 0.0
  %5275 = vmatprep.subr.mxu0 0.0
  %5276 = vmatpush1.xpose.msra.mxu0 0.0
  %5277 = vmatprep.subr.mxu0 0.0
  %5278 = vmatpush1.xpose.msra.mxu0 0.0
  %5279 = vmatprep.subr.mxu0 0.0
  %5280 = vmatpush1.xpose.msra.mxu0 0.0
  %5281 = vmatprep.subr.mxu0 0.0
  %5282 = vmatpush1.xpose.msra.mxu0 0.0
  %5283 = vmatprep.subr.mxu0 0.0
  %5284 = vmatpush1.xpose.msra.mxu0 0.0
  %5285 = vmatprep.subr.mxu0 0.0
  %5286 = vmatpush1.xpose.msra.mxu0 0.0
  %5287 = vmatprep.subr.mxu0 0.0
  %5288 = vmatpush1.xpose.msra.mxu0 0.0
  %5289 = vmatprep.subr.mxu0 0.0
  %5290 = vmatpush1.xpose.msra.mxu0 0.0
  %5291 = vmatprep.subr.mxu0 0.0
  %5292 = vmatpush1.xpose.msra.mxu0 0.0
  %5293 = vmatprep.subr.mxu0 0.0
  %5294 = vmatpush1.xpose.msra.mxu0 0.0
  %5295 = vmatprep.subr.mxu0 0.0
  %5296 = vmatpush1.xpose.msra.mxu0 0.0
  %5297 = vmatprep.subr.mxu0 0.0
  %5298 = vmatpush1.xpose.msra.mxu0 0.0
  %5299 = vmatprep.subr.mxu0 0.0
  %5300 = vmatpush1.xpose.msra.mxu0 0.0
  %5301 = vmatprep.subr.mxu0 0.0
  %5302 = vmatpush1.xpose.msra.mxu0 0.0
  %5303 = vmatprep.subr.mxu0 %v5269
  %5304 = vmatpush1.xpose.msra.mxu0 %v5264
  %5305 = vmatprep.subr.mxu0 0.0
  %5306 = vmatpush2.xpose.msra.mxu0 0.0
  %5307 = vmatprep.subr.mxu0 0.0
  %5308 = vmatpush2.xpose.msra.mxu0 0.0
  %5309 = vmatprep.subr.mxu0 0.0
  %5310 = vmatpush2.xpose.msra.mxu0 0.0
  %5311 = vmatprep.subr.mxu0 0.0
  %5312 = vmatpush2.xpose.msra.mxu0 0.0
  %5313 = vmatprep.subr.mxu0 0.0
  %5314 = vmatpush2.xpose.msra.mxu0 0.0
  %5315 = vmatprep.subr.mxu0 0.0
  %5316 = vmatpush2.xpose.msra.mxu0 0.0
  %5317 = vmatprep.subr.mxu0 0.0
  %5318 = vmatpush2.xpose.msra.mxu0 0.0
  %5319 = vmatprep.subr.mxu0 0.0
  %5320 = vmatpush2.xpose.msra.mxu0 0.0
  %5321 = vmatprep.subr.mxu0 0.0
  %5322 = vmatpush2.xpose.msra.mxu0 0.0
  %5323 = vmatprep.subr.mxu0 0.0
  %5324 = vmatpush2.xpose.msra.mxu0 0.0
  %5325 = vmatprep.subr.mxu0 0.0
  %5326 = vmatpush2.xpose.msra.mxu0 0.0
  %5327 = vmatprep.subr.mxu0 0.0
  %5328 = vmatpush2.xpose.msra.mxu0 0.0
  %5329 = vmatprep.subr.mxu0 0.0
  %5330 = vmatpush2.xpose.msra.mxu0 0.0
  %5331 = vmatprep.subr.mxu0 0.0
  %5332 = vmatpush2.xpose.msra.mxu0 0.0
  %5333 = vmatprep.subr.mxu0 0.0
  %5334 = vmatpush2.xpose.msra.mxu0 0.0
  %5335 = vmatprep.subr.mxu0 0.0
  %5336 = vmatpush2.xpose.msra.mxu0 0.0
  %5337 = vmatprep.mubr.f32.mxu0 %v5259
  %5338 = vmatmul.mubr.f32.gmra.mxu0 %v5258
  %v5339 = vpop.f32.mrf.mxu0
  %v5340 = vadd.f32 0.0, %v5339
  %v5341 = vpop.f32.mrf.mxu0
  %5342 = vdwg.mxu0
  %5343 = vmatprep.subr.mxu0 0.0
  %5344 = vmatpush1.xpose.msra.mxu0 0.0
  %5345 = vmatprep.subr.mxu0 0.0
  %5346 = vmatpush1.xpose.msra.mxu0 0.0
  %5347 = vmatprep.subr.mxu0 0.0
  %5348 = vmatpush1.xpose.msra.mxu0 0.0
  %5349 = vmatprep.subr.mxu0 0.0
  %5350 = vmatpush1.xpose.msra.mxu0 0.0
  %5351 = vmatprep.subr.mxu0 0.0
  %5352 = vmatpush1.xpose.msra.mxu0 0.0
  %5353 = vmatprep.subr.mxu0 0.0
  %5354 = vmatpush1.xpose.msra.mxu0 0.0
  %5355 = vmatprep.subr.mxu0 0.0
  %5356 = vmatpush1.xpose.msra.mxu0 0.0
  %5357 = vmatprep.subr.mxu0 0.0
  %5358 = vmatpush1.xpose.msra.mxu0 0.0
  %5359 = vmatprep.subr.mxu0 0.0
  %5360 = vmatpush1.xpose.msra.mxu0 0.0
  %5361 = vmatprep.subr.mxu0 0.0
  %5362 = vmatpush1.xpose.msra.mxu0 0.0
  %5363 = vmatprep.subr.mxu0 0.0
  %5364 = vmatpush1.xpose.msra.mxu0 0.0
  %5365 = vmatprep.subr.mxu0 0.0
  %5366 = vmatpush1.xpose.msra.mxu0 0.0
  %5367 = vmatprep.subr.mxu0 0.0
  %5368 = vmatpush1.xpose.msra.mxu0 0.0
  %5369 = vmatprep.subr.mxu0 0.0
  %5370 = vmatpush1.xpose.msra.mxu0 0.0
  %5371 = vmatprep.subr.mxu0 0.0
  %5372 = vmatpush1.xpose.msra.mxu0 0.0
  %5373 = vmatprep.subr.mxu0 %v5270
  %5374 = vmatpush1.xpose.msra.mxu0 %v5265
  %5375 = vmatprep.subr.mxu0 0.0
  %5376 = vmatpush2.xpose.msra.mxu0 0.0
  %5377 = vmatprep.subr.mxu0 0.0
  %5378 = vmatpush2.xpose.msra.mxu0 0.0
  %5379 = vmatprep.subr.mxu0 0.0
  %5380 = vmatpush2.xpose.msra.mxu0 0.0
  %5381 = vmatprep.subr.mxu0 0.0
  %5382 = vmatpush2.xpose.msra.mxu0 0.0
  %5383 = vmatprep.subr.mxu0 0.0
  %5384 = vmatpush2.xpose.msra.mxu0 0.0
  %5385 = vmatprep.subr.mxu0 0.0
  %5386 = vmatpush2.xpose.msra.mxu0 0.0
  %5387 = vmatprep.subr.mxu0 0.0
  %5388 = vmatpush2.xpose.msra.mxu0 0.0
  %5389 = vmatprep.subr.mxu0 0.0
  %5390 = vmatpush2.xpose.msra.mxu0 0.0
  %5391 = vmatprep.subr.mxu0 0.0
  %5392 = vmatpush2.xpose.msra.mxu0 0.0
  %5393 = vmatprep.subr.mxu0 0.0
  %5394 = vmatpush2.xpose.msra.mxu0 0.0
  %5395 = vmatprep.subr.mxu0 0.0
  %5396 = vmatpush2.xpose.msra.mxu0 0.0
  %5397 = vmatprep.subr.mxu0 0.0
  %5398 = vmatpush2.xpose.msra.mxu0 0.0
  %5399 = vmatprep.subr.mxu0 0.0
  %5400 = vmatpush2.xpose.msra.mxu0 0.0
  %5401 = vmatprep.subr.mxu0 0.0
  %5402 = vmatpush2.xpose.msra.mxu0 0.0
  %5403 = vmatprep.subr.mxu0 0.0
  %5404 = vmatpush2.xpose.msra.mxu0 0.0
  %5405 = vmatprep.subr.mxu0 0.0
  %5406 = vmatpush2.xpose.msra.mxu0 0.0
  %5407 = vmatprep.mubr.f32.mxu0 %v5261
  %5408 = vmatmul.mubr.f32.gmra.mxu0 %v5260
  %v5409 = vpop.f32.mrf.mxu0
  %v5410 = vadd.f32 %v5340, %v5409
  %v5411 = vpop.f32.mrf.mxu0
  %5412 = vdwg.mxu0
  %5413 = vmatprep.subr.mxu0 0.0
  %5414 = vmatpush1.xpose.msra.mxu0 0.0
  %5415 = vmatprep.subr.mxu0 0.0
  %5416 = vmatpush1.xpose.msra.mxu0 0.0
  %5417 = vmatprep.subr.mxu0 0.0
  %5418 = vmatpush1.xpose.msra.mxu0 0.0
  %5419 = vmatprep.subr.mxu0 0.0
  %5420 = vmatpush1.xpose.msra.mxu0 0.0
  %5421 = vmatprep.subr.mxu0 0.0
  %5422 = vmatpush1.xpose.msra.mxu0 0.0
  %5423 = vmatprep.subr.mxu0 0.0
  %5424 = vmatpush1.xpose.msra.mxu0 0.0
  %5425 = vmatprep.subr.mxu0 0.0
  %5426 = vmatpush1.xpose.msra.mxu0 0.0
  %5427 = vmatprep.subr.mxu0 0.0
  %5428 = vmatpush1.xpose.msra.mxu0 0.0
  %5429 = vmatprep.subr.mxu0 0.0
  %5430 = vmatpush1.xpose.msra.mxu0 0.0
  %5431 = vmatprep.subr.mxu0 0.0
  %5432 = vmatpush1.xpose.msra.mxu0 0.0
  %5433 = vmatprep.subr.mxu0 0.0
  %5434 = vmatpush1.xpose.msra.mxu0 0.0
  %5435 = vmatprep.subr.mxu0 0.0
  %5436 = vmatpush1.xpose.msra.mxu0 0.0
  %5437 = vmatprep.subr.mxu0 0.0
  %5438 = vmatpush1.xpose.msra.mxu0 0.0
  %5439 = vmatprep.subr.mxu0 0.0
  %5440 = vmatpush1.xpose.msra.mxu0 0.0
  %5441 = vmatprep.subr.mxu0 0.0
  %5442 = vmatpush1.xpose.msra.mxu0 0.0
  %5443 = vmatprep.subr.mxu0 0.0
  %5444 = vmatpush1.xpose.msra.mxu0 %v5266
  %5445 = vmatprep.subr.mxu0 0.0
  %5446 = vmatpush2.xpose.msra.mxu0 0.0
  %5447 = vmatprep.subr.mxu0 0.0
  %5448 = vmatpush2.xpose.msra.mxu0 0.0
  %5449 = vmatprep.subr.mxu0 0.0
  %5450 = vmatpush2.xpose.msra.mxu0 0.0
  %5451 = vmatprep.subr.mxu0 0.0
  %5452 = vmatpush2.xpose.msra.mxu0 0.0
  %5453 = vmatprep.subr.mxu0 0.0
  %5454 = vmatpush2.xpose.msra.mxu0 0.0
  %5455 = vmatprep.subr.mxu0 0.0
  %5456 = vmatpush2.xpose.msra.mxu0 0.0
  %5457 = vmatprep.subr.mxu0 0.0
  %5458 = vmatpush2.xpose.msra.mxu0 0.0
  %5459 = vmatprep.subr.mxu0 0.0
  %5460 = vmatpush2.xpose.msra.mxu0 0.0
  %5461 = vmatprep.subr.mxu0 0.0
  %5462 = vmatpush2.xpose.msra.mxu0 0.0
  %5463 = vmatprep.subr.mxu0 0.0
  %5464 = vmatpush2.xpose.msra.mxu0 0.0
  %5465 = vmatprep.subr.mxu0 0.0
  %5466 = vmatpush2.xpose.msra.mxu0 0.0
  %5467 = vmatprep.subr.mxu0 0.0
  %5468 = vmatpush2.xpose.msra.mxu0 0.0
  %5469 = vmatprep.subr.mxu0 0.0
  %5470 = vmatpush2.xpose.msra.mxu0 0.0
  %5471 = vmatprep.subr.mxu0 0.0
  %5472 = vmatpush2.xpose.msra.mxu0 0.0
  %5473 = vmatprep.subr.mxu0 0.0
  %5474 = vmatpush2.xpose.msra.mxu0 0.0
  %5475 = vmatprep.subr.mxu0 0.0
  %5476 = vmatpush2.xpose.msra.mxu0 0.0
  %5477 = vmatprep.mubr.f32.mxu0 0.0
  %5478 = vmatmul.mubr.f32.gmra.mxu0 %v5262
  %v5479 = vpop.f32.mrf.mxu0
  %v5480 = vadd.f32 %v5410, %v5479
  %v5481 = vpop.f32.mrf.mxu0
  %5482 = vdwg.mxu0
  %v5483 = vadd.f32 %v5043, %v5480
  %v5484 = vld [vmem:[%s0 + $0x60] sm:$0xff]
  %v5485 = vld [vmem:[%s0 + $0x68] sm:$0xff]
  %5486 = vmatprep.subr.mxu0 %v96
  %5487 = vmatpush1.msra.mxu0 %v95
  %5488 = vmatprep.subr.mxu0 %v91
  %5489 = vmatpush1.msra.mxu0 %v90
  %5490 = vmatprep.subr.mxu0 %v86
  %5491 = vmatpush1.msra.mxu0 %v85
  %5492 = vmatprep.subr.mxu0 %v81
  %5493 = vmatpush1.msra.mxu0 %v80
  %5494 = vmatprep.subr.mxu0 %v76
  %5495 = vmatpush1.msra.mxu0 %v75
  %5496 = vmatprep.subr.mxu0 %v71
  %5497 = vmatpush1.msra.mxu0 %v70
  %5498 = vmatprep.subr.mxu0 %v66
  %5499 = vmatpush1.msra.mxu0 %v65
  %5500 = vmatprep.subr.mxu0 %v61
  %5501 = vmatpush1.msra.mxu0 %v60
  %5502 = vmatprep.subr.mxu0 %v56
  %5503 = vmatpush1.msra.mxu0 %v55
  %5504 = vmatprep.subr.mxu0 %v51
  %5505 = vmatpush1.msra.mxu0 %v50
  %5506 = vmatprep.subr.mxu0 %v46
  %5507 = vmatpush1.msra.mxu0 %v45
  %5508 = vmatprep.subr.mxu0 %v41
  %5509 = vmatpush1.msra.mxu0 %v40
  %5510 = vmatprep.subr.mxu0 %v36
  %5511 = vmatpush1.msra.mxu0 %v35
  %5512 = vmatprep.subr.mxu0 %v31
  %5513 = vmatpush1.msra.mxu0 %v30
  %5514 = vmatprep.subr.mxu0 %v26
  %5515 = vmatpush1.msra.mxu0 %v25
  %5516 = vmatprep.subr.mxu0 %v21
  %5517 = vmatpush1.msra.mxu0 %v20
  %5518 = vmatprep.subr.mxu0 %v176
  %5519 = vmatpush2.msra.mxu0 %v175
  %5520 = vmatprep.subr.mxu0 %v171
  %5521 = vmatpush2.msra.mxu0 %v170
  %5522 = vmatprep.subr.mxu0 %v166
  %5523 = vmatpush2.msra.mxu0 %v165
  %5524 = vmatprep.subr.mxu0 %v161
  %5525 = vmatpush2.msra.mxu0 %v160
  %5526 = vmatprep.subr.mxu0 %v156
  %5527 = vmatpush2.msra.mxu0 %v155
  %5528 = vmatprep.subr.mxu0 %v151
  %5529 = vmatpush2.msra.mxu0 %v150
  %5530 = vmatprep.subr.mxu0 %v146
  %5531 = vmatpush2.msra.mxu0 %v145
  %5532 = vmatprep.subr.mxu0 %v141
  %5533 = vmatpush2.msra.mxu0 %v140
  %5534 = vmatprep.subr.mxu0 %v136
  %5535 = vmatpush2.msra.mxu0 %v135
  %5536 = vmatprep.subr.mxu0 %v131
  %5537 = vmatpush2.msra.mxu0 %v130
  %5538 = vmatprep.subr.mxu0 %v126
  %5539 = vmatpush2.msra.mxu0 %v125
  %5540 = vmatprep.subr.mxu0 %v121
  %5541 = vmatpush2.msra.mxu0 %v120
  %5542 = vmatprep.subr.mxu0 %v116
  %5543 = vmatpush2.msra.mxu0 %v115
  %5544 = vmatprep.subr.mxu0 %v111
  %5545 = vmatpush2.msra.mxu0 %v110
  %5546 = vmatprep.subr.mxu0 %v106
  %5547 = vmatpush2.msra.mxu0 %v105
  %5548 = vmatprep.subr.mxu0 %v101
  %5549 = vmatpush2.msra.mxu0 %v100
  %5550 = vmatprep.mubr.f32.mxu0 %v5485
  %5551 = vmatmul.mubr.f32.gmra.mxu0 %v5484
  %v5552 = vpop.f32.mrf.mxu0
  %v5553 = vadd.f32 %v187, %v5552
  %v5554 = vpop.f32.mrf.mxu0
  %v5555 = vadd.f32 %v191, %v5554
  %5556 = vdwg.mxu0
  %5557 = vmatprep.subr.mxu0 %v98
  %5558 = vmatpush1.msra.mxu0 %v97
  %5559 = vmatprep.subr.mxu0 %v93
  %5560 = vmatpush1.msra.mxu0 %v92
  %5561 = vmatprep.subr.mxu0 %v88
  %5562 = vmatpush1.msra.mxu0 %v87
  %5563 = vmatprep.subr.mxu0 %v83
  %5564 = vmatpush1.msra.mxu0 %v82
  %5565 = vmatprep.subr.mxu0 %v78
  %5566 = vmatpush1.msra.mxu0 %v77
  %5567 = vmatprep.subr.mxu0 %v73
  %5568 = vmatpush1.msra.mxu0 %v72
  %5569 = vmatprep.subr.mxu0 %v68
  %5570 = vmatpush1.msra.mxu0 %v67
  %5571 = vmatprep.subr.mxu0 %v63
  %5572 = vmatpush1.msra.mxu0 %v62
  %5573 = vmatprep.subr.mxu0 %v58
  %5574 = vmatpush1.msra.mxu0 %v57
  %5575 = vmatprep.subr.mxu0 %v53
  %5576 = vmatpush1.msra.mxu0 %v52
  %5577 = vmatprep.subr.mxu0 %v48
  %5578 = vmatpush1.msra.mxu0 %v47
  %5579 = vmatprep.subr.mxu0 %v43
  %5580 = vmatpush1.msra.mxu0 %v42
  %5581 = vmatprep.subr.mxu0 %v38
  %5582 = vmatpush1.msra.mxu0 %v37
  %5583 = vmatprep.subr.mxu0 %v33
  %5584 = vmatpush1.msra.mxu0 %v32
  %5585 = vmatprep.subr.mxu0 %v28
  %5586 = vmatpush1.msra.mxu0 %v27
  %5587 = vmatprep.subr.mxu0 %v23
  %5588 = vmatpush1.msra.mxu0 %v22
  %5589 = vmatprep.subr.mxu0 %v178
  %5590 = vmatpush2.msra.mxu0 %v177
  %5591 = vmatprep.subr.mxu0 %v173
  %5592 = vmatpush2.msra.mxu0 %v172
  %5593 = vmatprep.subr.mxu0 %v168
  %5594 = vmatpush2.msra.mxu0 %v167
  %5595 = vmatprep.subr.mxu0 %v163
  %5596 = vmatpush2.msra.mxu0 %v162
  %5597 = vmatprep.subr.mxu0 %v158
  %5598 = vmatpush2.msra.mxu0 %v157
  %5599 = vmatprep.subr.mxu0 %v153
  %5600 = vmatpush2.msra.mxu0 %v152
  %5601 = vmatprep.subr.mxu0 %v148
  %5602 = vmatpush2.msra.mxu0 %v147
  %5603 = vmatprep.subr.mxu0 %v143
  %5604 = vmatpush2.msra.mxu0 %v142
  %5605 = vmatprep.subr.mxu0 %v138
  %5606 = vmatpush2.msra.mxu0 %v137
  %5607 = vmatprep.subr.mxu0 %v133
  %5608 = vmatpush2.msra.mxu0 %v132
  %5609 = vmatprep.subr.mxu0 %v128
  %5610 = vmatpush2.msra.mxu0 %v127
  %5611 = vmatprep.subr.mxu0 %v123
  %5612 = vmatpush2.msra.mxu0 %v122
  %5613 = vmatprep.subr.mxu0 %v118
  %5614 = vmatpush2.msra.mxu0 %v117
  %5615 = vmatprep.subr.mxu0 %v113
  %5616 = vmatpush2.msra.mxu0 %v112
  %5617 = vmatprep.subr.mxu0 %v108
  %5618 = vmatpush2.msra.mxu0 %v107
  %5619 = vmatprep.subr.mxu0 %v103
  %5620 = vmatpush2.msra.mxu0 %v102
  %5621 = vmatprep.mubr.f32.mxu0 %v5485
  %5622 = vmatmul.mubr.f32.gmra.mxu0 %v5484
  %v5623 = vpop.f32.mrf.mxu0
  %v5624 = vadd.f32 %v195, %v5623
  %v5625 = vpop.f32.mrf.mxu0
  %v5626 = vadd.f32 %v199, %v5625
  %5627 = vdwg.mxu0
  %5628 = vmatprep.subr.mxu0 0.0
  %5629 = vmatpush1.msra.mxu0 %v99
  %5630 = vmatprep.subr.mxu0 0.0
  %5631 = vmatpush1.msra.mxu0 %v94
  %5632 = vmatprep.subr.mxu0 0.0
  %5633 = vmatpush1.msra.mxu0 %v89
  %5634 = vmatprep.subr.mxu0 0.0
  %5635 = vmatpush1.msra.mxu0 %v84
  %5636 = vmatprep.subr.mxu0 0.0
  %5637 = vmatpush1.msra.mxu0 %v79
  %5638 = vmatprep.subr.mxu0 0.0
  %5639 = vmatpush1.msra.mxu0 %v74
  %5640 = vmatprep.subr.mxu0 0.0
  %5641 = vmatpush1.msra.mxu0 %v69
  %5642 = vmatprep.subr.mxu0 0.0
  %5643 = vmatpush1.msra.mxu0 %v64
  %5644 = vmatprep.subr.mxu0 0.0
  %5645 = vmatpush1.msra.mxu0 %v59
  %5646 = vmatprep.subr.mxu0 0.0
  %5647 = vmatpush1.msra.mxu0 %v54
  %5648 = vmatprep.subr.mxu0 0.0
  %5649 = vmatpush1.msra.mxu0 %v49
  %5650 = vmatprep.subr.mxu0 0.0
  %5651 = vmatpush1.msra.mxu0 %v44
  %5652 = vmatprep.subr.mxu0 0.0
  %5653 = vmatpush1.msra.mxu0 %v39
  %5654 = vmatprep.subr.mxu0 0.0
  %5655 = vmatpush1.msra.mxu0 %v34
  %5656 = vmatprep.subr.mxu0 0.0
  %5657 = vmatpush1.msra.mxu0 %v29
  %5658 = vmatprep.subr.mxu0 0.0
  %5659 = vmatpush1.msra.mxu0 %v24
  %5660 = vmatprep.subr.mxu0 0.0
  %5661 = vmatpush2.msra.mxu0 %v179
  %5662 = vmatprep.subr.mxu0 0.0
  %5663 = vmatpush2.msra.mxu0 %v174
  %5664 = vmatprep.subr.mxu0 0.0
  %5665 = vmatpush2.msra.mxu0 %v169
  %5666 = vmatprep.subr.mxu0 0.0
  %5667 = vmatpush2.msra.mxu0 %v164
  %5668 = vmatprep.subr.mxu0 0.0
  %5669 = vmatpush2.msra.mxu0 %v159
  %5670 = vmatprep.subr.mxu0 0.0
  %5671 = vmatpush2.msra.mxu0 %v154
  %5672 = vmatprep.subr.mxu0 0.0
  %5673 = vmatpush2.msra.mxu0 %v149
  %5674 = vmatprep.subr.mxu0 0.0
  %5675 = vmatpush2.msra.mxu0 %v144
  %5676 = vmatprep.subr.mxu0 0.0
  %5677 = vmatpush2.msra.mxu0 %v139
  %5678 = vmatprep.subr.mxu0 0.0
  %5679 = vmatpush2.msra.mxu0 %v134
  %5680 = vmatprep.subr.mxu0 0.0
  %5681 = vmatpush2.msra.mxu0 %v129
  %5682 = vmatprep.subr.mxu0 0.0
  %5683 = vmatpush2.msra.mxu0 %v124
  %5684 = vmatprep.subr.mxu0 0.0
  %5685 = vmatpush2.msra.mxu0 %v119
  %5686 = vmatprep.subr.mxu0 0.0
  %5687 = vmatpush2.msra.mxu0 %v114
  %5688 = vmatprep.subr.mxu0 0.0
  %5689 = vmatpush2.msra.mxu0 %v109
  %5690 = vmatprep.subr.mxu0 0.0
  %5691 = vmatpush2.msra.mxu0 %v104
  %5692 = vmatprep.mubr.f32.mxu0 %v5485
  %5693 = vmatmul.mubr.f32.gmra.mxu0 %v5484
  %v5694 = vpop.f32.mrf.mxu0
  %v5695 = vadd.f32 %v203, %v5694
  %v5696 = vpop.f32.mrf.mxu0
  %5697 = vdwg.mxu0
  %v5698 = vtanh.pop %v5553
  %v5699 = vtanh.pop %v5555
  %v5700 = vtanh.pop %v5624
  %v5701 = vtanh.pop %v5626
  %v5702 = vtanh.pop %v5695
  %s5703 = scalar_lea.vmem %s3, 240
  %v5704 = vld [vmem:[%s5703] sm:$0xff]
  %v5705 = vld [vmem:[%s5703 + $0x8] sm:$0xff]
  %v5706 = vld [vmem:[%s5703 + $0x10] sm:$0xf]
  %v5709 = vcombine.high %v5704, %v5704
  %v5710 = vcombine.high %v5705, %v5705
  %5713 = vmatprep.subr.mxu0 0.0
  %5714 = vmatpush1.xpose.msra.mxu0 0.0
  %5715 = vmatprep.subr.mxu0 0.0
  %5716 = vmatpush1.xpose.msra.mxu0 0.0
  %5717 = vmatprep.subr.mxu0 0.0
  %5718 = vmatpush1.xpose.msra.mxu0 0.0
  %5719 = vmatprep.subr.mxu0 0.0
  %5720 = vmatpush1.xpose.msra.mxu0 0.0
  %5721 = vmatprep.subr.mxu0 0.0
  %5722 = vmatpush1.xpose.msra.mxu0 0.0
  %5723 = vmatprep.subr.mxu0 0.0
  %5724 = vmatpush1.xpose.msra.mxu0 0.0
  %5725 = vmatprep.subr.mxu0 0.0
  %5726 = vmatpush1.xpose.msra.mxu0 0.0
  %5727 = vmatprep.subr.mxu0 0.0
  %5728 = vmatpush1.xpose.msra.mxu0 0.0
  %5729 = vmatprep.subr.mxu0 0.0
  %5730 = vmatpush1.xpose.msra.mxu0 0.0
  %5731 = vmatprep.subr.mxu0 0.0
  %5732 = vmatpush1.xpose.msra.mxu0 0.0
  %5733 = vmatprep.subr.mxu0 0.0
  %5734 = vmatpush1.xpose.msra.mxu0 0.0
  %5735 = vmatprep.subr.mxu0 0.0
  %5736 = vmatpush1.xpose.msra.mxu0 0.0
  %5737 = vmatprep.subr.mxu0 0.0
  %5738 = vmatpush1.xpose.msra.mxu0 0.0
  %5739 = vmatprep.subr.mxu0 0.0
  %5740 = vmatpush1.xpose.msra.mxu0 0.0
  %5741 = vmatprep.subr.mxu0 0.0
  %5742 = vmatpush1.xpose.msra.mxu0 0.0
  %5743 = vmatprep.subr.mxu0 %v5709
  %5744 = vmatpush1.xpose.msra.mxu0 %v5704
  %5745 = vmatprep.subr.mxu0 0.0
  %5746 = vmatpush2.xpose.msra.mxu0 0.0
  %5747 = vmatprep.subr.mxu0 0.0
  %5748 = vmatpush2.xpose.msra.mxu0 0.0
  %5749 = vmatprep.subr.mxu0 0.0
  %5750 = vmatpush2.xpose.msra.mxu0 0.0
  %5751 = vmatprep.subr.mxu0 0.0
  %5752 = vmatpush2.xpose.msra.mxu0 0.0
  %5753 = vmatprep.subr.mxu0 0.0
  %5754 = vmatpush2.xpose.msra.mxu0 0.0
  %5755 = vmatprep.subr.mxu0 0.0
  %5756 = vmatpush2.xpose.msra.mxu0 0.0
  %5757 = vmatprep.subr.mxu0 0.0
  %5758 = vmatpush2.xpose.msra.mxu0 0.0
  %5759 = vmatprep.subr.mxu0 0.0
  %5760 = vmatpush2.xpose.msra.mxu0 0.0
  %5761 = vmatprep.subr.mxu0 0.0
  %5762 = vmatpush2.xpose.msra.mxu0 0.0
  %5763 = vmatprep.subr.mxu0 0.0
  %5764 = vmatpush2.xpose.msra.mxu0 0.0
  %5765 = vmatprep.subr.mxu0 0.0
  %5766 = vmatpush2.xpose.msra.mxu0 0.0
  %5767 = vmatprep.subr.mxu0 0.0
  %5768 = vmatpush2.xpose.msra.mxu0 0.0
  %5769 = vmatprep.subr.mxu0 0.0
  %5770 = vmatpush2.xpose.msra.mxu0 0.0
  %5771 = vmatprep.subr.mxu0 0.0
  %5772 = vmatpush2.xpose.msra.mxu0 0.0
  %5773 = vmatprep.subr.mxu0 0.0
  %5774 = vmatpush2.xpose.msra.mxu0 0.0
  %5775 = vmatprep.subr.mxu0 0.0
  %5776 = vmatpush2.xpose.msra.mxu0 0.0
  %5777 = vmatprep.mubr.f32.mxu0 %v5699
  %5778 = vmatmul.mubr.f32.gmra.mxu0 %v5698
  %v5779 = vpop.f32.mrf.mxu0
  %v5780 = vadd.f32 0.0, %v5779
  %v5781 = vpop.f32.mrf.mxu0
  %5782 = vdwg.mxu0
  %5783 = vmatprep.subr.mxu0 0.0
  %5784 = vmatpush1.xpose.msra.mxu0 0.0
  %5785 = vmatprep.subr.mxu0 0.0
  %5786 = vmatpush1.xpose.msra.mxu0 0.0
  %5787 = vmatprep.subr.mxu0 0.0
  %5788 = vmatpush1.xpose.msra.mxu0 0.0
  %5789 = vmatprep.subr.mxu0 0.0
  %5790 = vmatpush1.xpose.msra.mxu0 0.0
  %5791 = vmatprep.subr.mxu0 0.0
  %5792 = vmatpush1.xpose.msra.mxu0 0.0
  %5793 = vmatprep.subr.mxu0 0.0
  %5794 = vmatpush1.xpose.msra.mxu0 0.0
  %5795 = vmatprep.subr.mxu0 0.0
  %5796 = vmatpush1.xpose.msra.mxu0 0.0
  %5797 = vmatprep.subr.mxu0 0.0
  %5798 = vmatpush1.xpose.msra.mxu0 0.0
  %5799 = vmatprep.subr.mxu0 0.0
  %5800 = vmatpush1.xpose.msra.mxu0 0.0
  %5801 = vmatprep.subr.mxu0 0.0
  %5802 = vmatpush1.xpose.msra.mxu0 0.0
  %5803 = vmatprep.subr.mxu0 0.0
  %5804 = vmatpush1.xpose.msra.mxu0 0.0
  %5805 = vmatprep.subr.mxu0 0.0
  %5806 = vmatpush1.xpose.msra.mxu0 0.0
  %5807 = vmatprep.subr.mxu0 0.0
  %5808 = vmatpush1.xpose.msra.mxu0 0.0
  %5809 = vmatprep.subr.mxu0 0.0
  %5810 = vmatpush1.xpose.msra.mxu0 0.0
  %5811 = vmatprep.subr.mxu0 0.0
  %5812 = vmatpush1.xpose.msra.mxu0 0.0
  %5813 = vmatprep.subr.mxu0 %v5710
  %5814 = vmatpush1.xpose.msra.mxu0 %v5705
  %5815 = vmatprep.subr.mxu0 0.0
  %5816 = vmatpush2.xpose.msra.mxu0 0.0
  %5817 = vmatprep.subr.mxu0 0.0
  %5818 = vmatpush2.xpose.msra.mxu0 0.0
  %5819 = vmatprep.subr.mxu0 0.0
  %5820 = vmatpush2.xpose.msra.mxu0 0.0
  %5821 = vmatprep.subr.mxu0 0.0
  %5822 = vmatpush2.xpose.msra.mxu0 0.0
  %5823 = vmatprep.subr.mxu0 0.0
  %5824 = vmatpush2.xpose.msra.mxu0 0.0
  %5825 = vmatprep.subr.mxu0 0.0
  %5826 = vmatpush2.xpose.msra.mxu0 0.0
  %5827 = vmatprep.subr.mxu0 0.0
  %5828 = vmatpush2.xpose.msra.mxu0 0.0
  %5829 = vmatprep.subr.mxu0 0.0
  %5830 = vmatpush2.xpose.msra.mxu0 0.0
  %5831 = vmatprep.subr.mxu0 0.0
  %5832 = vmatpush2.xpose.msra.mxu0 0.0
  %5833 = vmatprep.subr.mxu0 0.0
  %5834 = vmatpush2.xpose.msra.mxu0 0.0
  %5835 = vmatprep.subr.mxu0 0.0
  %5836 = vmatpush2.xpose.msra.mxu0 0.0
  %5837 = vmatprep.subr.mxu0 0.0
  %5838 = vmatpush2.xpose.msra.mxu0 0.0
  %5839 = vmatprep.subr.mxu0 0.0
  %5840 = vmatpush2.xpose.msra.mxu0 0.0
  %5841 = vmatprep.subr.mxu0 0.0
  %5842 = vmatpush2.xpose.msra.mxu0 0.0
  %5843 = vmatprep.subr.mxu0 0.0
  %5844 = vmatpush2.xpose.msra.mxu0 0.0
  %5845 = vmatprep.subr.mxu0 0.0
  %5846 = vmatpush2.xpose.msra.mxu0 0.0
  %5847 = vmatprep.mubr.f32.mxu0 %v5701
  %5848 = vmatmul.mubr.f32.gmra.mxu0 %v5700
  %v5849 = vpop.f32.mrf.mxu0
  %v5850 = vadd.f32 %v5780, %v5849
  %v5851 = vpop.f32.mrf.mxu0
  %5852 = vdwg.mxu0
  %5853 = vmatprep.subr.mxu0 0.0
  %5854 = vmatpush1.xpose.msra.mxu0 0.0
  %5855 = vmatprep.subr.mxu0 0.0
  %5856 = vmatpush1.xpose.msra.mxu0 0.0
  %5857 = vmatprep.subr.mxu0 0.0
  %5858 = vmatpush1.xpose.msra.mxu0 0.0
  %5859 = vmatprep.subr.mxu0 0.0
  %5860 = vmatpush1.xpose.msra.mxu0 0.0
  %5861 = vmatprep.subr.mxu0 0.0
  %5862 = vmatpush1.xpose.msra.mxu0 0.0
  %5863 = vmatprep.subr.mxu0 0.0
  %5864 = vmatpush1.xpose.msra.mxu0 0.0
  %5865 = vmatprep.subr.mxu0 0.0
  %5866 = vmatpush1.xpose.msra.mxu0 0.0
  %5867 = vmatprep.subr.mxu0 0.0
  %5868 = vmatpush1.xpose.msra.mxu0 0.0
  %5869 = vmatprep.subr.mxu0 0.0
  %5870 = vmatpush1.xpose.msra.mxu0 0.0
  %5871 = vmatprep.subr.mxu0 0.0
  %5872 = vmatpush1.xpose.msra.mxu0 0.0
  %5873 = vmatprep.subr.mxu0 0.0
  %5874 = vmatpush1.xpose.msra.mxu0 0.0
  %5875 = vmatprep.subr.mxu0 0.0
  %5876 = vmatpush1.xpose.msra.mxu0 0.0
  %5877 = vmatprep.subr.mxu0 0.0
  %5878 = vmatpush1.xpose.msra.mxu0 0.0
  %5879 = vmatprep.subr.mxu0 0.0
  %5880 = vmatpush1.xpose.msra.mxu0 0.0
  %5881 = vmatprep.subr.mxu0 0.0
  %5882 = vmatpush1.xpose.msra.mxu0 0.0
  %5883 = vmatprep.subr.mxu0 0.0
  %5884 = vmatpush1.xpose.msra.mxu0 %v5706
  %5885 = vmatprep.subr.mxu0 0.0
  %5886 = vmatpush2.xpose.msra.mxu0 0.0
  %5887 = vmatprep.subr.mxu0 0.0
  %5888 = vmatpush2.xpose.msra.mxu0 0.0
  %5889 = vmatprep.subr.mxu0 0.0
  %5890 = vmatpush2.xpose.msra.mxu0 0.0
  %5891 = vmatprep.subr.mxu0 0.0
  %5892 = vmatpush2.xpose.msra.mxu0 0.0
  %5893 = vmatprep.subr.mxu0 0.0
  %5894 = vmatpush2.xpose.msra.mxu0 0.0
  %5895 = vmatprep.subr.mxu0 0.0
  %5896 = vmatpush2.xpose.msra.mxu0 0.0
  %5897 = vmatprep.subr.mxu0 0.0
  %5898 = vmatpush2.xpose.msra.mxu0 0.0
  %5899 = vmatprep.subr.mxu0 0.0
  %5900 = vmatpush2.xpose.msra.mxu0 0.0
  %5901 = vmatprep.subr.mxu0 0.0
  %5902 = vmatpush2.xpose.msra.mxu0 0.0
  %5903 = vmatprep.subr.mxu0 0.0
  %5904 = vmatpush2.xpose.msra.mxu0 0.0
  %5905 = vmatprep.subr.mxu0 0.0
  %5906 = vmatpush2.xpose.msra.mxu0 0.0
  %5907 = vmatprep.subr.mxu0 0.0
  %5908 = vmatpush2.xpose.msra.mxu0 0.0
  %5909 = vmatprep.subr.mxu0 0.0
  %5910 = vmatpush2.xpose.msra.mxu0 0.0
  %5911 = vmatprep.subr.mxu0 0.0
  %5912 = vmatpush2.xpose.msra.mxu0 0.0
  %5913 = vmatprep.subr.mxu0 0.0
  %5914 = vmatpush2.xpose.msra.mxu0 0.0
  %5915 = vmatprep.subr.mxu0 0.0
  %5916 = vmatpush2.xpose.msra.mxu0 0.0
  %5917 = vmatprep.mubr.f32.mxu0 0.0
  %5918 = vmatmul.mubr.f32.gmra.mxu0 %v5702
  %v5919 = vpop.f32.mrf.mxu0
  %v5920 = vadd.f32 %v5850, %v5919
  %v5921 = vpop.f32.mrf.mxu0
  %5922 = vdwg.mxu0
  %v5923 = vadd.f32 %v5483, %v5920
  %v5924 = vld [vmem:[%s0 + $0x68] sm:$0xff]
  %v5925 = vld [vmem:[%s0 + $0x70] sm:$0xff]
  %5926 = vmatprep.subr.mxu0 %v96
  %5927 = vmatpush1.msra.mxu0 %v95
  %5928 = vmatprep.subr.mxu0 %v91
  %5929 = vmatpush1.msra.mxu0 %v90
  %5930 = vmatprep.subr.mxu0 %v86
  %5931 = vmatpush1.msra.mxu0 %v85
  %5932 = vmatprep.subr.mxu0 %v81
  %5933 = vmatpush1.msra.mxu0 %v80
  %5934 = vmatprep.subr.mxu0 %v76
  %5935 = vmatpush1.msra.mxu0 %v75
  %5936 = vmatprep.subr.mxu0 %v71
  %5937 = vmatpush1.msra.mxu0 %v70
  %5938 = vmatprep.subr.mxu0 %v66
  %5939 = vmatpush1.msra.mxu0 %v65
  %5940 = vmatprep.subr.mxu0 %v61
  %5941 = vmatpush1.msra.mxu0 %v60
  %5942 = vmatprep.subr.mxu0 %v56
  %5943 = vmatpush1.msra.mxu0 %v55
  %5944 = vmatprep.subr.mxu0 %v51
  %5945 = vmatpush1.msra.mxu0 %v50
  %5946 = vmatprep.subr.mxu0 %v46
  %5947 = vmatpush1.msra.mxu0 %v45
  %5948 = vmatprep.subr.mxu0 %v41
  %5949 = vmatpush1.msra.mxu0 %v40
  %5950 = vmatprep.subr.mxu0 %v36
  %5951 = vmatpush1.msra.mxu0 %v35
  %5952 = vmatprep.subr.mxu0 %v31
  %5953 = vmatpush1.msra.mxu0 %v30
  %5954 = vmatprep.subr.mxu0 %v26
  %5955 = vmatpush1.msra.mxu0 %v25
  %5956 = vmatprep.subr.mxu0 %v21
  %5957 = vmatpush1.msra.mxu0 %v20
  %5958 = vmatprep.subr.mxu0 %v176
  %5959 = vmatpush2.msra.mxu0 %v175
  %5960 = vmatprep.subr.mxu0 %v171
  %5961 = vmatpush2.msra.mxu0 %v170
  %5962 = vmatprep.subr.mxu0 %v166
  %5963 = vmatpush2.msra.mxu0 %v165
  %5964 = vmatprep.subr.mxu0 %v161
  %5965 = vmatpush2.msra.mxu0 %v160
  %5966 = vmatprep.subr.mxu0 %v156
  %5967 = vmatpush2.msra.mxu0 %v155
  %5968 = vmatprep.subr.mxu0 %v151
  %5969 = vmatpush2.msra.mxu0 %v150
  %5970 = vmatprep.subr.mxu0 %v146
  %5971 = vmatpush2.msra.mxu0 %v145
  %5972 = vmatprep.subr.mxu0 %v141
  %5973 = vmatpush2.msra.mxu0 %v140
  %5974 = vmatprep.subr.mxu0 %v136
  %5975 = vmatpush2.msra.mxu0 %v135
  %5976 = vmatprep.subr.mxu0 %v131
  %5977 = vmatpush2.msra.mxu0 %v130
  %5978 = vmatprep.subr.mxu0 %v126
  %5979 = vmatpush2.msra.mxu0 %v125
  %5980 = vmatprep.subr.mxu0 %v121
  %5981 = vmatpush2.msra.mxu0 %v120
  %5982 = vmatprep.subr.mxu0 %v116
  %5983 = vmatpush2.msra.mxu0 %v115
  %5984 = vmatprep.subr.mxu0 %v111
  %5985 = vmatpush2.msra.mxu0 %v110
  %5986 = vmatprep.subr.mxu0 %v106
  %5987 = vmatpush2.msra.mxu0 %v105
  %5988 = vmatprep.subr.mxu0 %v101
  %5989 = vmatpush2.msra.mxu0 %v100
  %5990 = vmatprep.mubr.f32.mxu0 %v5925
  %5991 = vmatmul.mubr.f32.gmra.mxu0 %v5924
  %v5992 = vpop.f32.mrf.mxu0
  %v5993 = vadd.f32 %v187, %v5992
  %v5994 = vpop.f32.mrf.mxu0
  %v5995 = vadd.f32 %v191, %v5994
  %5996 = vdwg.mxu0
  %5997 = vmatprep.subr.mxu0 %v98
  %5998 = vmatpush1.msra.mxu0 %v97
  %5999 = vmatprep.subr.mxu0 %v93
  %6000 = vmatpush1.msra.mxu0 %v92
  %6001 = vmatprep.subr.mxu0 %v88
  %6002 = vmatpush1.msra.mxu0 %v87
  %6003 = vmatprep.subr.mxu0 %v83
  %6004 = vmatpush1.msra.mxu0 %v82
  %6005 = vmatprep.subr.mxu0 %v78
  %6006 = vmatpush1.msra.mxu0 %v77
  %6007 = vmatprep.subr.mxu0 %v73
  %6008 = vmatpush1.msra.mxu0 %v72
  %6009 = vmatprep.subr.mxu0 %v68
  %6010 = vmatpush1.msra.mxu0 %v67
  %6011 = vmatprep.subr.mxu0 %v63
  %6012 = vmatpush1.msra.mxu0 %v62
  %6013 = vmatprep.subr.mxu0 %v58
  %6014 = vmatpush1.msra.mxu0 %v57
  %6015 = vmatprep.subr.mxu0 %v53
  %6016 = vmatpush1.msra.mxu0 %v52
  %6017 = vmatprep.subr.mxu0 %v48
  %6018 = vmatpush1.msra.mxu0 %v47
  %6019 = vmatprep.subr.mxu0 %v43
  %6020 = vmatpush1.msra.mxu0 %v42
  %6021 = vmatprep.subr.mxu0 %v38
  %6022 = vmatpush1.msra.mxu0 %v37
  %6023 = vmatprep.subr.mxu0 %v33
  %6024 = vmatpush1.msra.mxu0 %v32
  %6025 = vmatprep.subr.mxu0 %v28
  %6026 = vmatpush1.msra.mxu0 %v27
  %6027 = vmatprep.subr.mxu0 %v23
  %6028 = vmatpush1.msra.mxu0 %v22
  %6029 = vmatprep.subr.mxu0 %v178
  %6030 = vmatpush2.msra.mxu0 %v177
  %6031 = vmatprep.subr.mxu0 %v173
  %6032 = vmatpush2.msra.mxu0 %v172
  %6033 = vmatprep.subr.mxu0 %v168
  %6034 = vmatpush2.msra.mxu0 %v167
  %6035 = vmatprep.subr.mxu0 %v163
  %6036 = vmatpush2.msra.mxu0 %v162
  %6037 = vmatprep.subr.mxu0 %v158
  %6038 = vmatpush2.msra.mxu0 %v157
  %6039 = vmatprep.subr.mxu0 %v153
  %6040 = vmatpush2.msra.mxu0 %v152
  %6041 = vmatprep.subr.mxu0 %v148
  %6042 = vmatpush2.msra.mxu0 %v147
  %6043 = vmatprep.subr.mxu0 %v143
  %6044 = vmatpush2.msra.mxu0 %v142
  %6045 = vmatprep.subr.mxu0 %v138
  %6046 = vmatpush2.msra.mxu0 %v137
  %6047 = vmatprep.subr.mxu0 %v133
  %6048 = vmatpush2.msra.mxu0 %v132
  %6049 = vmatprep.subr.mxu0 %v128
  %6050 = vmatpush2.msra.mxu0 %v127
  %6051 = vmatprep.subr.mxu0 %v123
  %6052 = vmatpush2.msra.mxu0 %v122
  %6053 = vmatprep.subr.mxu0 %v118
  %6054 = vmatpush2.msra.mxu0 %v117
  %6055 = vmatprep.subr.mxu0 %v113
  %6056 = vmatpush2.msra.mxu0 %v112
  %6057 = vmatprep.subr.mxu0 %v108
  %6058 = vmatpush2.msra.mxu0 %v107
  %6059 = vmatprep.subr.mxu0 %v103
  %6060 = vmatpush2.msra.mxu0 %v102
  %6061 = vmatprep.mubr.f32.mxu0 %v5925
  %6062 = vmatmul.mubr.f32.gmra.mxu0 %v5924
  %v6063 = vpop.f32.mrf.mxu0
  %v6064 = vadd.f32 %v195, %v6063
  %v6065 = vpop.f32.mrf.mxu0
  %v6066 = vadd.f32 %v199, %v6065
  %6067 = vdwg.mxu0
  %6068 = vmatprep.subr.mxu0 0.0
  %6069 = vmatpush1.msra.mxu0 %v99
  %6070 = vmatprep.subr.mxu0 0.0
  %6071 = vmatpush1.msra.mxu0 %v94
  %6072 = vmatprep.subr.mxu0 0.0
  %6073 = vmatpush1.msra.mxu0 %v89
  %6074 = vmatprep.subr.mxu0 0.0
  %6075 = vmatpush1.msra.mxu0 %v84
  %6076 = vmatprep.subr.mxu0 0.0
  %6077 = vmatpush1.msra.mxu0 %v79
  %6078 = vmatprep.subr.mxu0 0.0
  %6079 = vmatpush1.msra.mxu0 %v74
  %6080 = vmatprep.subr.mxu0 0.0
  %6081 = vmatpush1.msra.mxu0 %v69
  %6082 = vmatprep.subr.mxu0 0.0
  %6083 = vmatpush1.msra.mxu0 %v64
  %6084 = vmatprep.subr.mxu0 0.0
  %6085 = vmatpush1.msra.mxu0 %v59
  %6086 = vmatprep.subr.mxu0 0.0
  %6087 = vmatpush1.msra.mxu0 %v54
  %6088 = vmatprep.subr.mxu0 0.0
  %6089 = vmatpush1.msra.mxu0 %v49
  %6090 = vmatprep.subr.mxu0 0.0
  %6091 = vmatpush1.msra.mxu0 %v44
  %6092 = vmatprep.subr.mxu0 0.0
  %6093 = vmatpush1.msra.mxu0 %v39
  %6094 = vmatprep.subr.mxu0 0.0
  %6095 = vmatpush1.msra.mxu0 %v34
  %6096 = vmatprep.subr.mxu0 0.0
  %6097 = vmatpush1.msra.mxu0 %v29
  %6098 = vmatprep.subr.mxu0 0.0
  %6099 = vmatpush1.msra.mxu0 %v24
  %6100 = vmatprep.subr.mxu0 0.0
  %6101 = vmatpush2.msra.mxu0 %v179
  %6102 = vmatprep.subr.mxu0 0.0
  %6103 = vmatpush2.msra.mxu0 %v174
  %6104 = vmatprep.subr.mxu0 0.0
  %6105 = vmatpush2.msra.mxu0 %v169
  %6106 = vmatprep.subr.mxu0 0.0
  %6107 = vmatpush2.msra.mxu0 %v164
  %6108 = vmatprep.subr.mxu0 0.0
  %6109 = vmatpush2.msra.mxu0 %v159
  %6110 = vmatprep.subr.mxu0 0.0
  %6111 = vmatpush2.msra.mxu0 %v154
  %6112 = vmatprep.subr.mxu0 0.0
  %6113 = vmatpush2.msra.mxu0 %v149
  %6114 = vmatprep.subr.mxu0 0.0
  %6115 = vmatpush2.msra.mxu0 %v144
  %6116 = vmatprep.subr.mxu0 0.0
  %6117 = vmatpush2.msra.mxu0 %v139
  %6118 = vmatprep.subr.mxu0 0.0
  %6119 = vmatpush2.msra.mxu0 %v134
  %6120 = vmatprep.subr.mxu0 0.0
  %6121 = vmatpush2.msra.mxu0 %v129
  %6122 = vmatprep.subr.mxu0 0.0
  %6123 = vmatpush2.msra.mxu0 %v124
  %6124 = vmatprep.subr.mxu0 0.0
  %6125 = vmatpush2.msra.mxu0 %v119
  %6126 = vmatprep.subr.mxu0 0.0
  %6127 = vmatpush2.msra.mxu0 %v114
  %6128 = vmatprep.subr.mxu0 0.0
  %6129 = vmatpush2.msra.mxu0 %v109
  %6130 = vmatprep.subr.mxu0 0.0
  %6131 = vmatpush2.msra.mxu0 %v104
  %6132 = vmatprep.mubr.f32.mxu0 %v5925
  %6133 = vmatmul.mubr.f32.gmra.mxu0 %v5924
  %v6134 = vpop.f32.mrf.mxu0
  %v6135 = vadd.f32 %v203, %v6134
  %v6136 = vpop.f32.mrf.mxu0
  %6137 = vdwg.mxu0
  %v6138 = vtanh.pop %v5993
  %v6139 = vtanh.pop %v5995
  %v6140 = vtanh.pop %v6064
  %v6141 = vtanh.pop %v6066
  %v6142 = vtanh.pop %v6135
  %s6143 = scalar_lea.vmem %s3, 260
  %v6144 = vld [vmem:[%s6143] sm:$0xff]
  %v6145 = vld [vmem:[%s6143 + $0x8] sm:$0xff]
  %v6146 = vld [vmem:[%s6143 + $0x10] sm:$0xf]
  %v6149 = vcombine.high %v6144, %v6144
  %v6150 = vcombine.high %v6145, %v6145
  %6153 = vmatprep.subr.mxu0 0.0
  %6154 = vmatpush1.xpose.msra.mxu0 0.0
  %6155 = vmatprep.subr.mxu0 0.0
  %6156 = vmatpush1.xpose.msra.mxu0 0.0
  %6157 = vmatprep.subr.mxu0 0.0
  %6158 = vmatpush1.xpose.msra.mxu0 0.0
  %6159 = vmatprep.subr.mxu0 0.0
  %6160 = vmatpush1.xpose.msra.mxu0 0.0
  %6161 = vmatprep.subr.mxu0 0.0
  %6162 = vmatpush1.xpose.msra.mxu0 0.0
  %6163 = vmatprep.subr.mxu0 0.0
  %6164 = vmatpush1.xpose.msra.mxu0 0.0
  %6165 = vmatprep.subr.mxu0 0.0
  %6166 = vmatpush1.xpose.msra.mxu0 0.0
  %6167 = vmatprep.subr.mxu0 0.0
  %6168 = vmatpush1.xpose.msra.mxu0 0.0
  %6169 = vmatprep.subr.mxu0 0.0
  %6170 = vmatpush1.xpose.msra.mxu0 0.0
  %6171 = vmatprep.subr.mxu0 0.0
  %6172 = vmatpush1.xpose.msra.mxu0 0.0
  %6173 = vmatprep.subr.mxu0 0.0
  %6174 = vmatpush1.xpose.msra.mxu0 0.0
  %6175 = vmatprep.subr.mxu0 0.0
  %6176 = vmatpush1.xpose.msra.mxu0 0.0
  %6177 = vmatprep.subr.mxu0 0.0
  %6178 = vmatpush1.xpose.msra.mxu0 0.0
  %6179 = vmatprep.subr.mxu0 0.0
  %6180 = vmatpush1.xpose.msra.mxu0 0.0
  %6181 = vmatprep.subr.mxu0 0.0
  %6182 = vmatpush1.xpose.msra.mxu0 0.0
  %6183 = vmatprep.subr.mxu0 %v6149
  %6184 = vmatpush1.xpose.msra.mxu0 %v6144
  %6185 = vmatprep.subr.mxu0 0.0
  %6186 = vmatpush2.xpose.msra.mxu0 0.0
  %6187 = vmatprep.subr.mxu0 0.0
  %6188 = vmatpush2.xpose.msra.mxu0 0.0
  %6189 = vmatprep.subr.mxu0 0.0
  %6190 = vmatpush2.xpose.msra.mxu0 0.0
  %6191 = vmatprep.subr.mxu0 0.0
  %6192 = vmatpush2.xpose.msra.mxu0 0.0
  %6193 = vmatprep.subr.mxu0 0.0
  %6194 = vmatpush2.xpose.msra.mxu0 0.0
  %6195 = vmatprep.subr.mxu0 0.0
  %6196 = vmatpush2.xpose.msra.mxu0 0.0
  %6197 = vmatprep.subr.mxu0 0.0
  %6198 = vmatpush2.xpose.msra.mxu0 0.0
  %6199 = vmatprep.subr.mxu0 0.0
  %6200 = vmatpush2.xpose.msra.mxu0 0.0
  %6201 = vmatprep.subr.mxu0 0.0
  %6202 = vmatpush2.xpose.msra.mxu0 0.0
  %6203 = vmatprep.subr.mxu0 0.0
  %6204 = vmatpush2.xpose.msra.mxu0 0.0
  %6205 = vmatprep.subr.mxu0 0.0
  %6206 = vmatpush2.xpose.msra.mxu0 0.0
  %6207 = vmatprep.subr.mxu0 0.0
  %6208 = vmatpush2.xpose.msra.mxu0 0.0
  %6209 = vmatprep.subr.mxu0 0.0
  %6210 = vmatpush2.xpose.msra.mxu0 0.0
  %6211 = vmatprep.subr.mxu0 0.0
  %6212 = vmatpush2.xpose.msra.mxu0 0.0
  %6213 = vmatprep.subr.mxu0 0.0
  %6214 = vmatpush2.xpose.msra.mxu0 0.0
  %6215 = vmatprep.subr.mxu0 0.0
  %6216 = vmatpush2.xpose.msra.mxu0 0.0
  %6217 = vmatprep.mubr.f32.mxu0 %v6139
  %6218 = vmatmul.mubr.f32.gmra.mxu0 %v6138
  %v6219 = vpop.f32.mrf.mxu0
  %v6220 = vadd.f32 0.0, %v6219
  %v6221 = vpop.f32.mrf.mxu0
  %6222 = vdwg.mxu0
  %6223 = vmatprep.subr.mxu0 0.0
  %6224 = vmatpush1.xpose.msra.mxu0 0.0
  %6225 = vmatprep.subr.mxu0 0.0
  %6226 = vmatpush1.xpose.msra.mxu0 0.0
  %6227 = vmatprep.subr.mxu0 0.0
  %6228 = vmatpush1.xpose.msra.mxu0 0.0
  %6229 = vmatprep.subr.mxu0 0.0
  %6230 = vmatpush1.xpose.msra.mxu0 0.0
  %6231 = vmatprep.subr.mxu0 0.0
  %6232 = vmatpush1.xpose.msra.mxu0 0.0
  %6233 = vmatprep.subr.mxu0 0.0
  %6234 = vmatpush1.xpose.msra.mxu0 0.0
  %6235 = vmatprep.subr.mxu0 0.0
  %6236 = vmatpush1.xpose.msra.mxu0 0.0
  %6237 = vmatprep.subr.mxu0 0.0
  %6238 = vmatpush1.xpose.msra.mxu0 0.0
  %6239 = vmatprep.subr.mxu0 0.0
  %6240 = vmatpush1.xpose.msra.mxu0 0.0
  %6241 = vmatprep.subr.mxu0 0.0
  %6242 = vmatpush1.xpose.msra.mxu0 0.0
  %6243 = vmatprep.subr.mxu0 0.0
  %6244 = vmatpush1.xpose.msra.mxu0 0.0
  %6245 = vmatprep.subr.mxu0 0.0
  %6246 = vmatpush1.xpose.msra.mxu0 0.0
  %6247 = vmatprep.subr.mxu0 0.0
  %6248 = vmatpush1.xpose.msra.mxu0 0.0
  %6249 = vmatprep.subr.mxu0 0.0
  %6250 = vmatpush1.xpose.msra.mxu0 0.0
  %6251 = vmatprep.subr.mxu0 0.0
  %6252 = vmatpush1.xpose.msra.mxu0 0.0
  %6253 = vmatprep.subr.mxu0 %v6150
  %6254 = vmatpush1.xpose.msra.mxu0 %v6145
  %6255 = vmatprep.subr.mxu0 0.0
  %6256 = vmatpush2.xpose.msra.mxu0 0.0
  %6257 = vmatprep.subr.mxu0 0.0
  %6258 = vmatpush2.xpose.msra.mxu0 0.0
  %6259 = vmatprep.subr.mxu0 0.0
  %6260 = vmatpush2.xpose.msra.mxu0 0.0
  %6261 = vmatprep.subr.mxu0 0.0
  %6262 = vmatpush2.xpose.msra.mxu0 0.0
  %6263 = vmatprep.subr.mxu0 0.0
  %6264 = vmatpush2.xpose.msra.mxu0 0.0
  %6265 = vmatprep.subr.mxu0 0.0
  %6266 = vmatpush2.xpose.msra.mxu0 0.0
  %6267 = vmatprep.subr.mxu0 0.0
  %6268 = vmatpush2.xpose.msra.mxu0 0.0
  %6269 = vmatprep.subr.mxu0 0.0
  %6270 = vmatpush2.xpose.msra.mxu0 0.0
  %6271 = vmatprep.subr.mxu0 0.0
  %6272 = vmatpush2.xpose.msra.mxu0 0.0
  %6273 = vmatprep.subr.mxu0 0.0
  %6274 = vmatpush2.xpose.msra.mxu0 0.0
  %6275 = vmatprep.subr.mxu0 0.0
  %6276 = vmatpush2.xpose.msra.mxu0 0.0
  %6277 = vmatprep.subr.mxu0 0.0
  %6278 = vmatpush2.xpose.msra.mxu0 0.0
  %6279 = vmatprep.subr.mxu0 0.0
  %6280 = vmatpush2.xpose.msra.mxu0 0.0
  %6281 = vmatprep.subr.mxu0 0.0
  %6282 = vmatpush2.xpose.msra.mxu0 0.0
  %6283 = vmatprep.subr.mxu0 0.0
  %6284 = vmatpush2.xpose.msra.mxu0 0.0
  %6285 = vmatprep.subr.mxu0 0.0
  %6286 = vmatpush2.xpose.msra.mxu0 0.0
  %6287 = vmatprep.mubr.f32.mxu0 %v6141
  %6288 = vmatmul.mubr.f32.gmra.mxu0 %v6140
  %v6289 = vpop.f32.mrf.mxu0
  %v6290 = vadd.f32 %v6220, %v6289
  %v6291 = vpop.f32.mrf.mxu0
  %6292 = vdwg.mxu0
  %6293 = vmatprep.subr.mxu0 0.0
  %6294 = vmatpush1.xpose.msra.mxu0 0.0
  %6295 = vmatprep.subr.mxu0 0.0
  %6296 = vmatpush1.xpose.msra.mxu0 0.0
  %6297 = vmatprep.subr.mxu0 0.0
  %6298 = vmatpush1.xpose.msra.mxu0 0.0
  %6299 = vmatprep.subr.mxu0 0.0
  %6300 = vmatpush1.xpose.msra.mxu0 0.0
  %6301 = vmatprep.subr.mxu0 0.0
  %6302 = vmatpush1.xpose.msra.mxu0 0.0
  %6303 = vmatprep.subr.mxu0 0.0
  %6304 = vmatpush1.xpose.msra.mxu0 0.0
  %6305 = vmatprep.subr.mxu0 0.0
  %6306 = vmatpush1.xpose.msra.mxu0 0.0
  %6307 = vmatprep.subr.mxu0 0.0
  %6308 = vmatpush1.xpose.msra.mxu0 0.0
  %6309 = vmatprep.subr.mxu0 0.0
  %6310 = vmatpush1.xpose.msra.mxu0 0.0
  %6311 = vmatprep.subr.mxu0 0.0
  %6312 = vmatpush1.xpose.msra.mxu0 0.0
  %6313 = vmatprep.subr.mxu0 0.0
  %6314 = vmatpush1.xpose.msra.mxu0 0.0
  %6315 = vmatprep.subr.mxu0 0.0
  %6316 = vmatpush1.xpose.msra.mxu0 0.0
  %6317 = vmatprep.subr.mxu0 0.0
  %6318 = vmatpush1.xpose.msra.mxu0 0.0
  %6319 = vmatprep.subr.mxu0 0.0
  %6320 = vmatpush1.xpose.msra.mxu0 0.0
  %6321 = vmatprep.subr.mxu0 0.0
  %6322 = vmatpush1.xpose.msra.mxu0 0.0
  %6323 = vmatprep.subr.mxu0 0.0
  %6324 = vmatpush1.xpose.msra.mxu0 %v6146
  %6325 = vmatprep.subr.mxu0 0.0
  %6326 = vmatpush2.xpose.msra.mxu0 0.0
  %6327 = vmatprep.subr.mxu0 0.0
  %6328 = vmatpush2.xpose.msra.mxu0 0.0
  %6329 = vmatprep.subr.mxu0 0.0
  %6330 = vmatpush2.xpose.msra.mxu0 0.0
  %6331 = vmatprep.subr.mxu0 0.0
  %6332 = vmatpush2.xpose.msra.mxu0 0.0
  %6333 = vmatprep.subr.mxu0 0.0
  %6334 = vmatpush2.xpose.msra.mxu0 0.0
  %6335 = vmatprep.subr.mxu0 0.0
  %6336 = vmatpush2.xpose.msra.mxu0 0.0
  %6337 = vmatprep.subr.mxu0 0.0
  %6338 = vmatpush2.xpose.msra.mxu0 0.0
  %6339 = vmatprep.subr.mxu0 0.0
  %6340 = vmatpush2.xpose.msra.mxu0 0.0
  %6341 = vmatprep.subr.mxu0 0.0
  %6342 = vmatpush2.xpose.msra.mxu0 0.0
  %6343 = vmatprep.subr.mxu0 0.0
  %6344 = vmatpush2.xpose.msra.mxu0 0.0
  %6345 = vmatprep.subr.mxu0 0.0
  %6346 = vmatpush2.xpose.msra.mxu0 0.0
  %6347 = vmatprep.subr.mxu0 0.0
  %6348 = vmatpush2.xpose.msra.mxu0 0.0
  %6349 = vmatprep.subr.mxu0 0.0
  %6350 = vmatpush2.xpose.msra.mxu0 0.0
  %6351 = vmatprep.subr.mxu0 0.0
  %6352 = vmatpush2.xpose.msra.mxu0 0.0
  %6353 = vmatprep.subr.mxu0 0.0
  %6354 = vmatpush2.xpose.msra.mxu0 0.0
  %6355 = vmatprep.subr.mxu0 0.0
  %6356 = vmatpush2.xpose.msra.mxu0 0.0
  %6357 = vmatprep.mubr.f32.mxu0 0.0
  %6358 = vmatmul.mubr.f32.gmra.mxu0 %v6142
  %v6359 = vpop.f32.mrf.mxu0
  %v6360 = vadd.f32 %v6290, %v6359
  %v6361 = vpop.f32.mrf.mxu0
  %6362 = vdwg.mxu0
  %v6363 = vadd.f32 %v5923, %v6360
  %v6364 = vld [vmem:[%s0 + $0x70] sm:$0xff]
  %v6365 = vld [vmem:[%s0 + $0x78] sm:$0xff]
  %6366 = vmatprep.subr.mxu0 %v96
  %6367 = vmatpush1.msra.mxu0 %v95
  %6368 = vmatprep.subr.mxu0 %v91
  %6369 = vmatpush1.msra.mxu0 %v90
  %6370 = vmatprep.subr.mxu0 %v86
  %6371 = vmatpush1.msra.mxu0 %v85
  %6372 = vmatprep.subr.mxu0 %v81
  %6373 = vmatpush1.msra.mxu0 %v80
  %6374 = vmatprep.subr.mxu0 %v76
  %6375 = vmatpush1.msra.mxu0 %v75
  %6376 = vmatprep.subr.mxu0 %v71
  %6377 = vmatpush1.msra.mxu0 %v70
  %6378 = vmatprep.subr.mxu0 %v66
  %6379 = vmatpush1.msra.mxu0 %v65
  %6380 = vmatprep.subr.mxu0 %v61
  %6381 = vmatpush1.msra.mxu0 %v60
  %6382 = vmatprep.subr.mxu0 %v56
  %6383 = vmatpush1.msra.mxu0 %v55
  %6384 = vmatprep.subr.mxu0 %v51
  %6385 = vmatpush1.msra.mxu0 %v50
  %6386 = vmatprep.subr.mxu0 %v46
  %6387 = vmatpush1.msra.mxu0 %v45
  %6388 = vmatprep.subr.mxu0 %v41
  %6389 = vmatpush1.msra.mxu0 %v40
  %6390 = vmatprep.subr.mxu0 %v36
  %6391 = vmatpush1.msra.mxu0 %v35
  %6392 = vmatprep.subr.mxu0 %v31
  %6393 = vmatpush1.msra.mxu0 %v30
  %6394 = vmatprep.subr.mxu0 %v26
  %6395 = vmatpush1.msra.mxu0 %v25
  %6396 = vmatprep.subr.mxu0 %v21
  %6397 = vmatpush1.msra.mxu0 %v20
  %6398 = vmatprep.subr.mxu0 %v176
  %6399 = vmatpush2.msra.mxu0 %v175
  %6400 = vmatprep.subr.mxu0 %v171
  %6401 = vmatpush2.msra.mxu0 %v170
  %6402 = vmatprep.subr.mxu0 %v166
  %6403 = vmatpush2.msra.mxu0 %v165
  %6404 = vmatprep.subr.mxu0 %v161
  %6405 = vmatpush2.msra.mxu0 %v160
  %6406 = vmatprep.subr.mxu0 %v156
  %6407 = vmatpush2.msra.mxu0 %v155
  %6408 = vmatprep.subr.mxu0 %v151
  %6409 = vmatpush2.msra.mxu0 %v150
  %6410 = vmatprep.subr.mxu0 %v146
  %6411 = vmatpush2.msra.mxu0 %v145
  %6412 = vmatprep.subr.mxu0 %v141
  %6413 = vmatpush2.msra.mxu0 %v140
  %6414 = vmatprep.subr.mxu0 %v136
  %6415 = vmatpush2.msra.mxu0 %v135
  %6416 = vmatprep.subr.mxu0 %v131
  %6417 = vmatpush2.msra.mxu0 %v130
  %6418 = vmatprep.subr.mxu0 %v126
  %6419 = vmatpush2.msra.mxu0 %v125
  %6420 = vmatprep.subr.mxu0 %v121
  %6421 = vmatpush2.msra.mxu0 %v120
  %6422 = vmatprep.subr.mxu0 %v116
  %6423 = vmatpush2.msra.mxu0 %v115
  %6424 = vmatprep.subr.mxu0 %v111
  %6425 = vmatpush2.msra.mxu0 %v110
  %6426 = vmatprep.subr.mxu0 %v106
  %6427 = vmatpush2.msra.mxu0 %v105
  %6428 = vmatprep.subr.mxu0 %v101
  %6429 = vmatpush2.msra.mxu0 %v100
  %6430 = vmatprep.mubr.f32.mxu0 %v6365
  %6431 = vmatmul.mubr.f32.gmra.mxu0 %v6364
  %v6432 = vpop.f32.mrf.mxu0
  %v6433 = vadd.f32 %v187, %v6432
  %v6434 = vpop.f32.mrf.mxu0
  %v6435 = vadd.f32 %v191, %v6434
  %6436 = vdwg.mxu0
  %6437 = vmatprep.subr.mxu0 %v98
  %6438 = vmatpush1.msra.mxu0 %v97
  %6439 = vmatprep.subr.mxu0 %v93
  %6440 = vmatpush1.msra.mxu0 %v92
  %6441 = vmatprep.subr.mxu0 %v88
  %6442 = vmatpush1.msra.mxu0 %v87
  %6443 = vmatprep.subr.mxu0 %v83
  %6444 = vmatpush1.msra.mxu0 %v82
  %6445 = vmatprep.subr.mxu0 %v78
  %6446 = vmatpush1.msra.mxu0 %v77
  %6447 = vmatprep.subr.mxu0 %v73
  %6448 = vmatpush1.msra.mxu0 %v72
  %6449 = vmatprep.subr.mxu0 %v68
  %6450 = vmatpush1.msra.mxu0 %v67
  %6451 = vmatprep.subr.mxu0 %v63
  %6452 = vmatpush1.msra.mxu0 %v62
  %6453 = vmatprep.subr.mxu0 %v58
  %6454 = vmatpush1.msra.mxu0 %v57
  %6455 = vmatprep.subr.mxu0 %v53
  %6456 = vmatpush1.msra.mxu0 %v52
  %6457 = vmatprep.subr.mxu0 %v48
  %6458 = vmatpush1.msra.mxu0 %v47
  %6459 = vmatprep.subr.mxu0 %v43
  %6460 = vmatpush1.msra.mxu0 %v42
  %6461 = vmatprep.subr.mxu0 %v38
  %6462 = vmatpush1.msra.mxu0 %v37
  %6463 = vmatprep.subr.mxu0 %v33
  %6464 = vmatpush1.msra.mxu0 %v32
  %6465 = vmatprep.subr.mxu0 %v28
  %6466 = vmatpush1.msra.mxu0 %v27
  %6467 = vmatprep.subr.mxu0 %v23
  %6468 = vmatpush1.msra.mxu0 %v22
  %6469 = vmatprep.subr.mxu0 %v178
  %6470 = vmatpush2.msra.mxu0 %v177
  %6471 = vmatprep.subr.mxu0 %v173
  %6472 = vmatpush2.msra.mxu0 %v172
  %6473 = vmatprep.subr.mxu0 %v168
  %6474 = vmatpush2.msra.mxu0 %v167
  %6475 = vmatprep.subr.mxu0 %v163
  %6476 = vmatpush2.msra.mxu0 %v162
  %6477 = vmatprep.subr.mxu0 %v158
  %6478 = vmatpush2.msra.mxu0 %v157
  %6479 = vmatprep.subr.mxu0 %v153
  %6480 = vmatpush2.msra.mxu0 %v152
  %6481 = vmatprep.subr.mxu0 %v148
  %6482 = vmatpush2.msra.mxu0 %v147
  %6483 = vmatprep.subr.mxu0 %v143
  %6484 = vmatpush2.msra.mxu0 %v142
  %6485 = vmatprep.subr.mxu0 %v138
  %6486 = vmatpush2.msra.mxu0 %v137
  %6487 = vmatprep.subr.mxu0 %v133
  %6488 = vmatpush2.msra.mxu0 %v132
  %6489 = vmatprep.subr.mxu0 %v128
  %6490 = vmatpush2.msra.mxu0 %v127
  %6491 = vmatprep.subr.mxu0 %v123
  %6492 = vmatpush2.msra.mxu0 %v122
  %6493 = vmatprep.subr.mxu0 %v118
  %6494 = vmatpush2.msra.mxu0 %v117
  %6495 = vmatprep.subr.mxu0 %v113
  %6496 = vmatpush2.msra.mxu0 %v112
  %6497 = vmatprep.subr.mxu0 %v108
  %6498 = vmatpush2.msra.mxu0 %v107
  %6499 = vmatprep.subr.mxu0 %v103
  %6500 = vmatpush2.msra.mxu0 %v102
  %6501 = vmatprep.mubr.f32.mxu0 %v6365
  %6502 = vmatmul.mubr.f32.gmra.mxu0 %v6364
  %v6503 = vpop.f32.mrf.mxu0
  %v6504 = vadd.f32 %v195, %v6503
  %v6505 = vpop.f32.mrf.mxu0
  %v6506 = vadd.f32 %v199, %v6505
  %6507 = vdwg.mxu0
  %6508 = vmatprep.subr.mxu0 0.0
  %6509 = vmatpush1.msra.mxu0 %v99
  %6510 = vmatprep.subr.mxu0 0.0
  %6511 = vmatpush1.msra.mxu0 %v94
  %6512 = vmatprep.subr.mxu0 0.0
  %6513 = vmatpush1.msra.mxu0 %v89
  %6514 = vmatprep.subr.mxu0 0.0
  %6515 = vmatpush1.msra.mxu0 %v84
  %6516 = vmatprep.subr.mxu0 0.0
  %6517 = vmatpush1.msra.mxu0 %v79
  %6518 = vmatprep.subr.mxu0 0.0
  %6519 = vmatpush1.msra.mxu0 %v74
  %6520 = vmatprep.subr.mxu0 0.0
  %6521 = vmatpush1.msra.mxu0 %v69
  %6522 = vmatprep.subr.mxu0 0.0
  %6523 = vmatpush1.msra.mxu0 %v64
  %6524 = vmatprep.subr.mxu0 0.0
  %6525 = vmatpush1.msra.mxu0 %v59
  %6526 = vmatprep.subr.mxu0 0.0
  %6527 = vmatpush1.msra.mxu0 %v54
  %6528 = vmatprep.subr.mxu0 0.0
  %6529 = vmatpush1.msra.mxu0 %v49
  %6530 = vmatprep.subr.mxu0 0.0
  %6531 = vmatpush1.msra.mxu0 %v44
  %6532 = vmatprep.subr.mxu0 0.0
  %6533 = vmatpush1.msra.mxu0 %v39
  %6534 = vmatprep.subr.mxu0 0.0
  %6535 = vmatpush1.msra.mxu0 %v34
  %6536 = vmatprep.subr.mxu0 0.0
  %6537 = vmatpush1.msra.mxu0 %v29
  %6538 = vmatprep.subr.mxu0 0.0
  %6539 = vmatpush1.msra.mxu0 %v24
  %6540 = vmatprep.subr.mxu0 0.0
  %6541 = vmatpush2.msra.mxu0 %v179
  %6542 = vmatprep.subr.mxu0 0.0
  %6543 = vmatpush2.msra.mxu0 %v174
  %6544 = vmatprep.subr.mxu0 0.0
  %6545 = vmatpush2.msra.mxu0 %v169
  %6546 = vmatprep.subr.mxu0 0.0
  %6547 = vmatpush2.msra.mxu0 %v164
  %6548 = vmatprep.subr.mxu0 0.0
  %6549 = vmatpush2.msra.mxu0 %v159
  %6550 = vmatprep.subr.mxu0 0.0
  %6551 = vmatpush2.msra.mxu0 %v154
  %6552 = vmatprep.subr.mxu0 0.0
  %6553 = vmatpush2.msra.mxu0 %v149
  %6554 = vmatprep.subr.mxu0 0.0
  %6555 = vmatpush2.msra.mxu0 %v144
  %6556 = vmatprep.subr.mxu0 0.0
  %6557 = vmatpush2.msra.mxu0 %v139
  %6558 = vmatprep.subr.mxu0 0.0
  %6559 = vmatpush2.msra.mxu0 %v134
  %6560 = vmatprep.subr.mxu0 0.0
  %6561 = vmatpush2.msra.mxu0 %v129
  %6562 = vmatprep.subr.mxu0 0.0
  %6563 = vmatpush2.msra.mxu0 %v124
  %6564 = vmatprep.subr.mxu0 0.0
  %6565 = vmatpush2.msra.mxu0 %v119
  %6566 = vmatprep.subr.mxu0 0.0
  %6567 = vmatpush2.msra.mxu0 %v114
  %6568 = vmatprep.subr.mxu0 0.0
  %6569 = vmatpush2.msra.mxu0 %v109
  %6570 = vmatprep.subr.mxu0 0.0
  %6571 = vmatpush2.msra.mxu0 %v104
  %6572 = vmatprep.mubr.f32.mxu0 %v6365
  %6573 = vmatmul.mubr.f32.gmra.mxu0 %v6364
  %v6574 = vpop.f32.mrf.mxu0
  %v6575 = vadd.f32 %v203, %v6574
  %v6576 = vpop.f32.mrf.mxu0
  %6577 = vdwg.mxu0
  %v6578 = vtanh.pop %v6433
  %v6579 = vtanh.pop %v6435
  %v6580 = vtanh.pop %v6504
  %v6581 = vtanh.pop %v6506
  %v6582 = vtanh.pop %v6575
  %s6583 = scalar_lea.vmem %s3, 280
  %v6584 = vld [vmem:[%s6583] sm:$0xff]
  %v6585 = vld [vmem:[%s6583 + $0x8] sm:$0xff]
  %v6586 = vld [vmem:[%s6583 + $0x10] sm:$0xf]
  %v6589 = vcombine.high %v6584, %v6584
  %v6590 = vcombine.high %v6585, %v6585
  %6593 = vmatprep.subr.mxu0 0.0
  %6594 = vmatpush1.xpose.msra.mxu0 0.0
  %6595 = vmatprep.subr.mxu0 0.0
  %6596 = vmatpush1.xpose.msra.mxu0 0.0
  %6597 = vmatprep.subr.mxu0 0.0
  %6598 = vmatpush1.xpose.msra.mxu0 0.0
  %6599 = vmatprep.subr.mxu0 0.0
  %6600 = vmatpush1.xpose.msra.mxu0 0.0
  %6601 = vmatprep.subr.mxu0 0.0
  %6602 = vmatpush1.xpose.msra.mxu0 0.0
  %6603 = vmatprep.subr.mxu0 0.0
  %6604 = vmatpush1.xpose.msra.mxu0 0.0
  %6605 = vmatprep.subr.mxu0 0.0
  %6606 = vmatpush1.xpose.msra.mxu0 0.0
  %6607 = vmatprep.subr.mxu0 0.0
  %6608 = vmatpush1.xpose.msra.mxu0 0.0
  %6609 = vmatprep.subr.mxu0 0.0
  %6610 = vmatpush1.xpose.msra.mxu0 0.0
  %6611 = vmatprep.subr.mxu0 0.0
  %6612 = vmatpush1.xpose.msra.mxu0 0.0
  %6613 = vmatprep.subr.mxu0 0.0
  %6614 = vmatpush1.xpose.msra.mxu0 0.0
  %6615 = vmatprep.subr.mxu0 0.0
  %6616 = vmatpush1.xpose.msra.mxu0 0.0
  %6617 = vmatprep.subr.mxu0 0.0
  %6618 = vmatpush1.xpose.msra.mxu0 0.0
  %6619 = vmatprep.subr.mxu0 0.0
  %6620 = vmatpush1.xpose.msra.mxu0 0.0
  %6621 = vmatprep.subr.mxu0 0.0
  %6622 = vmatpush1.xpose.msra.mxu0 0.0
  %6623 = vmatprep.subr.mxu0 %v6589
  %6624 = vmatpush1.xpose.msra.mxu0 %v6584
  %6625 = vmatprep.subr.mxu0 0.0
  %6626 = vmatpush2.xpose.msra.mxu0 0.0
  %6627 = vmatprep.subr.mxu0 0.0
  %6628 = vmatpush2.xpose.msra.mxu0 0.0
  %6629 = vmatprep.subr.mxu0 0.0
  %6630 = vmatpush2.xpose.msra.mxu0 0.0
  %6631 = vmatprep.subr.mxu0 0.0
  %6632 = vmatpush2.xpose.msra.mxu0 0.0
  %6633 = vmatprep.subr.mxu0 0.0
  %6634 = vmatpush2.xpose.msra.mxu0 0.0
  %6635 = vmatprep.subr.mxu0 0.0
  %6636 = vmatpush2.xpose.msra.mxu0 0.0
  %6637 = vmatprep.subr.mxu0 0.0
  %6638 = vmatpush2.xpose.msra.mxu0 0.0
  %6639 = vmatprep.subr.mxu0 0.0
  %6640 = vmatpush2.xpose.msra.mxu0 0.0
  %6641 = vmatprep.subr.mxu0 0.0
  %6642 = vmatpush2.xpose.msra.mxu0 0.0
  %6643 = vmatprep.subr.mxu0 0.0
  %6644 = vmatpush2.xpose.msra.mxu0 0.0
  %6645 = vmatprep.subr.mxu0 0.0
  %6646 = vmatpush2.xpose.msra.mxu0 0.0
  %6647 = vmatprep.subr.mxu0 0.0
  %6648 = vmatpush2.xpose.msra.mxu0 0.0
  %6649 = vmatprep.subr.mxu0 0.0
  %6650 = vmatpush2.xpose.msra.mxu0 0.0
  %6651 = vmatprep.subr.mxu0 0.0
  %6652 = vmatpush2.xpose.msra.mxu0 0.0
  %6653 = vmatprep.subr.mxu0 0.0
  %6654 = vmatpush2.xpose.msra.mxu0 0.0
  %6655 = vmatprep.subr.mxu0 0.0
  %6656 = vmatpush2.xpose.msra.mxu0 0.0
  %6657 = vmatprep.mubr.f32.mxu0 %v6579
  %6658 = vmatmul.mubr.f32.gmra.mxu0 %v6578
  %v6659 = vpop.f32.mrf.mxu0
  %v6660 = vadd.f32 0.0, %v6659
  %v6661 = vpop.f32.mrf.mxu0
  %6662 = vdwg.mxu0
  %6663 = vmatprep.subr.mxu0 0.0
  %6664 = vmatpush1.xpose.msra.mxu0 0.0
  %6665 = vmatprep.subr.mxu0 0.0
  %6666 = vmatpush1.xpose.msra.mxu0 0.0
  %6667 = vmatprep.subr.mxu0 0.0
  %6668 = vmatpush1.xpose.msra.mxu0 0.0
  %6669 = vmatprep.subr.mxu0 0.0
  %6670 = vmatpush1.xpose.msra.mxu0 0.0
  %6671 = vmatprep.subr.mxu0 0.0
  %6672 = vmatpush1.xpose.msra.mxu0 0.0
  %6673 = vmatprep.subr.mxu0 0.0
  %6674 = vmatpush1.xpose.msra.mxu0 0.0
  %6675 = vmatprep.subr.mxu0 0.0
  %6676 = vmatpush1.xpose.msra.mxu0 0.0
  %6677 = vmatprep.subr.mxu0 0.0
  %6678 = vmatpush1.xpose.msra.mxu0 0.0
  %6679 = vmatprep.subr.mxu0 0.0
  %6680 = vmatpush1.xpose.msra.mxu0 0.0
  %6681 = vmatprep.subr.mxu0 0.0
  %6682 = vmatpush1.xpose.msra.mxu0 0.0
  %6683 = vmatprep.subr.mxu0 0.0
  %6684 = vmatpush1.xpose.msra.mxu0 0.0
  %6685 = vmatprep.subr.mxu0 0.0
  %6686 = vmatpush1.xpose.msra.mxu0 0.0
  %6687 = vmatprep.subr.mxu0 0.0
  %6688 = vmatpush1.xpose.msra.mxu0 0.0
  %6689 = vmatprep.subr.mxu0 0.0
  %6690 = vmatpush1.xpose.msra.mxu0 0.0
  %6691 = vmatprep.subr.mxu0 0.0
  %6692 = vmatpush1.xpose.msra.mxu0 0.0
  %6693 = vmatprep.subr.mxu0 %v6590
  %6694 = vmatpush1.xpose.msra.mxu0 %v6585
  %6695 = vmatprep.subr.mxu0 0.0
  %6696 = vmatpush2.xpose.msra.mxu0 0.0
  %6697 = vmatprep.subr.mxu0 0.0
  %6698 = vmatpush2.xpose.msra.mxu0 0.0
  %6699 = vmatprep.subr.mxu0 0.0
  %6700 = vmatpush2.xpose.msra.mxu0 0.0
  %6701 = vmatprep.subr.mxu0 0.0
  %6702 = vmatpush2.xpose.msra.mxu0 0.0
  %6703 = vmatprep.subr.mxu0 0.0
  %6704 = vmatpush2.xpose.msra.mxu0 0.0
  %6705 = vmatprep.subr.mxu0 0.0
  %6706 = vmatpush2.xpose.msra.mxu0 0.0
  %6707 = vmatprep.subr.mxu0 0.0
  %6708 = vmatpush2.xpose.msra.mxu0 0.0
  %6709 = vmatprep.subr.mxu0 0.0
  %6710 = vmatpush2.xpose.msra.mxu0 0.0
  %6711 = vmatprep.subr.mxu0 0.0
  %6712 = vmatpush2.xpose.msra.mxu0 0.0
  %6713 = vmatprep.subr.mxu0 0.0
  %6714 = vmatpush2.xpose.msra.mxu0 0.0
  %6715 = vmatprep.subr.mxu0 0.0
  %6716 = vmatpush2.xpose.msra.mxu0 0.0
  %6717 = vmatprep.subr.mxu0 0.0
  %6718 = vmatpush2.xpose.msra.mxu0 0.0
  %6719 = vmatprep.subr.mxu0 0.0
  %6720 = vmatpush2.xpose.msra.mxu0 0.0
  %6721 = vmatprep.subr.mxu0 0.0
  %6722 = vmatpush2.xpose.msra.mxu0 0.0
  %6723 = vmatprep.subr.mxu0 0.0
  %6724 = vmatpush2.xpose.msra.mxu0 0.0
  %6725 = vmatprep.subr.mxu0 0.0
  %6726 = vmatpush2.xpose.msra.mxu0 0.0
  %6727 = vmatprep.mubr.f32.mxu0 %v6581
  %6728 = vmatmul.mubr.f32.gmra.mxu0 %v6580
  %v6729 = vpop.f32.mrf.mxu0
  %v6730 = vadd.f32 %v6660, %v6729
  %v6731 = vpop.f32.mrf.mxu0
  %6732 = vdwg.mxu0
  %6733 = vmatprep.subr.mxu0 0.0
  %6734 = vmatpush1.xpose.msra.mxu0 0.0
  %6735 = vmatprep.subr.mxu0 0.0
  %6736 = vmatpush1.xpose.msra.mxu0 0.0
  %6737 = vmatprep.subr.mxu0 0.0
  %6738 = vmatpush1.xpose.msra.mxu0 0.0
  %6739 = vmatprep.subr.mxu0 0.0
  %6740 = vmatpush1.xpose.msra.mxu0 0.0
  %6741 = vmatprep.subr.mxu0 0.0
  %6742 = vmatpush1.xpose.msra.mxu0 0.0
  %6743 = vmatprep.subr.mxu0 0.0
  %6744 = vmatpush1.xpose.msra.mxu0 0.0
  %6745 = vmatprep.subr.mxu0 0.0
  %6746 = vmatpush1.xpose.msra.mxu0 0.0
  %6747 = vmatprep.subr.mxu0 0.0
  %6748 = vmatpush1.xpose.msra.mxu0 0.0
  %6749 = vmatprep.subr.mxu0 0.0
  %6750 = vmatpush1.xpose.msra.mxu0 0.0
  %6751 = vmatprep.subr.mxu0 0.0
  %6752 = vmatpush1.xpose.msra.mxu0 0.0
  %6753 = vmatprep.subr.mxu0 0.0
  %6754 = vmatpush1.xpose.msra.mxu0 0.0
  %6755 = vmatprep.subr.mxu0 0.0
  %6756 = vmatpush1.xpose.msra.mxu0 0.0
  %6757 = vmatprep.subr.mxu0 0.0
  %6758 = vmatpush1.xpose.msra.mxu0 0.0
  %6759 = vmatprep.subr.mxu0 0.0
  %6760 = vmatpush1.xpose.msra.mxu0 0.0
  %6761 = vmatprep.subr.mxu0 0.0
  %6762 = vmatpush1.xpose.msra.mxu0 0.0
  %6763 = vmatprep.subr.mxu0 0.0
  %6764 = vmatpush1.xpose.msra.mxu0 %v6586
  %6765 = vmatprep.subr.mxu0 0.0
  %6766 = vmatpush2.xpose.msra.mxu0 0.0
  %6767 = vmatprep.subr.mxu0 0.0
  %6768 = vmatpush2.xpose.msra.mxu0 0.0
  %6769 = vmatprep.subr.mxu0 0.0
  %6770 = vmatpush2.xpose.msra.mxu0 0.0
  %6771 = vmatprep.subr.mxu0 0.0
  %6772 = vmatpush2.xpose.msra.mxu0 0.0
  %6773 = vmatprep.subr.mxu0 0.0
  %6774 = vmatpush2.xpose.msra.mxu0 0.0
  %6775 = vmatprep.subr.mxu0 0.0
  %6776 = vmatpush2.xpose.msra.mxu0 0.0
  %6777 = vmatprep.subr.mxu0 0.0
  %6778 = vmatpush2.xpose.msra.mxu0 0.0
  %6779 = vmatprep.subr.mxu0 0.0
  %6780 = vmatpush2.xpose.msra.mxu0 0.0
  %6781 = vmatprep.subr.mxu0 0.0
  %6782 = vmatpush2.xpose.msra.mxu0 0.0
  %6783 = vmatprep.subr.mxu0 0.0
  %6784 = vmatpush2.xpose.msra.mxu0 0.0
  %6785 = vmatprep.subr.mxu0 0.0
  %6786 = vmatpush2.xpose.msra.mxu0 0.0
  %6787 = vmatprep.subr.mxu0 0.0
  %6788 = vmatpush2.xpose.msra.mxu0 0.0
  %6789 = vmatprep.subr.mxu0 0.0
  %6790 = vmatpush2.xpose.msra.mxu0 0.0
  %6791 = vmatprep.subr.mxu0 0.0
  %6792 = vmatpush2.xpose.msra.mxu0 0.0
  %6793 = vmatprep.subr.mxu0 0.0
  %6794 = vmatpush2.xpose.msra.mxu0 0.0
  %6795 = vmatprep.subr.mxu0 0.0
  %6796 = vmatpush2.xpose.msra.mxu0 0.0
  %6797 = vmatprep.mubr.f32.mxu0 0.0
  %6798 = vmatmul.mubr.f32.gmra.mxu0 %v6582
  %v6799 = vpop.f32.mrf.mxu0
  %v6800 = vadd.f32 %v6730, %v6799
  %v6801 = vpop.f32.mrf.mxu0
  %6802 = vdwg.mxu0
  %v6803 = vadd.f32 %v6363, %v6800
  %v6804 = vld [vmem:[%s4] sm:$0x1]
  %v6806 = vlaneseq
  %v6807 = vshrl.u32 %v6806, 7
  %v6808 = vsub.s32 0, %v6807
  %v6809 = vrot.slane %v6804, %v6808
  %v6811 = vadd.f32 %v6803, %v6809
  %vm6812 = vcmask 31744
  %6813 = vst.msk [vmem:[%s5] sm:$0xff] %vm6812, %v6811
  // Predicated region
  $region22: #{classifier_forward.1} parent=0 // pred_check
    _
  $region23: #{classifier_forward.1} parent=0 // pred_check_branch
    %6815 = sbr.rel (0) target = $region25
  $region24: #{classifier_forward.1} parent=0 // pred_region
    _
  $region25: #{classifier_forward.1} parent=0 // pred_fallthru
    _
  // Predicated region
  $region26: #{classifier_forward.1} parent=0 // pred_check
    _
  $region27: #{classifier_forward.1} parent=0 // pred_check_branch
    %6817 = sbr.rel (0) target = $region29
  $region28: #{classifier_forward.1} parent=0 // pred_region
    _
  $region29: #{classifier_forward.1} parent=0 // pred_fallthru
    _

</llo_original>
